<compile_context>
chip_gen: v7x
topology: tpu7x:2x2x1
jax: 0.10.0
libtpu: 0.0.40
codegen_flags: <defaults>
</compile_context>

<pallas_src>
import jax
import jax.numpy as jnp
from jax import lax
from jax.experimental import pallas as pl
from jax.experimental.pallas import tpu as pltpu

_VMEM = pl.BlockSpec(memory_space=pltpu.MemorySpace.VMEM)
_EPS = 1e-5


# ----------------------------------------------------------------------------
# Fused Pallas kernel
# ----------------------------------------------------------------------------
def _bn_relu(z, gamma, beta):
    # Training-mode BatchNorm2d (biased batch stats over N*H*W, eps=1e-5),
    # single-pass statistics, followed by ReLU.  z: (M, C); gamma/beta: (1, C).
    inv_m = 1.0 / z.shape[0]
    mean = jnp.sum(z, axis=0, keepdims=True) * inv_m
    var = jnp.sum(z * z, axis=0, keepdims=True) * inv_m - mean * mean
    y = (z - mean) * lax.rsqrt(var + _EPS) * gamma + beta
    return jnp.maximum(y, 0.0)


def _decoder_block_kernel(x_ref, w1_ref, g1_ref, bt1_ref,
                          w2_ref, g2_ref, bt2_ref, wd_ref, bd_ref,
                          o_ref, p1_ref, a1_ref, p2_ref):
    # x_ref : (N, H, W, Cin)           NHWC input, single VMEM block
    # w1_ref: (9*Cin,  Cmid)           conv1 weights (3x3 taps folded into K)
    # w2_ref: (9*Cmid, Cmid)           conv2 weights
    # g*/bt*: (1, Cmid)                BatchNorm gamma / beta
    # wd_ref: (Cmid, 4*Cout)           ConvTranspose2d 2x2 as one matmul
    # bd_ref: (1, 4*Cout)
    # o_ref : (N*H2*W2, 4*Cout)
    # p1_ref: (N*H1*W1, 9*Cin)   VMEM scratch: stage-1 im2col patches
    # a1_ref: (N*H1*W1, Cmid)    VMEM scratch: stage-1 activation (flat NHWC)
    # p2_ref: (N*H2*W2, 9*Cmid)  VMEM scratch: stage-2 im2col patches
    n, h, w, _ = x_ref.shape
    h1, w1 = h - 2, w - 2          # spatial dims after conv1 (VALID 3x3)
    h2, w2 = h - 4, w - 4          # spatial dims after conv2

    # ---- stage 1: in-kernel im2col straight from the input block ----------
    # For each output row, gather the 9 shifted (W1, Cin) tap slabs and store
    # them lane-concatenated into the VMEM patch matrix (static slices only).
    for nn in range(n):
        for i in range(h1):
            row = (nn * h1 + i) * w1
            taps = [x_ref[nn, i + dy, dx:dx + w1, :]            # (w1, Cin)
                    for dy in range(3) for dx in range(3)]
            p1_ref[row:row + w1, :] = jnp.concatenate(taps, axis=-1)

    # single MXU matmul with K = 9*Cin (no per-tap accumulation loop)
    z1 = jnp.dot(p1_ref[...], w1_ref[...], preferred_element_type=jnp.float32)
    # conv bias omitted: a per-channel constant cancels in train-mode BN
    a1_ref[...] = _bn_relu(z1, g1_ref[...], bt1_ref[...])

    # ---- stage 2: im2col from the VMEM-resident stage-1 activation --------
    for nn in range(n):
        for i in range(h2):
            row = (nn * h2 + i) * w2
            taps = []
            for dy in range(3):
                for dx in range(3):
                    start = (nn * h1 + i + dy) * w1 + dx
                    taps.append(a1_ref[start:start + w2, :])    # (w2, Cmid)
            p2_ref[row:row + w2, :] = jnp.concatenate(taps, axis=-1)

    z2 = jnp.dot(p2_ref[...], w2_ref[...], preferred_element_type=jnp.float32)
    a2 = _bn_relu(z2, g2_ref[...], bt2_ref[...])                # (M2, Cmid)

    # ---- ConvTranspose2d(k=2, s=2): one matmul over the 4 kernel taps -----
    y = jnp.dot(a2, wd_ref[...], preferred_element_type=jnp.float32) + bd_ref[...]
    o_ref[...] = y.astype(o_ref.dtype)


# ----------------------------------------------------------------------------
# Wrapper (layout / reshape glue only)
# ----------------------------------------------------------------------------
def prepare_params(p):
    """One-time parameter preparation, hoisted out of the per-call forward."""
    cin, cmid = p["w1"].shape[2], p["w1"].shape[3]
    cout = p["wd"].shape[1]
    return dict(
        w1=p["w1"].reshape(9 * cin, cmid),        # HWIO -> (9*Cin, Cmid)
        g1=p["g1"].reshape(1, cmid),
        beta1=p["beta1"].reshape(1, cmid),
        w2=p["w2"].reshape(9 * cmid, cmid),
        g2=p["g2"].reshape(1, cmid),
        beta2=p["beta2"].reshape(1, cmid),
        # ConvTranspose2d weight (Cin, Cout, 2, 2) -> (Cin, dy, dx, Cout) -> (Cin, 4*Cout)
        wd=jnp.transpose(p["wd"], (0, 2, 3, 1)).reshape(cmid, 4 * cout),
        bd=jnp.tile(p["bd"], 4).reshape(1, 4 * cout),
        # conv biases b1/b2 intentionally omitted: they cancel exactly in
        # training-mode BatchNorm's mean subtraction.
    )


def decoder_block_forward(x_nchw, prep):
    x = jnp.transpose(x_nchw, (0, 2, 3, 1))       # NCHW -> NHWC
    n, h, w, cin = x.shape
    cmid = prep["w1"].shape[1]
    cout4 = prep["wd"].shape[1]
    cout = cout4 // 4
    h1, w1 = h - 2, w - 2
    h2, w2 = h - 4, w - 4
    m1, m2 = n * h1 * w1, n * h2 * w2

    out2d = pl.pallas_call(
        _decoder_block_kernel,
        out_shape=jax.ShapeDtypeStruct((m2, cout4), jnp.float32),
        in_specs=[_VMEM] * 9,
        out_specs=_VMEM,
        scratch_shapes=[
            pltpu.VMEM((m1, 9 * cin), jnp.float32),    # stage-1 patches
            pltpu.VMEM((m1, cmid), jnp.float32),       # stage-1 activation
            pltpu.VMEM((m2, 9 * cmid), jnp.float32),   # stage-2 patches
        ],
    )(x, prep["w1"], prep["g1"], prep["beta1"],
      prep["w2"], prep["g2"], prep["beta2"], prep["wd"], prep["bd"])

    # interleave the 2x2 transposed-conv taps into stride-2 output pixels
    y = out2d.reshape(n, h2, w2, 2, 2, cout).transpose(0, 1, 3, 2, 4, 5)
    y = y.reshape(n, 2 * h2, 2 * w2, cout)
    return jnp.transpose(y, (0, 3, 1, 2))         # NHWC -> NCHW


# ----------------------------------------------------------------------------
# Pure-JAX reference (independent path, includes the conv biases)
# ----------------------------------------------------------------------------
def _ref_conv_bn_relu(x, w, b, g, beta):
    y = lax.conv_general_dilated(
        x, w, (1, 1), "VALID",
        dimension_numbers=("NHWC", "HWIO", "NHWC"),
        precision=lax.Precision.HIGHEST) + b
    mean = jnp.mean(y, axis=(0, 1, 2), keepdims=True)
    var = jnp.mean((y - mean) ** 2, axis=(0, 1, 2), keepdims=True)
    y = (y - mean) / jnp.sqrt(var + _EPS) * g + beta
    return jnp.maximum(y, 0.0)


def _ref_deconv(x, w_pt, b):
    N, H, W, _ = x.shape
    Cout = w_pt.shape[1]
    out = jnp.zeros((N, 2 * H, 2 * W, Cout), jnp.float32)
    for dy in range(2):
        for dx in range(2):
            c = jnp.einsum("nhwc,co->nhwo", x, w_pt[:, :, dy, dx],
                           precision=lax.Precision.HIGHEST)
            out = out.at[:, dy::2, dx::2, :].set(c)
    return out + b


def ref_forward(x_nchw, p):
    x = jnp.transpose(x_nchw, (0, 2, 3, 1))
    h = _ref_conv_bn_relu(x, p["w1"], p["b1"], p["g1"], p["beta1"])
    h = _ref_conv_bn_relu(h, p["w2"], p["b2"], p["g2"], p["beta2"])
    y = _ref_deconv(h, p["wd"], p["bd"])
    return jnp.transpose(y, (0, 3, 1, 2))


# ----------------------------------------------------------------------------
if __name__ == "__main__":
    in_c, mid_c, out_c = 4, 8, 4
    N, H, W = 2, 16, 16

    ks = jax.random.split(jax.random.PRNGKey(0), 11)
    params = dict(
        w1=0.1 * jax.random.normal(ks[0], (3, 3, in_c, mid_c), jnp.float32),
        b1=0.1 * jax.random.normal(ks[1], (mid_c,), jnp.float32),
        g1=1.0 + 0.1 * jax.random.normal(ks[2], (mid_c,), jnp.float32),
        beta1=0.1 * jax.random.normal(ks[3], (mid_c,), jnp.float32),
        w2=0.1 * jax.random.normal(ks[4], (3, 3, mid_c, mid_c), jnp.float32),
        b2=0.1 * jax.random.normal(ks[5], (mid_c,), jnp.float32),
        g2=1.0 + 0.1 * jax.random.normal(ks[6], (mid_c,), jnp.float32),
        beta2=0.1 * jax.random.normal(ks[7], (mid_c,), jnp.float32),
        wd=0.1 * jax.random.normal(ks[8], (mid_c, out_c, 2, 2), jnp.float32),
        bd=0.1 * jax.random.normal(ks[9], (out_c,), jnp.float32),
    )
    x = jax.random.normal(ks[10], (N, in_c, H, W), jnp.float32)  # NCHW input

    prep = prepare_params(params)                 # one-time parameter prep
    fwd = jax.jit(decoder_block_forward)
    out = jax.block_until_ready(fwd(x, prep))

    assert out.shape == (N, out_c, 2 * (H - 4), 2 * (W - 4)), out.shape

    expect = ref_forward(x, params)
    err = float(jnp.max(jnp.abs(out - expect)))
    if err > 2e-2:
        raise AssertionError(f"mismatch vs reference: max abs err {err}")

    print("KERNEL_OK")
</pallas_src>

<mosaic_0001>
module attributes {stable_mosaic.version = 11 : i64} {
  func.func @_decoder_block_kernel(%arg0: memref<2x16x16x4xf32, #tpu.memory_space<vmem>>, %arg1: memref<36x8xf32, #tpu.memory_space<vmem>>, %arg2: memref<1x8xf32, #tpu.memory_space<vmem>>, %arg3: memref<1x8xf32, #tpu.memory_space<vmem>>, %arg4: memref<72x8xf32, #tpu.memory_space<vmem>>, %arg5: memref<1x8xf32, #tpu.memory_space<vmem>>, %arg6: memref<1x8xf32, #tpu.memory_space<vmem>>, %arg7: memref<8x16xf32, #tpu.memory_space<vmem>>, %arg8: memref<1x16xf32, #tpu.memory_space<vmem>>, %arg9: memref<288x16xf32, #tpu.memory_space<vmem>>, %arg10: memref<392x36xf32, #tpu.memory_space<vmem>>, %arg11: memref<392x8xf32, #tpu.memory_space<vmem>>, %arg12: memref<288x72xf32, #tpu.memory_space<vmem>>) attributes {dimension_semantics = [], scalar_prefetch = 0 : i64, scratch_operands = 3 : i64, tpu.core_type = #tpu.core_type<tc>} {
    %c0 = arith.constant 0 : index
    %c0_0 = arith.constant 0 : index
    %c0_1 = arith.constant 0 : index
    %c0_2 = arith.constant 0 : index
    %0 = vector.load %arg0[%c0, %c0_0, %c0_1, %c0_2] : memref<2x16x16x4xf32, #tpu.memory_space<vmem>>, vector<1x1x14x4xf32>
    %1 = vector.shape_cast %0 : vector<1x1x14x4xf32> to vector<14x4xf32>
    %c0_3 = arith.constant 0 : index
    %c0_4 = arith.constant 0 : index
    %c1 = arith.constant 1 : index
    %c0_5 = arith.constant 0 : index
    %2 = vector.load %arg0[%c0_3, %c0_4, %c1, %c0_5] : memref<2x16x16x4xf32, #tpu.memory_space<vmem>>, vector<1x1x14x4xf32>
    %3 = vector.shape_cast %2 : vector<1x1x14x4xf32> to vector<14x4xf32>
    %c0_6 = arith.constant 0 : index
    %c0_7 = arith.constant 0 : index
    %c2 = arith.constant 2 : index
    %c0_8 = arith.constant 0 : index
    %4 = vector.load %arg0[%c0_6, %c0_7, %c2, %c0_8] : memref<2x16x16x4xf32, #tpu.memory_space<vmem>>, vector<1x1x14x4xf32>
    %5 = vector.shape_cast %4 : vector<1x1x14x4xf32> to vector<14x4xf32>
    %c0_9 = arith.constant 0 : index
    %c1_10 = arith.constant 1 : index
    %c0_11 = arith.constant 0 : index
    %c0_12 = arith.constant 0 : index
    %6 = vector.load %arg0[%c0_9, %c1_10, %c0_11, %c0_12] : memref<2x16x16x4xf32, #tpu.memory_space<vmem>>, vector<1x1x14x4xf32>
    %7 = vector.shape_cast %6 : vector<1x1x14x4xf32> to vector<14x4xf32>
    %c0_13 = arith.constant 0 : index
    %c1_14 = arith.constant 1 : index
    %c1_15 = arith.constant 1 : index
    %c0_16 = arith.constant 0 : index
    %8 = vector.load %arg0[%c0_13, %c1_14, %c1_15, %c0_16] : memref<2x16x16x4xf32, #tpu.memory_space<vmem>>, vector<1x1x14x4xf32>
    %9 = vector.shape_cast %8 : vector<1x1x14x4xf32> to vector<14x4xf32>
    %c0_17 = arith.constant 0 : index
    %c1_18 = arith.constant 1 : index
    %c2_19 = arith.constant 2 : index
    %c0_20 = arith.constant 0 : index
    %10 = vector.load %arg0[%c0_17, %c1_18, %c2_19, %c0_20] : memref<2x16x16x4xf32, #tpu.memory_space<vmem>>, vector<1x1x14x4xf32>
    %11 = vector.shape_cast %10 : vector<1x1x14x4xf32> to vector<14x4xf32>
    %c0_21 = arith.constant 0 : index
    %c2_22 = arith.constant 2 : index
    %c0_23 = arith.constant 0 : index
    %c0_24 = arith.constant 0 : index
    %12 = vector.load %arg0[%c0_21, %c2_22, %c0_23, %c0_24] : memref<2x16x16x4xf32, #tpu.memory_space<vmem>>, vector<1x1x14x4xf32>
    %13 = vector.shape_cast %12 : vector<1x1x14x4xf32> to vector<14x4xf32>
    %c0_25 = arith.constant 0 : index
    %c2_26 = arith.constant 2 : index
    %c1_27 = arith.constant 1 : index
    %c0_28 = arith.constant 0 : index
    %14 = vector.load %arg0[%c0_25, %c2_26, %c1_27, %c0_28] : memref<2x16x16x4xf32, #tpu.memory_space<vmem>>, vector<1x1x14x4xf32>
    %15 = vector.shape_cast %14 : vector<1x1x14x4xf32> to vector<14x4xf32>
    %c0_29 = arith.constant 0 : index
    %c2_30 = arith.constant 2 : index
    %c2_31 = arith.constant 2 : index
    %c0_32 = arith.constant 0 : index
    %16 = vector.load %arg0[%c0_29, %c2_30, %c2_31, %c0_32] : memref<2x16x16x4xf32, #tpu.memory_space<vmem>>, vector<1x1x14x4xf32>
    %17 = vector.shape_cast %16 : vector<1x1x14x4xf32> to vector<14x4xf32>
    %18 = tpu.concatenate %1, %3, %5, %7, %9, %11, %13, %15, %17 in 1 : vector<14x4xf32>, vector<14x4xf32>, vector<14x4xf32>, vector<14x4xf32>, vector<14x4xf32>, vector<14x4xf32>, vector<14x4xf32>, vector<14x4xf32>, vector<14x4xf32> -> vector<14x36xf32>
    %c0_33 = arith.constant 0 : index
    %c0_34 = arith.constant 0 : index
    %19 = vector.load %arg10[%c0_33, %c0_34] : memref<392x36xf32, #tpu.memory_space<vmem>>, vector<14x36xf32>
    tpu.vector_store %arg10[%c0_33, %c0_34], %18 {strides = array<i32>} : memref<392x36xf32, #tpu.memory_space<vmem>>, vector<14x36xf32>,
    %c0_35 = arith.constant 0 : index
    %c1_36 = arith.constant 1 : index
    %c0_37 = arith.constant 0 : index
    %c0_38 = arith.constant 0 : index
    %20 = vector.load %arg0[%c0_35, %c1_36, %c0_37, %c0_38] : memref<2x16x16x4xf32, #tpu.memory_space<vmem>>, vector<1x1x14x4xf32>
    %21 = vector.shape_cast %20 : vector<1x1x14x4xf32> to vector<14x4xf32>
    %c0_39 = arith.constant 0 : index
    %c1_40 = arith.constant 1 : index
    %c1_41 = arith.constant 1 : index
    %c0_42 = arith.constant 0 : index
    %22 = vector.load %arg0[%c0_39, %c1_40, %c1_41, %c0_42] : memref<2x16x16x4xf32, #tpu.memory_space<vmem>>, vector<1x1x14x4xf32>
    %23 = vector.shape_cast %22 : vector<1x1x14x4xf32> to vector<14x4xf32>
    %c0_43 = arith.constant 0 : index
    %c1_44 = arith.constant 1 : index
    %c2_45 = arith.constant 2 : index
    %c0_46 = arith.constant 0 : index
    %24 = vector.load %arg0[%c0_43, %c1_44, %c2_45, %c0_46] : memref<2x16x16x4xf32, #tpu.memory_space<vmem>>, vector<1x1x14x4xf32>
    %25 = vector.shape_cast %24 : vector<1x1x14x4xf32> to vector<14x4xf32>
    %c0_47 = arith.constant 0 : index
    %c2_48 = arith.constant 2 : index
    %c0_49 = arith.constant 0 : index
    %c0_50 = arith.constant 0 : index
    %26 = vector.load %arg0[%c0_47, %c2_48, %c0_49, %c0_50] : memref<2x16x16x4xf32, #tpu.memory_space<vmem>>, vector<1x1x14x4xf32>
    %27 = vector.shape_cast %26 : vector<1x1x14x4xf32> to vector<14x4xf32>
    %c0_51 = arith.constant 0 : index
    %c2_52 = arith.constant 2 : index
    %c1_53 = arith.constant 1 : index
    %c0_54 = arith.constant 0 : index
    %28 = vector.load %arg0[%c0_51, %c2_52, %c1_53, %c0_54] : memref<2x16x16x4xf32, #tpu.memory_space<vmem>>, vector<1x1x14x4xf32>
    %29 = vector.shape_cast %28 : vector<1x1x14x4xf32> to vector<14x4xf32>
    %c0_55 = arith.constant 0 : index
    %c2_56 = arith.constant 2 : index
    %c2_57 = arith.constant 2 : index
    %c0_58 = arith.constant 0 : index
    %30 = vector.load %arg0[%c0_55, %c2_56, %c2_57, %c0_58] : memref<2x16x16x4xf32, #tpu.memory_space<vmem>>, vector<1x1x14x4xf32>
    %31 = vector.shape_cast %30 : vector<1x1x14x4xf32> to vector<14x4xf32>
    %c0_59 = arith.constant 0 : index
    %c3 = arith.constant 3 : index
    %c0_60 = arith.constant 0 : index
    %c0_61 = arith.constant 0 : index
    %32 = vector.load %arg0[%c0_59, %c3, %c0_60, %c0_61] : memref<2x16x16x4xf32, #tpu.memory_space<vmem>>, vector<1x1x14x4xf32>
    %33 = vector.shape_cast %32 : vector<1x1x14x4xf32> to vector<14x4xf32>
    %c0_62 = arith.constant 0 : index
    %c3_63 = arith.constant 3 : index
    %c1_64 = arith.constant 1 : index
    %c0_65 = arith.constant 0 : index
    %34 = vector.load %arg0[%c0_62, %c3_63, %c1_64, %c0_65] : memref<2x16x16x4xf32, #tpu.memory_space<vmem>>, vector<1x1x14x4xf32>
    %35 = vector.shape_cast %34 : vector<1x1x14x4xf32> to vector<14x4xf32>
    %c0_66 = arith.constant 0 : index
    %c3_67 = arith.constant 3 : index
    %c2_68 = arith.constant 2 : index
    %c0_69 = arith.constant 0 : index
    %36 = vector.load %arg0[%c0_66, %c3_67, %c2_68, %c0_69] : memref<2x16x16x4xf32, #tpu.memory_space<vmem>>, vector<1x1x14x4xf32>
    %37 = vector.shape_cast %36 : vector<1x1x14x4xf32> to vector<14x4xf32>
    %38 = tpu.concatenate %21, %23, %25, %27, %29, %31, %33, %35, %37 in 1 : vector<14x4xf32>, vector<14x4xf32>, vector<14x4xf32>, vector<14x4xf32>, vector<14x4xf32>, vector<14x4xf32>, vector<14x4xf32>, vector<14x4xf32>, vector<14x4xf32> -> vector<14x36xf32>
    %c14 = arith.constant 14 : index
    %c0_70 = arith.constant 0 : index
    %39 = vector.load %arg10[%c14, %c0_70] : memref<392x36xf32, #tpu.memory_space<vmem>>, vector<14x36xf32>
    tpu.vector_store %arg10[%c14, %c0_70], %38 {strides = array<i32>} : memref<392x36xf32, #tpu.memory_space<vmem>>, vector<14x36xf32>,
    %c0_71 = arith.constant 0 : index
    %c2_72 = arith.constant 2 : index
    %c0_73 = arith.constant 0 : index
    %c0_74 = arith.constant 0 : index
    %40 = vector.load %arg0[%c0_71, %c2_72, %c0_73, %c0_74] : memref<2x16x16x4xf32, #tpu.memory_space<vmem>>, vector<1x1x14x4xf32>
    %41 = vector.shape_cast %40 : vector<1x1x14x4xf32> to vector<14x4xf32>
    %c0_75 = arith.constant 0 : index
    %c2_76 = arith.constant 2 : index
    %c1_77 = arith.constant 1 : index
    %c0_78 = arith.constant 0 : index
    %42 = vector.load %arg0[%c0_75, %c2_76, %c1_77, %c0_78] : memref<2x16x16x4xf32, #tpu.memory_space<vmem>>, vector<1x1x14x4xf32>
    %43 = vector.shape_cast %42 : vector<1x1x14x4xf32> to vector<14x4xf32>
    %c0_79 = arith.constant 0 : index
    %c2_80 = arith.constant 2 : index
    %c2_81 = arith.constant 2 : index
    %c0_82 = arith.constant 0 : index
    %44 = vector.load %arg0[%c0_79, %c2_80, %c2_81, %c0_82] : memref<2x16x16x4xf32, #tpu.memory_space<vmem>>, vector<1x1x14x4xf32>
    %45 = vector.shape_cast %44 : vector<1x1x14x4xf32> to vector<14x4xf32>
    %c0_83 = arith.constant 0 : index
    %c3_84 = arith.constant 3 : index
    %c0_85 = arith.constant 0 : index
    %c0_86 = arith.constant 0 : index
    %46 = vector.load %arg0[%c0_83, %c3_84, %c0_85, %c0_86] : memref<2x16x16x4xf32, #tpu.memory_space<vmem>>, vector<1x1x14x4xf32>
    %47 = vector.shape_cast %46 : vector<1x1x14x4xf32> to vector<14x4xf32>
    %c0_87 = arith.constant 0 : index
    %c3_88 = arith.constant 3 : index
    %c1_89 = arith.constant 1 : index
    %c0_90 = arith.constant 0 : index
    %48 = vector.load %arg0[%c0_87, %c3_88, %c1_89, %c0_90] : memref<2x16x16x4xf32, #tpu.memory_space<vmem>>, vector<1x1x14x4xf32>
    %49 = vector.shape_cast %48 : vector<1x1x14x4xf32> to vector<14x4xf32>
    %c0_91 = arith.constant 0 : index
    %c3_92 = arith.constant 3 : index
    %c2_93 = arith.constant 2 : index
    %c0_94 = arith.constant 0 : index
    %50 = vector.load %arg0[%c0_91, %c3_92, %c2_93, %c0_94] : memref<2x16x16x4xf32, #tpu.memory_space<vmem>>, vector<1x1x14x4xf32>
    %51 = vector.shape_cast %50 : vector<1x1x14x4xf32> to vector<14x4xf32>
    %c0_95 = arith.constant 0 : index
    %c4 = arith.constant 4 : index
    %c0_96 = arith.constant 0 : index
    %c0_97 = arith.constant 0 : index
    %52 = vector.load %arg0[%c0_95, %c4, %c0_96, %c0_97] : memref<2x16x16x4xf32, #tpu.memory_space<vmem>>, vector<1x1x14x4xf32>
    %53 = vector.shape_cast %52 : vector<1x1x14x4xf32> to vector<14x4xf32>
    %c0_98 = arith.constant 0 : index
    %c4_99 = arith.constant 4 : index
    %c1_100 = arith.constant 1 : index
    %c0_101 = arith.constant 0 : index
    %54 = vector.load %arg0[%c0_98, %c4_99, %c1_100, %c0_101] : memref<2x16x16x4xf32, #tpu.memory_space<vmem>>, vector<1x1x14x4xf32>
    %55 = vector.shape_cast %54 : vector<1x1x14x4xf32> to vector<14x4xf32>
    %c0_102 = arith.constant 0 : index
    %c4_103 = arith.constant 4 : index
    %c2_104 = arith.constant 2 : index
    %c0_105 = arith.constant 0 : index
    %56 = vector.load %arg0[%c0_102, %c4_103, %c2_104, %c0_105] : memref<2x16x16x4xf32, #tpu.memory_space<vmem>>, vector<1x1x14x4xf32>
    %57 = vector.shape_cast %56 : vector<1x1x14x4xf32> to vector<14x4xf32>
    %58 = tpu.concatenate %41, %43, %45, %47, %49, %51, %53, %55, %57 in 1 : vector<14x4xf32>, vector<14x4xf32>, vector<14x4xf32>, vector<14x4xf32>, vector<14x4xf32>, vector<14x4xf32>, vector<14x4xf32>, vector<14x4xf32>, vector<14x4xf32> -> vector<14x36xf32>
    %c28 = arith.constant 28 : index
    %c0_106 = arith.constant 0 : index
    %59 = vector.load %arg10[%c28, %c0_106] : memref<392x36xf32, #tpu.memory_space<vmem>>, vector<14x36xf32>
    tpu.vector_store %arg10[%c28, %c0_106], %58 {strides = array<i32>} : memref<392x36xf32, #tpu.memory_space<vmem>>, vector<14x36xf32>,
    %c0_107 = arith.constant 0 : index
    %c3_108 = arith.constant 3 : index
    %c0_109 = arith.constant 0 : index
    %c0_110 = arith.constant 0 : index
    %60 = vector.load %arg0[%c0_107, %c3_108, %c0_109, %c0_110] : memref<2x16x16x4xf32, #tpu.memory_space<vmem>>, vector<1x1x14x4xf32>
    %61 = vector.shape_cast %60 : vector<1x1x14x4xf32> to vector<14x4xf32>
    %c0_111 = arith.constant 0 : index
    %c3_112 = arith.constant 3 : index
    %c1_113 = arith.constant 1 : index
    %c0_114 = arith.constant 0 : index
    %62 = vector.load %arg0[%c0_111, %c3_112, %c1_113, %c0_114] : memref<2x16x16x4xf32, #tpu.memory_space<vmem>>, vector<1x1x14x4xf32>
    %63 = vector.shape_cast %62 : vector<1x1x14x4xf32> to vector<14x4xf32>
    %c0_115 = arith.constant 0 : index
    %c3_116 = arith.constant 3 : index
    %c2_117 = arith.constant 2 : index
    %c0_118 = arith.constant 0 : index
    %64 = vector.load %arg0[%c0_115, %c3_116, %c2_117, %c0_118] : memref<2x16x16x4xf32, #tpu.memory_space<vmem>>, vector<1x1x14x4xf32>
    %65 = vector.shape_cast %64 : vector<1x1x14x4xf32> to vector<14x4xf32>
    %c0_119 = arith.constant 0 : index
    %c4_120 = arith.constant 4 : index
    %c0_121 = arith.constant 0 : index
    %c0_122 = arith.constant 0 : index
    %66 = vector.load %arg0[%c0_119, %c4_120, %c0_121, %c0_122] : memref<2x16x16x4xf32, #tpu.memory_space<vmem>>, vector<1x1x14x4xf32>
    %67 = vector.shape_cast %66 : vector<1x1x14x4xf32> to vector<14x4xf32>
    %c0_123 = arith.constant 0 : index
    %c4_124 = arith.constant 4 : index
    %c1_125 = arith.constant 1 : index
    %c0_126 = arith.constant 0 : index
    %68 = vector.load %arg0[%c0_123, %c4_124, %c1_125, %c0_126] : memref<2x16x16x4xf32, #tpu.memory_space<vmem>>, vector<1x1x14x4xf32>
    %69 = vector.shape_cast %68 : vector<1x1x14x4xf32> to vector<14x4xf32>
    %c0_127 = arith.constant 0 : index
    %c4_128 = arith.constant 4 : index
    %c2_129 = arith.constant 2 : index
    %c0_130 = arith.constant 0 : index
    %70 = vector.load %arg0[%c0_127, %c4_128, %c2_129, %c0_130] : memref<2x16x16x4xf32, #tpu.memory_space<vmem>>, vector<1x1x14x4xf32>
    %71 = vector.shape_cast %70 : vector<1x1x14x4xf32> to vector<14x4xf32>
    %c0_131 = arith.constant 0 : index
    %c5 = arith.constant 5 : index
    %c0_132 = arith.constant 0 : index
    %c0_133 = arith.constant 0 : index
    %72 = vector.load %arg0[%c0_131, %c5, %c0_132, %c0_133] : memref<2x16x16x4xf32, #tpu.memory_space<vmem>>, vector<1x1x14x4xf32>
    %73 = vector.shape_cast %72 : vector<1x1x14x4xf32> to vector<14x4xf32>
    %c0_134 = arith.constant 0 : index
    %c5_135 = arith.constant 5 : index
    %c1_136 = arith.constant 1 : index
    %c0_137 = arith.constant 0 : index
    %74 = vector.load %arg0[%c0_134, %c5_135, %c1_136, %c0_137] : memref<2x16x16x4xf32, #tpu.memory_space<vmem>>, vector<1x1x14x4xf32>
    %75 = vector.shape_cast %74 : vector<1x1x14x4xf32> to vector<14x4xf32>
    %c0_138 = arith.constant 0 : index
    %c5_139 = arith.constant 5 : index
    %c2_140 = arith.constant 2 : index
    %c0_141 = arith.constant 0 : index
    %76 = vector.load %arg0[%c0_138, %c5_139, %c2_140, %c0_141] : memref<2x16x16x4xf32, #tpu.memory_space<vmem>>, vector<1x1x14x4xf32>
    %77 = vector.shape_cast %76 : vector<1x1x14x4xf32> to vector<14x4xf32>
    %78 = tpu.concatenate %61, %63, %65, %67, %69, %71, %73, %75, %77 in 1 : vector<14x4xf32>, vector<14x4xf32>, vector<14x4xf32>, vector<14x4xf32>, vector<14x4xf32>, vector<14x4xf32>, vector<14x4xf32>, vector<14x4xf32>, vector<14x4xf32> -> vector<14x36xf32>
    %c42 = arith.constant 42 : index
    %c0_142 = arith.constant 0 : index
    %79 = vector.load %arg10[%c42, %c0_142] : memref<392x36xf32, #tpu.memory_space<vmem>>, vector<14x36xf32>
    tpu.vector_store %arg10[%c42, %c0_142], %78 {strides = array<i32>} : memref<392x36xf32, #tpu.memory_space<vmem>>, vector<14x36xf32>,
    %c0_143 = arith.constant 0 : index
    %c4_144 = arith.constant 4 : index
    %c0_145 = arith.constant 0 : index
    %c0_146 = arith.constant 0 : index
    %80 = vector.load %arg0[%c0_143, %c4_144, %c0_145, %c0_146] : memref<2x16x16x4xf32, #tpu.memory_space<vmem>>, vector<1x1x14x4xf32>
    %81 = vector.shape_cast %80 : vector<1x1x14x4xf32> to vector<14x4xf32>
    %c0_147 = arith.constant 0 : index
    %c4_148 = arith.constant 4 : index
    %c1_149 = arith.constant 1 : index
    %c0_150 = arith.constant 0 : index
    %82 = vector.load %arg0[%c0_147, %c4_148, %c1_149, %c0_150] : memref<2x16x16x4xf32, #tpu.memory_space<vmem>>, vector<1x1x14x4xf32>
    %83 = vector.shape_cast %82 : vector<1x1x14x4xf32> to vector<14x4xf32>
    %c0_151 = arith.constant 0 : index
    %c4_152 = arith.constant 4 : index
    %c2_153 = arith.constant 2 : index
    %c0_154 = arith.constant 0 : index
    %84 = vector.load %arg0[%c0_151, %c4_152, %c2_153, %c0_154] : memref<2x16x16x4xf32, #tpu.memory_space<vmem>>, vector<1x1x14x4xf32>
    %85 = vector.shape_cast %84 : vector<1x1x14x4xf32> to vector<14x4xf32>
    %c0_155 = arith.constant 0 : index
    %c5_156 = arith.constant 5 : index
    %c0_157 = arith.constant 0 : index
    %c0_158 = arith.constant 0 : index
    %86 = vector.load %arg0[%c0_155, %c5_156, %c0_157, %c0_158] : memref<2x16x16x4xf32, #tpu.memory_space<vmem>>, vector<1x1x14x4xf32>
    %87 = vector.shape_cast %86 : vector<1x1x14x4xf32> to vector<14x4xf32>
    %c0_159 = arith.constant 0 : index
    %c5_160 = arith.constant 5 : index
    %c1_161 = arith.constant 1 : index
    %c0_162 = arith.constant 0 : index
    %88 = vector.load %arg0[%c0_159, %c5_160, %c1_161, %c0_162] : memref<2x16x16x4xf32, #tpu.memory_space<vmem>>, vector<1x1x14x4xf32>
    %89 = vector.shape_cast %88 : vector<1x1x14x4xf32> to vector<14x4xf32>
    %c0_163 = arith.constant 0 : index
    %c5_164 = arith.constant 5 : index
    %c2_165 = arith.constant 2 : index
    %c0_166 = arith.constant 0 : index
    %90 = vector.load %arg0[%c0_163, %c5_164, %c2_165, %c0_166] : memref<2x16x16x4xf32, #tpu.memory_space<vmem>>, vector<1x1x14x4xf32>
    %91 = vector.shape_cast %90 : vector<1x1x14x4xf32> to vector<14x4xf32>
    %c0_167 = arith.constant 0 : index
    %c6 = arith.constant 6 : index
    %c0_168 = arith.constant 0 : index
    %c0_169 = arith.constant 0 : index
    %92 = vector.load %arg0[%c0_167, %c6, %c0_168, %c0_169] : memref<2x16x16x4xf32, #tpu.memory_space<vmem>>, vector<1x1x14x4xf32>
    %93 = vector.shape_cast %92 : vector<1x1x14x4xf32> to vector<14x4xf32>
    %c0_170 = arith.constant 0 : index
    %c6_171 = arith.constant 6 : index
    %c1_172 = arith.constant 1 : index
    %c0_173 = arith.constant 0 : index
    %94 = vector.load %arg0[%c0_170, %c6_171, %c1_172, %c0_173] : memref<2x16x16x4xf32, #tpu.memory_space<vmem>>, vector<1x1x14x4xf32>
    %95 = vector.shape_cast %94 : vector<1x1x14x4xf32> to vector<14x4xf32>
    %c0_174 = arith.constant 0 : index
    %c6_175 = arith.constant 6 : index
    %c2_176 = arith.constant 2 : index
    %c0_177 = arith.constant 0 : index
    %96 = vector.load %arg0[%c0_174, %c6_175, %c2_176, %c0_177] : memref<2x16x16x4xf32, #tpu.memory_space<vmem>>, vector<1x1x14x4xf32>
    %97 = vector.shape_cast %96 : vector<1x1x14x4xf32> to vector<14x4xf32>
    %98 = tpu.concatenate %81, %83, %85, %87, %89, %91, %93, %95, %97 in 1 : vector<14x4xf32>, vector<14x4xf32>, vector<14x4xf32>, vector<14x4xf32>, vector<14x4xf32>, vector<14x4xf32>, vector<14x4xf32>, vector<14x4xf32>, vector<14x4xf32> -> vector<14x36xf32>
    %c56 = arith.constant 56 : index
    %c0_178 = arith.constant 0 : index
    %99 = vector.load %arg10[%c56, %c0_178] : memref<392x36xf32, #tpu.memory_space<vmem>>, vector<14x36xf32>
    tpu.vector_store %arg10[%c56, %c0_178], %98 {strides = array<i32>} : memref<392x36xf32, #tpu.memory_space<vmem>>, vector<14x36xf32>,
    %c0_179 = arith.constant 0 : index
    %c5_180 = arith.constant 5 : index
    %c0_181 = arith.constant 0 : index
    %c0_182 = arith.constant 0 : index
    %100 = vector.load %arg0[%c0_179, %c5_180, %c0_181, %c0_182] : memref<2x16x16x4xf32, #tpu.memory_space<vmem>>, vector<1x1x14x4xf32>
    %101 = vector.shape_cast %100 : vector<1x1x14x4xf32> to vector<14x4xf32>
    %c0_183 = arith.constant 0 : index
    %c5_184 = arith.constant 5 : index
    %c1_185 = arith.constant 1 : index
    %c0_186 = arith.constant 0 : index
    %102 = vector.load %arg0[%c0_183, %c5_184, %c1_185, %c0_186] : memref<2x16x16x4xf32, #tpu.memory_space<vmem>>, vector<1x1x14x4xf32>
    %103 = vector.shape_cast %102 : vector<1x1x14x4xf32> to vector<14x4xf32>
    %c0_187 = arith.constant 0 : index
    %c5_188 = arith.constant 5 : index
    %c2_189 = arith.constant 2 : index
    %c0_190 = arith.constant 0 : index
    %104 = vector.load %arg0[%c0_187, %c5_188, %c2_189, %c0_190] : memref<2x16x16x4xf32, #tpu.memory_space<vmem>>, vector<1x1x14x4xf32>
    %105 = vector.shape_cast %104 : vector<1x1x14x4xf32> to vector<14x4xf32>
    %c0_191 = arith.constant 0 : index
    %c6_192 = arith.constant 6 : index
    %c0_193 = arith.constant 0 : index
    %c0_194 = arith.constant 0 : index
    %106 = vector.load %arg0[%c0_191, %c6_192, %c0_193, %c0_194] : memref<2x16x16x4xf32, #tpu.memory_space<vmem>>, vector<1x1x14x4xf32>
    %107 = vector.shape_cast %106 : vector<1x1x14x4xf32> to vector<14x4xf32>
    %c0_195 = arith.constant 0 : index
    %c6_196 = arith.constant 6 : index
    %c1_197 = arith.constant 1 : index
    %c0_198 = arith.constant 0 : index
    %108 = vector.load %arg0[%c0_195, %c6_196, %c1_197, %c0_198] : memref<2x16x16x4xf32, #tpu.memory_space<vmem>>, vector<1x1x14x4xf32>
    %109 = vector.shape_cast %108 : vector<1x1x14x4xf32> to vector<14x4xf32>
    %c0_199 = arith.constant 0 : index
    %c6_200 = arith.constant 6 : index
    %c2_201 = arith.constant 2 : index
    %c0_202 = arith.constant 0 : index
    %110 = vector.load %arg0[%c0_199, %c6_200, %c2_201, %c0_202] : memref<2x16x16x4xf32, #tpu.memory_space<vmem>>, vector<1x1x14x4xf32>
    %111 = vector.shape_cast %110 : vector<1x1x14x4xf32> to vector<14x4xf32>
    %c0_203 = arith.constant 0 : index
    %c7 = arith.constant 7 : index
    %c0_204 = arith.constant 0 : index
    %c0_205 = arith.constant 0 : index
    %112 = vector.load %arg0[%c0_203, %c7, %c0_204, %c0_205] : memref<2x16x16x4xf32, #tpu.memory_space<vmem>>, vector<1x1x14x4xf32>
    %113 = vector.shape_cast %112 : vector<1x1x14x4xf32> to vector<14x4xf32>
    %c0_206 = arith.constant 0 : index
    %c7_207 = arith.constant 7 : index
    %c1_208 = arith.constant 1 : index
    %c0_209 = arith.constant 0 : index
    %114 = vector.load %arg0[%c0_206, %c7_207, %c1_208, %c0_209] : memref<2x16x16x4xf32, #tpu.memory_space<vmem>>, vector<1x1x14x4xf32>
    %115 = vector.shape_cast %114 : vector<1x1x14x4xf32> to vector<14x4xf32>
    %c0_210 = arith.constant 0 : index
    %c7_211 = arith.constant 7 : index
    %c2_212 = arith.constant 2 : index
    %c0_213 = arith.constant 0 : index
    %116 = vector.load %arg0[%c0_210, %c7_211, %c2_212, %c0_213] : memref<2x16x16x4xf32, #tpu.memory_space<vmem>>, vector<1x1x14x4xf32>
    %117 = vector.shape_cast %116 : vector<1x1x14x4xf32> to vector<14x4xf32>
    %118 = tpu.concatenate %101, %103, %105, %107, %109, %111, %113, %115, %117 in 1 : vector<14x4xf32>, vector<14x4xf32>, vector<14x4xf32>, vector<14x4xf32>, vector<14x4xf32>, vector<14x4xf32>, vector<14x4xf32>, vector<14x4xf32>, vector<14x4xf32> -> vector<14x36xf32>
    %c70 = arith.constant 70 : index
    %c0_214 = arith.constant 0 : index
    %119 = vector.load %arg10[%c70, %c0_214] : memref<392x36xf32, #tpu.memory_space<vmem>>, vector<14x36xf32>
    tpu.vector_store %arg10[%c70, %c0_214], %118 {strides = array<i32>} : memref<392x36xf32, #tpu.memory_space<vmem>>, vector<14x36xf32>,
    %c0_215 = arith.constant 0 : index
    %c6_216 = arith.constant 6 : index
    %c0_217 = arith.constant 0 : index
    %c0_218 = arith.constant 0 : index
    %120 = vector.load %arg0[%c0_215, %c6_216, %c0_217, %c0_218] : memref<2x16x16x4xf32, #tpu.memory_space<vmem>>, vector<1x1x14x4xf32>
    %121 = vector.shape_cast %120 : vector<1x1x14x4xf32> to vector<14x4xf32>
    %c0_219 = arith.constant 0 : index
    %c6_220 = arith.constant 6 : index
    %c1_221 = arith.constant 1 : index
    %c0_222 = arith.constant 0 : index
    %122 = vector.load %arg0[%c0_219, %c6_220, %c1_221, %c0_222] : memref<2x16x16x4xf32, #tpu.memory_space<vmem>>, vector<1x1x14x4xf32>
    %123 = vector.shape_cast %122 : vector<1x1x14x4xf32> to vector<14x4xf32>
    %c0_223 = arith.constant 0 : index
    %c6_224 = arith.constant 6 : index
    %c2_225 = arith.constant 2 : index
    %c0_226 = arith.constant 0 : index
    %124 = vector.load %arg0[%c0_223, %c6_224, %c2_225, %c0_226] : memref<2x16x16x4xf32, #tpu.memory_space<vmem>>, vector<1x1x14x4xf32>
    %125 = vector.shape_cast %124 : vector<1x1x14x4xf32> to vector<14x4xf32>
    %c0_227 = arith.constant 0 : index
    %c7_228 = arith.constant 7 : index
    %c0_229 = arith.constant 0 : index
    %c0_230 = arith.constant 0 : index
    %126 = vector.load %arg0[%c0_227, %c7_228, %c0_229, %c0_230] : memref<2x16x16x4xf32, #tpu.memory_space<vmem>>, vector<1x1x14x4xf32>
    %127 = vector.shape_cast %126 : vector<1x1x14x4xf32> to vector<14x4xf32>
    %c0_231 = arith.constant 0 : index
    %c7_232 = arith.constant 7 : index
    %c1_233 = arith.constant 1 : index
    %c0_234 = arith.constant 0 : index
    %128 = vector.load %arg0[%c0_231, %c7_232, %c1_233, %c0_234] : memref<2x16x16x4xf32, #tpu.memory_space<vmem>>, vector<1x1x14x4xf32>
    %129 = vector.shape_cast %128 : vector<1x1x14x4xf32> to vector<14x4xf32>
    %c0_235 = arith.constant 0 : index
    %c7_236 = arith.constant 7 : index
    %c2_237 = arith.constant 2 : index
    %c0_238 = arith.constant 0 : index
    %130 = vector.load %arg0[%c0_235, %c7_236, %c2_237, %c0_238] : memref<2x16x16x4xf32, #tpu.memory_space<vmem>>, vector<1x1x14x4xf32>
    %131 = vector.shape_cast %130 : vector<1x1x14x4xf32> to vector<14x4xf32>
    %c0_239 = arith.constant 0 : index
    %c8 = arith.constant 8 : index
    %c0_240 = arith.constant 0 : index
    %c0_241 = arith.constant 0 : index
    %132 = vector.load %arg0[%c0_239, %c8, %c0_240, %c0_241] : memref<2x16x16x4xf32, #tpu.memory_space<vmem>>, vector<1x1x14x4xf32>
    %133 = vector.shape_cast %132 : vector<1x1x14x4xf32> to vector<14x4xf32>
    %c0_242 = arith.constant 0 : index
    %c8_243 = arith.constant 8 : index
    %c1_244 = arith.constant 1 : index
    %c0_245 = arith.constant 0 : index
    %134 = vector.load %arg0[%c0_242, %c8_243, %c1_244, %c0_245] : memref<2x16x16x4xf32, #tpu.memory_space<vmem>>, vector<1x1x14x4xf32>
    %135 = vector.shape_cast %134 : vector<1x1x14x4xf32> to vector<14x4xf32>
    %c0_246 = arith.constant 0 : index
    %c8_247 = arith.constant 8 : index
    %c2_248 = arith.constant 2 : index
    %c0_249 = arith.constant 0 : index
    %136 = vector.load %arg0[%c0_246, %c8_247, %c2_248, %c0_249] : memref<2x16x16x4xf32, #tpu.memory_space<vmem>>, vector<1x1x14x4xf32>
    %137 = vector.shape_cast %136 : vector<1x1x14x4xf32> to vector<14x4xf32>
    %138 = tpu.concatenate %121, %123, %125, %127, %129, %131, %133, %135, %137 in 1 : vector<14x4xf32>, vector<14x4xf32>, vector<14x4xf32>, vector<14x4xf32>, vector<14x4xf32>, vector<14x4xf32>, vector<14x4xf32>, vector<14x4xf32>, vector<14x4xf32> -> vector<14x36xf32>
    %c84 = arith.constant 84 : index
    %c0_250 = arith.constant 0 : index
    %139 = vector.load %arg10[%c84, %c0_250] : memref<392x36xf32, #tpu.memory_space<vmem>>, vector<14x36xf32>
    tpu.vector_store %arg10[%c84, %c0_250], %138 {strides = array<i32>} : memref<392x36xf32, #tpu.memory_space<vmem>>, vector<14x36xf32>,
    %c0_251 = arith.constant 0 : index
    %c7_252 = arith.constant 7 : index
    %c0_253 = arith.constant 0 : index
    %c0_254 = arith.constant 0 : index
    %140 = vector.load %arg0[%c0_251, %c7_252, %c0_253, %c0_254] : memref<2x16x16x4xf32, #tpu.memory_space<vmem>>, vector<1x1x14x4xf32>
    %141 = vector.shape_cast %140 : vector<1x1x14x4xf32> to vector<14x4xf32>
    %c0_255 = arith.constant 0 : index
    %c7_256 = arith.constant 7 : index
    %c1_257 = arith.constant 1 : index
    %c0_258 = arith.constant 0 : index
    %142 = vector.load %arg0[%c0_255, %c7_256, %c1_257, %c0_258] : memref<2x16x16x4xf32, #tpu.memory_space<vmem>>, vector<1x1x14x4xf32>
    %143 = vector.shape_cast %142 : vector<1x1x14x4xf32> to vector<14x4xf32>
    %c0_259 = arith.constant 0 : index
    %c7_260 = arith.constant 7 : index
    %c2_261 = arith.constant 2 : index
    %c0_262 = arith.constant 0 : index
    %144 = vector.load %arg0[%c0_259, %c7_260, %c2_261, %c0_262] : memref<2x16x16x4xf32, #tpu.memory_space<vmem>>, vector<1x1x14x4xf32>
    %145 = vector.shape_cast %144 : vector<1x1x14x4xf32> to vector<14x4xf32>
    %c0_263 = arith.constant 0 : index
    %c8_264 = arith.constant 8 : index
    %c0_265 = arith.constant 0 : index
    %c0_266 = arith.constant 0 : index
    %146 = vector.load %arg0[%c0_263, %c8_264, %c0_265, %c0_266] : memref<2x16x16x4xf32, #tpu.memory_space<vmem>>, vector<1x1x14x4xf32>
    %147 = vector.shape_cast %146 : vector<1x1x14x4xf32> to vector<14x4xf32>
    %c0_267 = arith.constant 0 : index
    %c8_268 = arith.constant 8 : index
    %c1_269 = arith.constant 1 : index
    %c0_270 = arith.constant 0 : index
    %148 = vector.load %arg0[%c0_267, %c8_268, %c1_269, %c0_270] : memref<2x16x16x4xf32, #tpu.memory_space<vmem>>, vector<1x1x14x4xf32>
    %149 = vector.shape_cast %148 : vector<1x1x14x4xf32> to vector<14x4xf32>
    %c0_271 = arith.constant 0 : index
    %c8_272 = arith.constant 8 : index
    %c2_273 = arith.constant 2 : index
    %c0_274 = arith.constant 0 : index
    %150 = vector.load %arg0[%c0_271, %c8_272, %c2_273, %c0_274] : memref<2x16x16x4xf32, #tpu.memory_space<vmem>>, vector<1x1x14x4xf32>
    %151 = vector.shape_cast %150 : vector<1x1x14x4xf32> to vector<14x4xf32>
    %c0_275 = arith.constant 0 : index
    %c9 = arith.constant 9 : index
    %c0_276 = arith.constant 0 : index
    %c0_277 = arith.constant 0 : index
    %152 = vector.load %arg0[%c0_275, %c9, %c0_276, %c0_277] : memref<2x16x16x4xf32, #tpu.memory_space<vmem>>, vector<1x1x14x4xf32>
    %153 = vector.shape_cast %152 : vector<1x1x14x4xf32> to vector<14x4xf32>
    %c0_278 = arith.constant 0 : index
    %c9_279 = arith.constant 9 : index
    %c1_280 = arith.constant 1 : index
    %c0_281 = arith.constant 0 : index
    %154 = vector.load %arg0[%c0_278, %c9_279, %c1_280, %c0_281] : memref<2x16x16x4xf32, #tpu.memory_space<vmem>>, vector<1x1x14x4xf32>
    %155 = vector.shape_cast %154 : vector<1x1x14x4xf32> to vector<14x4xf32>
    %c0_282 = arith.constant 0 : index
    %c9_283 = arith.constant 9 : index
    %c2_284 = arith.constant 2 : index
    %c0_285 = arith.constant 0 : index
    %156 = vector.load %arg0[%c0_282, %c9_283, %c2_284, %c0_285] : memref<2x16x16x4xf32, #tpu.memory_space<vmem>>, vector<1x1x14x4xf32>
    %157 = vector.shape_cast %156 : vector<1x1x14x4xf32> to vector<14x4xf32>
    %158 = tpu.concatenate %141, %143, %145, %147, %149, %151, %153, %155, %157 in 1 : vector<14x4xf32>, vector<14x4xf32>, vector<14x4xf32>, vector<14x4xf32>, vector<14x4xf32>, vector<14x4xf32>, vector<14x4xf32>, vector<14x4xf32>, vector<14x4xf32> -> vector<14x36xf32>
    %c98 = arith.constant 98 : index
    %c0_286 = arith.constant 0 : index
    %159 = vector.load %arg10[%c98, %c0_286] : memref<392x36xf32, #tpu.memory_space<vmem>>, vector<14x36xf32>
    tpu.vector_store %arg10[%c98, %c0_286], %158 {strides = array<i32>} : memref<392x36xf32, #tpu.memory_space<vmem>>, vector<14x36xf32>,
    %c0_287 = arith.constant 0 : index
    %c8_288 = arith.constant 8 : index
    %c0_289 = arith.constant 0 : index
    %c0_290 = arith.constant 0 : index
    %160 = vector.load %arg0[%c0_287, %c8_288, %c0_289, %c0_290] : memref<2x16x16x4xf32, #tpu.memory_space<vmem>>, vector<1x1x14x4xf32>
    %161 = vector.shape_cast %160 : vector<1x1x14x4xf32> to vector<14x4xf32>
    %c0_291 = arith.constant 0 : index
    %c8_292 = arith.constant 8 : index
    %c1_293 = arith.constant 1 : index
    %c0_294 = arith.constant 0 : index
    %162 = vector.load %arg0[%c0_291, %c8_292, %c1_293, %c0_294] : memref<2x16x16x4xf32, #tpu.memory_space<vmem>>, vector<1x1x14x4xf32>
    %163 = vector.shape_cast %162 : vector<1x1x14x4xf32> to vector<14x4xf32>
    %c0_295 = arith.constant 0 : index
    %c8_296 = arith.constant 8 : index
    %c2_297 = arith.constant 2 : index
    %c0_298 = arith.constant 0 : index
    %164 = vector.load %arg0[%c0_295, %c8_296, %c2_297, %c0_298] : memref<2x16x16x4xf32, #tpu.memory_space<vmem>>, vector<1x1x14x4xf32>
    %165 = vector.shape_cast %164 : vector<1x1x14x4xf32> to vector<14x4xf32>
    %c0_299 = arith.constant 0 : index
    %c9_300 = arith.constant 9 : index
    %c0_301 = arith.constant 0 : index
    %c0_302 = arith.constant 0 : index
    %166 = vector.load %arg0[%c0_299, %c9_300, %c0_301, %c0_302] : memref<2x16x16x4xf32, #tpu.memory_space<vmem>>, vector<1x1x14x4xf32>
    %167 = vector.shape_cast %166 : vector<1x1x14x4xf32> to vector<14x4xf32>
    %c0_303 = arith.constant 0 : index
    %c9_304 = arith.constant 9 : index
    %c1_305 = arith.constant 1 : index
    %c0_306 = arith.constant 0 : index
    %168 = vector.load %arg0[%c0_303, %c9_304, %c1_305, %c0_306] : memref<2x16x16x4xf32, #tpu.memory_space<vmem>>, vector<1x1x14x4xf32>
    %169 = vector.shape_cast %168 : vector<1x1x14x4xf32> to vector<14x4xf32>
    %c0_307 = arith.constant 0 : index
    %c9_308 = arith.constant 9 : index
    %c2_309 = arith.constant 2 : index
    %c0_310 = arith.constant 0 : index
    %170 = vector.load %arg0[%c0_307, %c9_308, %c2_309, %c0_310] : memref<2x16x16x4xf32, #tpu.memory_space<vmem>>, vector<1x1x14x4xf32>
    %171 = vector.shape_cast %170 : vector<1x1x14x4xf32> to vector<14x4xf32>
    %c0_311 = arith.constant 0 : index
    %c10 = arith.constant 10 : index
    %c0_312 = arith.constant 0 : index
    %c0_313 = arith.constant 0 : index
    %172 = vector.load %arg0[%c0_311, %c10, %c0_312, %c0_313] : memref<2x16x16x4xf32, #tpu.memory_space<vmem>>, vector<1x1x14x4xf32>
    %173 = vector.shape_cast %172 : vector<1x1x14x4xf32> to vector<14x4xf32>
    %c0_314 = arith.constant 0 : index
    %c10_315 = arith.constant 10 : index
    %c1_316 = arith.constant 1 : index
    %c0_317 = arith.constant 0 : index
    %174 = vector.load %arg0[%c0_314, %c10_315, %c1_316, %c0_317] : memref<2x16x16x4xf32, #tpu.memory_space<vmem>>, vector<1x1x14x4xf32>
    %175 = vector.shape_cast %174 : vector<1x1x14x4xf32> to vector<14x4xf32>
    %c0_318 = arith.constant 0 : index
    %c10_319 = arith.constant 10 : index
    %c2_320 = arith.constant 2 : index
    %c0_321 = arith.constant 0 : index
    %176 = vector.load %arg0[%c0_318, %c10_319, %c2_320, %c0_321] : memref<2x16x16x4xf32, #tpu.memory_space<vmem>>, vector<1x1x14x4xf32>
    %177 = vector.shape_cast %176 : vector<1x1x14x4xf32> to vector<14x4xf32>
    %178 = tpu.concatenate %161, %163, %165, %167, %169, %171, %173, %175, %177 in 1 : vector<14x4xf32>, vector<14x4xf32>, vector<14x4xf32>, vector<14x4xf32>, vector<14x4xf32>, vector<14x4xf32>, vector<14x4xf32>, vector<14x4xf32>, vector<14x4xf32> -> vector<14x36xf32>
    %c112 = arith.constant 112 : index
    %c0_322 = arith.constant 0 : index
    %179 = vector.load %arg10[%c112, %c0_322] : memref<392x36xf32, #tpu.memory_space<vmem>>, vector<14x36xf32>
    tpu.vector_store %arg10[%c112, %c0_322], %178 {strides = array<i32>} : memref<392x36xf32, #tpu.memory_space<vmem>>, vector<14x36xf32>,
    %c0_323 = arith.constant 0 : index
    %c9_324 = arith.constant 9 : index
    %c0_325 = arith.constant 0 : index
    %c0_326 = arith.constant 0 : index
    %180 = vector.load %arg0[%c0_323, %c9_324, %c0_325, %c0_326] : memref<2x16x16x4xf32, #tpu.memory_space<vmem>>, vector<1x1x14x4xf32>
    %181 = vector.shape_cast %180 : vector<1x1x14x4xf32> to vector<14x4xf32>
    %c0_327 = arith.constant 0 : index
    %c9_328 = arith.constant 9 : index
    %c1_329 = arith.constant 1 : index
    %c0_330 = arith.constant 0 : index
    %182 = vector.load %arg0[%c0_327, %c9_328, %c1_329, %c0_330] : memref<2x16x16x4xf32, #tpu.memory_space<vmem>>, vector<1x1x14x4xf32>
    %183 = vector.shape_cast %182 : vector<1x1x14x4xf32> to vector<14x4xf32>
    %c0_331 = arith.constant 0 : index
    %c9_332 = arith.constant 9 : index
    %c2_333 = arith.constant 2 : index
    %c0_334 = arith.constant 0 : index
    %184 = vector.load %arg0[%c0_331, %c9_332, %c2_333, %c0_334] : memref<2x16x16x4xf32, #tpu.memory_space<vmem>>, vector<1x1x14x4xf32>
    %185 = vector.shape_cast %184 : vector<1x1x14x4xf32> to vector<14x4xf32>
    %c0_335 = arith.constant 0 : index
    %c10_336 = arith.constant 10 : index
    %c0_337 = arith.constant 0 : index
    %c0_338 = arith.constant 0 : index
    %186 = vector.load %arg0[%c0_335, %c10_336, %c0_337, %c0_338] : memref<2x16x16x4xf32, #tpu.memory_space<vmem>>, vector<1x1x14x4xf32>
    %187 = vector.shape_cast %186 : vector<1x1x14x4xf32> to vector<14x4xf32>
    %c0_339 = arith.constant 0 : index
    %c10_340 = arith.constant 10 : index
    %c1_341 = arith.constant 1 : index
    %c0_342 = arith.constant 0 : index
    %188 = vector.load %arg0[%c0_339, %c10_340, %c1_341, %c0_342] : memref<2x16x16x4xf32, #tpu.memory_space<vmem>>, vector<1x1x14x4xf32>
    %189 = vector.shape_cast %188 : vector<1x1x14x4xf32> to vector<14x4xf32>
    %c0_343 = arith.constant 0 : index
    %c10_344 = arith.constant 10 : index
    %c2_345 = arith.constant 2 : index
    %c0_346 = arith.constant 0 : index
    %190 = vector.load %arg0[%c0_343, %c10_344, %c2_345, %c0_346] : memref<2x16x16x4xf32, #tpu.memory_space<vmem>>, vector<1x1x14x4xf32>
    %191 = vector.shape_cast %190 : vector<1x1x14x4xf32> to vector<14x4xf32>
    %c0_347 = arith.constant 0 : index
    %c11 = arith.constant 11 : index
    %c0_348 = arith.constant 0 : index
    %c0_349 = arith.constant 0 : index
    %192 = vector.load %arg0[%c0_347, %c11, %c0_348, %c0_349] : memref<2x16x16x4xf32, #tpu.memory_space<vmem>>, vector<1x1x14x4xf32>
    %193 = vector.shape_cast %192 : vector<1x1x14x4xf32> to vector<14x4xf32>
    %c0_350 = arith.constant 0 : index
    %c11_351 = arith.constant 11 : index
    %c1_352 = arith.constant 1 : index
    %c0_353 = arith.constant 0 : index
    %194 = vector.load %arg0[%c0_350, %c11_351, %c1_352, %c0_353] : memref<2x16x16x4xf32, #tpu.memory_space<vmem>>, vector<1x1x14x4xf32>
    %195 = vector.shape_cast %194 : vector<1x1x14x4xf32> to vector<14x4xf32>
    %c0_354 = arith.constant 0 : index
    %c11_355 = arith.constant 11 : index
    %c2_356 = arith.constant 2 : index
    %c0_357 = arith.constant 0 : index
    %196 = vector.load %arg0[%c0_354, %c11_355, %c2_356, %c0_357] : memref<2x16x16x4xf32, #tpu.memory_space<vmem>>, vector<1x1x14x4xf32>
    %197 = vector.shape_cast %196 : vector<1x1x14x4xf32> to vector<14x4xf32>
    %198 = tpu.concatenate %181, %183, %185, %187, %189, %191, %193, %195, %197 in 1 : vector<14x4xf32>, vector<14x4xf32>, vector<14x4xf32>, vector<14x4xf32>, vector<14x4xf32>, vector<14x4xf32>, vector<14x4xf32>, vector<14x4xf32>, vector<14x4xf32> -> vector<14x36xf32>
    %c126 = arith.constant 126 : index
    %c0_358 = arith.constant 0 : index
    %199 = vector.load %arg10[%c126, %c0_358] : memref<392x36xf32, #tpu.memory_space<vmem>>, vector<14x36xf32>
    tpu.vector_store %arg10[%c126, %c0_358], %198 {strides = array<i32>} : memref<392x36xf32, #tpu.memory_space<vmem>>, vector<14x36xf32>,
    %c0_359 = arith.constant 0 : index
    %c10_360 = arith.constant 10 : index
    %c0_361 = arith.constant 0 : index
    %c0_362 = arith.constant 0 : index
    %200 = vector.load %arg0[%c0_359, %c10_360, %c0_361, %c0_362] : memref<2x16x16x4xf32, #tpu.memory_space<vmem>>, vector<1x1x14x4xf32>
    %201 = vector.shape_cast %200 : vector<1x1x14x4xf32> to vector<14x4xf32>
    %c0_363 = arith.constant 0 : index
    %c10_364 = arith.constant 10 : index
    %c1_365 = arith.constant 1 : index
    %c0_366 = arith.constant 0 : index
    %202 = vector.load %arg0[%c0_363, %c10_364, %c1_365, %c0_366] : memref<2x16x16x4xf32, #tpu.memory_space<vmem>>, vector<1x1x14x4xf32>
    %203 = vector.shape_cast %202 : vector<1x1x14x4xf32> to vector<14x4xf32>
    %c0_367 = arith.constant 0 : index
    %c10_368 = arith.constant 10 : index
    %c2_369 = arith.constant 2 : index
    %c0_370 = arith.constant 0 : index
    %204 = vector.load %arg0[%c0_367, %c10_368, %c2_369, %c0_370] : memref<2x16x16x4xf32, #tpu.memory_space<vmem>>, vector<1x1x14x4xf32>
    %205 = vector.shape_cast %204 : vector<1x1x14x4xf32> to vector<14x4xf32>
    %c0_371 = arith.constant 0 : index
    %c11_372 = arith.constant 11 : index
    %c0_373 = arith.constant 0 : index
    %c0_374 = arith.constant 0 : index
    %206 = vector.load %arg0[%c0_371, %c11_372, %c0_373, %c0_374] : memref<2x16x16x4xf32, #tpu.memory_space<vmem>>, vector<1x1x14x4xf32>
    %207 = vector.shape_cast %206 : vector<1x1x14x4xf32> to vector<14x4xf32>
    %c0_375 = arith.constant 0 : index
    %c11_376 = arith.constant 11 : index
    %c1_377 = arith.constant 1 : index
    %c0_378 = arith.constant 0 : index
    %208 = vector.load %arg0[%c0_375, %c11_376, %c1_377, %c0_378] : memref<2x16x16x4xf32, #tpu.memory_space<vmem>>, vector<1x1x14x4xf32>
    %209 = vector.shape_cast %208 : vector<1x1x14x4xf32> to vector<14x4xf32>
    %c0_379 = arith.constant 0 : index
    %c11_380 = arith.constant 11 : index
    %c2_381 = arith.constant 2 : index
    %c0_382 = arith.constant 0 : index
    %210 = vector.load %arg0[%c0_379, %c11_380, %c2_381, %c0_382] : memref<2x16x16x4xf32, #tpu.memory_space<vmem>>, vector<1x1x14x4xf32>
    %211 = vector.shape_cast %210 : vector<1x1x14x4xf32> to vector<14x4xf32>
    %c0_383 = arith.constant 0 : index
    %c12 = arith.constant 12 : index
    %c0_384 = arith.constant 0 : index
    %c0_385 = arith.constant 0 : index
    %212 = vector.load %arg0[%c0_383, %c12, %c0_384, %c0_385] : memref<2x16x16x4xf32, #tpu.memory_space<vmem>>, vector<1x1x14x4xf32>
    %213 = vector.shape_cast %212 : vector<1x1x14x4xf32> to vector<14x4xf32>
    %c0_386 = arith.constant 0 : index
    %c12_387 = arith.constant 12 : index
    %c1_388 = arith.constant 1 : index
    %c0_389 = arith.constant 0 : index
    %214 = vector.load %arg0[%c0_386, %c12_387, %c1_388, %c0_389] : memref<2x16x16x4xf32, #tpu.memory_space<vmem>>, vector<1x1x14x4xf32>
    %215 = vector.shape_cast %214 : vector<1x1x14x4xf32> to vector<14x4xf32>
    %c0_390 = arith.constant 0 : index
    %c12_391 = arith.constant 12 : index
    %c2_392 = arith.constant 2 : index
    %c0_393 = arith.constant 0 : index
    %216 = vector.load %arg0[%c0_390, %c12_391, %c2_392, %c0_393] : memref<2x16x16x4xf32, #tpu.memory_space<vmem>>, vector<1x1x14x4xf32>
    %217 = vector.shape_cast %216 : vector<1x1x14x4xf32> to vector<14x4xf32>
    %218 = tpu.concatenate %201, %203, %205, %207, %209, %211, %213, %215, %217 in 1 : vector<14x4xf32>, vector<14x4xf32>, vector<14x4xf32>, vector<14x4xf32>, vector<14x4xf32>, vector<14x4xf32>, vector<14x4xf32>, vector<14x4xf32>, vector<14x4xf32> -> vector<14x36xf32>
    %c140 = arith.constant 140 : index
    %c0_394 = arith.constant 0 : index
    %219 = vector.load %arg10[%c140, %c0_394] : memref<392x36xf32, #tpu.memory_space<vmem>>, vector<14x36xf32>
    tpu.vector_store %arg10[%c140, %c0_394], %218 {strides = array<i32>} : memref<392x36xf32, #tpu.memory_space<vmem>>, vector<14x36xf32>,
    %c0_395 = arith.constant 0 : index
    %c11_396 = arith.constant 11 : index
    %c0_397 = arith.constant 0 : index
    %c0_398 = arith.constant 0 : index
    %220 = vector.load %arg0[%c0_395, %c11_396, %c0_397, %c0_398] : memref<2x16x16x4xf32, #tpu.memory_space<vmem>>, vector<1x1x14x4xf32>
    %221 = vector.shape_cast %220 : vector<1x1x14x4xf32> to vector<14x4xf32>
    %c0_399 = arith.constant 0 : index
    %c11_400 = arith.constant 11 : index
    %c1_401 = arith.constant 1 : index
    %c0_402 = arith.constant 0 : index
    %222 = vector.load %arg0[%c0_399, %c11_400, %c1_401, %c0_402] : memref<2x16x16x4xf32, #tpu.memory_space<vmem>>, vector<1x1x14x4xf32>
    %223 = vector.shape_cast %222 : vector<1x1x14x4xf32> to vector<14x4xf32>
    %c0_403 = arith.constant 0 : index
    %c11_404 = arith.constant 11 : index
    %c2_405 = arith.constant 2 : index
    %c0_406 = arith.constant 0 : index
    %224 = vector.load %arg0[%c0_403, %c11_404, %c2_405, %c0_406] : memref<2x16x16x4xf32, #tpu.memory_space<vmem>>, vector<1x1x14x4xf32>
    %225 = vector.shape_cast %224 : vector<1x1x14x4xf32> to vector<14x4xf32>
    %c0_407 = arith.constant 0 : index
    %c12_408 = arith.constant 12 : index
    %c0_409 = arith.constant 0 : index
    %c0_410 = arith.constant 0 : index
    %226 = vector.load %arg0[%c0_407, %c12_408, %c0_409, %c0_410] : memref<2x16x16x4xf32, #tpu.memory_space<vmem>>, vector<1x1x14x4xf32>
    %227 = vector.shape_cast %226 : vector<1x1x14x4xf32> to vector<14x4xf32>
    %c0_411 = arith.constant 0 : index
    %c12_412 = arith.constant 12 : index
    %c1_413 = arith.constant 1 : index
    %c0_414 = arith.constant 0 : index
    %228 = vector.load %arg0[%c0_411, %c12_412, %c1_413, %c0_414] : memref<2x16x16x4xf32, #tpu.memory_space<vmem>>, vector<1x1x14x4xf32>
    %229 = vector.shape_cast %228 : vector<1x1x14x4xf32> to vector<14x4xf32>
    %c0_415 = arith.constant 0 : index
    %c12_416 = arith.constant 12 : index
    %c2_417 = arith.constant 2 : index
    %c0_418 = arith.constant 0 : index
    %230 = vector.load %arg0[%c0_415, %c12_416, %c2_417, %c0_418] : memref<2x16x16x4xf32, #tpu.memory_space<vmem>>, vector<1x1x14x4xf32>
    %231 = vector.shape_cast %230 : vector<1x1x14x4xf32> to vector<14x4xf32>
    %c0_419 = arith.constant 0 : index
    %c13 = arith.constant 13 : index
    %c0_420 = arith.constant 0 : index
    %c0_421 = arith.constant 0 : index
    %232 = vector.load %arg0[%c0_419, %c13, %c0_420, %c0_421] : memref<2x16x16x4xf32, #tpu.memory_space<vmem>>, vector<1x1x14x4xf32>
    %233 = vector.shape_cast %232 : vector<1x1x14x4xf32> to vector<14x4xf32>
    %c0_422 = arith.constant 0 : index
    %c13_423 = arith.constant 13 : index
    %c1_424 = arith.constant 1 : index
    %c0_425 = arith.constant 0 : index
    %234 = vector.load %arg0[%c0_422, %c13_423, %c1_424, %c0_425] : memref<2x16x16x4xf32, #tpu.memory_space<vmem>>, vector<1x1x14x4xf32>
    %235 = vector.shape_cast %234 : vector<1x1x14x4xf32> to vector<14x4xf32>
    %c0_426 = arith.constant 0 : index
    %c13_427 = arith.constant 13 : index
    %c2_428 = arith.constant 2 : index
    %c0_429 = arith.constant 0 : index
    %236 = vector.load %arg0[%c0_426, %c13_427, %c2_428, %c0_429] : memref<2x16x16x4xf32, #tpu.memory_space<vmem>>, vector<1x1x14x4xf32>
    %237 = vector.shape_cast %236 : vector<1x1x14x4xf32> to vector<14x4xf32>
    %238 = tpu.concatenate %221, %223, %225, %227, %229, %231, %233, %235, %237 in 1 : vector<14x4xf32>, vector<14x4xf32>, vector<14x4xf32>, vector<14x4xf32>, vector<14x4xf32>, vector<14x4xf32>, vector<14x4xf32>, vector<14x4xf32>, vector<14x4xf32> -> vector<14x36xf32>
    %c154 = arith.constant 154 : index
    %c0_430 = arith.constant 0 : index
    %239 = vector.load %arg10[%c154, %c0_430] : memref<392x36xf32, #tpu.memory_space<vmem>>, vector<14x36xf32>
    tpu.vector_store %arg10[%c154, %c0_430], %238 {strides = array<i32>} : memref<392x36xf32, #tpu.memory_space<vmem>>, vector<14x36xf32>,
    %c0_431 = arith.constant 0 : index
    %c12_432 = arith.constant 12 : index
    %c0_433 = arith.constant 0 : index
    %c0_434 = arith.constant 0 : index
    %240 = vector.load %arg0[%c0_431, %c12_432, %c0_433, %c0_434] : memref<2x16x16x4xf32, #tpu.memory_space<vmem>>, vector<1x1x14x4xf32>
    %241 = vector.shape_cast %240 : vector<1x1x14x4xf32> to vector<14x4xf32>
    %c0_435 = arith.constant 0 : index
    %c12_436 = arith.constant 12 : index
    %c1_437 = arith.constant 1 : index
    %c0_438 = arith.constant 0 : index
    %242 = vector.load %arg0[%c0_435, %c12_436, %c1_437, %c0_438] : memref<2x16x16x4xf32, #tpu.memory_space<vmem>>, vector<1x1x14x4xf32>
    %243 = vector.shape_cast %242 : vector<1x1x14x4xf32> to vector<14x4xf32>
    %c0_439 = arith.constant 0 : index
    %c12_440 = arith.constant 12 : index
    %c2_441 = arith.constant 2 : index
    %c0_442 = arith.constant 0 : index
    %244 = vector.load %arg0[%c0_439, %c12_440, %c2_441, %c0_442] : memref<2x16x16x4xf32, #tpu.memory_space<vmem>>, vector<1x1x14x4xf32>
    %245 = vector.shape_cast %244 : vector<1x1x14x4xf32> to vector<14x4xf32>
    %c0_443 = arith.constant 0 : index
    %c13_444 = arith.constant 13 : index
    %c0_445 = arith.constant 0 : index
    %c0_446 = arith.constant 0 : index
    %246 = vector.load %arg0[%c0_443, %c13_444, %c0_445, %c0_446] : memref<2x16x16x4xf32, #tpu.memory_space<vmem>>, vector<1x1x14x4xf32>
    %247 = vector.shape_cast %246 : vector<1x1x14x4xf32> to vector<14x4xf32>
    %c0_447 = arith.constant 0 : index
    %c13_448 = arith.constant 13 : index
    %c1_449 = arith.constant 1 : index
    %c0_450 = arith.constant 0 : index
    %248 = vector.load %arg0[%c0_447, %c13_448, %c1_449, %c0_450] : memref<2x16x16x4xf32, #tpu.memory_space<vmem>>, vector<1x1x14x4xf32>
    %249 = vector.shape_cast %248 : vector<1x1x14x4xf32> to vector<14x4xf32>
    %c0_451 = arith.constant 0 : index
    %c13_452 = arith.constant 13 : index
    %c2_453 = arith.constant 2 : index
    %c0_454 = arith.constant 0 : index
    %250 = vector.load %arg0[%c0_451, %c13_452, %c2_453, %c0_454] : memref<2x16x16x4xf32, #tpu.memory_space<vmem>>, vector<1x1x14x4xf32>
    %251 = vector.shape_cast %250 : vector<1x1x14x4xf32> to vector<14x4xf32>
    %c0_455 = arith.constant 0 : index
    %c14_456 = arith.constant 14 : index
    %c0_457 = arith.constant 0 : index
    %c0_458 = arith.constant 0 : index
    %252 = vector.load %arg0[%c0_455, %c14_456, %c0_457, %c0_458] : memref<2x16x16x4xf32, #tpu.memory_space<vmem>>, vector<1x1x14x4xf32>
    %253 = vector.shape_cast %252 : vector<1x1x14x4xf32> to vector<14x4xf32>
    %c0_459 = arith.constant 0 : index
    %c14_460 = arith.constant 14 : index
    %c1_461 = arith.constant 1 : index
    %c0_462 = arith.constant 0 : index
    %254 = vector.load %arg0[%c0_459, %c14_460, %c1_461, %c0_462] : memref<2x16x16x4xf32, #tpu.memory_space<vmem>>, vector<1x1x14x4xf32>
    %255 = vector.shape_cast %254 : vector<1x1x14x4xf32> to vector<14x4xf32>
    %c0_463 = arith.constant 0 : index
    %c14_464 = arith.constant 14 : index
    %c2_465 = arith.constant 2 : index
    %c0_466 = arith.constant 0 : index
    %256 = vector.load %arg0[%c0_463, %c14_464, %c2_465, %c0_466] : memref<2x16x16x4xf32, #tpu.memory_space<vmem>>, vector<1x1x14x4xf32>
    %257 = vector.shape_cast %256 : vector<1x1x14x4xf32> to vector<14x4xf32>
    %258 = tpu.concatenate %241, %243, %245, %247, %249, %251, %253, %255, %257 in 1 : vector<14x4xf32>, vector<14x4xf32>, vector<14x4xf32>, vector<14x4xf32>, vector<14x4xf32>, vector<14x4xf32>, vector<14x4xf32>, vector<14x4xf32>, vector<14x4xf32> -> vector<14x36xf32>
    %c168 = arith.constant 168 : index
    %c0_467 = arith.constant 0 : index
    %259 = vector.load %arg10[%c168, %c0_467] : memref<392x36xf32, #tpu.memory_space<vmem>>, vector<14x36xf32>
    tpu.vector_store %arg10[%c168, %c0_467], %258 {strides = array<i32>} : memref<392x36xf32, #tpu.memory_space<vmem>>, vector<14x36xf32>,
    %c0_468 = arith.constant 0 : index
    %c13_469 = arith.constant 13 : index
    %c0_470 = arith.constant 0 : index
    %c0_471 = arith.constant 0 : index
    %260 = vector.load %arg0[%c0_468, %c13_469, %c0_470, %c0_471] : memref<2x16x16x4xf32, #tpu.memory_space<vmem>>, vector<1x1x14x4xf32>
    %261 = vector.shape_cast %260 : vector<1x1x14x4xf32> to vector<14x4xf32>
    %c0_472 = arith.constant 0 : index
    %c13_473 = arith.constant 13 : index
    %c1_474 = arith.constant 1 : index
    %c0_475 = arith.constant 0 : index
    %262 = vector.load %arg0[%c0_472, %c13_473, %c1_474, %c0_475] : memref<2x16x16x4xf32, #tpu.memory_space<vmem>>, vector<1x1x14x4xf32>
    %263 = vector.shape_cast %262 : vector<1x1x14x4xf32> to vector<14x4xf32>
    %c0_476 = arith.constant 0 : index
    %c13_477 = arith.constant 13 : index
    %c2_478 = arith.constant 2 : index
    %c0_479 = arith.constant 0 : index
    %264 = vector.load %arg0[%c0_476, %c13_477, %c2_478, %c0_479] : memref<2x16x16x4xf32, #tpu.memory_space<vmem>>, vector<1x1x14x4xf32>
    %265 = vector.shape_cast %264 : vector<1x1x14x4xf32> to vector<14x4xf32>
    %c0_480 = arith.constant 0 : index
    %c14_481 = arith.constant 14 : index
    %c0_482 = arith.constant 0 : index
    %c0_483 = arith.constant 0 : index
    %266 = vector.load %arg0[%c0_480, %c14_481, %c0_482, %c0_483] : memref<2x16x16x4xf32, #tpu.memory_space<vmem>>, vector<1x1x14x4xf32>
    %267 = vector.shape_cast %266 : vector<1x1x14x4xf32> to vector<14x4xf32>
    %c0_484 = arith.constant 0 : index
    %c14_485 = arith.constant 14 : index
    %c1_486 = arith.constant 1 : index
    %c0_487 = arith.constant 0 : index
    %268 = vector.load %arg0[%c0_484, %c14_485, %c1_486, %c0_487] : memref<2x16x16x4xf32, #tpu.memory_space<vmem>>, vector<1x1x14x4xf32>
    %269 = vector.shape_cast %268 : vector<1x1x14x4xf32> to vector<14x4xf32>
    %c0_488 = arith.constant 0 : index
    %c14_489 = arith.constant 14 : index
    %c2_490 = arith.constant 2 : index
    %c0_491 = arith.constant 0 : index
    %270 = vector.load %arg0[%c0_488, %c14_489, %c2_490, %c0_491] : memref<2x16x16x4xf32, #tpu.memory_space<vmem>>, vector<1x1x14x4xf32>
    %271 = vector.shape_cast %270 : vector<1x1x14x4xf32> to vector<14x4xf32>
    %c0_492 = arith.constant 0 : index
    %c15 = arith.constant 15 : index
    %c0_493 = arith.constant 0 : index
    %c0_494 = arith.constant 0 : index
    %272 = vector.load %arg0[%c0_492, %c15, %c0_493, %c0_494] : memref<2x16x16x4xf32, #tpu.memory_space<vmem>>, vector<1x1x14x4xf32>
    %273 = vector.shape_cast %272 : vector<1x1x14x4xf32> to vector<14x4xf32>
    %c0_495 = arith.constant 0 : index
    %c15_496 = arith.constant 15 : index
    %c1_497 = arith.constant 1 : index
    %c0_498 = arith.constant 0 : index
    %274 = vector.load %arg0[%c0_495, %c15_496, %c1_497, %c0_498] : memref<2x16x16x4xf32, #tpu.memory_space<vmem>>, vector<1x1x14x4xf32>
    %275 = vector.shape_cast %274 : vector<1x1x14x4xf32> to vector<14x4xf32>
    %c0_499 = arith.constant 0 : index
    %c15_500 = arith.constant 15 : index
    %c2_501 = arith.constant 2 : index
    %c0_502 = arith.constant 0 : index
    %276 = vector.load %arg0[%c0_499, %c15_500, %c2_501, %c0_502] : memref<2x16x16x4xf32, #tpu.memory_space<vmem>>, vector<1x1x14x4xf32>
    %277 = vector.shape_cast %276 : vector<1x1x14x4xf32> to vector<14x4xf32>
    %278 = tpu.concatenate %261, %263, %265, %267, %269, %271, %273, %275, %277 in 1 : vector<14x4xf32>, vector<14x4xf32>, vector<14x4xf32>, vector<14x4xf32>, vector<14x4xf32>, vector<14x4xf32>, vector<14x4xf32>, vector<14x4xf32>, vector<14x4xf32> -> vector<14x36xf32>
    %c182 = arith.constant 182 : index
    %c0_503 = arith.constant 0 : index
    %279 = vector.load %arg10[%c182, %c0_503] : memref<392x36xf32, #tpu.memory_space<vmem>>, vector<14x36xf32>
    tpu.vector_store %arg10[%c182, %c0_503], %278 {strides = array<i32>} : memref<392x36xf32, #tpu.memory_space<vmem>>, vector<14x36xf32>,
    %c1_504 = arith.constant 1 : index
    %c0_505 = arith.constant 0 : index
    %c0_506 = arith.constant 0 : index
    %c0_507 = arith.constant 0 : index
    %280 = vector.load %arg0[%c1_504, %c0_505, %c0_506, %c0_507] : memref<2x16x16x4xf32, #tpu.memory_space<vmem>>, vector<1x1x14x4xf32>
    %281 = vector.shape_cast %280 : vector<1x1x14x4xf32> to vector<14x4xf32>
    %c1_508 = arith.constant 1 : index
    %c0_509 = arith.constant 0 : index
    %c1_510 = arith.constant 1 : index
    %c0_511 = arith.constant 0 : index
    %282 = vector.load %arg0[%c1_508, %c0_509, %c1_510, %c0_511] : memref<2x16x16x4xf32, #tpu.memory_space<vmem>>, vector<1x1x14x4xf32>
    %283 = vector.shape_cast %282 : vector<1x1x14x4xf32> to vector<14x4xf32>
    %c1_512 = arith.constant 1 : index
    %c0_513 = arith.constant 0 : index
    %c2_514 = arith.constant 2 : index
    %c0_515 = arith.constant 0 : index
    %284 = vector.load %arg0[%c1_512, %c0_513, %c2_514, %c0_515] : memref<2x16x16x4xf32, #tpu.memory_space<vmem>>, vector<1x1x14x4xf32>
    %285 = vector.shape_cast %284 : vector<1x1x14x4xf32> to vector<14x4xf32>
    %c1_516 = arith.constant 1 : index
    %c1_517 = arith.constant 1 : index
    %c0_518 = arith.constant 0 : index
    %c0_519 = arith.constant 0 : index
    %286 = vector.load %arg0[%c1_516, %c1_517, %c0_518, %c0_519] : memref<2x16x16x4xf32, #tpu.memory_space<vmem>>, vector<1x1x14x4xf32>
    %287 = vector.shape_cast %286 : vector<1x1x14x4xf32> to vector<14x4xf32>
    %c1_520 = arith.constant 1 : index
    %c1_521 = arith.constant 1 : index
    %c1_522 = arith.constant 1 : index
    %c0_523 = arith.constant 0 : index
    %288 = vector.load %arg0[%c1_520, %c1_521, %c1_522, %c0_523] : memref<2x16x16x4xf32, #tpu.memory_space<vmem>>, vector<1x1x14x4xf32>
    %289 = vector.shape_cast %288 : vector<1x1x14x4xf32> to vector<14x4xf32>
    %c1_524 = arith.constant 1 : index
    %c1_525 = arith.constant 1 : index
    %c2_526 = arith.constant 2 : index
    %c0_527 = arith.constant 0 : index
    %290 = vector.load %arg0[%c1_524, %c1_525, %c2_526, %c0_527] : memref<2x16x16x4xf32, #tpu.memory_space<vmem>>, vector<1x1x14x4xf32>
    %291 = vector.shape_cast %290 : vector<1x1x14x4xf32> to vector<14x4xf32>
    %c1_528 = arith.constant 1 : index
    %c2_529 = arith.constant 2 : index
    %c0_530 = arith.constant 0 : index
    %c0_531 = arith.constant 0 : index
    %292 = vector.load %arg0[%c1_528, %c2_529, %c0_530, %c0_531] : memref<2x16x16x4xf32, #tpu.memory_space<vmem>>, vector<1x1x14x4xf32>
    %293 = vector.shape_cast %292 : vector<1x1x14x4xf32> to vector<14x4xf32>
    %c1_532 = arith.constant 1 : index
    %c2_533 = arith.constant 2 : index
    %c1_534 = arith.constant 1 : index
    %c0_535 = arith.constant 0 : index
    %294 = vector.load %arg0[%c1_532, %c2_533, %c1_534, %c0_535] : memref<2x16x16x4xf32, #tpu.memory_space<vmem>>, vector<1x1x14x4xf32>
    %295 = vector.shape_cast %294 : vector<1x1x14x4xf32> to vector<14x4xf32>
    %c1_536 = arith.constant 1 : index
    %c2_537 = arith.constant 2 : index
    %c2_538 = arith.constant 2 : index
    %c0_539 = arith.constant 0 : index
    %296 = vector.load %arg0[%c1_536, %c2_537, %c2_538, %c0_539] : memref<2x16x16x4xf32, #tpu.memory_space<vmem>>, vector<1x1x14x4xf32>
    %297 = vector.shape_cast %296 : vector<1x1x14x4xf32> to vector<14x4xf32>
    %298 = tpu.concatenate %281, %283, %285, %287, %289, %291, %293, %295, %297 in 1 : vector<14x4xf32>, vector<14x4xf32>, vector<14x4xf32>, vector<14x4xf32>, vector<14x4xf32>, vector<14x4xf32>, vector<14x4xf32>, vector<14x4xf32>, vector<14x4xf32> -> vector<14x36xf32>
    %c196 = arith.constant 196 : index
    %c0_540 = arith.constant 0 : index
    %299 = vector.load %arg10[%c196, %c0_540] : memref<392x36xf32, #tpu.memory_space<vmem>>, vector<14x36xf32>
    tpu.vector_store %arg10[%c196, %c0_540], %298 {strides = array<i32>} : memref<392x36xf32, #tpu.memory_space<vmem>>, vector<14x36xf32>,
    %c1_541 = arith.constant 1 : index
    %c1_542 = arith.constant 1 : index
    %c0_543 = arith.constant 0 : index
    %c0_544 = arith.constant 0 : index
    %300 = vector.load %arg0[%c1_541, %c1_542, %c0_543, %c0_544] : memref<2x16x16x4xf32, #tpu.memory_space<vmem>>, vector<1x1x14x4xf32>
    %301 = vector.shape_cast %300 : vector<1x1x14x4xf32> to vector<14x4xf32>
    %c1_545 = arith.constant 1 : index
    %c1_546 = arith.constant 1 : index
    %c1_547 = arith.constant 1 : index
    %c0_548 = arith.constant 0 : index
    %302 = vector.load %arg0[%c1_545, %c1_546, %c1_547, %c0_548] : memref<2x16x16x4xf32, #tpu.memory_space<vmem>>, vector<1x1x14x4xf32>
    %303 = vector.shape_cast %302 : vector<1x1x14x4xf32> to vector<14x4xf32>
    %c1_549 = arith.constant 1 : index
    %c1_550 = arith.constant 1 : index
    %c2_551 = arith.constant 2 : index
    %c0_552 = arith.constant 0 : index
    %304 = vector.load %arg0[%c1_549, %c1_550, %c2_551, %c0_552] : memref<2x16x16x4xf32, #tpu.memory_space<vmem>>, vector<1x1x14x4xf32>
    %305 = vector.shape_cast %304 : vector<1x1x14x4xf32> to vector<14x4xf32>
    %c1_553 = arith.constant 1 : index
    %c2_554 = arith.constant 2 : index
    %c0_555 = arith.constant 0 : index
    %c0_556 = arith.constant 0 : index
    %306 = vector.load %arg0[%c1_553, %c2_554, %c0_555, %c0_556] : memref<2x16x16x4xf32, #tpu.memory_space<vmem>>, vector<1x1x14x4xf32>
    %307 = vector.shape_cast %306 : vector<1x1x14x4xf32> to vector<14x4xf32>
    %c1_557 = arith.constant 1 : index
    %c2_558 = arith.constant 2 : index
    %c1_559 = arith.constant 1 : index
    %c0_560 = arith.constant 0 : index
    %308 = vector.load %arg0[%c1_557, %c2_558, %c1_559, %c0_560] : memref<2x16x16x4xf32, #tpu.memory_space<vmem>>, vector<1x1x14x4xf32>
    %309 = vector.shape_cast %308 : vector<1x1x14x4xf32> to vector<14x4xf32>
    %c1_561 = arith.constant 1 : index
    %c2_562 = arith.constant 2 : index
    %c2_563 = arith.constant 2 : index
    %c0_564 = arith.constant 0 : index
    %310 = vector.load %arg0[%c1_561, %c2_562, %c2_563, %c0_564] : memref<2x16x16x4xf32, #tpu.memory_space<vmem>>, vector<1x1x14x4xf32>
    %311 = vector.shape_cast %310 : vector<1x1x14x4xf32> to vector<14x4xf32>
    %c1_565 = arith.constant 1 : index
    %c3_566 = arith.constant 3 : index
    %c0_567 = arith.constant 0 : index
    %c0_568 = arith.constant 0 : index
    %312 = vector.load %arg0[%c1_565, %c3_566, %c0_567, %c0_568] : memref<2x16x16x4xf32, #tpu.memory_space<vmem>>, vector<1x1x14x4xf32>
    %313 = vector.shape_cast %312 : vector<1x1x14x4xf32> to vector<14x4xf32>
    %c1_569 = arith.constant 1 : index
    %c3_570 = arith.constant 3 : index
    %c1_571 = arith.constant 1 : index
    %c0_572 = arith.constant 0 : index
    %314 = vector.load %arg0[%c1_569, %c3_570, %c1_571, %c0_572] : memref<2x16x16x4xf32, #tpu.memory_space<vmem>>, vector<1x1x14x4xf32>
    %315 = vector.shape_cast %314 : vector<1x1x14x4xf32> to vector<14x4xf32>
    %c1_573 = arith.constant 1 : index
    %c3_574 = arith.constant 3 : index
    %c2_575 = arith.constant 2 : index
    %c0_576 = arith.constant 0 : index
    %316 = vector.load %arg0[%c1_573, %c3_574, %c2_575, %c0_576] : memref<2x16x16x4xf32, #tpu.memory_space<vmem>>, vector<1x1x14x4xf32>
    %317 = vector.shape_cast %316 : vector<1x1x14x4xf32> to vector<14x4xf32>
    %318 = tpu.concatenate %301, %303, %305, %307, %309, %311, %313, %315, %317 in 1 : vector<14x4xf32>, vector<14x4xf32>, vector<14x4xf32>, vector<14x4xf32>, vector<14x4xf32>, vector<14x4xf32>, vector<14x4xf32>, vector<14x4xf32>, vector<14x4xf32> -> vector<14x36xf32>
    %c210 = arith.constant 210 : index
    %c0_577 = arith.constant 0 : index
    %319 = vector.load %arg10[%c210, %c0_577] : memref<392x36xf32, #tpu.memory_space<vmem>>, vector<14x36xf32>
    tpu.vector_store %arg10[%c210, %c0_577], %318 {strides = array<i32>} : memref<392x36xf32, #tpu.memory_space<vmem>>, vector<14x36xf32>,
    %c1_578 = arith.constant 1 : index
    %c2_579 = arith.constant 2 : index
    %c0_580 = arith.constant 0 : index
    %c0_581 = arith.constant 0 : index
    %320 = vector.load %arg0[%c1_578, %c2_579, %c0_580, %c0_581] : memref<2x16x16x4xf32, #tpu.memory_space<vmem>>, vector<1x1x14x4xf32>
    %321 = vector.shape_cast %320 : vector<1x1x14x4xf32> to vector<14x4xf32>
    %c1_582 = arith.constant 1 : index
    %c2_583 = arith.constant 2 : index
    %c1_584 = arith.constant 1 : index
    %c0_585 = arith.constant 0 : index
    %322 = vector.load %arg0[%c1_582, %c2_583, %c1_584, %c0_585] : memref<2x16x16x4xf32, #tpu.memory_space<vmem>>, vector<1x1x14x4xf32>
    %323 = vector.shape_cast %322 : vector<1x1x14x4xf32> to vector<14x4xf32>
    %c1_586 = arith.constant 1 : index
    %c2_587 = arith.constant 2 : index
    %c2_588 = arith.constant 2 : index
    %c0_589 = arith.constant 0 : index
    %324 = vector.load %arg0[%c1_586, %c2_587, %c2_588, %c0_589] : memref<2x16x16x4xf32, #tpu.memory_space<vmem>>, vector<1x1x14x4xf32>
    %325 = vector.shape_cast %324 : vector<1x1x14x4xf32> to vector<14x4xf32>
    %c1_590 = arith.constant 1 : index
    %c3_591 = arith.constant 3 : index
    %c0_592 = arith.constant 0 : index
    %c0_593 = arith.constant 0 : index
    %326 = vector.load %arg0[%c1_590, %c3_591, %c0_592, %c0_593] : memref<2x16x16x4xf32, #tpu.memory_space<vmem>>, vector<1x1x14x4xf32>
    %327 = vector.shape_cast %326 : vector<1x1x14x4xf32> to vector<14x4xf32>
    %c1_594 = arith.constant 1 : index
    %c3_595 = arith.constant 3 : index
    %c1_596 = arith.constant 1 : index
    %c0_597 = arith.constant 0 : index
    %328 = vector.load %arg0[%c1_594, %c3_595, %c1_596, %c0_597] : memref<2x16x16x4xf32, #tpu.memory_space<vmem>>, vector<1x1x14x4xf32>
    %329 = vector.shape_cast %328 : vector<1x1x14x4xf32> to vector<14x4xf32>
    %c1_598 = arith.constant 1 : index
    %c3_599 = arith.constant 3 : index
    %c2_600 = arith.constant 2 : index
    %c0_601 = arith.constant 0 : index
    %330 = vector.load %arg0[%c1_598, %c3_599, %c2_600, %c0_601] : memref<2x16x16x4xf32, #tpu.memory_space<vmem>>, vector<1x1x14x4xf32>
    %331 = vector.shape_cast %330 : vector<1x1x14x4xf32> to vector<14x4xf32>
    %c1_602 = arith.constant 1 : index
    %c4_603 = arith.constant 4 : index
    %c0_604 = arith.constant 0 : index
    %c0_605 = arith.constant 0 : index
    %332 = vector.load %arg0[%c1_602, %c4_603, %c0_604, %c0_605] : memref<2x16x16x4xf32, #tpu.memory_space<vmem>>, vector<1x1x14x4xf32>
    %333 = vector.shape_cast %332 : vector<1x1x14x4xf32> to vector<14x4xf32>
    %c1_606 = arith.constant 1 : index
    %c4_607 = arith.constant 4 : index
    %c1_608 = arith.constant 1 : index
    %c0_609 = arith.constant 0 : index
    %334 = vector.load %arg0[%c1_606, %c4_607, %c1_608, %c0_609] : memref<2x16x16x4xf32, #tpu.memory_space<vmem>>, vector<1x1x14x4xf32>
    %335 = vector.shape_cast %334 : vector<1x1x14x4xf32> to vector<14x4xf32>
    %c1_610 = arith.constant 1 : index
    %c4_611 = arith.constant 4 : index
    %c2_612 = arith.constant 2 : index
    %c0_613 = arith.constant 0 : index
    %336 = vector.load %arg0[%c1_610, %c4_611, %c2_612, %c0_613] : memref<2x16x16x4xf32, #tpu.memory_space<vmem>>, vector<1x1x14x4xf32>
    %337 = vector.shape_cast %336 : vector<1x1x14x4xf32> to vector<14x4xf32>
    %338 = tpu.concatenate %321, %323, %325, %327, %329, %331, %333, %335, %337 in 1 : vector<14x4xf32>, vector<14x4xf32>, vector<14x4xf32>, vector<14x4xf32>, vector<14x4xf32>, vector<14x4xf32>, vector<14x4xf32>, vector<14x4xf32>, vector<14x4xf32> -> vector<14x36xf32>
    %c224 = arith.constant 224 : index
    %c0_614 = arith.constant 0 : index
    %339 = vector.load %arg10[%c224, %c0_614] : memref<392x36xf32, #tpu.memory_space<vmem>>, vector<14x36xf32>
    tpu.vector_store %arg10[%c224, %c0_614], %338 {strides = array<i32>} : memref<392x36xf32, #tpu.memory_space<vmem>>, vector<14x36xf32>,
    %c1_615 = arith.constant 1 : index
    %c3_616 = arith.constant 3 : index
    %c0_617 = arith.constant 0 : index
    %c0_618 = arith.constant 0 : index
    %340 = vector.load %arg0[%c1_615, %c3_616, %c0_617, %c0_618] : memref<2x16x16x4xf32, #tpu.memory_space<vmem>>, vector<1x1x14x4xf32>
    %341 = vector.shape_cast %340 : vector<1x1x14x4xf32> to vector<14x4xf32>
    %c1_619 = arith.constant 1 : index
    %c3_620 = arith.constant 3 : index
    %c1_621 = arith.constant 1 : index
    %c0_622 = arith.constant 0 : index
    %342 = vector.load %arg0[%c1_619, %c3_620, %c1_621, %c0_622] : memref<2x16x16x4xf32, #tpu.memory_space<vmem>>, vector<1x1x14x4xf32>
    %343 = vector.shape_cast %342 : vector<1x1x14x4xf32> to vector<14x4xf32>
    %c1_623 = arith.constant 1 : index
    %c3_624 = arith.constant 3 : index
    %c2_625 = arith.constant 2 : index
    %c0_626 = arith.constant 0 : index
    %344 = vector.load %arg0[%c1_623, %c3_624, %c2_625, %c0_626] : memref<2x16x16x4xf32, #tpu.memory_space<vmem>>, vector<1x1x14x4xf32>
    %345 = vector.shape_cast %344 : vector<1x1x14x4xf32> to vector<14x4xf32>
    %c1_627 = arith.constant 1 : index
    %c4_628 = arith.constant 4 : index
    %c0_629 = arith.constant 0 : index
    %c0_630 = arith.constant 0 : index
    %346 = vector.load %arg0[%c1_627, %c4_628, %c0_629, %c0_630] : memref<2x16x16x4xf32, #tpu.memory_space<vmem>>, vector<1x1x14x4xf32>
    %347 = vector.shape_cast %346 : vector<1x1x14x4xf32> to vector<14x4xf32>
    %c1_631 = arith.constant 1 : index
    %c4_632 = arith.constant 4 : index
    %c1_633 = arith.constant 1 : index
    %c0_634 = arith.constant 0 : index
    %348 = vector.load %arg0[%c1_631, %c4_632, %c1_633, %c0_634] : memref<2x16x16x4xf32, #tpu.memory_space<vmem>>, vector<1x1x14x4xf32>
    %349 = vector.shape_cast %348 : vector<1x1x14x4xf32> to vector<14x4xf32>
    %c1_635 = arith.constant 1 : index
    %c4_636 = arith.constant 4 : index
    %c2_637 = arith.constant 2 : index
    %c0_638 = arith.constant 0 : index
    %350 = vector.load %arg0[%c1_635, %c4_636, %c2_637, %c0_638] : memref<2x16x16x4xf32, #tpu.memory_space<vmem>>, vector<1x1x14x4xf32>
    %351 = vector.shape_cast %350 : vector<1x1x14x4xf32> to vector<14x4xf32>
    %c1_639 = arith.constant 1 : index
    %c5_640 = arith.constant 5 : index
    %c0_641 = arith.constant 0 : index
    %c0_642 = arith.constant 0 : index
    %352 = vector.load %arg0[%c1_639, %c5_640, %c0_641, %c0_642] : memref<2x16x16x4xf32, #tpu.memory_space<vmem>>, vector<1x1x14x4xf32>
    %353 = vector.shape_cast %352 : vector<1x1x14x4xf32> to vector<14x4xf32>
    %c1_643 = arith.constant 1 : index
    %c5_644 = arith.constant 5 : index
    %c1_645 = arith.constant 1 : index
    %c0_646 = arith.constant 0 : index
    %354 = vector.load %arg0[%c1_643, %c5_644, %c1_645, %c0_646] : memref<2x16x16x4xf32, #tpu.memory_space<vmem>>, vector<1x1x14x4xf32>
    %355 = vector.shape_cast %354 : vector<1x1x14x4xf32> to vector<14x4xf32>
    %c1_647 = arith.constant 1 : index
    %c5_648 = arith.constant 5 : index
    %c2_649 = arith.constant 2 : index
    %c0_650 = arith.constant 0 : index
    %356 = vector.load %arg0[%c1_647, %c5_648, %c2_649, %c0_650] : memref<2x16x16x4xf32, #tpu.memory_space<vmem>>, vector<1x1x14x4xf32>
    %357 = vector.shape_cast %356 : vector<1x1x14x4xf32> to vector<14x4xf32>
    %358 = tpu.concatenate %341, %343, %345, %347, %349, %351, %353, %355, %357 in 1 : vector<14x4xf32>, vector<14x4xf32>, vector<14x4xf32>, vector<14x4xf32>, vector<14x4xf32>, vector<14x4xf32>, vector<14x4xf32>, vector<14x4xf32>, vector<14x4xf32> -> vector<14x36xf32>
    %c238 = arith.constant 238 : index
    %c0_651 = arith.constant 0 : index
    %359 = vector.load %arg10[%c238, %c0_651] : memref<392x36xf32, #tpu.memory_space<vmem>>, vector<14x36xf32>
    tpu.vector_store %arg10[%c238, %c0_651], %358 {strides = array<i32>} : memref<392x36xf32, #tpu.memory_space<vmem>>, vector<14x36xf32>,
    %c1_652 = arith.constant 1 : index
    %c4_653 = arith.constant 4 : index
    %c0_654 = arith.constant 0 : index
    %c0_655 = arith.constant 0 : index
    %360 = vector.load %arg0[%c1_652, %c4_653, %c0_654, %c0_655] : memref<2x16x16x4xf32, #tpu.memory_space<vmem>>, vector<1x1x14x4xf32>
    %361 = vector.shape_cast %360 : vector<1x1x14x4xf32> to vector<14x4xf32>
    %c1_656 = arith.constant 1 : index
    %c4_657 = arith.constant 4 : index
    %c1_658 = arith.constant 1 : index
    %c0_659 = arith.constant 0 : index
    %362 = vector.load %arg0[%c1_656, %c4_657, %c1_658, %c0_659] : memref<2x16x16x4xf32, #tpu.memory_space<vmem>>, vector<1x1x14x4xf32>
    %363 = vector.shape_cast %362 : vector<1x1x14x4xf32> to vector<14x4xf32>
    %c1_660 = arith.constant 1 : index
    %c4_661 = arith.constant 4 : index
    %c2_662 = arith.constant 2 : index
    %c0_663 = arith.constant 0 : index
    %364 = vector.load %arg0[%c1_660, %c4_661, %c2_662, %c0_663] : memref<2x16x16x4xf32, #tpu.memory_space<vmem>>, vector<1x1x14x4xf32>
    %365 = vector.shape_cast %364 : vector<1x1x14x4xf32> to vector<14x4xf32>
    %c1_664 = arith.constant 1 : index
    %c5_665 = arith.constant 5 : index
    %c0_666 = arith.constant 0 : index
    %c0_667 = arith.constant 0 : index
    %366 = vector.load %arg0[%c1_664, %c5_665, %c0_666, %c0_667] : memref<2x16x16x4xf32, #tpu.memory_space<vmem>>, vector<1x1x14x4xf32>
    %367 = vector.shape_cast %366 : vector<1x1x14x4xf32> to vector<14x4xf32>
    %c1_668 = arith.constant 1 : index
    %c5_669 = arith.constant 5 : index
    %c1_670 = arith.constant 1 : index
    %c0_671 = arith.constant 0 : index
    %368 = vector.load %arg0[%c1_668, %c5_669, %c1_670, %c0_671] : memref<2x16x16x4xf32, #tpu.memory_space<vmem>>, vector<1x1x14x4xf32>
    %369 = vector.shape_cast %368 : vector<1x1x14x4xf32> to vector<14x4xf32>
    %c1_672 = arith.constant 1 : index
    %c5_673 = arith.constant 5 : index
    %c2_674 = arith.constant 2 : index
    %c0_675 = arith.constant 0 : index
    %370 = vector.load %arg0[%c1_672, %c5_673, %c2_674, %c0_675] : memref<2x16x16x4xf32, #tpu.memory_space<vmem>>, vector<1x1x14x4xf32>
    %371 = vector.shape_cast %370 : vector<1x1x14x4xf32> to vector<14x4xf32>
    %c1_676 = arith.constant 1 : index
    %c6_677 = arith.constant 6 : index
    %c0_678 = arith.constant 0 : index
    %c0_679 = arith.constant 0 : index
    %372 = vector.load %arg0[%c1_676, %c6_677, %c0_678, %c0_679] : memref<2x16x16x4xf32, #tpu.memory_space<vmem>>, vector<1x1x14x4xf32>
    %373 = vector.shape_cast %372 : vector<1x1x14x4xf32> to vector<14x4xf32>
    %c1_680 = arith.constant 1 : index
    %c6_681 = arith.constant 6 : index
    %c1_682 = arith.constant 1 : index
    %c0_683 = arith.constant 0 : index
    %374 = vector.load %arg0[%c1_680, %c6_681, %c1_682, %c0_683] : memref<2x16x16x4xf32, #tpu.memory_space<vmem>>, vector<1x1x14x4xf32>
    %375 = vector.shape_cast %374 : vector<1x1x14x4xf32> to vector<14x4xf32>
    %c1_684 = arith.constant 1 : index
    %c6_685 = arith.constant 6 : index
    %c2_686 = arith.constant 2 : index
    %c0_687 = arith.constant 0 : index
    %376 = vector.load %arg0[%c1_684, %c6_685, %c2_686, %c0_687] : memref<2x16x16x4xf32, #tpu.memory_space<vmem>>, vector<1x1x14x4xf32>
    %377 = vector.shape_cast %376 : vector<1x1x14x4xf32> to vector<14x4xf32>
    %378 = tpu.concatenate %361, %363, %365, %367, %369, %371, %373, %375, %377 in 1 : vector<14x4xf32>, vector<14x4xf32>, vector<14x4xf32>, vector<14x4xf32>, vector<14x4xf32>, vector<14x4xf32>, vector<14x4xf32>, vector<14x4xf32>, vector<14x4xf32> -> vector<14x36xf32>
    %c252 = arith.constant 252 : index
    %c0_688 = arith.constant 0 : index
    %379 = vector.load %arg10[%c252, %c0_688] : memref<392x36xf32, #tpu.memory_space<vmem>>, vector<14x36xf32>
    tpu.vector_store %arg10[%c252, %c0_688], %378 {strides = array<i32>} : memref<392x36xf32, #tpu.memory_space<vmem>>, vector<14x36xf32>,
    %c1_689 = arith.constant 1 : index
    %c5_690 = arith.constant 5 : index
    %c0_691 = arith.constant 0 : index
    %c0_692 = arith.constant 0 : index
    %380 = vector.load %arg0[%c1_689, %c5_690, %c0_691, %c0_692] : memref<2x16x16x4xf32, #tpu.memory_space<vmem>>, vector<1x1x14x4xf32>
    %381 = vector.shape_cast %380 : vector<1x1x14x4xf32> to vector<14x4xf32>
    %c1_693 = arith.constant 1 : index
    %c5_694 = arith.constant 5 : index
    %c1_695 = arith.constant 1 : index
    %c0_696 = arith.constant 0 : index
    %382 = vector.load %arg0[%c1_693, %c5_694, %c1_695, %c0_696] : memref<2x16x16x4xf32, #tpu.memory_space<vmem>>, vector<1x1x14x4xf32>
    %383 = vector.shape_cast %382 : vector<1x1x14x4xf32> to vector<14x4xf32>
    %c1_697 = arith.constant 1 : index
    %c5_698 = arith.constant 5 : index
    %c2_699 = arith.constant 2 : index
    %c0_700 = arith.constant 0 : index
    %384 = vector.load %arg0[%c1_697, %c5_698, %c2_699, %c0_700] : memref<2x16x16x4xf32, #tpu.memory_space<vmem>>, vector<1x1x14x4xf32>
    %385 = vector.shape_cast %384 : vector<1x1x14x4xf32> to vector<14x4xf32>
    %c1_701 = arith.constant 1 : index
    %c6_702 = arith.constant 6 : index
    %c0_703 = arith.constant 0 : index
    %c0_704 = arith.constant 0 : index
    %386 = vector.load %arg0[%c1_701, %c6_702, %c0_703, %c0_704] : memref<2x16x16x4xf32, #tpu.memory_space<vmem>>, vector<1x1x14x4xf32>
    %387 = vector.shape_cast %386 : vector<1x1x14x4xf32> to vector<14x4xf32>
    %c1_705 = arith.constant 1 : index
    %c6_706 = arith.constant 6 : index
    %c1_707 = arith.constant 1 : index
    %c0_708 = arith.constant 0 : index
    %388 = vector.load %arg0[%c1_705, %c6_706, %c1_707, %c0_708] : memref<2x16x16x4xf32, #tpu.memory_space<vmem>>, vector<1x1x14x4xf32>
    %389 = vector.shape_cast %388 : vector<1x1x14x4xf32> to vector<14x4xf32>
    %c1_709 = arith.constant 1 : index
    %c6_710 = arith.constant 6 : index
    %c2_711 = arith.constant 2 : index
    %c0_712 = arith.constant 0 : index
    %390 = vector.load %arg0[%c1_709, %c6_710, %c2_711, %c0_712] : memref<2x16x16x4xf32, #tpu.memory_space<vmem>>, vector<1x1x14x4xf32>
    %391 = vector.shape_cast %390 : vector<1x1x14x4xf32> to vector<14x4xf32>
    %c1_713 = arith.constant 1 : index
    %c7_714 = arith.constant 7 : index
    %c0_715 = arith.constant 0 : index
    %c0_716 = arith.constant 0 : index
    %392 = vector.load %arg0[%c1_713, %c7_714, %c0_715, %c0_716] : memref<2x16x16x4xf32, #tpu.memory_space<vmem>>, vector<1x1x14x4xf32>
    %393 = vector.shape_cast %392 : vector<1x1x14x4xf32> to vector<14x4xf32>
    %c1_717 = arith.constant 1 : index
    %c7_718 = arith.constant 7 : index
    %c1_719 = arith.constant 1 : index
    %c0_720 = arith.constant 0 : index
    %394 = vector.load %arg0[%c1_717, %c7_718, %c1_719, %c0_720] : memref<2x16x16x4xf32, #tpu.memory_space<vmem>>, vector<1x1x14x4xf32>
    %395 = vector.shape_cast %394 : vector<1x1x14x4xf32> to vector<14x4xf32>
    %c1_721 = arith.constant 1 : index
    %c7_722 = arith.constant 7 : index
    %c2_723 = arith.constant 2 : index
    %c0_724 = arith.constant 0 : index
    %396 = vector.load %arg0[%c1_721, %c7_722, %c2_723, %c0_724] : memref<2x16x16x4xf32, #tpu.memory_space<vmem>>, vector<1x1x14x4xf32>
    %397 = vector.shape_cast %396 : vector<1x1x14x4xf32> to vector<14x4xf32>
    %398 = tpu.concatenate %381, %383, %385, %387, %389, %391, %393, %395, %397 in 1 : vector<14x4xf32>, vector<14x4xf32>, vector<14x4xf32>, vector<14x4xf32>, vector<14x4xf32>, vector<14x4xf32>, vector<14x4xf32>, vector<14x4xf32>, vector<14x4xf32> -> vector<14x36xf32>
    %c266 = arith.constant 266 : index
    %c0_725 = arith.constant 0 : index
    %399 = vector.load %arg10[%c266, %c0_725] : memref<392x36xf32, #tpu.memory_space<vmem>>, vector<14x36xf32>
    tpu.vector_store %arg10[%c266, %c0_725], %398 {strides = array<i32>} : memref<392x36xf32, #tpu.memory_space<vmem>>, vector<14x36xf32>,
    %c1_726 = arith.constant 1 : index
    %c6_727 = arith.constant 6 : index
    %c0_728 = arith.constant 0 : index
    %c0_729 = arith.constant 0 : index
    %400 = vector.load %arg0[%c1_726, %c6_727, %c0_728, %c0_729] : memref<2x16x16x4xf32, #tpu.memory_space<vmem>>, vector<1x1x14x4xf32>
    %401 = vector.shape_cast %400 : vector<1x1x14x4xf32> to vector<14x4xf32>
    %c1_730 = arith.constant 1 : index
    %c6_731 = arith.constant 6 : index
    %c1_732 = arith.constant 1 : index
    %c0_733 = arith.constant 0 : index
    %402 = vector.load %arg0[%c1_730, %c6_731, %c1_732, %c0_733] : memref<2x16x16x4xf32, #tpu.memory_space<vmem>>, vector<1x1x14x4xf32>
    %403 = vector.shape_cast %402 : vector<1x1x14x4xf32> to vector<14x4xf32>
    %c1_734 = arith.constant 1 : index
    %c6_735 = arith.constant 6 : index
    %c2_736 = arith.constant 2 : index
    %c0_737 = arith.constant 0 : index
    %404 = vector.load %arg0[%c1_734, %c6_735, %c2_736, %c0_737] : memref<2x16x16x4xf32, #tpu.memory_space<vmem>>, vector<1x1x14x4xf32>
    %405 = vector.shape_cast %404 : vector<1x1x14x4xf32> to vector<14x4xf32>
    %c1_738 = arith.constant 1 : index
    %c7_739 = arith.constant 7 : index
    %c0_740 = arith.constant 0 : index
    %c0_741 = arith.constant 0 : index
    %406 = vector.load %arg0[%c1_738, %c7_739, %c0_740, %c0_741] : memref<2x16x16x4xf32, #tpu.memory_space<vmem>>, vector<1x1x14x4xf32>
    %407 = vector.shape_cast %406 : vector<1x1x14x4xf32> to vector<14x4xf32>
    %c1_742 = arith.constant 1 : index
    %c7_743 = arith.constant 7 : index
    %c1_744 = arith.constant 1 : index
    %c0_745 = arith.constant 0 : index
    %408 = vector.load %arg0[%c1_742, %c7_743, %c1_744, %c0_745] : memref<2x16x16x4xf32, #tpu.memory_space<vmem>>, vector<1x1x14x4xf32>
    %409 = vector.shape_cast %408 : vector<1x1x14x4xf32> to vector<14x4xf32>
    %c1_746 = arith.constant 1 : index
    %c7_747 = arith.constant 7 : index
    %c2_748 = arith.constant 2 : index
    %c0_749 = arith.constant 0 : index
    %410 = vector.load %arg0[%c1_746, %c7_747, %c2_748, %c0_749] : memref<2x16x16x4xf32, #tpu.memory_space<vmem>>, vector<1x1x14x4xf32>
    %411 = vector.shape_cast %410 : vector<1x1x14x4xf32> to vector<14x4xf32>
    %c1_750 = arith.constant 1 : index
    %c8_751 = arith.constant 8 : index
    %c0_752 = arith.constant 0 : index
    %c0_753 = arith.constant 0 : index
    %412 = vector.load %arg0[%c1_750, %c8_751, %c0_752, %c0_753] : memref<2x16x16x4xf32, #tpu.memory_space<vmem>>, vector<1x1x14x4xf32>
    %413 = vector.shape_cast %412 : vector<1x1x14x4xf32> to vector<14x4xf32>
    %c1_754 = arith.constant 1 : index
    %c8_755 = arith.constant 8 : index
    %c1_756 = arith.constant 1 : index
    %c0_757 = arith.constant 0 : index
    %414 = vector.load %arg0[%c1_754, %c8_755, %c1_756, %c0_757] : memref<2x16x16x4xf32, #tpu.memory_space<vmem>>, vector<1x1x14x4xf32>
    %415 = vector.shape_cast %414 : vector<1x1x14x4xf32> to vector<14x4xf32>
    %c1_758 = arith.constant 1 : index
    %c8_759 = arith.constant 8 : index
    %c2_760 = arith.constant 2 : index
    %c0_761 = arith.constant 0 : index
    %416 = vector.load %arg0[%c1_758, %c8_759, %c2_760, %c0_761] : memref<2x16x16x4xf32, #tpu.memory_space<vmem>>, vector<1x1x14x4xf32>
    %417 = vector.shape_cast %416 : vector<1x1x14x4xf32> to vector<14x4xf32>
    %418 = tpu.concatenate %401, %403, %405, %407, %409, %411, %413, %415, %417 in 1 : vector<14x4xf32>, vector<14x4xf32>, vector<14x4xf32>, vector<14x4xf32>, vector<14x4xf32>, vector<14x4xf32>, vector<14x4xf32>, vector<14x4xf32>, vector<14x4xf32> -> vector<14x36xf32>
    %c280 = arith.constant 280 : index
    %c0_762 = arith.constant 0 : index
    %419 = vector.load %arg10[%c280, %c0_762] : memref<392x36xf32, #tpu.memory_space<vmem>>, vector<14x36xf32>
    tpu.vector_store %arg10[%c280, %c0_762], %418 {strides = array<i32>} : memref<392x36xf32, #tpu.memory_space<vmem>>, vector<14x36xf32>,
    %c1_763 = arith.constant 1 : index
    %c7_764 = arith.constant 7 : index
    %c0_765 = arith.constant 0 : index
    %c0_766 = arith.constant 0 : index
    %420 = vector.load %arg0[%c1_763, %c7_764, %c0_765, %c0_766] : memref<2x16x16x4xf32, #tpu.memory_space<vmem>>, vector<1x1x14x4xf32>
    %421 = vector.shape_cast %420 : vector<1x1x14x4xf32> to vector<14x4xf32>
    %c1_767 = arith.constant 1 : index
    %c7_768 = arith.constant 7 : index
    %c1_769 = arith.constant 1 : index
    %c0_770 = arith.constant 0 : index
    %422 = vector.load %arg0[%c1_767, %c7_768, %c1_769, %c0_770] : memref<2x16x16x4xf32, #tpu.memory_space<vmem>>, vector<1x1x14x4xf32>
    %423 = vector.shape_cast %422 : vector<1x1x14x4xf32> to vector<14x4xf32>
    %c1_771 = arith.constant 1 : index
    %c7_772 = arith.constant 7 : index
    %c2_773 = arith.constant 2 : index
    %c0_774 = arith.constant 0 : index
    %424 = vector.load %arg0[%c1_771, %c7_772, %c2_773, %c0_774] : memref<2x16x16x4xf32, #tpu.memory_space<vmem>>, vector<1x1x14x4xf32>
    %425 = vector.shape_cast %424 : vector<1x1x14x4xf32> to vector<14x4xf32>
    %c1_775 = arith.constant 1 : index
    %c8_776 = arith.constant 8 : index
    %c0_777 = arith.constant 0 : index
    %c0_778 = arith.constant 0 : index
    %426 = vector.load %arg0[%c1_775, %c8_776, %c0_777, %c0_778] : memref<2x16x16x4xf32, #tpu.memory_space<vmem>>, vector<1x1x14x4xf32>
    %427 = vector.shape_cast %426 : vector<1x1x14x4xf32> to vector<14x4xf32>
    %c1_779 = arith.constant 1 : index
    %c8_780 = arith.constant 8 : index
    %c1_781 = arith.constant 1 : index
    %c0_782 = arith.constant 0 : index
    %428 = vector.load %arg0[%c1_779, %c8_780, %c1_781, %c0_782] : memref<2x16x16x4xf32, #tpu.memory_space<vmem>>, vector<1x1x14x4xf32>
    %429 = vector.shape_cast %428 : vector<1x1x14x4xf32> to vector<14x4xf32>
    %c1_783 = arith.constant 1 : index
    %c8_784 = arith.constant 8 : index
    %c2_785 = arith.constant 2 : index
    %c0_786 = arith.constant 0 : index
    %430 = vector.load %arg0[%c1_783, %c8_784, %c2_785, %c0_786] : memref<2x16x16x4xf32, #tpu.memory_space<vmem>>, vector<1x1x14x4xf32>
    %431 = vector.shape_cast %430 : vector<1x1x14x4xf32> to vector<14x4xf32>
    %c1_787 = arith.constant 1 : index
    %c9_788 = arith.constant 9 : index
    %c0_789 = arith.constant 0 : index
    %c0_790 = arith.constant 0 : index
    %432 = vector.load %arg0[%c1_787, %c9_788, %c0_789, %c0_790] : memref<2x16x16x4xf32, #tpu.memory_space<vmem>>, vector<1x1x14x4xf32>
    %433 = vector.shape_cast %432 : vector<1x1x14x4xf32> to vector<14x4xf32>
    %c1_791 = arith.constant 1 : index
    %c9_792 = arith.constant 9 : index
    %c1_793 = arith.constant 1 : index
    %c0_794 = arith.constant 0 : index
    %434 = vector.load %arg0[%c1_791, %c9_792, %c1_793, %c0_794] : memref<2x16x16x4xf32, #tpu.memory_space<vmem>>, vector<1x1x14x4xf32>
    %435 = vector.shape_cast %434 : vector<1x1x14x4xf32> to vector<14x4xf32>
    %c1_795 = arith.constant 1 : index
    %c9_796 = arith.constant 9 : index
    %c2_797 = arith.constant 2 : index
    %c0_798 = arith.constant 0 : index
    %436 = vector.load %arg0[%c1_795, %c9_796, %c2_797, %c0_798] : memref<2x16x16x4xf32, #tpu.memory_space<vmem>>, vector<1x1x14x4xf32>
    %437 = vector.shape_cast %436 : vector<1x1x14x4xf32> to vector<14x4xf32>
    %438 = tpu.concatenate %421, %423, %425, %427, %429, %431, %433, %435, %437 in 1 : vector<14x4xf32>, vector<14x4xf32>, vector<14x4xf32>, vector<14x4xf32>, vector<14x4xf32>, vector<14x4xf32>, vector<14x4xf32>, vector<14x4xf32>, vector<14x4xf32> -> vector<14x36xf32>
    %c294 = arith.constant 294 : index
    %c0_799 = arith.constant 0 : index
    %439 = vector.load %arg10[%c294, %c0_799] : memref<392x36xf32, #tpu.memory_space<vmem>>, vector<14x36xf32>
    tpu.vector_store %arg10[%c294, %c0_799], %438 {strides = array<i32>} : memref<392x36xf32, #tpu.memory_space<vmem>>, vector<14x36xf32>,
    %c1_800 = arith.constant 1 : index
    %c8_801 = arith.constant 8 : index
    %c0_802 = arith.constant 0 : index
    %c0_803 = arith.constant 0 : index
    %440 = vector.load %arg0[%c1_800, %c8_801, %c0_802, %c0_803] : memref<2x16x16x4xf32, #tpu.memory_space<vmem>>, vector<1x1x14x4xf32>
    %441 = vector.shape_cast %440 : vector<1x1x14x4xf32> to vector<14x4xf32>
    %c1_804 = arith.constant 1 : index
    %c8_805 = arith.constant 8 : index
    %c1_806 = arith.constant 1 : index
    %c0_807 = arith.constant 0 : index
    %442 = vector.load %arg0[%c1_804, %c8_805, %c1_806, %c0_807] : memref<2x16x16x4xf32, #tpu.memory_space<vmem>>, vector<1x1x14x4xf32>
    %443 = vector.shape_cast %442 : vector<1x1x14x4xf32> to vector<14x4xf32>
    %c1_808 = arith.constant 1 : index
    %c8_809 = arith.constant 8 : index
    %c2_810 = arith.constant 2 : index
    %c0_811 = arith.constant 0 : index
    %444 = vector.load %arg0[%c1_808, %c8_809, %c2_810, %c0_811] : memref<2x16x16x4xf32, #tpu.memory_space<vmem>>, vector<1x1x14x4xf32>
    %445 = vector.shape_cast %444 : vector<1x1x14x4xf32> to vector<14x4xf32>
    %c1_812 = arith.constant 1 : index
    %c9_813 = arith.constant 9 : index
    %c0_814 = arith.constant 0 : index
    %c0_815 = arith.constant 0 : index
    %446 = vector.load %arg0[%c1_812, %c9_813, %c0_814, %c0_815] : memref<2x16x16x4xf32, #tpu.memory_space<vmem>>, vector<1x1x14x4xf32>
    %447 = vector.shape_cast %446 : vector<1x1x14x4xf32> to vector<14x4xf32>
    %c1_816 = arith.constant 1 : index
    %c9_817 = arith.constant 9 : index
    %c1_818 = arith.constant 1 : index
    %c0_819 = arith.constant 0 : index
    %448 = vector.load %arg0[%c1_816, %c9_817, %c1_818, %c0_819] : memref<2x16x16x4xf32, #tpu.memory_space<vmem>>, vector<1x1x14x4xf32>
    %449 = vector.shape_cast %448 : vector<1x1x14x4xf32> to vector<14x4xf32>
    %c1_820 = arith.constant 1 : index
    %c9_821 = arith.constant 9 : index
    %c2_822 = arith.constant 2 : index
    %c0_823 = arith.constant 0 : index
    %450 = vector.load %arg0[%c1_820, %c9_821, %c2_822, %c0_823] : memref<2x16x16x4xf32, #tpu.memory_space<vmem>>, vector<1x1x14x4xf32>
    %451 = vector.shape_cast %450 : vector<1x1x14x4xf32> to vector<14x4xf32>
    %c1_824 = arith.constant 1 : index
    %c10_825 = arith.constant 10 : index
    %c0_826 = arith.constant 0 : index
    %c0_827 = arith.constant 0 : index
    %452 = vector.load %arg0[%c1_824, %c10_825, %c0_826, %c0_827] : memref<2x16x16x4xf32, #tpu.memory_space<vmem>>, vector<1x1x14x4xf32>
    %453 = vector.shape_cast %452 : vector<1x1x14x4xf32> to vector<14x4xf32>
    %c1_828 = arith.constant 1 : index
    %c10_829 = arith.constant 10 : index
    %c1_830 = arith.constant 1 : index
    %c0_831 = arith.constant 0 : index
    %454 = vector.load %arg0[%c1_828, %c10_829, %c1_830, %c0_831] : memref<2x16x16x4xf32, #tpu.memory_space<vmem>>, vector<1x1x14x4xf32>
    %455 = vector.shape_cast %454 : vector<1x1x14x4xf32> to vector<14x4xf32>
    %c1_832 = arith.constant 1 : index
    %c10_833 = arith.constant 10 : index
    %c2_834 = arith.constant 2 : index
    %c0_835 = arith.constant 0 : index
    %456 = vector.load %arg0[%c1_832, %c10_833, %c2_834, %c0_835] : memref<2x16x16x4xf32, #tpu.memory_space<vmem>>, vector<1x1x14x4xf32>
    %457 = vector.shape_cast %456 : vector<1x1x14x4xf32> to vector<14x4xf32>
    %458 = tpu.concatenate %441, %443, %445, %447, %449, %451, %453, %455, %457 in 1 : vector<14x4xf32>, vector<14x4xf32>, vector<14x4xf32>, vector<14x4xf32>, vector<14x4xf32>, vector<14x4xf32>, vector<14x4xf32>, vector<14x4xf32>, vector<14x4xf32> -> vector<14x36xf32>
    %c308 = arith.constant 308 : index
    %c0_836 = arith.constant 0 : index
    %459 = vector.load %arg10[%c308, %c0_836] : memref<392x36xf32, #tpu.memory_space<vmem>>, vector<14x36xf32>
    tpu.vector_store %arg10[%c308, %c0_836], %458 {strides = array<i32>} : memref<392x36xf32, #tpu.memory_space<vmem>>, vector<14x36xf32>,
    %c1_837 = arith.constant 1 : index
    %c9_838 = arith.constant 9 : index
    %c0_839 = arith.constant 0 : index
    %c0_840 = arith.constant 0 : index
    %460 = vector.load %arg0[%c1_837, %c9_838, %c0_839, %c0_840] : memref<2x16x16x4xf32, #tpu.memory_space<vmem>>, vector<1x1x14x4xf32>
    %461 = vector.shape_cast %460 : vector<1x1x14x4xf32> to vector<14x4xf32>
    %c1_841 = arith.constant 1 : index
    %c9_842 = arith.constant 9 : index
    %c1_843 = arith.constant 1 : index
    %c0_844 = arith.constant 0 : index
    %462 = vector.load %arg0[%c1_841, %c9_842, %c1_843, %c0_844] : memref<2x16x16x4xf32, #tpu.memory_space<vmem>>, vector<1x1x14x4xf32>
    %463 = vector.shape_cast %462 : vector<1x1x14x4xf32> to vector<14x4xf32>
    %c1_845 = arith.constant 1 : index
    %c9_846 = arith.constant 9 : index
    %c2_847 = arith.constant 2 : index
    %c0_848 = arith.constant 0 : index
    %464 = vector.load %arg0[%c1_845, %c9_846, %c2_847, %c0_848] : memref<2x16x16x4xf32, #tpu.memory_space<vmem>>, vector<1x1x14x4xf32>
    %465 = vector.shape_cast %464 : vector<1x1x14x4xf32> to vector<14x4xf32>
    %c1_849 = arith.constant 1 : index
    %c10_850 = arith.constant 10 : index
    %c0_851 = arith.constant 0 : index
    %c0_852 = arith.constant 0 : index
    %466 = vector.load %arg0[%c1_849, %c10_850, %c0_851, %c0_852] : memref<2x16x16x4xf32, #tpu.memory_space<vmem>>, vector<1x1x14x4xf32>
    %467 = vector.shape_cast %466 : vector<1x1x14x4xf32> to vector<14x4xf32>
    %c1_853 = arith.constant 1 : index
    %c10_854 = arith.constant 10 : index
    %c1_855 = arith.constant 1 : index
    %c0_856 = arith.constant 0 : index
    %468 = vector.load %arg0[%c1_853, %c10_854, %c1_855, %c0_856] : memref<2x16x16x4xf32, #tpu.memory_space<vmem>>, vector<1x1x14x4xf32>
    %469 = vector.shape_cast %468 : vector<1x1x14x4xf32> to vector<14x4xf32>
    %c1_857 = arith.constant 1 : index
    %c10_858 = arith.constant 10 : index
    %c2_859 = arith.constant 2 : index
    %c0_860 = arith.constant 0 : index
    %470 = vector.load %arg0[%c1_857, %c10_858, %c2_859, %c0_860] : memref<2x16x16x4xf32, #tpu.memory_space<vmem>>, vector<1x1x14x4xf32>
    %471 = vector.shape_cast %470 : vector<1x1x14x4xf32> to vector<14x4xf32>
    %c1_861 = arith.constant 1 : index
    %c11_862 = arith.constant 11 : index
    %c0_863 = arith.constant 0 : index
    %c0_864 = arith.constant 0 : index
    %472 = vector.load %arg0[%c1_861, %c11_862, %c0_863, %c0_864] : memref<2x16x16x4xf32, #tpu.memory_space<vmem>>, vector<1x1x14x4xf32>
    %473 = vector.shape_cast %472 : vector<1x1x14x4xf32> to vector<14x4xf32>
    %c1_865 = arith.constant 1 : index
    %c11_866 = arith.constant 11 : index
    %c1_867 = arith.constant 1 : index
    %c0_868 = arith.constant 0 : index
    %474 = vector.load %arg0[%c1_865, %c11_866, %c1_867, %c0_868] : memref<2x16x16x4xf32, #tpu.memory_space<vmem>>, vector<1x1x14x4xf32>
    %475 = vector.shape_cast %474 : vector<1x1x14x4xf32> to vector<14x4xf32>
    %c1_869 = arith.constant 1 : index
    %c11_870 = arith.constant 11 : index
    %c2_871 = arith.constant 2 : index
    %c0_872 = arith.constant 0 : index
    %476 = vector.load %arg0[%c1_869, %c11_870, %c2_871, %c0_872] : memref<2x16x16x4xf32, #tpu.memory_space<vmem>>, vector<1x1x14x4xf32>
    %477 = vector.shape_cast %476 : vector<1x1x14x4xf32> to vector<14x4xf32>
    %478 = tpu.concatenate %461, %463, %465, %467, %469, %471, %473, %475, %477 in 1 : vector<14x4xf32>, vector<14x4xf32>, vector<14x4xf32>, vector<14x4xf32>, vector<14x4xf32>, vector<14x4xf32>, vector<14x4xf32>, vector<14x4xf32>, vector<14x4xf32> -> vector<14x36xf32>
    %c322 = arith.constant 322 : index
    %c0_873 = arith.constant 0 : index
    %479 = vector.load %arg10[%c322, %c0_873] : memref<392x36xf32, #tpu.memory_space<vmem>>, vector<14x36xf32>
    tpu.vector_store %arg10[%c322, %c0_873], %478 {strides = array<i32>} : memref<392x36xf32, #tpu.memory_space<vmem>>, vector<14x36xf32>,
    %c1_874 = arith.constant 1 : index
    %c10_875 = arith.constant 10 : index
    %c0_876 = arith.constant 0 : index
    %c0_877 = arith.constant 0 : index
    %480 = vector.load %arg0[%c1_874, %c10_875, %c0_876, %c0_877] : memref<2x16x16x4xf32, #tpu.memory_space<vmem>>, vector<1x1x14x4xf32>
    %481 = vector.shape_cast %480 : vector<1x1x14x4xf32> to vector<14x4xf32>
    %c1_878 = arith.constant 1 : index
    %c10_879 = arith.constant 10 : index
    %c1_880 = arith.constant 1 : index
    %c0_881 = arith.constant 0 : index
    %482 = vector.load %arg0[%c1_878, %c10_879, %c1_880, %c0_881] : memref<2x16x16x4xf32, #tpu.memory_space<vmem>>, vector<1x1x14x4xf32>
    %483 = vector.shape_cast %482 : vector<1x1x14x4xf32> to vector<14x4xf32>
    %c1_882 = arith.constant 1 : index
    %c10_883 = arith.constant 10 : index
    %c2_884 = arith.constant 2 : index
    %c0_885 = arith.constant 0 : index
    %484 = vector.load %arg0[%c1_882, %c10_883, %c2_884, %c0_885] : memref<2x16x16x4xf32, #tpu.memory_space<vmem>>, vector<1x1x14x4xf32>
    %485 = vector.shape_cast %484 : vector<1x1x14x4xf32> to vector<14x4xf32>
    %c1_886 = arith.constant 1 : index
    %c11_887 = arith.constant 11 : index
    %c0_888 = arith.constant 0 : index
    %c0_889 = arith.constant 0 : index
    %486 = vector.load %arg0[%c1_886, %c11_887, %c0_888, %c0_889] : memref<2x16x16x4xf32, #tpu.memory_space<vmem>>, vector<1x1x14x4xf32>
    %487 = vector.shape_cast %486 : vector<1x1x14x4xf32> to vector<14x4xf32>
    %c1_890 = arith.constant 1 : index
    %c11_891 = arith.constant 11 : index
    %c1_892 = arith.constant 1 : index
    %c0_893 = arith.constant 0 : index
    %488 = vector.load %arg0[%c1_890, %c11_891, %c1_892, %c0_893] : memref<2x16x16x4xf32, #tpu.memory_space<vmem>>, vector<1x1x14x4xf32>
    %489 = vector.shape_cast %488 : vector<1x1x14x4xf32> to vector<14x4xf32>
    %c1_894 = arith.constant 1 : index
    %c11_895 = arith.constant 11 : index
    %c2_896 = arith.constant 2 : index
    %c0_897 = arith.constant 0 : index
    %490 = vector.load %arg0[%c1_894, %c11_895, %c2_896, %c0_897] : memref<2x16x16x4xf32, #tpu.memory_space<vmem>>, vector<1x1x14x4xf32>
    %491 = vector.shape_cast %490 : vector<1x1x14x4xf32> to vector<14x4xf32>
    %c1_898 = arith.constant 1 : index
    %c12_899 = arith.constant 12 : index
    %c0_900 = arith.constant 0 : index
    %c0_901 = arith.constant 0 : index
    %492 = vector.load %arg0[%c1_898, %c12_899, %c0_900, %c0_901] : memref<2x16x16x4xf32, #tpu.memory_space<vmem>>, vector<1x1x14x4xf32>
    %493 = vector.shape_cast %492 : vector<1x1x14x4xf32> to vector<14x4xf32>
    %c1_902 = arith.constant 1 : index
    %c12_903 = arith.constant 12 : index
    %c1_904 = arith.constant 1 : index
    %c0_905 = arith.constant 0 : index
    %494 = vector.load %arg0[%c1_902, %c12_903, %c1_904, %c0_905] : memref<2x16x16x4xf32, #tpu.memory_space<vmem>>, vector<1x1x14x4xf32>
    %495 = vector.shape_cast %494 : vector<1x1x14x4xf32> to vector<14x4xf32>
    %c1_906 = arith.constant 1 : index
    %c12_907 = arith.constant 12 : index
    %c2_908 = arith.constant 2 : index
    %c0_909 = arith.constant 0 : index
    %496 = vector.load %arg0[%c1_906, %c12_907, %c2_908, %c0_909] : memref<2x16x16x4xf32, #tpu.memory_space<vmem>>, vector<1x1x14x4xf32>
    %497 = vector.shape_cast %496 : vector<1x1x14x4xf32> to vector<14x4xf32>
    %498 = tpu.concatenate %481, %483, %485, %487, %489, %491, %493, %495, %497 in 1 : vector<14x4xf32>, vector<14x4xf32>, vector<14x4xf32>, vector<14x4xf32>, vector<14x4xf32>, vector<14x4xf32>, vector<14x4xf32>, vector<14x4xf32>, vector<14x4xf32> -> vector<14x36xf32>
    %c336 = arith.constant 336 : index
    %c0_910 = arith.constant 0 : index
    %499 = vector.load %arg10[%c336, %c0_910] : memref<392x36xf32, #tpu.memory_space<vmem>>, vector<14x36xf32>
    tpu.vector_store %arg10[%c336, %c0_910], %498 {strides = array<i32>} : memref<392x36xf32, #tpu.memory_space<vmem>>, vector<14x36xf32>,
    %c1_911 = arith.constant 1 : index
    %c11_912 = arith.constant 11 : index
    %c0_913 = arith.constant 0 : index
    %c0_914 = arith.constant 0 : index
    %500 = vector.load %arg0[%c1_911, %c11_912, %c0_913, %c0_914] : memref<2x16x16x4xf32, #tpu.memory_space<vmem>>, vector<1x1x14x4xf32>
    %501 = vector.shape_cast %500 : vector<1x1x14x4xf32> to vector<14x4xf32>
    %c1_915 = arith.constant 1 : index
    %c11_916 = arith.constant 11 : index
    %c1_917 = arith.constant 1 : index
    %c0_918 = arith.constant 0 : index
    %502 = vector.load %arg0[%c1_915, %c11_916, %c1_917, %c0_918] : memref<2x16x16x4xf32, #tpu.memory_space<vmem>>, vector<1x1x14x4xf32>
    %503 = vector.shape_cast %502 : vector<1x1x14x4xf32> to vector<14x4xf32>
    %c1_919 = arith.constant 1 : index
    %c11_920 = arith.constant 11 : index
    %c2_921 = arith.constant 2 : index
    %c0_922 = arith.constant 0 : index
    %504 = vector.load %arg0[%c1_919, %c11_920, %c2_921, %c0_922] : memref<2x16x16x4xf32, #tpu.memory_space<vmem>>, vector<1x1x14x4xf32>
    %505 = vector.shape_cast %504 : vector<1x1x14x4xf32> to vector<14x4xf32>
    %c1_923 = arith.constant 1 : index
    %c12_924 = arith.constant 12 : index
    %c0_925 = arith.constant 0 : index
    %c0_926 = arith.constant 0 : index
    %506 = vector.load %arg0[%c1_923, %c12_924, %c0_925, %c0_926] : memref<2x16x16x4xf32, #tpu.memory_space<vmem>>, vector<1x1x14x4xf32>
    %507 = vector.shape_cast %506 : vector<1x1x14x4xf32> to vector<14x4xf32>
    %c1_927 = arith.constant 1 : index
    %c12_928 = arith.constant 12 : index
    %c1_929 = arith.constant 1 : index
    %c0_930 = arith.constant 0 : index
    %508 = vector.load %arg0[%c1_927, %c12_928, %c1_929, %c0_930] : memref<2x16x16x4xf32, #tpu.memory_space<vmem>>, vector<1x1x14x4xf32>
    %509 = vector.shape_cast %508 : vector<1x1x14x4xf32> to vector<14x4xf32>
    %c1_931 = arith.constant 1 : index
    %c12_932 = arith.constant 12 : index
    %c2_933 = arith.constant 2 : index
    %c0_934 = arith.constant 0 : index
    %510 = vector.load %arg0[%c1_931, %c12_932, %c2_933, %c0_934] : memref<2x16x16x4xf32, #tpu.memory_space<vmem>>, vector<1x1x14x4xf32>
    %511 = vector.shape_cast %510 : vector<1x1x14x4xf32> to vector<14x4xf32>
    %c1_935 = arith.constant 1 : index
    %c13_936 = arith.constant 13 : index
    %c0_937 = arith.constant 0 : index
    %c0_938 = arith.constant 0 : index
    %512 = vector.load %arg0[%c1_935, %c13_936, %c0_937, %c0_938] : memref<2x16x16x4xf32, #tpu.memory_space<vmem>>, vector<1x1x14x4xf32>
    %513 = vector.shape_cast %512 : vector<1x1x14x4xf32> to vector<14x4xf32>
    %c1_939 = arith.constant 1 : index
    %c13_940 = arith.constant 13 : index
    %c1_941 = arith.constant 1 : index
    %c0_942 = arith.constant 0 : index
    %514 = vector.load %arg0[%c1_939, %c13_940, %c1_941, %c0_942] : memref<2x16x16x4xf32, #tpu.memory_space<vmem>>, vector<1x1x14x4xf32>
    %515 = vector.shape_cast %514 : vector<1x1x14x4xf32> to vector<14x4xf32>
    %c1_943 = arith.constant 1 : index
    %c13_944 = arith.constant 13 : index
    %c2_945 = arith.constant 2 : index
    %c0_946 = arith.constant 0 : index
    %516 = vector.load %arg0[%c1_943, %c13_944, %c2_945, %c0_946] : memref<2x16x16x4xf32, #tpu.memory_space<vmem>>, vector<1x1x14x4xf32>
    %517 = vector.shape_cast %516 : vector<1x1x14x4xf32> to vector<14x4xf32>
    %518 = tpu.concatenate %501, %503, %505, %507, %509, %511, %513, %515, %517 in 1 : vector<14x4xf32>, vector<14x4xf32>, vector<14x4xf32>, vector<14x4xf32>, vector<14x4xf32>, vector<14x4xf32>, vector<14x4xf32>, vector<14x4xf32>, vector<14x4xf32> -> vector<14x36xf32>
    %c350 = arith.constant 350 : index
    %c0_947 = arith.constant 0 : index
    %519 = vector.load %arg10[%c350, %c0_947] : memref<392x36xf32, #tpu.memory_space<vmem>>, vector<14x36xf32>
    tpu.vector_store %arg10[%c350, %c0_947], %518 {strides = array<i32>} : memref<392x36xf32, #tpu.memory_space<vmem>>, vector<14x36xf32>,
    %c1_948 = arith.constant 1 : index
    %c12_949 = arith.constant 12 : index
    %c0_950 = arith.constant 0 : index
    %c0_951 = arith.constant 0 : index
    %520 = vector.load %arg0[%c1_948, %c12_949, %c0_950, %c0_951] : memref<2x16x16x4xf32, #tpu.memory_space<vmem>>, vector<1x1x14x4xf32>
    %521 = vector.shape_cast %520 : vector<1x1x14x4xf32> to vector<14x4xf32>
    %c1_952 = arith.constant 1 : index
    %c12_953 = arith.constant 12 : index
    %c1_954 = arith.constant 1 : index
    %c0_955 = arith.constant 0 : index
    %522 = vector.load %arg0[%c1_952, %c12_953, %c1_954, %c0_955] : memref<2x16x16x4xf32, #tpu.memory_space<vmem>>, vector<1x1x14x4xf32>
    %523 = vector.shape_cast %522 : vector<1x1x14x4xf32> to vector<14x4xf32>
    %c1_956 = arith.constant 1 : index
    %c12_957 = arith.constant 12 : index
    %c2_958 = arith.constant 2 : index
    %c0_959 = arith.constant 0 : index
    %524 = vector.load %arg0[%c1_956, %c12_957, %c2_958, %c0_959] : memref<2x16x16x4xf32, #tpu.memory_space<vmem>>, vector<1x1x14x4xf32>
    %525 = vector.shape_cast %524 : vector<1x1x14x4xf32> to vector<14x4xf32>
    %c1_960 = arith.constant 1 : index
    %c13_961 = arith.constant 13 : index
    %c0_962 = arith.constant 0 : index
    %c0_963 = arith.constant 0 : index
    %526 = vector.load %arg0[%c1_960, %c13_961, %c0_962, %c0_963] : memref<2x16x16x4xf32, #tpu.memory_space<vmem>>, vector<1x1x14x4xf32>
    %527 = vector.shape_cast %526 : vector<1x1x14x4xf32> to vector<14x4xf32>
    %c1_964 = arith.constant 1 : index
    %c13_965 = arith.constant 13 : index
    %c1_966 = arith.constant 1 : index
    %c0_967 = arith.constant 0 : index
    %528 = vector.load %arg0[%c1_964, %c13_965, %c1_966, %c0_967] : memref<2x16x16x4xf32, #tpu.memory_space<vmem>>, vector<1x1x14x4xf32>
    %529 = vector.shape_cast %528 : vector<1x1x14x4xf32> to vector<14x4xf32>
    %c1_968 = arith.constant 1 : index
    %c13_969 = arith.constant 13 : index
    %c2_970 = arith.constant 2 : index
    %c0_971 = arith.constant 0 : index
    %530 = vector.load %arg0[%c1_968, %c13_969, %c2_970, %c0_971] : memref<2x16x16x4xf32, #tpu.memory_space<vmem>>, vector<1x1x14x4xf32>
    %531 = vector.shape_cast %530 : vector<1x1x14x4xf32> to vector<14x4xf32>
    %c1_972 = arith.constant 1 : index
    %c14_973 = arith.constant 14 : index
    %c0_974 = arith.constant 0 : index
    %c0_975 = arith.constant 0 : index
    %532 = vector.load %arg0[%c1_972, %c14_973, %c0_974, %c0_975] : memref<2x16x16x4xf32, #tpu.memory_space<vmem>>, vector<1x1x14x4xf32>
    %533 = vector.shape_cast %532 : vector<1x1x14x4xf32> to vector<14x4xf32>
    %c1_976 = arith.constant 1 : index
    %c14_977 = arith.constant 14 : index
    %c1_978 = arith.constant 1 : index
    %c0_979 = arith.constant 0 : index
    %534 = vector.load %arg0[%c1_976, %c14_977, %c1_978, %c0_979] : memref<2x16x16x4xf32, #tpu.memory_space<vmem>>, vector<1x1x14x4xf32>
    %535 = vector.shape_cast %534 : vector<1x1x14x4xf32> to vector<14x4xf32>
    %c1_980 = arith.constant 1 : index
    %c14_981 = arith.constant 14 : index
    %c2_982 = arith.constant 2 : index
    %c0_983 = arith.constant 0 : index
    %536 = vector.load %arg0[%c1_980, %c14_981, %c2_982, %c0_983] : memref<2x16x16x4xf32, #tpu.memory_space<vmem>>, vector<1x1x14x4xf32>
    %537 = vector.shape_cast %536 : vector<1x1x14x4xf32> to vector<14x4xf32>
    %538 = tpu.concatenate %521, %523, %525, %527, %529, %531, %533, %535, %537 in 1 : vector<14x4xf32>, vector<14x4xf32>, vector<14x4xf32>, vector<14x4xf32>, vector<14x4xf32>, vector<14x4xf32>, vector<14x4xf32>, vector<14x4xf32>, vector<14x4xf32> -> vector<14x36xf32>
    %c364 = arith.constant 364 : index
    %c0_984 = arith.constant 0 : index
    %539 = vector.load %arg10[%c364, %c0_984] : memref<392x36xf32, #tpu.memory_space<vmem>>, vector<14x36xf32>
    tpu.vector_store %arg10[%c364, %c0_984], %538 {strides = array<i32>} : memref<392x36xf32, #tpu.memory_space<vmem>>, vector<14x36xf32>,
    %c1_985 = arith.constant 1 : index
    %c13_986 = arith.constant 13 : index
    %c0_987 = arith.constant 0 : index
    %c0_988 = arith.constant 0 : index
    %540 = vector.load %arg0[%c1_985, %c13_986, %c0_987, %c0_988] : memref<2x16x16x4xf32, #tpu.memory_space<vmem>>, vector<1x1x14x4xf32>
    %541 = vector.shape_cast %540 : vector<1x1x14x4xf32> to vector<14x4xf32>
    %c1_989 = arith.constant 1 : index
    %c13_990 = arith.constant 13 : index
    %c1_991 = arith.constant 1 : index
    %c0_992 = arith.constant 0 : index
    %542 = vector.load %arg0[%c1_989, %c13_990, %c1_991, %c0_992] : memref<2x16x16x4xf32, #tpu.memory_space<vmem>>, vector<1x1x14x4xf32>
    %543 = vector.shape_cast %542 : vector<1x1x14x4xf32> to vector<14x4xf32>
    %c1_993 = arith.constant 1 : index
    %c13_994 = arith.constant 13 : index
    %c2_995 = arith.constant 2 : index
    %c0_996 = arith.constant 0 : index
    %544 = vector.load %arg0[%c1_993, %c13_994, %c2_995, %c0_996] : memref<2x16x16x4xf32, #tpu.memory_space<vmem>>, vector<1x1x14x4xf32>
    %545 = vector.shape_cast %544 : vector<1x1x14x4xf32> to vector<14x4xf32>
    %c1_997 = arith.constant 1 : index
    %c14_998 = arith.constant 14 : index
    %c0_999 = arith.constant 0 : index
    %c0_1000 = arith.constant 0 : index
    %546 = vector.load %arg0[%c1_997, %c14_998, %c0_999, %c0_1000] : memref<2x16x16x4xf32, #tpu.memory_space<vmem>>, vector<1x1x14x4xf32>
    %547 = vector.shape_cast %546 : vector<1x1x14x4xf32> to vector<14x4xf32>
    %c1_1001 = arith.constant 1 : index
    %c14_1002 = arith.constant 14 : index
    %c1_1003 = arith.constant 1 : index
    %c0_1004 = arith.constant 0 : index
    %548 = vector.load %arg0[%c1_1001, %c14_1002, %c1_1003, %c0_1004] : memref<2x16x16x4xf32, #tpu.memory_space<vmem>>, vector<1x1x14x4xf32>
    %549 = vector.shape_cast %548 : vector<1x1x14x4xf32> to vector<14x4xf32>
    %c1_1005 = arith.constant 1 : index
    %c14_1006 = arith.constant 14 : index
    %c2_1007 = arith.constant 2 : index
    %c0_1008 = arith.constant 0 : index
    %550 = vector.load %arg0[%c1_1005, %c14_1006, %c2_1007, %c0_1008] : memref<2x16x16x4xf32, #tpu.memory_space<vmem>>, vector<1x1x14x4xf32>
    %551 = vector.shape_cast %550 : vector<1x1x14x4xf32> to vector<14x4xf32>
    %c1_1009 = arith.constant 1 : index
    %c15_1010 = arith.constant 15 : index
    %c0_1011 = arith.constant 0 : index
    %c0_1012 = arith.constant 0 : index
    %552 = vector.load %arg0[%c1_1009, %c15_1010, %c0_1011, %c0_1012] : memref<2x16x16x4xf32, #tpu.memory_space<vmem>>, vector<1x1x14x4xf32>
    %553 = vector.shape_cast %552 : vector<1x1x14x4xf32> to vector<14x4xf32>
    %c1_1013 = arith.constant 1 : index
    %c15_1014 = arith.constant 15 : index
    %c1_1015 = arith.constant 1 : index
    %c0_1016 = arith.constant 0 : index
    %554 = vector.load %arg0[%c1_1013, %c15_1014, %c1_1015, %c0_1016] : memref<2x16x16x4xf32, #tpu.memory_space<vmem>>, vector<1x1x14x4xf32>
    %555 = vector.shape_cast %554 : vector<1x1x14x4xf32> to vector<14x4xf32>
    %c1_1017 = arith.constant 1 : index
    %c15_1018 = arith.constant 15 : index
    %c2_1019 = arith.constant 2 : index
    %c0_1020 = arith.constant 0 : index
    %556 = vector.load %arg0[%c1_1017, %c15_1018, %c2_1019, %c0_1020] : memref<2x16x16x4xf32, #tpu.memory_space<vmem>>, vector<1x1x14x4xf32>
    %557 = vector.shape_cast %556 : vector<1x1x14x4xf32> to vector<14x4xf32>
    %558 = tpu.concatenate %541, %543, %545, %547, %549, %551, %553, %555, %557 in 1 : vector<14x4xf32>, vector<14x4xf32>, vector<14x4xf32>, vector<14x4xf32>, vector<14x4xf32>, vector<14x4xf32>, vector<14x4xf32>, vector<14x4xf32>, vector<14x4xf32> -> vector<14x36xf32>
    %c378 = arith.constant 378 : index
    %c0_1021 = arith.constant 0 : index
    %559 = vector.load %arg10[%c378, %c0_1021] : memref<392x36xf32, #tpu.memory_space<vmem>>, vector<14x36xf32>
    tpu.vector_store %arg10[%c378, %c0_1021], %558 {strides = array<i32>} : memref<392x36xf32, #tpu.memory_space<vmem>>, vector<14x36xf32>,
    %c0_1022 = arith.constant 0 : index
    %c0_1023 = arith.constant 0 : index
    %560 = vector.load %arg10[%c0_1022, %c0_1023] : memref<392x36xf32, #tpu.memory_space<vmem>>, vector<392x36xf32>
    %c0_1024 = arith.constant 0 : index
    %c0_1025 = arith.constant 0 : index
    %561 = vector.load %arg1[%c0_1024, %c0_1025] : memref<36x8xf32, #tpu.memory_space<vmem>>, vector<36x8xf32>
    %cst = arith.constant dense<0.000000e+00> : vector<392x8xf32>
    %562 = tpu.matmul %560, %561, %cst {dimension_numbers = #tpu.dot_dimension_numbers<[1], [0], [0], [1], [0, 0, 1, 1], [], []>} : vector<392x36xf32>, vector<36x8xf32>, vector<392x8xf32> -> vector<392x8xf32>
    %c0_1026 = arith.constant 0 : index
    %c0_1027 = arith.constant 0 : index
    %563 = vector.load %arg2[%c0_1026, %c0_1027] : memref<1x8xf32, #tpu.memory_space<vmem>>, vector<1x8xf32>
    %c0_1028 = arith.constant 0 : index
    %c0_1029 = arith.constant 0 : index
    %564 = vector.load %arg3[%c0_1028, %c0_1029] : memref<1x8xf32, #tpu.memory_space<vmem>>, vector<1x8xf32>
    %cst_1030 = arith.constant dense<0.000000e+00> : vector<8xf32>
    %565 = vector.multi_reduction <add>, %562, %cst_1030 [0] : vector<392x8xf32> to vector<8xf32>
    %566 = vector.shape_cast %565 : vector<8xf32> to vector<1x8xf32>
    %cst_1031 = arith.constant 0.00255102036 : f32
    %567 = vector.broadcast %cst_1031 : f32 to vector<1x8xf32>
    %568 = arith.mulf %566, %567 : vector<1x8xf32>
    %569 = arith.mulf %562, %562 : vector<392x8xf32>
    %cst_1032 = arith.constant dense<0.000000e+00> : vector<8xf32>
    %570 = vector.multi_reduction <add>, %569, %cst_1032 [0] : vector<392x8xf32> to vector<8xf32>
    %571 = vector.shape_cast %570 : vector<8xf32> to vector<1x8xf32>
    %cst_1033 = arith.constant 0.00255102036 : f32
    %572 = vector.broadcast %cst_1033 : f32 to vector<1x8xf32>
    %573 = arith.mulf %571, %572 : vector<1x8xf32>
    %574 = arith.mulf %568, %568 : vector<1x8xf32>
    %575 = arith.subf %573, %574 : vector<1x8xf32>
    %576 = vector.broadcast %568 : vector<1x8xf32> to vector<392x8xf32>
    %577 = arith.subf %562, %576 : vector<392x8xf32>
    %cst_1034 = arith.constant 9.99999974E-6 : f32
    %578 = vector.broadcast %cst_1034 : f32 to vector<1x8xf32>
    %579 = arith.addf %575, %578 : vector<1x8xf32>
    %580 = math.rsqrt %579 : vector<1x8xf32>
    %581 = vector.broadcast %580 : vector<1x8xf32> to vector<392x8xf32>
    %582 = arith.mulf %577, %581 : vector<392x8xf32>
    %583 = vector.broadcast %563 : vector<1x8xf32> to vector<392x8xf32>
    %584 = arith.mulf %582, %583 : vector<392x8xf32>
    %585 = vector.broadcast %564 : vector<1x8xf32> to vector<392x8xf32>
    %586 = arith.addf %584, %585 : vector<392x8xf32>
    %cst_1035 = arith.constant 0.000000e+00 : f32
    %587 = vector.broadcast %cst_1035 : f32 to vector<392x8xf32>
    %588 = arith.maximumf %586, %587 : vector<392x8xf32>
    %c0_1036 = arith.constant 0 : index
    %c0_1037 = arith.constant 0 : index
    %589 = vector.load %arg11[%c0_1036, %c0_1037] : memref<392x8xf32, #tpu.memory_space<vmem>>, vector<392x8xf32>
    tpu.vector_store %arg11[%c0_1036, %c0_1037], %588 {strides = array<i32>} : memref<392x8xf32, #tpu.memory_space<vmem>>, vector<392x8xf32>,
    %c0_1038 = arith.constant 0 : index
    %c0_1039 = arith.constant 0 : index
    %590 = vector.load %arg11[%c0_1038, %c0_1039] : memref<392x8xf32, #tpu.memory_space<vmem>>, vector<12x8xf32>
    %c1_1040 = arith.constant 1 : index
    %c0_1041 = arith.constant 0 : index
    %591 = vector.load %arg11[%c1_1040, %c0_1041] : memref<392x8xf32, #tpu.memory_space<vmem>>, vector<12x8xf32>
    %c2_1042 = arith.constant 2 : index
    %c0_1043 = arith.constant 0 : index
    %592 = vector.load %arg11[%c2_1042, %c0_1043] : memref<392x8xf32, #tpu.memory_space<vmem>>, vector<12x8xf32>
    %c14_1044 = arith.constant 14 : index
    %c0_1045 = arith.constant 0 : index
    %593 = vector.load %arg11[%c14_1044, %c0_1045] : memref<392x8xf32, #tpu.memory_space<vmem>>, vector<12x8xf32>
    %c15_1046 = arith.constant 15 : index
    %c0_1047 = arith.constant 0 : index
    %594 = vector.load %arg11[%c15_1046, %c0_1047] : memref<392x8xf32, #tpu.memory_space<vmem>>, vector<12x8xf32>
    %c16 = arith.constant 16 : index
    %c0_1048 = arith.constant 0 : index
    %595 = vector.load %arg11[%c16, %c0_1048] : memref<392x8xf32, #tpu.memory_space<vmem>>, vector<12x8xf32>
    %c28_1049 = arith.constant 28 : index
    %c0_1050 = arith.constant 0 : index
    %596 = vector.load %arg11[%c28_1049, %c0_1050] : memref<392x8xf32, #tpu.memory_space<vmem>>, vector<12x8xf32>
    %c29 = arith.constant 29 : index
    %c0_1051 = arith.constant 0 : index
    %597 = vector.load %arg11[%c29, %c0_1051] : memref<392x8xf32, #tpu.memory_space<vmem>>, vector<12x8xf32>
    %c30 = arith.constant 30 : index
    %c0_1052 = arith.constant 0 : index
    %598 = vector.load %arg11[%c30, %c0_1052] : memref<392x8xf32, #tpu.memory_space<vmem>>, vector<12x8xf32>
    %599 = tpu.concatenate %590, %591, %592, %593, %594, %595, %596, %597, %598 in 1 : vector<12x8xf32>, vector<12x8xf32>, vector<12x8xf32>, vector<12x8xf32>, vector<12x8xf32>, vector<12x8xf32>, vector<12x8xf32>, vector<12x8xf32>, vector<12x8xf32> -> vector<12x72xf32>
    %c0_1053 = arith.constant 0 : index
    %c0_1054 = arith.constant 0 : index
    %600 = vector.load %arg12[%c0_1053, %c0_1054] : memref<288x72xf32, #tpu.memory_space<vmem>>, vector<12x72xf32>
    tpu.vector_store %arg12[%c0_1053, %c0_1054], %599 {strides = array<i32>} : memref<288x72xf32, #tpu.memory_space<vmem>>, vector<12x72xf32>,
    %c14_1055 = arith.constant 14 : index
    %c0_1056 = arith.constant 0 : index
    %601 = vector.load %arg11[%c14_1055, %c0_1056] : memref<392x8xf32, #tpu.memory_space<vmem>>, vector<12x8xf32>
    %c15_1057 = arith.constant 15 : index
    %c0_1058 = arith.constant 0 : index
    %602 = vector.load %arg11[%c15_1057, %c0_1058] : memref<392x8xf32, #tpu.memory_space<vmem>>, vector<12x8xf32>
    %c16_1059 = arith.constant 16 : index
    %c0_1060 = arith.constant 0 : index
    %603 = vector.load %arg11[%c16_1059, %c0_1060] : memref<392x8xf32, #tpu.memory_space<vmem>>, vector<12x8xf32>
    %c28_1061 = arith.constant 28 : index
    %c0_1062 = arith.constant 0 : index
    %604 = vector.load %arg11[%c28_1061, %c0_1062] : memref<392x8xf32, #tpu.memory_space<vmem>>, vector<12x8xf32>
    %c29_1063 = arith.constant 29 : index
    %c0_1064 = arith.constant 0 : index
    %605 = vector.load %arg11[%c29_1063, %c0_1064] : memref<392x8xf32, #tpu.memory_space<vmem>>, vector<12x8xf32>
    %c30_1065 = arith.constant 30 : index
    %c0_1066 = arith.constant 0 : index
    %606 = vector.load %arg11[%c30_1065, %c0_1066] : memref<392x8xf32, #tpu.memory_space<vmem>>, vector<12x8xf32>
    %c42_1067 = arith.constant 42 : index
    %c0_1068 = arith.constant 0 : index
    %607 = vector.load %arg11[%c42_1067, %c0_1068] : memref<392x8xf32, #tpu.memory_space<vmem>>, vector<12x8xf32>
    %c43 = arith.constant 43 : index
    %c0_1069 = arith.constant 0 : index
    %608 = vector.load %arg11[%c43, %c0_1069] : memref<392x8xf32, #tpu.memory_space<vmem>>, vector<12x8xf32>
    %c44 = arith.constant 44 : index
    %c0_1070 = arith.constant 0 : index
    %609 = vector.load %arg11[%c44, %c0_1070] : memref<392x8xf32, #tpu.memory_space<vmem>>, vector<12x8xf32>
    %610 = tpu.concatenate %601, %602, %603, %604, %605, %606, %607, %608, %609 in 1 : vector<12x8xf32>, vector<12x8xf32>, vector<12x8xf32>, vector<12x8xf32>, vector<12x8xf32>, vector<12x8xf32>, vector<12x8xf32>, vector<12x8xf32>, vector<12x8xf32> -> vector<12x72xf32>
    %c12_1071 = arith.constant 12 : index
    %c0_1072 = arith.constant 0 : index
    %611 = vector.load %arg12[%c12_1071, %c0_1072] : memref<288x72xf32, #tpu.memory_space<vmem>>, vector<12x72xf32>
    tpu.vector_store %arg12[%c12_1071, %c0_1072], %610 {strides = array<i32>} : memref<288x72xf32, #tpu.memory_space<vmem>>, vector<12x72xf32>,
    %c28_1073 = arith.constant 28 : index
    %c0_1074 = arith.constant 0 : index
    %612 = vector.load %arg11[%c28_1073, %c0_1074] : memref<392x8xf32, #tpu.memory_space<vmem>>, vector<12x8xf32>
    %c29_1075 = arith.constant 29 : index
    %c0_1076 = arith.constant 0 : index
    %613 = vector.load %arg11[%c29_1075, %c0_1076] : memref<392x8xf32, #tpu.memory_space<vmem>>, vector<12x8xf32>
    %c30_1077 = arith.constant 30 : index
    %c0_1078 = arith.constant 0 : index
    %614 = vector.load %arg11[%c30_1077, %c0_1078] : memref<392x8xf32, #tpu.memory_space<vmem>>, vector<12x8xf32>
    %c42_1079 = arith.constant 42 : index
    %c0_1080 = arith.constant 0 : index
    %615 = vector.load %arg11[%c42_1079, %c0_1080] : memref<392x8xf32, #tpu.memory_space<vmem>>, vector<12x8xf32>
    %c43_1081 = arith.constant 43 : index
    %c0_1082 = arith.constant 0 : index
    %616 = vector.load %arg11[%c43_1081, %c0_1082] : memref<392x8xf32, #tpu.memory_space<vmem>>, vector<12x8xf32>
    %c44_1083 = arith.constant 44 : index
    %c0_1084 = arith.constant 0 : index
    %617 = vector.load %arg11[%c44_1083, %c0_1084] : memref<392x8xf32, #tpu.memory_space<vmem>>, vector<12x8xf32>
    %c56_1085 = arith.constant 56 : index
    %c0_1086 = arith.constant 0 : index
    %618 = vector.load %arg11[%c56_1085, %c0_1086] : memref<392x8xf32, #tpu.memory_space<vmem>>, vector<12x8xf32>
    %c57 = arith.constant 57 : index
    %c0_1087 = arith.constant 0 : index
    %619 = vector.load %arg11[%c57, %c0_1087] : memref<392x8xf32, #tpu.memory_space<vmem>>, vector<12x8xf32>
    %c58 = arith.constant 58 : index
    %c0_1088 = arith.constant 0 : index
    %620 = vector.load %arg11[%c58, %c0_1088] : memref<392x8xf32, #tpu.memory_space<vmem>>, vector<12x8xf32>
    %621 = tpu.concatenate %612, %613, %614, %615, %616, %617, %618, %619, %620 in 1 : vector<12x8xf32>, vector<12x8xf32>, vector<12x8xf32>, vector<12x8xf32>, vector<12x8xf32>, vector<12x8xf32>, vector<12x8xf32>, vector<12x8xf32>, vector<12x8xf32> -> vector<12x72xf32>
    %c24 = arith.constant 24 : index
    %c0_1089 = arith.constant 0 : index
    %622 = vector.load %arg12[%c24, %c0_1089] : memref<288x72xf32, #tpu.memory_space<vmem>>, vector<12x72xf32>
    tpu.vector_store %arg12[%c24, %c0_1089], %621 {strides = array<i32>} : memref<288x72xf32, #tpu.memory_space<vmem>>, vector<12x72xf32>,
    %c42_1090 = arith.constant 42 : index
    %c0_1091 = arith.constant 0 : index
    %623 = vector.load %arg11[%c42_1090, %c0_1091] : memref<392x8xf32, #tpu.memory_space<vmem>>, vector<12x8xf32>
    %c43_1092 = arith.constant 43 : index
    %c0_1093 = arith.constant 0 : index
    %624 = vector.load %arg11[%c43_1092, %c0_1093] : memref<392x8xf32, #tpu.memory_space<vmem>>, vector<12x8xf32>
    %c44_1094 = arith.constant 44 : index
    %c0_1095 = arith.constant 0 : index
    %625 = vector.load %arg11[%c44_1094, %c0_1095] : memref<392x8xf32, #tpu.memory_space<vmem>>, vector<12x8xf32>
    %c56_1096 = arith.constant 56 : index
    %c0_1097 = arith.constant 0 : index
    %626 = vector.load %arg11[%c56_1096, %c0_1097] : memref<392x8xf32, #tpu.memory_space<vmem>>, vector<12x8xf32>
    %c57_1098 = arith.constant 57 : index
    %c0_1099 = arith.constant 0 : index
    %627 = vector.load %arg11[%c57_1098, %c0_1099] : memref<392x8xf32, #tpu.memory_space<vmem>>, vector<12x8xf32>
    %c58_1100 = arith.constant 58 : index
    %c0_1101 = arith.constant 0 : index
    %628 = vector.load %arg11[%c58_1100, %c0_1101] : memref<392x8xf32, #tpu.memory_space<vmem>>, vector<12x8xf32>
    %c70_1102 = arith.constant 70 : index
    %c0_1103 = arith.constant 0 : index
    %629 = vector.load %arg11[%c70_1102, %c0_1103] : memref<392x8xf32, #tpu.memory_space<vmem>>, vector<12x8xf32>
    %c71 = arith.constant 71 : index
    %c0_1104 = arith.constant 0 : index
    %630 = vector.load %arg11[%c71, %c0_1104] : memref<392x8xf32, #tpu.memory_space<vmem>>, vector<12x8xf32>
    %c72 = arith.constant 72 : index
    %c0_1105 = arith.constant 0 : index
    %631 = vector.load %arg11[%c72, %c0_1105] : memref<392x8xf32, #tpu.memory_space<vmem>>, vector<12x8xf32>
    %632 = tpu.concatenate %623, %624, %625, %626, %627, %628, %629, %630, %631 in 1 : vector<12x8xf32>, vector<12x8xf32>, vector<12x8xf32>, vector<12x8xf32>, vector<12x8xf32>, vector<12x8xf32>, vector<12x8xf32>, vector<12x8xf32>, vector<12x8xf32> -> vector<12x72xf32>
    %c36 = arith.constant 36 : index
    %c0_1106 = arith.constant 0 : index
    %633 = vector.load %arg12[%c36, %c0_1106] : memref<288x72xf32, #tpu.memory_space<vmem>>, vector<12x72xf32>
    tpu.vector_store %arg12[%c36, %c0_1106], %632 {strides = array<i32>} : memref<288x72xf32, #tpu.memory_space<vmem>>, vector<12x72xf32>,
    %c56_1107 = arith.constant 56 : index
    %c0_1108 = arith.constant 0 : index
    %634 = vector.load %arg11[%c56_1107, %c0_1108] : memref<392x8xf32, #tpu.memory_space<vmem>>, vector<12x8xf32>
    %c57_1109 = arith.constant 57 : index
    %c0_1110 = arith.constant 0 : index
    %635 = vector.load %arg11[%c57_1109, %c0_1110] : memref<392x8xf32, #tpu.memory_space<vmem>>, vector<12x8xf32>
    %c58_1111 = arith.constant 58 : index
    %c0_1112 = arith.constant 0 : index
    %636 = vector.load %arg11[%c58_1111, %c0_1112] : memref<392x8xf32, #tpu.memory_space<vmem>>, vector<12x8xf32>
    %c70_1113 = arith.constant 70 : index
    %c0_1114 = arith.constant 0 : index
    %637 = vector.load %arg11[%c70_1113, %c0_1114] : memref<392x8xf32, #tpu.memory_space<vmem>>, vector<12x8xf32>
    %c71_1115 = arith.constant 71 : index
    %c0_1116 = arith.constant 0 : index
    %638 = vector.load %arg11[%c71_1115, %c0_1116] : memref<392x8xf32, #tpu.memory_space<vmem>>, vector<12x8xf32>
    %c72_1117 = arith.constant 72 : index
    %c0_1118 = arith.constant 0 : index
    %639 = vector.load %arg11[%c72_1117, %c0_1118] : memref<392x8xf32, #tpu.memory_space<vmem>>, vector<12x8xf32>
    %c84_1119 = arith.constant 84 : index
    %c0_1120 = arith.constant 0 : index
    %640 = vector.load %arg11[%c84_1119, %c0_1120] : memref<392x8xf32, #tpu.memory_space<vmem>>, vector<12x8xf32>
    %c85 = arith.constant 85 : index
    %c0_1121 = arith.constant 0 : index
    %641 = vector.load %arg11[%c85, %c0_1121] : memref<392x8xf32, #tpu.memory_space<vmem>>, vector<12x8xf32>
    %c86 = arith.constant 86 : index
    %c0_1122 = arith.constant 0 : index
    %642 = vector.load %arg11[%c86, %c0_1122] : memref<392x8xf32, #tpu.memory_space<vmem>>, vector<12x8xf32>
    %643 = tpu.concatenate %634, %635, %636, %637, %638, %639, %640, %641, %642 in 1 : vector<12x8xf32>, vector<12x8xf32>, vector<12x8xf32>, vector<12x8xf32>, vector<12x8xf32>, vector<12x8xf32>, vector<12x8xf32>, vector<12x8xf32>, vector<12x8xf32> -> vector<12x72xf32>
    %c48 = arith.constant 48 : index
    %c0_1123 = arith.constant 0 : index
    %644 = vector.load %arg12[%c48, %c0_1123] : memref<288x72xf32, #tpu.memory_space<vmem>>, vector<12x72xf32>
    tpu.vector_store %arg12[%c48, %c0_1123], %643 {strides = array<i32>} : memref<288x72xf32, #tpu.memory_space<vmem>>, vector<12x72xf32>,
    %c70_1124 = arith.constant 70 : index
    %c0_1125 = arith.constant 0 : index
    %645 = vector.load %arg11[%c70_1124, %c0_1125] : memref<392x8xf32, #tpu.memory_space<vmem>>, vector<12x8xf32>
    %c71_1126 = arith.constant 71 : index
    %c0_1127 = arith.constant 0 : index
    %646 = vector.load %arg11[%c71_1126, %c0_1127] : memref<392x8xf32, #tpu.memory_space<vmem>>, vector<12x8xf32>
    %c72_1128 = arith.constant 72 : index
    %c0_1129 = arith.constant 0 : index
    %647 = vector.load %arg11[%c72_1128, %c0_1129] : memref<392x8xf32, #tpu.memory_space<vmem>>, vector<12x8xf32>
    %c84_1130 = arith.constant 84 : index
    %c0_1131 = arith.constant 0 : index
    %648 = vector.load %arg11[%c84_1130, %c0_1131] : memref<392x8xf32, #tpu.memory_space<vmem>>, vector<12x8xf32>
    %c85_1132 = arith.constant 85 : index
    %c0_1133 = arith.constant 0 : index
    %649 = vector.load %arg11[%c85_1132, %c0_1133] : memref<392x8xf32, #tpu.memory_space<vmem>>, vector<12x8xf32>
    %c86_1134 = arith.constant 86 : index
    %c0_1135 = arith.constant 0 : index
    %650 = vector.load %arg11[%c86_1134, %c0_1135] : memref<392x8xf32, #tpu.memory_space<vmem>>, vector<12x8xf32>
    %c98_1136 = arith.constant 98 : index
    %c0_1137 = arith.constant 0 : index
    %651 = vector.load %arg11[%c98_1136, %c0_1137] : memref<392x8xf32, #tpu.memory_space<vmem>>, vector<12x8xf32>
    %c99 = arith.constant 99 : index
    %c0_1138 = arith.constant 0 : index
    %652 = vector.load %arg11[%c99, %c0_1138] : memref<392x8xf32, #tpu.memory_space<vmem>>, vector<12x8xf32>
    %c100 = arith.constant 100 : index
    %c0_1139 = arith.constant 0 : index
    %653 = vector.load %arg11[%c100, %c0_1139] : memref<392x8xf32, #tpu.memory_space<vmem>>, vector<12x8xf32>
    %654 = tpu.concatenate %645, %646, %647, %648, %649, %650, %651, %652, %653 in 1 : vector<12x8xf32>, vector<12x8xf32>, vector<12x8xf32>, vector<12x8xf32>, vector<12x8xf32>, vector<12x8xf32>, vector<12x8xf32>, vector<12x8xf32>, vector<12x8xf32> -> vector<12x72xf32>
    %c60 = arith.constant 60 : index
    %c0_1140 = arith.constant 0 : index
    %655 = vector.load %arg12[%c60, %c0_1140] : memref<288x72xf32, #tpu.memory_space<vmem>>, vector<12x72xf32>
    tpu.vector_store %arg12[%c60, %c0_1140], %654 {strides = array<i32>} : memref<288x72xf32, #tpu.memory_space<vmem>>, vector<12x72xf32>,
    %c84_1141 = arith.constant 84 : index
    %c0_1142 = arith.constant 0 : index
    %656 = vector.load %arg11[%c84_1141, %c0_1142] : memref<392x8xf32, #tpu.memory_space<vmem>>, vector<12x8xf32>
    %c85_1143 = arith.constant 85 : index
    %c0_1144 = arith.constant 0 : index
    %657 = vector.load %arg11[%c85_1143, %c0_1144] : memref<392x8xf32, #tpu.memory_space<vmem>>, vector<12x8xf32>
    %c86_1145 = arith.constant 86 : index
    %c0_1146 = arith.constant 0 : index
    %658 = vector.load %arg11[%c86_1145, %c0_1146] : memref<392x8xf32, #tpu.memory_space<vmem>>, vector<12x8xf32>
    %c98_1147 = arith.constant 98 : index
    %c0_1148 = arith.constant 0 : index
    %659 = vector.load %arg11[%c98_1147, %c0_1148] : memref<392x8xf32, #tpu.memory_space<vmem>>, vector<12x8xf32>
    %c99_1149 = arith.constant 99 : index
    %c0_1150 = arith.constant 0 : index
    %660 = vector.load %arg11[%c99_1149, %c0_1150] : memref<392x8xf32, #tpu.memory_space<vmem>>, vector<12x8xf32>
    %c100_1151 = arith.constant 100 : index
    %c0_1152 = arith.constant 0 : index
    %661 = vector.load %arg11[%c100_1151, %c0_1152] : memref<392x8xf32, #tpu.memory_space<vmem>>, vector<12x8xf32>
    %c112_1153 = arith.constant 112 : index
    %c0_1154 = arith.constant 0 : index
    %662 = vector.load %arg11[%c112_1153, %c0_1154] : memref<392x8xf32, #tpu.memory_space<vmem>>, vector<12x8xf32>
    %c113 = arith.constant 113 : index
    %c0_1155 = arith.constant 0 : index
    %663 = vector.load %arg11[%c113, %c0_1155] : memref<392x8xf32, #tpu.memory_space<vmem>>, vector<12x8xf32>
    %c114 = arith.constant 114 : index
    %c0_1156 = arith.constant 0 : index
    %664 = vector.load %arg11[%c114, %c0_1156] : memref<392x8xf32, #tpu.memory_space<vmem>>, vector<12x8xf32>
    %665 = tpu.concatenate %656, %657, %658, %659, %660, %661, %662, %663, %664 in 1 : vector<12x8xf32>, vector<12x8xf32>, vector<12x8xf32>, vector<12x8xf32>, vector<12x8xf32>, vector<12x8xf32>, vector<12x8xf32>, vector<12x8xf32>, vector<12x8xf32> -> vector<12x72xf32>
    %c72_1157 = arith.constant 72 : index
    %c0_1158 = arith.constant 0 : index
    %666 = vector.load %arg12[%c72_1157, %c0_1158] : memref<288x72xf32, #tpu.memory_space<vmem>>, vector<12x72xf32>
    tpu.vector_store %arg12[%c72_1157, %c0_1158], %665 {strides = array<i32>} : memref<288x72xf32, #tpu.memory_space<vmem>>, vector<12x72xf32>,
    %c98_1159 = arith.constant 98 : index
    %c0_1160 = arith.constant 0 : index
    %667 = vector.load %arg11[%c98_1159, %c0_1160] : memref<392x8xf32, #tpu.memory_space<vmem>>, vector<12x8xf32>
    %c99_1161 = arith.constant 99 : index
    %c0_1162 = arith.constant 0 : index
    %668 = vector.load %arg11[%c99_1161, %c0_1162] : memref<392x8xf32, #tpu.memory_space<vmem>>, vector<12x8xf32>
    %c100_1163 = arith.constant 100 : index
    %c0_1164 = arith.constant 0 : index
    %669 = vector.load %arg11[%c100_1163, %c0_1164] : memref<392x8xf32, #tpu.memory_space<vmem>>, vector<12x8xf32>
    %c112_1165 = arith.constant 112 : index
    %c0_1166 = arith.constant 0 : index
    %670 = vector.load %arg11[%c112_1165, %c0_1166] : memref<392x8xf32, #tpu.memory_space<vmem>>, vector<12x8xf32>
    %c113_1167 = arith.constant 113 : index
    %c0_1168 = arith.constant 0 : index
    %671 = vector.load %arg11[%c113_1167, %c0_1168] : memref<392x8xf32, #tpu.memory_space<vmem>>, vector<12x8xf32>
    %c114_1169 = arith.constant 114 : index
    %c0_1170 = arith.constant 0 : index
    %672 = vector.load %arg11[%c114_1169, %c0_1170] : memref<392x8xf32, #tpu.memory_space<vmem>>, vector<12x8xf32>
    %c126_1171 = arith.constant 126 : index
    %c0_1172 = arith.constant 0 : index
    %673 = vector.load %arg11[%c126_1171, %c0_1172] : memref<392x8xf32, #tpu.memory_space<vmem>>, vector<12x8xf32>
    %c127 = arith.constant 127 : index
    %c0_1173 = arith.constant 0 : index
    %674 = vector.load %arg11[%c127, %c0_1173] : memref<392x8xf32, #tpu.memory_space<vmem>>, vector<12x8xf32>
    %c128 = arith.constant 128 : index
    %c0_1174 = arith.constant 0 : index
    %675 = vector.load %arg11[%c128, %c0_1174] : memref<392x8xf32, #tpu.memory_space<vmem>>, vector<12x8xf32>
    %676 = tpu.concatenate %667, %668, %669, %670, %671, %672, %673, %674, %675 in 1 : vector<12x8xf32>, vector<12x8xf32>, vector<12x8xf32>, vector<12x8xf32>, vector<12x8xf32>, vector<12x8xf32>, vector<12x8xf32>, vector<12x8xf32>, vector<12x8xf32> -> vector<12x72xf32>
    %c84_1175 = arith.constant 84 : index
    %c0_1176 = arith.constant 0 : index
    %677 = vector.load %arg12[%c84_1175, %c0_1176] : memref<288x72xf32, #tpu.memory_space<vmem>>, vector<12x72xf32>
    tpu.vector_store %arg12[%c84_1175, %c0_1176], %676 {strides = array<i32>} : memref<288x72xf32, #tpu.memory_space<vmem>>, vector<12x72xf32>,
    %c112_1177 = arith.constant 112 : index
    %c0_1178 = arith.constant 0 : index
    %678 = vector.load %arg11[%c112_1177, %c0_1178] : memref<392x8xf32, #tpu.memory_space<vmem>>, vector<12x8xf32>
    %c113_1179 = arith.constant 113 : index
    %c0_1180 = arith.constant 0 : index
    %679 = vector.load %arg11[%c113_1179, %c0_1180] : memref<392x8xf32, #tpu.memory_space<vmem>>, vector<12x8xf32>
    %c114_1181 = arith.constant 114 : index
    %c0_1182 = arith.constant 0 : index
    %680 = vector.load %arg11[%c114_1181, %c0_1182] : memref<392x8xf32, #tpu.memory_space<vmem>>, vector<12x8xf32>
    %c126_1183 = arith.constant 126 : index
    %c0_1184 = arith.constant 0 : index
    %681 = vector.load %arg11[%c126_1183, %c0_1184] : memref<392x8xf32, #tpu.memory_space<vmem>>, vector<12x8xf32>
    %c127_1185 = arith.constant 127 : index
    %c0_1186 = arith.constant 0 : index
    %682 = vector.load %arg11[%c127_1185, %c0_1186] : memref<392x8xf32, #tpu.memory_space<vmem>>, vector<12x8xf32>
    %c128_1187 = arith.constant 128 : index
    %c0_1188 = arith.constant 0 : index
    %683 = vector.load %arg11[%c128_1187, %c0_1188] : memref<392x8xf32, #tpu.memory_space<vmem>>, vector<12x8xf32>
    %c140_1189 = arith.constant 140 : index
    %c0_1190 = arith.constant 0 : index
    %684 = vector.load %arg11[%c140_1189, %c0_1190] : memref<392x8xf32, #tpu.memory_space<vmem>>, vector<12x8xf32>
    %c141 = arith.constant 141 : index
    %c0_1191 = arith.constant 0 : index
    %685 = vector.load %arg11[%c141, %c0_1191] : memref<392x8xf32, #tpu.memory_space<vmem>>, vector<12x8xf32>
    %c142 = arith.constant 142 : index
    %c0_1192 = arith.constant 0 : index
    %686 = vector.load %arg11[%c142, %c0_1192] : memref<392x8xf32, #tpu.memory_space<vmem>>, vector<12x8xf32>
    %687 = tpu.concatenate %678, %679, %680, %681, %682, %683, %684, %685, %686 in 1 : vector<12x8xf32>, vector<12x8xf32>, vector<12x8xf32>, vector<12x8xf32>, vector<12x8xf32>, vector<12x8xf32>, vector<12x8xf32>, vector<12x8xf32>, vector<12x8xf32> -> vector<12x72xf32>
    %c96 = arith.constant 96 : index
    %c0_1193 = arith.constant 0 : index
    %688 = vector.load %arg12[%c96, %c0_1193] : memref<288x72xf32, #tpu.memory_space<vmem>>, vector<12x72xf32>
    tpu.vector_store %arg12[%c96, %c0_1193], %687 {strides = array<i32>} : memref<288x72xf32, #tpu.memory_space<vmem>>, vector<12x72xf32>,
    %c126_1194 = arith.constant 126 : index
    %c0_1195 = arith.constant 0 : index
    %689 = vector.load %arg11[%c126_1194, %c0_1195] : memref<392x8xf32, #tpu.memory_space<vmem>>, vector<12x8xf32>
    %c127_1196 = arith.constant 127 : index
    %c0_1197 = arith.constant 0 : index
    %690 = vector.load %arg11[%c127_1196, %c0_1197] : memref<392x8xf32, #tpu.memory_space<vmem>>, vector<12x8xf32>
    %c128_1198 = arith.constant 128 : index
    %c0_1199 = arith.constant 0 : index
    %691 = vector.load %arg11[%c128_1198, %c0_1199] : memref<392x8xf32, #tpu.memory_space<vmem>>, vector<12x8xf32>
    %c140_1200 = arith.constant 140 : index
    %c0_1201 = arith.constant 0 : index
    %692 = vector.load %arg11[%c140_1200, %c0_1201] : memref<392x8xf32, #tpu.memory_space<vmem>>, vector<12x8xf32>
    %c141_1202 = arith.constant 141 : index
    %c0_1203 = arith.constant 0 : index
    %693 = vector.load %arg11[%c141_1202, %c0_1203] : memref<392x8xf32, #tpu.memory_space<vmem>>, vector<12x8xf32>
    %c142_1204 = arith.constant 142 : index
    %c0_1205 = arith.constant 0 : index
    %694 = vector.load %arg11[%c142_1204, %c0_1205] : memref<392x8xf32, #tpu.memory_space<vmem>>, vector<12x8xf32>
    %c154_1206 = arith.constant 154 : index
    %c0_1207 = arith.constant 0 : index
    %695 = vector.load %arg11[%c154_1206, %c0_1207] : memref<392x8xf32, #tpu.memory_space<vmem>>, vector<12x8xf32>
    %c155 = arith.constant 155 : index
    %c0_1208 = arith.constant 0 : index
    %696 = vector.load %arg11[%c155, %c0_1208] : memref<392x8xf32, #tpu.memory_space<vmem>>, vector<12x8xf32>
    %c156 = arith.constant 156 : index
    %c0_1209 = arith.constant 0 : index
    %697 = vector.load %arg11[%c156, %c0_1209] : memref<392x8xf32, #tpu.memory_space<vmem>>, vector<12x8xf32>
    %698 = tpu.concatenate %689, %690, %691, %692, %693, %694, %695, %696, %697 in 1 : vector<12x8xf32>, vector<12x8xf32>, vector<12x8xf32>, vector<12x8xf32>, vector<12x8xf32>, vector<12x8xf32>, vector<12x8xf32>, vector<12x8xf32>, vector<12x8xf32> -> vector<12x72xf32>
    %c108 = arith.constant 108 : index
    %c0_1210 = arith.constant 0 : index
    %699 = vector.load %arg12[%c108, %c0_1210] : memref<288x72xf32, #tpu.memory_space<vmem>>, vector<12x72xf32>
    tpu.vector_store %arg12[%c108, %c0_1210], %698 {strides = array<i32>} : memref<288x72xf32, #tpu.memory_space<vmem>>, vector<12x72xf32>,
    %c140_1211 = arith.constant 140 : index
    %c0_1212 = arith.constant 0 : index
    %700 = vector.load %arg11[%c140_1211, %c0_1212] : memref<392x8xf32, #tpu.memory_space<vmem>>, vector<12x8xf32>
    %c141_1213 = arith.constant 141 : index
    %c0_1214 = arith.constant 0 : index
    %701 = vector.load %arg11[%c141_1213, %c0_1214] : memref<392x8xf32, #tpu.memory_space<vmem>>, vector<12x8xf32>
    %c142_1215 = arith.constant 142 : index
    %c0_1216 = arith.constant 0 : index
    %702 = vector.load %arg11[%c142_1215, %c0_1216] : memref<392x8xf32, #tpu.memory_space<vmem>>, vector<12x8xf32>
    %c154_1217 = arith.constant 154 : index
    %c0_1218 = arith.constant 0 : index
    %703 = vector.load %arg11[%c154_1217, %c0_1218] : memref<392x8xf32, #tpu.memory_space<vmem>>, vector<12x8xf32>
    %c155_1219 = arith.constant 155 : index
    %c0_1220 = arith.constant 0 : index
    %704 = vector.load %arg11[%c155_1219, %c0_1220] : memref<392x8xf32, #tpu.memory_space<vmem>>, vector<12x8xf32>
    %c156_1221 = arith.constant 156 : index
    %c0_1222 = arith.constant 0 : index
    %705 = vector.load %arg11[%c156_1221, %c0_1222] : memref<392x8xf32, #tpu.memory_space<vmem>>, vector<12x8xf32>
    %c168_1223 = arith.constant 168 : index
    %c0_1224 = arith.constant 0 : index
    %706 = vector.load %arg11[%c168_1223, %c0_1224] : memref<392x8xf32, #tpu.memory_space<vmem>>, vector<12x8xf32>
    %c169 = arith.constant 169 : index
    %c0_1225 = arith.constant 0 : index
    %707 = vector.load %arg11[%c169, %c0_1225] : memref<392x8xf32, #tpu.memory_space<vmem>>, vector<12x8xf32>
    %c170 = arith.constant 170 : index
    %c0_1226 = arith.constant 0 : index
    %708 = vector.load %arg11[%c170, %c0_1226] : memref<392x8xf32, #tpu.memory_space<vmem>>, vector<12x8xf32>
    %709 = tpu.concatenate %700, %701, %702, %703, %704, %705, %706, %707, %708 in 1 : vector<12x8xf32>, vector<12x8xf32>, vector<12x8xf32>, vector<12x8xf32>, vector<12x8xf32>, vector<12x8xf32>, vector<12x8xf32>, vector<12x8xf32>, vector<12x8xf32> -> vector<12x72xf32>
    %c120 = arith.constant 120 : index
    %c0_1227 = arith.constant 0 : index
    %710 = vector.load %arg12[%c120, %c0_1227] : memref<288x72xf32, #tpu.memory_space<vmem>>, vector<12x72xf32>
    tpu.vector_store %arg12[%c120, %c0_1227], %709 {strides = array<i32>} : memref<288x72xf32, #tpu.memory_space<vmem>>, vector<12x72xf32>,
    %c154_1228 = arith.constant 154 : index
    %c0_1229 = arith.constant 0 : index
    %711 = vector.load %arg11[%c154_1228, %c0_1229] : memref<392x8xf32, #tpu.memory_space<vmem>>, vector<12x8xf32>
    %c155_1230 = arith.constant 155 : index
    %c0_1231 = arith.constant 0 : index
    %712 = vector.load %arg11[%c155_1230, %c0_1231] : memref<392x8xf32, #tpu.memory_space<vmem>>, vector<12x8xf32>
    %c156_1232 = arith.constant 156 : index
    %c0_1233 = arith.constant 0 : index
    %713 = vector.load %arg11[%c156_1232, %c0_1233] : memref<392x8xf32, #tpu.memory_space<vmem>>, vector<12x8xf32>
    %c168_1234 = arith.constant 168 : index
    %c0_1235 = arith.constant 0 : index
    %714 = vector.load %arg11[%c168_1234, %c0_1235] : memref<392x8xf32, #tpu.memory_space<vmem>>, vector<12x8xf32>
    %c169_1236 = arith.constant 169 : index
    %c0_1237 = arith.constant 0 : index
    %715 = vector.load %arg11[%c169_1236, %c0_1237] : memref<392x8xf32, #tpu.memory_space<vmem>>, vector<12x8xf32>
    %c170_1238 = arith.constant 170 : index
    %c0_1239 = arith.constant 0 : index
    %716 = vector.load %arg11[%c170_1238, %c0_1239] : memref<392x8xf32, #tpu.memory_space<vmem>>, vector<12x8xf32>
    %c182_1240 = arith.constant 182 : index
    %c0_1241 = arith.constant 0 : index
    %717 = vector.load %arg11[%c182_1240, %c0_1241] : memref<392x8xf32, #tpu.memory_space<vmem>>, vector<12x8xf32>
    %c183 = arith.constant 183 : index
    %c0_1242 = arith.constant 0 : index
    %718 = vector.load %arg11[%c183, %c0_1242] : memref<392x8xf32, #tpu.memory_space<vmem>>, vector<12x8xf32>
    %c184 = arith.constant 184 : index
    %c0_1243 = arith.constant 0 : index
    %719 = vector.load %arg11[%c184, %c0_1243] : memref<392x8xf32, #tpu.memory_space<vmem>>, vector<12x8xf32>
    %720 = tpu.concatenate %711, %712, %713, %714, %715, %716, %717, %718, %719 in 1 : vector<12x8xf32>, vector<12x8xf32>, vector<12x8xf32>, vector<12x8xf32>, vector<12x8xf32>, vector<12x8xf32>, vector<12x8xf32>, vector<12x8xf32>, vector<12x8xf32> -> vector<12x72xf32>
    %c132 = arith.constant 132 : index
    %c0_1244 = arith.constant 0 : index
    %721 = vector.load %arg12[%c132, %c0_1244] : memref<288x72xf32, #tpu.memory_space<vmem>>, vector<12x72xf32>
    tpu.vector_store %arg12[%c132, %c0_1244], %720 {strides = array<i32>} : memref<288x72xf32, #tpu.memory_space<vmem>>, vector<12x72xf32>,
    %c196_1245 = arith.constant 196 : index
    %c0_1246 = arith.constant 0 : index
    %722 = vector.load %arg11[%c196_1245, %c0_1246] : memref<392x8xf32, #tpu.memory_space<vmem>>, vector<12x8xf32>
    %c197 = arith.constant 197 : index
    %c0_1247 = arith.constant 0 : index
    %723 = vector.load %arg11[%c197, %c0_1247] : memref<392x8xf32, #tpu.memory_space<vmem>>, vector<12x8xf32>
    %c198 = arith.constant 198 : index
    %c0_1248 = arith.constant 0 : index
    %724 = vector.load %arg11[%c198, %c0_1248] : memref<392x8xf32, #tpu.memory_space<vmem>>, vector<12x8xf32>
    %c210_1249 = arith.constant 210 : index
    %c0_1250 = arith.constant 0 : index
    %725 = vector.load %arg11[%c210_1249, %c0_1250] : memref<392x8xf32, #tpu.memory_space<vmem>>, vector<12x8xf32>
    %c211 = arith.constant 211 : index
    %c0_1251 = arith.constant 0 : index
    %726 = vector.load %arg11[%c211, %c0_1251] : memref<392x8xf32, #tpu.memory_space<vmem>>, vector<12x8xf32>
    %c212 = arith.constant 212 : index
    %c0_1252 = arith.constant 0 : index
    %727 = vector.load %arg11[%c212, %c0_1252] : memref<392x8xf32, #tpu.memory_space<vmem>>, vector<12x8xf32>
    %c224_1253 = arith.constant 224 : index
    %c0_1254 = arith.constant 0 : index
    %728 = vector.load %arg11[%c224_1253, %c0_1254] : memref<392x8xf32, #tpu.memory_space<vmem>>, vector<12x8xf32>
    %c225 = arith.constant 225 : index
    %c0_1255 = arith.constant 0 : index
    %729 = vector.load %arg11[%c225, %c0_1255] : memref<392x8xf32, #tpu.memory_space<vmem>>, vector<12x8xf32>
    %c226 = arith.constant 226 : index
    %c0_1256 = arith.constant 0 : index
    %730 = vector.load %arg11[%c226, %c0_1256] : memref<392x8xf32, #tpu.memory_space<vmem>>, vector<12x8xf32>
    %731 = tpu.concatenate %722, %723, %724, %725, %726, %727, %728, %729, %730 in 1 : vector<12x8xf32>, vector<12x8xf32>, vector<12x8xf32>, vector<12x8xf32>, vector<12x8xf32>, vector<12x8xf32>, vector<12x8xf32>, vector<12x8xf32>, vector<12x8xf32> -> vector<12x72xf32>
    %c144 = arith.constant 144 : index
    %c0_1257 = arith.constant 0 : index
    %732 = vector.load %arg12[%c144, %c0_1257] : memref<288x72xf32, #tpu.memory_space<vmem>>, vector<12x72xf32>
    tpu.vector_store %arg12[%c144, %c0_1257], %731 {strides = array<i32>} : memref<288x72xf32, #tpu.memory_space<vmem>>, vector<12x72xf32>,
    %c210_1258 = arith.constant 210 : index
    %c0_1259 = arith.constant 0 : index
    %733 = vector.load %arg11[%c210_1258, %c0_1259] : memref<392x8xf32, #tpu.memory_space<vmem>>, vector<12x8xf32>
    %c211_1260 = arith.constant 211 : index
    %c0_1261 = arith.constant 0 : index
    %734 = vector.load %arg11[%c211_1260, %c0_1261] : memref<392x8xf32, #tpu.memory_space<vmem>>, vector<12x8xf32>
    %c212_1262 = arith.constant 212 : index
    %c0_1263 = arith.constant 0 : index
    %735 = vector.load %arg11[%c212_1262, %c0_1263] : memref<392x8xf32, #tpu.memory_space<vmem>>, vector<12x8xf32>
    %c224_1264 = arith.constant 224 : index
    %c0_1265 = arith.constant 0 : index
    %736 = vector.load %arg11[%c224_1264, %c0_1265] : memref<392x8xf32, #tpu.memory_space<vmem>>, vector<12x8xf32>
    %c225_1266 = arith.constant 225 : index
    %c0_1267 = arith.constant 0 : index
    %737 = vector.load %arg11[%c225_1266, %c0_1267] : memref<392x8xf32, #tpu.memory_space<vmem>>, vector<12x8xf32>
    %c226_1268 = arith.constant 226 : index
    %c0_1269 = arith.constant 0 : index
    %738 = vector.load %arg11[%c226_1268, %c0_1269] : memref<392x8xf32, #tpu.memory_space<vmem>>, vector<12x8xf32>
    %c238_1270 = arith.constant 238 : index
    %c0_1271 = arith.constant 0 : index
    %739 = vector.load %arg11[%c238_1270, %c0_1271] : memref<392x8xf32, #tpu.memory_space<vmem>>, vector<12x8xf32>
    %c239 = arith.constant 239 : index
    %c0_1272 = arith.constant 0 : index
    %740 = vector.load %arg11[%c239, %c0_1272] : memref<392x8xf32, #tpu.memory_space<vmem>>, vector<12x8xf32>
    %c240 = arith.constant 240 : index
    %c0_1273 = arith.constant 0 : index
    %741 = vector.load %arg11[%c240, %c0_1273] : memref<392x8xf32, #tpu.memory_space<vmem>>, vector<12x8xf32>
    %742 = tpu.concatenate %733, %734, %735, %736, %737, %738, %739, %740, %741 in 1 : vector<12x8xf32>, vector<12x8xf32>, vector<12x8xf32>, vector<12x8xf32>, vector<12x8xf32>, vector<12x8xf32>, vector<12x8xf32>, vector<12x8xf32>, vector<12x8xf32> -> vector<12x72xf32>
    %c156_1274 = arith.constant 156 : index
    %c0_1275 = arith.constant 0 : index
    %743 = vector.load %arg12[%c156_1274, %c0_1275] : memref<288x72xf32, #tpu.memory_space<vmem>>, vector<12x72xf32>
    tpu.vector_store %arg12[%c156_1274, %c0_1275], %742 {strides = array<i32>} : memref<288x72xf32, #tpu.memory_space<vmem>>, vector<12x72xf32>,
    %c224_1276 = arith.constant 224 : index
    %c0_1277 = arith.constant 0 : index
    %744 = vector.load %arg11[%c224_1276, %c0_1277] : memref<392x8xf32, #tpu.memory_space<vmem>>, vector<12x8xf32>
    %c225_1278 = arith.constant 225 : index
    %c0_1279 = arith.constant 0 : index
    %745 = vector.load %arg11[%c225_1278, %c0_1279] : memref<392x8xf32, #tpu.memory_space<vmem>>, vector<12x8xf32>
    %c226_1280 = arith.constant 226 : index
    %c0_1281 = arith.constant 0 : index
    %746 = vector.load %arg11[%c226_1280, %c0_1281] : memref<392x8xf32, #tpu.memory_space<vmem>>, vector<12x8xf32>
    %c238_1282 = arith.constant 238 : index
    %c0_1283 = arith.constant 0 : index
    %747 = vector.load %arg11[%c238_1282, %c0_1283] : memref<392x8xf32, #tpu.memory_space<vmem>>, vector<12x8xf32>
    %c239_1284 = arith.constant 239 : index
    %c0_1285 = arith.constant 0 : index
    %748 = vector.load %arg11[%c239_1284, %c0_1285] : memref<392x8xf32, #tpu.memory_space<vmem>>, vector<12x8xf32>
    %c240_1286 = arith.constant 240 : index
    %c0_1287 = arith.constant 0 : index
    %749 = vector.load %arg11[%c240_1286, %c0_1287] : memref<392x8xf32, #tpu.memory_space<vmem>>, vector<12x8xf32>
    %c252_1288 = arith.constant 252 : index
    %c0_1289 = arith.constant 0 : index
    %750 = vector.load %arg11[%c252_1288, %c0_1289] : memref<392x8xf32, #tpu.memory_space<vmem>>, vector<12x8xf32>
    %c253 = arith.constant 253 : index
    %c0_1290 = arith.constant 0 : index
    %751 = vector.load %arg11[%c253, %c0_1290] : memref<392x8xf32, #tpu.memory_space<vmem>>, vector<12x8xf32>
    %c254 = arith.constant 254 : index
    %c0_1291 = arith.constant 0 : index
    %752 = vector.load %arg11[%c254, %c0_1291] : memref<392x8xf32, #tpu.memory_space<vmem>>, vector<12x8xf32>
    %753 = tpu.concatenate %744, %745, %746, %747, %748, %749, %750, %751, %752 in 1 : vector<12x8xf32>, vector<12x8xf32>, vector<12x8xf32>, vector<12x8xf32>, vector<12x8xf32>, vector<12x8xf32>, vector<12x8xf32>, vector<12x8xf32>, vector<12x8xf32> -> vector<12x72xf32>
    %c168_1292 = arith.constant 168 : index
    %c0_1293 = arith.constant 0 : index
    %754 = vector.load %arg12[%c168_1292, %c0_1293] : memref<288x72xf32, #tpu.memory_space<vmem>>, vector<12x72xf32>
    tpu.vector_store %arg12[%c168_1292, %c0_1293], %753 {strides = array<i32>} : memref<288x72xf32, #tpu.memory_space<vmem>>, vector<12x72xf32>,
    %c238_1294 = arith.constant 238 : index
    %c0_1295 = arith.constant 0 : index
    %755 = vector.load %arg11[%c238_1294, %c0_1295] : memref<392x8xf32, #tpu.memory_space<vmem>>, vector<12x8xf32>
    %c239_1296 = arith.constant 239 : index
    %c0_1297 = arith.constant 0 : index
    %756 = vector.load %arg11[%c239_1296, %c0_1297] : memref<392x8xf32, #tpu.memory_space<vmem>>, vector<12x8xf32>
    %c240_1298 = arith.constant 240 : index
    %c0_1299 = arith.constant 0 : index
    %757 = vector.load %arg11[%c240_1298, %c0_1299] : memref<392x8xf32, #tpu.memory_space<vmem>>, vector<12x8xf32>
    %c252_1300 = arith.constant 252 : index
    %c0_1301 = arith.constant 0 : index
    %758 = vector.load %arg11[%c252_1300, %c0_1301] : memref<392x8xf32, #tpu.memory_space<vmem>>, vector<12x8xf32>
    %c253_1302 = arith.constant 253 : index
    %c0_1303 = arith.constant 0 : index
    %759 = vector.load %arg11[%c253_1302, %c0_1303] : memref<392x8xf32, #tpu.memory_space<vmem>>, vector<12x8xf32>
    %c254_1304 = arith.constant 254 : index
    %c0_1305 = arith.constant 0 : index
    %760 = vector.load %arg11[%c254_1304, %c0_1305] : memref<392x8xf32, #tpu.memory_space<vmem>>, vector<12x8xf32>
    %c266_1306 = arith.constant 266 : index
    %c0_1307 = arith.constant 0 : index
    %761 = vector.load %arg11[%c266_1306, %c0_1307] : memref<392x8xf32, #tpu.memory_space<vmem>>, vector<12x8xf32>
    %c267 = arith.constant 267 : index
    %c0_1308 = arith.constant 0 : index
    %762 = vector.load %arg11[%c267, %c0_1308] : memref<392x8xf32, #tpu.memory_space<vmem>>, vector<12x8xf32>
    %c268 = arith.constant 268 : index
    %c0_1309 = arith.constant 0 : index
    %763 = vector.load %arg11[%c268, %c0_1309] : memref<392x8xf32, #tpu.memory_space<vmem>>, vector<12x8xf32>
    %764 = tpu.concatenate %755, %756, %757, %758, %759, %760, %761, %762, %763 in 1 : vector<12x8xf32>, vector<12x8xf32>, vector<12x8xf32>, vector<12x8xf32>, vector<12x8xf32>, vector<12x8xf32>, vector<12x8xf32>, vector<12x8xf32>, vector<12x8xf32> -> vector<12x72xf32>
    %c180 = arith.constant 180 : index
    %c0_1310 = arith.constant 0 : index
    %765 = vector.load %arg12[%c180, %c0_1310] : memref<288x72xf32, #tpu.memory_space<vmem>>, vector<12x72xf32>
    tpu.vector_store %arg12[%c180, %c0_1310], %764 {strides = array<i32>} : memref<288x72xf32, #tpu.memory_space<vmem>>, vector<12x72xf32>,
    %c252_1311 = arith.constant 252 : index
    %c0_1312 = arith.constant 0 : index
    %766 = vector.load %arg11[%c252_1311, %c0_1312] : memref<392x8xf32, #tpu.memory_space<vmem>>, vector<12x8xf32>
    %c253_1313 = arith.constant 253 : index
    %c0_1314 = arith.constant 0 : index
    %767 = vector.load %arg11[%c253_1313, %c0_1314] : memref<392x8xf32, #tpu.memory_space<vmem>>, vector<12x8xf32>
    %c254_1315 = arith.constant 254 : index
    %c0_1316 = arith.constant 0 : index
    %768 = vector.load %arg11[%c254_1315, %c0_1316] : memref<392x8xf32, #tpu.memory_space<vmem>>, vector<12x8xf32>
    %c266_1317 = arith.constant 266 : index
    %c0_1318 = arith.constant 0 : index
    %769 = vector.load %arg11[%c266_1317, %c0_1318] : memref<392x8xf32, #tpu.memory_space<vmem>>, vector<12x8xf32>
    %c267_1319 = arith.constant 267 : index
    %c0_1320 = arith.constant 0 : index
    %770 = vector.load %arg11[%c267_1319, %c0_1320] : memref<392x8xf32, #tpu.memory_space<vmem>>, vector<12x8xf32>
    %c268_1321 = arith.constant 268 : index
    %c0_1322 = arith.constant 0 : index
    %771 = vector.load %arg11[%c268_1321, %c0_1322] : memref<392x8xf32, #tpu.memory_space<vmem>>, vector<12x8xf32>
    %c280_1323 = arith.constant 280 : index
    %c0_1324 = arith.constant 0 : index
    %772 = vector.load %arg11[%c280_1323, %c0_1324] : memref<392x8xf32, #tpu.memory_space<vmem>>, vector<12x8xf32>
    %c281 = arith.constant 281 : index
    %c0_1325 = arith.constant 0 : index
    %773 = vector.load %arg11[%c281, %c0_1325] : memref<392x8xf32, #tpu.memory_space<vmem>>, vector<12x8xf32>
    %c282 = arith.constant 282 : index
    %c0_1326 = arith.constant 0 : index
    %774 = vector.load %arg11[%c282, %c0_1326] : memref<392x8xf32, #tpu.memory_space<vmem>>, vector<12x8xf32>
    %775 = tpu.concatenate %766, %767, %768, %769, %770, %771, %772, %773, %774 in 1 : vector<12x8xf32>, vector<12x8xf32>, vector<12x8xf32>, vector<12x8xf32>, vector<12x8xf32>, vector<12x8xf32>, vector<12x8xf32>, vector<12x8xf32>, vector<12x8xf32> -> vector<12x72xf32>
    %c192 = arith.constant 192 : index
    %c0_1327 = arith.constant 0 : index
    %776 = vector.load %arg12[%c192, %c0_1327] : memref<288x72xf32, #tpu.memory_space<vmem>>, vector<12x72xf32>
    tpu.vector_store %arg12[%c192, %c0_1327], %775 {strides = array<i32>} : memref<288x72xf32, #tpu.memory_space<vmem>>, vector<12x72xf32>,
    %c266_1328 = arith.constant 266 : index
    %c0_1329 = arith.constant 0 : index
    %777 = vector.load %arg11[%c266_1328, %c0_1329] : memref<392x8xf32, #tpu.memory_space<vmem>>, vector<12x8xf32>
    %c267_1330 = arith.constant 267 : index
    %c0_1331 = arith.constant 0 : index
    %778 = vector.load %arg11[%c267_1330, %c0_1331] : memref<392x8xf32, #tpu.memory_space<vmem>>, vector<12x8xf32>
    %c268_1332 = arith.constant 268 : index
    %c0_1333 = arith.constant 0 : index
    %779 = vector.load %arg11[%c268_1332, %c0_1333] : memref<392x8xf32, #tpu.memory_space<vmem>>, vector<12x8xf32>
    %c280_1334 = arith.constant 280 : index
    %c0_1335 = arith.constant 0 : index
    %780 = vector.load %arg11[%c280_1334, %c0_1335] : memref<392x8xf32, #tpu.memory_space<vmem>>, vector<12x8xf32>
    %c281_1336 = arith.constant 281 : index
    %c0_1337 = arith.constant 0 : index
    %781 = vector.load %arg11[%c281_1336, %c0_1337] : memref<392x8xf32, #tpu.memory_space<vmem>>, vector<12x8xf32>
    %c282_1338 = arith.constant 282 : index
    %c0_1339 = arith.constant 0 : index
    %782 = vector.load %arg11[%c282_1338, %c0_1339] : memref<392x8xf32, #tpu.memory_space<vmem>>, vector<12x8xf32>
    %c294_1340 = arith.constant 294 : index
    %c0_1341 = arith.constant 0 : index
    %783 = vector.load %arg11[%c294_1340, %c0_1341] : memref<392x8xf32, #tpu.memory_space<vmem>>, vector<12x8xf32>
    %c295 = arith.constant 295 : index
    %c0_1342 = arith.constant 0 : index
    %784 = vector.load %arg11[%c295, %c0_1342] : memref<392x8xf32, #tpu.memory_space<vmem>>, vector<12x8xf32>
    %c296 = arith.constant 296 : index
    %c0_1343 = arith.constant 0 : index
    %785 = vector.load %arg11[%c296, %c0_1343] : memref<392x8xf32, #tpu.memory_space<vmem>>, vector<12x8xf32>
    %786 = tpu.concatenate %777, %778, %779, %780, %781, %782, %783, %784, %785 in 1 : vector<12x8xf32>, vector<12x8xf32>, vector<12x8xf32>, vector<12x8xf32>, vector<12x8xf32>, vector<12x8xf32>, vector<12x8xf32>, vector<12x8xf32>, vector<12x8xf32> -> vector<12x72xf32>
    %c204 = arith.constant 204 : index
    %c0_1344 = arith.constant 0 : index
    %787 = vector.load %arg12[%c204, %c0_1344] : memref<288x72xf32, #tpu.memory_space<vmem>>, vector<12x72xf32>
    tpu.vector_store %arg12[%c204, %c0_1344], %786 {strides = array<i32>} : memref<288x72xf32, #tpu.memory_space<vmem>>, vector<12x72xf32>,
    %c280_1345 = arith.constant 280 : index
    %c0_1346 = arith.constant 0 : index
    %788 = vector.load %arg11[%c280_1345, %c0_1346] : memref<392x8xf32, #tpu.memory_space<vmem>>, vector<12x8xf32>
    %c281_1347 = arith.constant 281 : index
    %c0_1348 = arith.constant 0 : index
    %789 = vector.load %arg11[%c281_1347, %c0_1348] : memref<392x8xf32, #tpu.memory_space<vmem>>, vector<12x8xf32>
    %c282_1349 = arith.constant 282 : index
    %c0_1350 = arith.constant 0 : index
    %790 = vector.load %arg11[%c282_1349, %c0_1350] : memref<392x8xf32, #tpu.memory_space<vmem>>, vector<12x8xf32>
    %c294_1351 = arith.constant 294 : index
    %c0_1352 = arith.constant 0 : index
    %791 = vector.load %arg11[%c294_1351, %c0_1352] : memref<392x8xf32, #tpu.memory_space<vmem>>, vector<12x8xf32>
    %c295_1353 = arith.constant 295 : index
    %c0_1354 = arith.constant 0 : index
    %792 = vector.load %arg11[%c295_1353, %c0_1354] : memref<392x8xf32, #tpu.memory_space<vmem>>, vector<12x8xf32>
    %c296_1355 = arith.constant 296 : index
    %c0_1356 = arith.constant 0 : index
    %793 = vector.load %arg11[%c296_1355, %c0_1356] : memref<392x8xf32, #tpu.memory_space<vmem>>, vector<12x8xf32>
    %c308_1357 = arith.constant 308 : index
    %c0_1358 = arith.constant 0 : index
    %794 = vector.load %arg11[%c308_1357, %c0_1358] : memref<392x8xf32, #tpu.memory_space<vmem>>, vector<12x8xf32>
    %c309 = arith.constant 309 : index
    %c0_1359 = arith.constant 0 : index
    %795 = vector.load %arg11[%c309, %c0_1359] : memref<392x8xf32, #tpu.memory_space<vmem>>, vector<12x8xf32>
    %c310 = arith.constant 310 : index
    %c0_1360 = arith.constant 0 : index
    %796 = vector.load %arg11[%c310, %c0_1360] : memref<392x8xf32, #tpu.memory_space<vmem>>, vector<12x8xf32>
    %797 = tpu.concatenate %788, %789, %790, %791, %792, %793, %794, %795, %796 in 1 : vector<12x8xf32>, vector<12x8xf32>, vector<12x8xf32>, vector<12x8xf32>, vector<12x8xf32>, vector<12x8xf32>, vector<12x8xf32>, vector<12x8xf32>, vector<12x8xf32> -> vector<12x72xf32>
    %c216 = arith.constant 216 : index
    %c0_1361 = arith.constant 0 : index
    %798 = vector.load %arg12[%c216, %c0_1361] : memref<288x72xf32, #tpu.memory_space<vmem>>, vector<12x72xf32>
    tpu.vector_store %arg12[%c216, %c0_1361], %797 {strides = array<i32>} : memref<288x72xf32, #tpu.memory_space<vmem>>, vector<12x72xf32>,
    %c294_1362 = arith.constant 294 : index
    %c0_1363 = arith.constant 0 : index
    %799 = vector.load %arg11[%c294_1362, %c0_1363] : memref<392x8xf32, #tpu.memory_space<vmem>>, vector<12x8xf32>
    %c295_1364 = arith.constant 295 : index
    %c0_1365 = arith.constant 0 : index
    %800 = vector.load %arg11[%c295_1364, %c0_1365] : memref<392x8xf32, #tpu.memory_space<vmem>>, vector<12x8xf32>
    %c296_1366 = arith.constant 296 : index
    %c0_1367 = arith.constant 0 : index
    %801 = vector.load %arg11[%c296_1366, %c0_1367] : memref<392x8xf32, #tpu.memory_space<vmem>>, vector<12x8xf32>
    %c308_1368 = arith.constant 308 : index
    %c0_1369 = arith.constant 0 : index
    %802 = vector.load %arg11[%c308_1368, %c0_1369] : memref<392x8xf32, #tpu.memory_space<vmem>>, vector<12x8xf32>
    %c309_1370 = arith.constant 309 : index
    %c0_1371 = arith.constant 0 : index
    %803 = vector.load %arg11[%c309_1370, %c0_1371] : memref<392x8xf32, #tpu.memory_space<vmem>>, vector<12x8xf32>
    %c310_1372 = arith.constant 310 : index
    %c0_1373 = arith.constant 0 : index
    %804 = vector.load %arg11[%c310_1372, %c0_1373] : memref<392x8xf32, #tpu.memory_space<vmem>>, vector<12x8xf32>
    %c322_1374 = arith.constant 322 : index
    %c0_1375 = arith.constant 0 : index
    %805 = vector.load %arg11[%c322_1374, %c0_1375] : memref<392x8xf32, #tpu.memory_space<vmem>>, vector<12x8xf32>
    %c323 = arith.constant 323 : index
    %c0_1376 = arith.constant 0 : index
    %806 = vector.load %arg11[%c323, %c0_1376] : memref<392x8xf32, #tpu.memory_space<vmem>>, vector<12x8xf32>
    %c324 = arith.constant 324 : index
    %c0_1377 = arith.constant 0 : index
    %807 = vector.load %arg11[%c324, %c0_1377] : memref<392x8xf32, #tpu.memory_space<vmem>>, vector<12x8xf32>
    %808 = tpu.concatenate %799, %800, %801, %802, %803, %804, %805, %806, %807 in 1 : vector<12x8xf32>, vector<12x8xf32>, vector<12x8xf32>, vector<12x8xf32>, vector<12x8xf32>, vector<12x8xf32>, vector<12x8xf32>, vector<12x8xf32>, vector<12x8xf32> -> vector<12x72xf32>
    %c228 = arith.constant 228 : index
    %c0_1378 = arith.constant 0 : index
    %809 = vector.load %arg12[%c228, %c0_1378] : memref<288x72xf32, #tpu.memory_space<vmem>>, vector<12x72xf32>
    tpu.vector_store %arg12[%c228, %c0_1378], %808 {strides = array<i32>} : memref<288x72xf32, #tpu.memory_space<vmem>>, vector<12x72xf32>,
    %c308_1379 = arith.constant 308 : index
    %c0_1380 = arith.constant 0 : index
    %810 = vector.load %arg11[%c308_1379, %c0_1380] : memref<392x8xf32, #tpu.memory_space<vmem>>, vector<12x8xf32>
    %c309_1381 = arith.constant 309 : index
    %c0_1382 = arith.constant 0 : index
    %811 = vector.load %arg11[%c309_1381, %c0_1382] : memref<392x8xf32, #tpu.memory_space<vmem>>, vector<12x8xf32>
    %c310_1383 = arith.constant 310 : index
    %c0_1384 = arith.constant 0 : index
    %812 = vector.load %arg11[%c310_1383, %c0_1384] : memref<392x8xf32, #tpu.memory_space<vmem>>, vector<12x8xf32>
    %c322_1385 = arith.constant 322 : index
    %c0_1386 = arith.constant 0 : index
    %813 = vector.load %arg11[%c322_1385, %c0_1386] : memref<392x8xf32, #tpu.memory_space<vmem>>, vector<12x8xf32>
    %c323_1387 = arith.constant 323 : index
    %c0_1388 = arith.constant 0 : index
    %814 = vector.load %arg11[%c323_1387, %c0_1388] : memref<392x8xf32, #tpu.memory_space<vmem>>, vector<12x8xf32>
    %c324_1389 = arith.constant 324 : index
    %c0_1390 = arith.constant 0 : index
    %815 = vector.load %arg11[%c324_1389, %c0_1390] : memref<392x8xf32, #tpu.memory_space<vmem>>, vector<12x8xf32>
    %c336_1391 = arith.constant 336 : index
    %c0_1392 = arith.constant 0 : index
    %816 = vector.load %arg11[%c336_1391, %c0_1392] : memref<392x8xf32, #tpu.memory_space<vmem>>, vector<12x8xf32>
    %c337 = arith.constant 337 : index
    %c0_1393 = arith.constant 0 : index
    %817 = vector.load %arg11[%c337, %c0_1393] : memref<392x8xf32, #tpu.memory_space<vmem>>, vector<12x8xf32>
    %c338 = arith.constant 338 : index
    %c0_1394 = arith.constant 0 : index
    %818 = vector.load %arg11[%c338, %c0_1394] : memref<392x8xf32, #tpu.memory_space<vmem>>, vector<12x8xf32>
    %819 = tpu.concatenate %810, %811, %812, %813, %814, %815, %816, %817, %818 in 1 : vector<12x8xf32>, vector<12x8xf32>, vector<12x8xf32>, vector<12x8xf32>, vector<12x8xf32>, vector<12x8xf32>, vector<12x8xf32>, vector<12x8xf32>, vector<12x8xf32> -> vector<12x72xf32>
    %c240_1395 = arith.constant 240 : index
    %c0_1396 = arith.constant 0 : index
    %820 = vector.load %arg12[%c240_1395, %c0_1396] : memref<288x72xf32, #tpu.memory_space<vmem>>, vector<12x72xf32>
    tpu.vector_store %arg12[%c240_1395, %c0_1396], %819 {strides = array<i32>} : memref<288x72xf32, #tpu.memory_space<vmem>>, vector<12x72xf32>,
    %c322_1397 = arith.constant 322 : index
    %c0_1398 = arith.constant 0 : index
    %821 = vector.load %arg11[%c322_1397, %c0_1398] : memref<392x8xf32, #tpu.memory_space<vmem>>, vector<12x8xf32>
    %c323_1399 = arith.constant 323 : index
    %c0_1400 = arith.constant 0 : index
    %822 = vector.load %arg11[%c323_1399, %c0_1400] : memref<392x8xf32, #tpu.memory_space<vmem>>, vector<12x8xf32>
    %c324_1401 = arith.constant 324 : index
    %c0_1402 = arith.constant 0 : index
    %823 = vector.load %arg11[%c324_1401, %c0_1402] : memref<392x8xf32, #tpu.memory_space<vmem>>, vector<12x8xf32>
    %c336_1403 = arith.constant 336 : index
    %c0_1404 = arith.constant 0 : index
    %824 = vector.load %arg11[%c336_1403, %c0_1404] : memref<392x8xf32, #tpu.memory_space<vmem>>, vector<12x8xf32>
    %c337_1405 = arith.constant 337 : index
    %c0_1406 = arith.constant 0 : index
    %825 = vector.load %arg11[%c337_1405, %c0_1406] : memref<392x8xf32, #tpu.memory_space<vmem>>, vector<12x8xf32>
    %c338_1407 = arith.constant 338 : index
    %c0_1408 = arith.constant 0 : index
    %826 = vector.load %arg11[%c338_1407, %c0_1408] : memref<392x8xf32, #tpu.memory_space<vmem>>, vector<12x8xf32>
    %c350_1409 = arith.constant 350 : index
    %c0_1410 = arith.constant 0 : index
    %827 = vector.load %arg11[%c350_1409, %c0_1410] : memref<392x8xf32, #tpu.memory_space<vmem>>, vector<12x8xf32>
    %c351 = arith.constant 351 : index
    %c0_1411 = arith.constant 0 : index
    %828 = vector.load %arg11[%c351, %c0_1411] : memref<392x8xf32, #tpu.memory_space<vmem>>, vector<12x8xf32>
    %c352 = arith.constant 352 : index
    %c0_1412 = arith.constant 0 : index
    %829 = vector.load %arg11[%c352, %c0_1412] : memref<392x8xf32, #tpu.memory_space<vmem>>, vector<12x8xf32>
    %830 = tpu.concatenate %821, %822, %823, %824, %825, %826, %827, %828, %829 in 1 : vector<12x8xf32>, vector<12x8xf32>, vector<12x8xf32>, vector<12x8xf32>, vector<12x8xf32>, vector<12x8xf32>, vector<12x8xf32>, vector<12x8xf32>, vector<12x8xf32> -> vector<12x72xf32>
    %c252_1413 = arith.constant 252 : index
    %c0_1414 = arith.constant 0 : index
    %831 = vector.load %arg12[%c252_1413, %c0_1414] : memref<288x72xf32, #tpu.memory_space<vmem>>, vector<12x72xf32>
    tpu.vector_store %arg12[%c252_1413, %c0_1414], %830 {strides = array<i32>} : memref<288x72xf32, #tpu.memory_space<vmem>>, vector<12x72xf32>,
    %c336_1415 = arith.constant 336 : index
    %c0_1416 = arith.constant 0 : index
    %832 = vector.load %arg11[%c336_1415, %c0_1416] : memref<392x8xf32, #tpu.memory_space<vmem>>, vector<12x8xf32>
    %c337_1417 = arith.constant 337 : index
    %c0_1418 = arith.constant 0 : index
    %833 = vector.load %arg11[%c337_1417, %c0_1418] : memref<392x8xf32, #tpu.memory_space<vmem>>, vector<12x8xf32>
    %c338_1419 = arith.constant 338 : index
    %c0_1420 = arith.constant 0 : index
    %834 = vector.load %arg11[%c338_1419, %c0_1420] : memref<392x8xf32, #tpu.memory_space<vmem>>, vector<12x8xf32>
    %c350_1421 = arith.constant 350 : index
    %c0_1422 = arith.constant 0 : index
    %835 = vector.load %arg11[%c350_1421, %c0_1422] : memref<392x8xf32, #tpu.memory_space<vmem>>, vector<12x8xf32>
    %c351_1423 = arith.constant 351 : index
    %c0_1424 = arith.constant 0 : index
    %836 = vector.load %arg11[%c351_1423, %c0_1424] : memref<392x8xf32, #tpu.memory_space<vmem>>, vector<12x8xf32>
    %c352_1425 = arith.constant 352 : index
    %c0_1426 = arith.constant 0 : index
    %837 = vector.load %arg11[%c352_1425, %c0_1426] : memref<392x8xf32, #tpu.memory_space<vmem>>, vector<12x8xf32>
    %c364_1427 = arith.constant 364 : index
    %c0_1428 = arith.constant 0 : index
    %838 = vector.load %arg11[%c364_1427, %c0_1428] : memref<392x8xf32, #tpu.memory_space<vmem>>, vector<12x8xf32>
    %c365 = arith.constant 365 : index
    %c0_1429 = arith.constant 0 : index
    %839 = vector.load %arg11[%c365, %c0_1429] : memref<392x8xf32, #tpu.memory_space<vmem>>, vector<12x8xf32>
    %c366 = arith.constant 366 : index
    %c0_1430 = arith.constant 0 : index
    %840 = vector.load %arg11[%c366, %c0_1430] : memref<392x8xf32, #tpu.memory_space<vmem>>, vector<12x8xf32>
    %841 = tpu.concatenate %832, %833, %834, %835, %836, %837, %838, %839, %840 in 1 : vector<12x8xf32>, vector<12x8xf32>, vector<12x8xf32>, vector<12x8xf32>, vector<12x8xf32>, vector<12x8xf32>, vector<12x8xf32>, vector<12x8xf32>, vector<12x8xf32> -> vector<12x72xf32>
    %c264 = arith.constant 264 : index
    %c0_1431 = arith.constant 0 : index
    %842 = vector.load %arg12[%c264, %c0_1431] : memref<288x72xf32, #tpu.memory_space<vmem>>, vector<12x72xf32>
    tpu.vector_store %arg12[%c264, %c0_1431], %841 {strides = array<i32>} : memref<288x72xf32, #tpu.memory_space<vmem>>, vector<12x72xf32>,
    %c350_1432 = arith.constant 350 : index
    %c0_1433 = arith.constant 0 : index
    %843 = vector.load %arg11[%c350_1432, %c0_1433] : memref<392x8xf32, #tpu.memory_space<vmem>>, vector<12x8xf32>
    %c351_1434 = arith.constant 351 : index
    %c0_1435 = arith.constant 0 : index
    %844 = vector.load %arg11[%c351_1434, %c0_1435] : memref<392x8xf32, #tpu.memory_space<vmem>>, vector<12x8xf32>
    %c352_1436 = arith.constant 352 : index
    %c0_1437 = arith.constant 0 : index
    %845 = vector.load %arg11[%c352_1436, %c0_1437] : memref<392x8xf32, #tpu.memory_space<vmem>>, vector<12x8xf32>
    %c364_1438 = arith.constant 364 : index
    %c0_1439 = arith.constant 0 : index
    %846 = vector.load %arg11[%c364_1438, %c0_1439] : memref<392x8xf32, #tpu.memory_space<vmem>>, vector<12x8xf32>
    %c365_1440 = arith.constant 365 : index
    %c0_1441 = arith.constant 0 : index
    %847 = vector.load %arg11[%c365_1440, %c0_1441] : memref<392x8xf32, #tpu.memory_space<vmem>>, vector<12x8xf32>
    %c366_1442 = arith.constant 366 : index
    %c0_1443 = arith.constant 0 : index
    %848 = vector.load %arg11[%c366_1442, %c0_1443] : memref<392x8xf32, #tpu.memory_space<vmem>>, vector<12x8xf32>
    %c378_1444 = arith.constant 378 : index
    %c0_1445 = arith.constant 0 : index
    %849 = vector.load %arg11[%c378_1444, %c0_1445] : memref<392x8xf32, #tpu.memory_space<vmem>>, vector<12x8xf32>
    %c379 = arith.constant 379 : index
    %c0_1446 = arith.constant 0 : index
    %850 = vector.load %arg11[%c379, %c0_1446] : memref<392x8xf32, #tpu.memory_space<vmem>>, vector<12x8xf32>
    %c380 = arith.constant 380 : index
    %c0_1447 = arith.constant 0 : index
    %851 = vector.load %arg11[%c380, %c0_1447] : memref<392x8xf32, #tpu.memory_space<vmem>>, vector<12x8xf32>
    %852 = tpu.concatenate %843, %844, %845, %846, %847, %848, %849, %850, %851 in 1 : vector<12x8xf32>, vector<12x8xf32>, vector<12x8xf32>, vector<12x8xf32>, vector<12x8xf32>, vector<12x8xf32>, vector<12x8xf32>, vector<12x8xf32>, vector<12x8xf32> -> vector<12x72xf32>
    %c276 = arith.constant 276 : index
    %c0_1448 = arith.constant 0 : index
    %853 = vector.load %arg12[%c276, %c0_1448] : memref<288x72xf32, #tpu.memory_space<vmem>>, vector<12x72xf32>
    tpu.vector_store %arg12[%c276, %c0_1448], %852 {strides = array<i32>} : memref<288x72xf32, #tpu.memory_space<vmem>>, vector<12x72xf32>,
    %c0_1449 = arith.constant 0 : index
    %c0_1450 = arith.constant 0 : index
    %854 = vector.load %arg12[%c0_1449, %c0_1450] : memref<288x72xf32, #tpu.memory_space<vmem>>, vector<288x72xf32>
    %c0_1451 = arith.constant 0 : index
    %c0_1452 = arith.constant 0 : index
    %855 = vector.load %arg4[%c0_1451, %c0_1452] : memref<72x8xf32, #tpu.memory_space<vmem>>, vector<72x8xf32>
    %cst_1453 = arith.constant dense<0.000000e+00> : vector<288x8xf32>
    %856 = tpu.matmul %854, %855, %cst_1453 {dimension_numbers = #tpu.dot_dimension_numbers<[1], [0], [0], [1], [0, 0, 1, 1], [], []>} : vector<288x72xf32>, vector<72x8xf32>, vector<288x8xf32> -> vector<288x8xf32>
    %c0_1454 = arith.constant 0 : index
    %c0_1455 = arith.constant 0 : index
    %857 = vector.load %arg5[%c0_1454, %c0_1455] : memref<1x8xf32, #tpu.memory_space<vmem>>, vector<1x8xf32>
    %c0_1456 = arith.constant 0 : index
    %c0_1457 = arith.constant 0 : index
    %858 = vector.load %arg6[%c0_1456, %c0_1457] : memref<1x8xf32, #tpu.memory_space<vmem>>, vector<1x8xf32>
    %cst_1458 = arith.constant dense<0.000000e+00> : vector<8xf32>
    %859 = vector.multi_reduction <add>, %856, %cst_1458 [0] : vector<288x8xf32> to vector<8xf32>
    %860 = vector.shape_cast %859 : vector<8xf32> to vector<1x8xf32>
    %cst_1459 = arith.constant 0.00347222225 : f32
    %861 = vector.broadcast %cst_1459 : f32 to vector<1x8xf32>
    %862 = arith.mulf %860, %861 : vector<1x8xf32>
    %863 = arith.mulf %856, %856 : vector<288x8xf32>
    %cst_1460 = arith.constant dense<0.000000e+00> : vector<8xf32>
    %864 = vector.multi_reduction <add>, %863, %cst_1460 [0] : vector<288x8xf32> to vector<8xf32>
    %865 = vector.shape_cast %864 : vector<8xf32> to vector<1x8xf32>
    %cst_1461 = arith.constant 0.00347222225 : f32
    %866 = vector.broadcast %cst_1461 : f32 to vector<1x8xf32>
    %867 = arith.mulf %865, %866 : vector<1x8xf32>
    %868 = arith.mulf %862, %862 : vector<1x8xf32>
    %869 = arith.subf %867, %868 : vector<1x8xf32>
    %870 = vector.broadcast %862 : vector<1x8xf32> to vector<288x8xf32>
    %871 = arith.subf %856, %870 : vector<288x8xf32>
    %cst_1462 = arith.constant 9.99999974E-6 : f32
    %872 = vector.broadcast %cst_1462 : f32 to vector<1x8xf32>
    %873 = arith.addf %869, %872 : vector<1x8xf32>
    %874 = math.rsqrt %873 : vector<1x8xf32>
    %875 = vector.broadcast %874 : vector<1x8xf32> to vector<288x8xf32>
    %876 = arith.mulf %871, %875 : vector<288x8xf32>
    %877 = vector.broadcast %857 : vector<1x8xf32> to vector<288x8xf32>
    %878 = arith.mulf %876, %877 : vector<288x8xf32>
    %879 = vector.broadcast %858 : vector<1x8xf32> to vector<288x8xf32>
    %880 = arith.addf %878, %879 : vector<288x8xf32>
    %cst_1463 = arith.constant 0.000000e+00 : f32
    %881 = vector.broadcast %cst_1463 : f32 to vector<288x8xf32>
    %882 = arith.maximumf %880, %881 : vector<288x8xf32>
    %c0_1464 = arith.constant 0 : index
    %c0_1465 = arith.constant 0 : index
    %883 = vector.load %arg7[%c0_1464, %c0_1465] : memref<8x16xf32, #tpu.memory_space<vmem>>, vector<8x16xf32>
    %cst_1466 = arith.constant dense<0.000000e+00> : vector<288x16xf32>
    %884 = tpu.matmul %882, %883, %cst_1466 {dimension_numbers = #tpu.dot_dimension_numbers<[1], [0], [0], [1], [0, 0, 1, 1], [], []>} : vector<288x8xf32>, vector<8x16xf32>, vector<288x16xf32> -> vector<288x16xf32>
    %c0_1467 = arith.constant 0 : index
    %c0_1468 = arith.constant 0 : index
    %885 = vector.load %arg8[%c0_1467, %c0_1468] : memref<1x16xf32, #tpu.memory_space<vmem>>, vector<1x16xf32>
    %886 = vector.broadcast %885 : vector<1x16xf32> to vector<288x16xf32>
    %887 = arith.addf %884, %886 : vector<288x16xf32>
    %c0_1469 = arith.constant 0 : index
    %c0_1470 = arith.constant 0 : index
    %888 = vector.load %arg9[%c0_1469, %c0_1470] : memref<288x16xf32, #tpu.memory_space<vmem>>, vector<288x16xf32>
    tpu.vector_store %arg9[%c0_1469, %c0_1470], %887 {strides = array<i32>} : memref<288x16xf32, #tpu.memory_space<vmem>>, vector<288x16xf32>,
    return
  }
}

</mosaic_0001>

<llo_original>
// kernel: decoder_block_forward.1
$region0: #{decoder_block_forward.1}
  #allocation0 [shape = 'u32[]', space=smem, size = 0x4, offset = 0x4, fixed_abs, tag = 'smem constant byte address 0x4 - core index']
  #allocation1 [shape = 'u32[144,128]{1,0:T(1,128)}', space=vmem, size = 0x12000, scoped, tag = 'internal scratch']
  #allocation2 [shape = 'f32[392,36]{1,0:T(8,128)}', space=vmem, size = 0x31000, scoped, tag = 'scratch operand']
  #allocation3 [shape = 'f32[392,8]{1,0:T(8,128)}', space=vmem, size = 0x31000, scoped, tag = 'scratch operand']
  #allocation4 [shape = 'f32[288,72]{1,0:T(8,128)}', space=vmem, size = 0x24000, scoped, tag = 'scratch operand']
  %s0 = inlined_call_operand.vmem [shape: f32[2,16,16,4], index: 0, kind: input, shape index: {}]
  %s1 = inlined_call_operand.vmem [shape: f32[36,8], index: 1, kind: input, shape index: {}]
  %s2 = inlined_call_operand.vmem [shape: f32[1,8], index: 2, kind: input, shape index: {}]
  %s3 = inlined_call_operand.vmem [shape: f32[1,8], index: 3, kind: input, shape index: {}]
  %s4 = inlined_call_operand.vmem [shape: f32[72,8], index: 4, kind: input, shape index: {}]
  %s5 = inlined_call_operand.vmem [shape: f32[1,8], index: 5, kind: input, shape index: {}]
  %s6 = inlined_call_operand.vmem [shape: f32[1,8], index: 6, kind: input, shape index: {}]
  %s7 = inlined_call_operand.vmem [shape: f32[8,16], index: 7, kind: input, shape index: {}]
  %s8 = inlined_call_operand.vmem [shape: f32[1,16], index: 8, kind: input, shape index: {}]
  %s9 = inlined_call_operand.vmem [shape: f32[288,16], index: 9, kind: output, shape index: {}]
  %s10 = sld [smem:[#allocation0]]
  $region46: #{decoder_block_forward.1} parent=0
    _
  %s12 = ssub.s32 1, %s10
  %s13 = scalar_select 0, %s12, %s10
  // Predicated region
  $region2: #{decoder_block_forward.1} parent=0 // pred_check
    _
  $region3: #{decoder_block_forward.1} parent=0 // pred_check_branch
    %15 = sbr.rel (0) target = $region5
  $region4: #{decoder_block_forward.1} parent=0 // pred_region
    _
  $region5: #{decoder_block_forward.1} parent=0 // pred_fallthru
    _
  // Predicated region
  $region6: #{decoder_block_forward.1} parent=0 // pred_check
    _
  $region7: #{decoder_block_forward.1} parent=0 // pred_check_branch
    %17 = sbr.rel (0) target = $region9
  $region8: #{decoder_block_forward.1} parent=0 // pred_region
    _
  $region9: #{decoder_block_forward.1} parent=0 // pred_fallthru
    _
  // Predicated region
  $region10: #{decoder_block_forward.1} parent=0 // pred_check
    _
  $region11: #{decoder_block_forward.1} parent=0 // pred_check_branch
    %19 = sbr.rel (0) target = $region13
  $region12: #{decoder_block_forward.1} parent=0 // pred_region
    _
  $region13: #{decoder_block_forward.1} parent=0 // pred_fallthru
    _
  // Predicated region
  $region14: #{decoder_block_forward.1} parent=0 // pred_check
    _
  $region15: #{decoder_block_forward.1} parent=0 // pred_check_branch
    %21 = sbr.rel (0) target = $region17
  $region16: #{decoder_block_forward.1} parent=0 // pred_region
    _
  $region17: #{decoder_block_forward.1} parent=0 // pred_fallthru
    _
  // Predicated region
  $region18: #{decoder_block_forward.1} parent=0 // pred_check
    _
  $region19: #{decoder_block_forward.1} parent=0 // pred_check_branch
    %23 = sbr.rel (0) target = $region21
  $region20: #{decoder_block_forward.1} parent=0 // pred_region
    _
  $region21: #{decoder_block_forward.1} parent=0 // pred_fallthru
    _
  // Predicated region
  $region22: #{decoder_block_forward.1} parent=0 // pred_check
    _
  $region23: #{decoder_block_forward.1} parent=0 // pred_check_branch
    %25 = sbr.rel (0) target = $region25
  $region24: #{decoder_block_forward.1} parent=0 // pred_region
    _
  $region25: #{decoder_block_forward.1} parent=0 // pred_fallthru
    _
  // Predicated region
  $region26: #{decoder_block_forward.1} parent=0 // pred_check
    _
  $region27: #{decoder_block_forward.1} parent=0 // pred_check_branch
    %27 = sbr.rel (0) target = $region29
  $region28: #{decoder_block_forward.1} parent=0 // pred_region
    _
  $region29: #{decoder_block_forward.1} parent=0 // pred_fallthru
    _
  // Predicated region
  $region30: #{decoder_block_forward.1} parent=0 // pred_check
    _
  $region31: #{decoder_block_forward.1} parent=0 // pred_check_branch
    %29 = sbr.rel (0) target = $region33
  $region32: #{decoder_block_forward.1} parent=0 // pred_region
    _
  $region33: #{decoder_block_forward.1} parent=0 // pred_fallthru
    _
  // Predicated region
  $region34: #{decoder_block_forward.1} parent=0 // pred_check
    _
  $region35: #{decoder_block_forward.1} parent=0 // pred_check_branch
    %31 = sbr.rel (0) target = $region37
  $region36: #{decoder_block_forward.1} parent=0 // pred_region
    _
  $region37: #{decoder_block_forward.1} parent=0 // pred_fallthru
    _
  %v32 = vld [vmem:[%s0] sm:$0xff]
  %v33 = vld [vmem:[%s0 + $0x8] sm:$0x3f]
  %v34 = vld [vmem:[%s0 + $0x1] sm:$0xff]
  %v35 = vld [vmem:[%s0 + $0x9] sm:$0x3f]
  %v36 = vld [vmem:[%s0 + $0x2] sm:$0xff]
  %v37 = vld [vmem:[%s0 + $0xa] sm:$0x3f]
  %s38 = scalar_lea.vmem %s0, 16
  %v39 = vld [vmem:[%s38] sm:$0xff]
  %v40 = vld [vmem:[%s38 + $0x8] sm:$0x3f]
  %v41 = vld [vmem:[%s38 + $0x1] sm:$0xff]
  %v42 = vld [vmem:[%s38 + $0x9] sm:$0x3f]
  %v43 = vld [vmem:[%s38 + $0x2] sm:$0xff]
  %v44 = vld [vmem:[%s38 + $0xa] sm:$0x3f]
  %s45 = scalar_lea.vmem %s0, 32
  %v46 = vld [vmem:[%s45] sm:$0xff]
  %v47 = vld [vmem:[%s45 + $0x8] sm:$0x3f]
  %v48 = vld [vmem:[%s45 + $0x1] sm:$0xff]
  %v49 = vld [vmem:[%s45 + $0x9] sm:$0x3f]
  %v50 = vld [vmem:[%s45 + $0x2] sm:$0xff]
  %v51 = vld [vmem:[%s45 + $0xa] sm:$0x3f]
  %54 = vrot.lane.b32.xlu0 %v34, 4
  %v55 = vpop.permute.xlu0 %54
  %56 = vrot.lane.b32.xlu0 %v35, 4
  %v57 = vpop.permute.xlu0 %56
  %62 = vrot.lane.b32.xlu0 %v36, 8
  %v63 = vpop.permute.xlu0 %62
  %64 = vrot.lane.b32.xlu0 %v37, 8
  %v65 = vpop.permute.xlu0 %64
  %70 = vrot.lane.b32.xlu0 %v39, 12
  %v71 = vpop.permute.xlu0 %70
  %72 = vrot.lane.b32.xlu0 %v40, 12
  %v73 = vpop.permute.xlu0 %72
  %78 = vrot.lane.b32.xlu0 %v41, 16
  %v79 = vpop.permute.xlu0 %78
  %80 = vrot.lane.b32.xlu0 %v42, 16
  %v81 = vpop.permute.xlu0 %80
  %86 = vrot.lane.b32.xlu0 %v43, 20
  %v87 = vpop.permute.xlu0 %86
  %88 = vrot.lane.b32.xlu0 %v44, 20
  %v89 = vpop.permute.xlu0 %88
  %94 = vrot.lane.b32.xlu0 %v46, 24
  %v95 = vpop.permute.xlu0 %94
  %96 = vrot.lane.b32.xlu0 %v47, 24
  %v97 = vpop.permute.xlu0 %96
  %102 = vrot.lane.b32.xlu0 %v48, 28
  %v103 = vpop.permute.xlu0 %102
  %104 = vrot.lane.b32.xlu0 %v49, 28
  %v105 = vpop.permute.xlu0 %104
  %110 = vrot.lane.b32.xlu0 %v50, 32
  %v111 = vpop.permute.xlu0 %110
  %112 = vrot.lane.b32.xlu0 %v51, 32
  %v113 = vpop.permute.xlu0 %112
  %vm116 = vcmask 31744
  %v117 = vsel %vm116, %v32, %v55
  %v118 = vsel %vm116, %v33, %v57
  %vm119 = vcmask 64512
  %v120 = vsel %vm119, %v117, %v63
  %v121 = vsel %vm119, %v118, %v65
  %vm122 = vcmask 97280
  %v123 = vsel %vm122, %v120, %v71
  %v124 = vsel %vm122, %v121, %v73
  %vm125 = vcmask 130048
  %v126 = vsel %vm125, %v123, %v79
  %v127 = vsel %vm125, %v124, %v81
  %vm128 = vcmask 162816
  %v129 = vsel %vm128, %v126, %v87
  %v130 = vsel %vm128, %v127, %v89
  %vm131 = vcmask 195584
  %v132 = vsel %vm131, %v129, %v95
  %v133 = vsel %vm131, %v130, %v97
  %vm134 = vcmask 228352
  %v135 = vsel %vm134, %v132, %v103
  %v136 = vsel %vm134, %v133, %v105
  %vm137 = vcmask 261120
  %v138 = vsel %vm137, %v135, %v111
  %v139 = vsel %vm137, %v136, %v113
  %vm140 = vcmask 293888
  %141 = vst.msk [vmem:[#allocation2] sm:$0xff] %vm140, %v138
  %vm142 = vcmask 291840
  %143 = vst.msk [vmem:[#allocation2 + $0x8] sm:$0x3f] %vm142, %v139
  %v144 = vld [vmem:[%s38] sm:$0xff]
  %v145 = vld [vmem:[%s38 + $0x8] sm:$0x3f]
  %v146 = vld [vmem:[%s38 + $0x1] sm:$0xff]
  %v147 = vld [vmem:[%s38 + $0x9] sm:$0x3f]
  %v148 = vld [vmem:[%s38 + $0x2] sm:$0xff]
  %v149 = vld [vmem:[%s38 + $0xa] sm:$0x3f]
  %v150 = vld [vmem:[%s45] sm:$0xff]
  %v151 = vld [vmem:[%s45 + $0x8] sm:$0x3f]
  %v152 = vld [vmem:[%s45 + $0x1] sm:$0xff]
  %v153 = vld [vmem:[%s45 + $0x9] sm:$0x3f]
  %v154 = vld [vmem:[%s45 + $0x2] sm:$0xff]
  %v155 = vld [vmem:[%s45 + $0xa] sm:$0x3f]
  %s156 = scalar_lea.vmem %s0, 48
  %v157 = vld [vmem:[%s156] sm:$0xff]
  %v158 = vld [vmem:[%s156 + $0x8] sm:$0x3f]
  %v159 = vld [vmem:[%s156 + $0x1] sm:$0xff]
  %v160 = vld [vmem:[%s156 + $0x9] sm:$0x3f]
  %v161 = vld [vmem:[%s156 + $0x2] sm:$0xff]
  %v162 = vld [vmem:[%s156 + $0xa] sm:$0x3f]
  %165 = vrot.lane.b32.xlu0 %v146, 4
  %v166 = vpop.permute.xlu0 %165
  %167 = vrot.lane.b32.xlu0 %v147, 4
  %v168 = vpop.permute.xlu0 %167
  %173 = vrot.lane.b32.xlu0 %v148, 8
  %v174 = vpop.permute.xlu0 %173
  %175 = vrot.lane.b32.xlu0 %v149, 8
  %v176 = vpop.permute.xlu0 %175
  %181 = vrot.lane.b32.xlu0 %v150, 12
  %v182 = vpop.permute.xlu0 %181
  %183 = vrot.lane.b32.xlu0 %v151, 12
  %v184 = vpop.permute.xlu0 %183
  %189 = vrot.lane.b32.xlu0 %v152, 16
  %v190 = vpop.permute.xlu0 %189
  %191 = vrot.lane.b32.xlu0 %v153, 16
  %v192 = vpop.permute.xlu0 %191
  %197 = vrot.lane.b32.xlu0 %v154, 20
  %v198 = vpop.permute.xlu0 %197
  %199 = vrot.lane.b32.xlu0 %v155, 20
  %v200 = vpop.permute.xlu0 %199
  %205 = vrot.lane.b32.xlu0 %v157, 24
  %v206 = vpop.permute.xlu0 %205
  %207 = vrot.lane.b32.xlu0 %v158, 24
  %v208 = vpop.permute.xlu0 %207
  %213 = vrot.lane.b32.xlu0 %v159, 28
  %v214 = vpop.permute.xlu0 %213
  %215 = vrot.lane.b32.xlu0 %v160, 28
  %v216 = vpop.permute.xlu0 %215
  %221 = vrot.lane.b32.xlu0 %v161, 32
  %v222 = vpop.permute.xlu0 %221
  %223 = vrot.lane.b32.xlu0 %v162, 32
  %v224 = vpop.permute.xlu0 %223
  %v227 = vsel %vm116, %v144, %v166
  %v228 = vsel %vm116, %v145, %v168
  %v229 = vsel %vm119, %v227, %v174
  %v230 = vsel %vm119, %v228, %v176
  %v231 = vsel %vm122, %v229, %v182
  %v232 = vsel %vm122, %v230, %v184
  %v233 = vsel %vm125, %v231, %v190
  %v234 = vsel %vm125, %v232, %v192
  %v235 = vsel %vm128, %v233, %v198
  %v236 = vsel %vm128, %v234, %v200
  %v237 = vsel %vm131, %v235, %v206
  %v238 = vsel %vm131, %v236, %v208
  %v239 = vsel %vm134, %v237, %v214
  %v240 = vsel %vm134, %v238, %v216
  %v241 = vsel %vm137, %v239, %v222
  %v242 = vsel %vm137, %v240, %v224
  %243 = vst.msk [vmem:[#allocation2 + $0xe] sm:$0xff] %vm140, %v241
  %244 = vst.msk [vmem:[#allocation2 + $0x16] sm:$0x3f] %vm142, %v242
  %v245 = vld [vmem:[%s45] sm:$0xff]
  %v246 = vld [vmem:[%s45 + $0x8] sm:$0x3f]
  %v247 = vld [vmem:[%s45 + $0x1] sm:$0xff]
  %v248 = vld [vmem:[%s45 + $0x9] sm:$0x3f]
  %v249 = vld [vmem:[%s45 + $0x2] sm:$0xff]
  %v250 = vld [vmem:[%s45 + $0xa] sm:$0x3f]
  %v251 = vld [vmem:[%s156] sm:$0xff]
  %v252 = vld [vmem:[%s156 + $0x8] sm:$0x3f]
  %v253 = vld [vmem:[%s156 + $0x1] sm:$0xff]
  %v254 = vld [vmem:[%s156 + $0x9] sm:$0x3f]
  %v255 = vld [vmem:[%s156 + $0x2] sm:$0xff]
  %v256 = vld [vmem:[%s156 + $0xa] sm:$0x3f]
  %s257 = scalar_lea.vmem %s0, 64
  %v258 = vld [vmem:[%s257] sm:$0xff]
  %v259 = vld [vmem:[%s257 + $0x8] sm:$0x3f]
  %v260 = vld [vmem:[%s257 + $0x1] sm:$0xff]
  %v261 = vld [vmem:[%s257 + $0x9] sm:$0x3f]
  %v262 = vld [vmem:[%s257 + $0x2] sm:$0xff]
  %v263 = vld [vmem:[%s257 + $0xa] sm:$0x3f]
  %266 = vrot.lane.b32.xlu0 %v247, 4
  %v267 = vpop.permute.xlu0 %266
  %268 = vrot.lane.b32.xlu0 %v248, 4
  %v269 = vpop.permute.xlu0 %268
  %274 = vrot.lane.b32.xlu0 %v249, 8
  %v275 = vpop.permute.xlu0 %274
  %276 = vrot.lane.b32.xlu0 %v250, 8
  %v277 = vpop.permute.xlu0 %276
  %282 = vrot.lane.b32.xlu0 %v251, 12
  %v283 = vpop.permute.xlu0 %282
  %284 = vrot.lane.b32.xlu0 %v252, 12
  %v285 = vpop.permute.xlu0 %284
  %290 = vrot.lane.b32.xlu0 %v253, 16
  %v291 = vpop.permute.xlu0 %290
  %292 = vrot.lane.b32.xlu0 %v254, 16
  %v293 = vpop.permute.xlu0 %292
  %298 = vrot.lane.b32.xlu0 %v255, 20
  %v299 = vpop.permute.xlu0 %298
  %300 = vrot.lane.b32.xlu0 %v256, 20
  %v301 = vpop.permute.xlu0 %300
  %306 = vrot.lane.b32.xlu0 %v258, 24
  %v307 = vpop.permute.xlu0 %306
  %308 = vrot.lane.b32.xlu0 %v259, 24
  %v309 = vpop.permute.xlu0 %308
  %314 = vrot.lane.b32.xlu0 %v260, 28
  %v315 = vpop.permute.xlu0 %314
  %316 = vrot.lane.b32.xlu0 %v261, 28
  %v317 = vpop.permute.xlu0 %316
  %322 = vrot.lane.b32.xlu0 %v262, 32
  %v323 = vpop.permute.xlu0 %322
  %324 = vrot.lane.b32.xlu0 %v263, 32
  %v325 = vpop.permute.xlu0 %324
  %v328 = vsel %vm116, %v245, %v267
  %v329 = vsel %vm116, %v246, %v269
  %v330 = vsel %vm119, %v328, %v275
  %v331 = vsel %vm119, %v329, %v277
  %v332 = vsel %vm122, %v330, %v283
  %v333 = vsel %vm122, %v331, %v285
  %v334 = vsel %vm125, %v332, %v291
  %v335 = vsel %vm125, %v333, %v293
  %v336 = vsel %vm128, %v334, %v299
  %v337 = vsel %vm128, %v335, %v301
  %v338 = vsel %vm131, %v336, %v307
  %v339 = vsel %vm131, %v337, %v309
  %v340 = vsel %vm134, %v338, %v315
  %v341 = vsel %vm134, %v339, %v317
  %v342 = vsel %vm137, %v340, %v323
  %v343 = vsel %vm137, %v341, %v325
  %344 = vst.msk [vmem:[#allocation2 + $0x1c] sm:$0xff] %vm140, %v342
  %345 = vst.msk [vmem:[#allocation2 + $0x24] sm:$0x3f] %vm142, %v343
  %v346 = vld [vmem:[%s156] sm:$0xff]
  %v347 = vld [vmem:[%s156 + $0x8] sm:$0x3f]
  %v348 = vld [vmem:[%s156 + $0x1] sm:$0xff]
  %v349 = vld [vmem:[%s156 + $0x9] sm:$0x3f]
  %v350 = vld [vmem:[%s156 + $0x2] sm:$0xff]
  %v351 = vld [vmem:[%s156 + $0xa] sm:$0x3f]
  %v352 = vld [vmem:[%s257] sm:$0xff]
  %v353 = vld [vmem:[%s257 + $0x8] sm:$0x3f]
  %v354 = vld [vmem:[%s257 + $0x1] sm:$0xff]
  %v355 = vld [vmem:[%s257 + $0x9] sm:$0x3f]
  %v356 = vld [vmem:[%s257 + $0x2] sm:$0xff]
  %v357 = vld [vmem:[%s257 + $0xa] sm:$0x3f]
  %s358 = scalar_lea.vmem %s0, 80
  %v359 = vld [vmem:[%s358] sm:$0xff]
  %v360 = vld [vmem:[%s358 + $0x8] sm:$0x3f]
  %v361 = vld [vmem:[%s358 + $0x1] sm:$0xff]
  %v362 = vld [vmem:[%s358 + $0x9] sm:$0x3f]
  %v363 = vld [vmem:[%s358 + $0x2] sm:$0xff]
  %v364 = vld [vmem:[%s358 + $0xa] sm:$0x3f]
  %367 = vrot.lane.b32.xlu0 %v348, 4
  %v368 = vpop.permute.xlu0 %367
  %369 = vrot.lane.b32.xlu0 %v349, 4
  %v370 = vpop.permute.xlu0 %369
  %375 = vrot.lane.b32.xlu0 %v350, 8
  %v376 = vpop.permute.xlu0 %375
  %377 = vrot.lane.b32.xlu0 %v351, 8
  %v378 = vpop.permute.xlu0 %377
  %383 = vrot.lane.b32.xlu0 %v352, 12
  %v384 = vpop.permute.xlu0 %383
  %385 = vrot.lane.b32.xlu0 %v353, 12
  %v386 = vpop.permute.xlu0 %385
  %391 = vrot.lane.b32.xlu0 %v354, 16
  %v392 = vpop.permute.xlu0 %391
  %393 = vrot.lane.b32.xlu0 %v355, 16
  %v394 = vpop.permute.xlu0 %393
  %399 = vrot.lane.b32.xlu0 %v356, 20
  %v400 = vpop.permute.xlu0 %399
  %401 = vrot.lane.b32.xlu0 %v357, 20
  %v402 = vpop.permute.xlu0 %401
  %407 = vrot.lane.b32.xlu0 %v359, 24
  %v408 = vpop.permute.xlu0 %407
  %409 = vrot.lane.b32.xlu0 %v360, 24
  %v410 = vpop.permute.xlu0 %409
  %415 = vrot.lane.b32.xlu0 %v361, 28
  %v416 = vpop.permute.xlu0 %415
  %417 = vrot.lane.b32.xlu0 %v362, 28
  %v418 = vpop.permute.xlu0 %417
  %423 = vrot.lane.b32.xlu0 %v363, 32
  %v424 = vpop.permute.xlu0 %423
  %425 = vrot.lane.b32.xlu0 %v364, 32
  %v426 = vpop.permute.xlu0 %425
  %v429 = vsel %vm116, %v346, %v368
  %v430 = vsel %vm116, %v347, %v370
  %v431 = vsel %vm119, %v429, %v376
  %v432 = vsel %vm119, %v430, %v378
  %v433 = vsel %vm122, %v431, %v384
  %v434 = vsel %vm122, %v432, %v386
  %v435 = vsel %vm125, %v433, %v392
  %v436 = vsel %vm125, %v434, %v394
  %v437 = vsel %vm128, %v435, %v400
  %v438 = vsel %vm128, %v436, %v402
  %v439 = vsel %vm131, %v437, %v408
  %v440 = vsel %vm131, %v438, %v410
  %v441 = vsel %vm134, %v439, %v416
  %v442 = vsel %vm134, %v440, %v418
  %v443 = vsel %vm137, %v441, %v424
  %v444 = vsel %vm137, %v442, %v426
  %445 = vst.msk [vmem:[#allocation2 + $0x2a] sm:$0xff] %vm140, %v443
  %446 = vst.msk [vmem:[#allocation2 + $0x32] sm:$0x3f] %vm142, %v444
  %v447 = vld [vmem:[%s257] sm:$0xff]
  %v448 = vld [vmem:[%s257 + $0x8] sm:$0x3f]
  %v449 = vld [vmem:[%s257 + $0x1] sm:$0xff]
  %v450 = vld [vmem:[%s257 + $0x9] sm:$0x3f]
  %v451 = vld [vmem:[%s257 + $0x2] sm:$0xff]
  %v452 = vld [vmem:[%s257 + $0xa] sm:$0x3f]
  %v453 = vld [vmem:[%s358] sm:$0xff]
  %v454 = vld [vmem:[%s358 + $0x8] sm:$0x3f]
  %v455 = vld [vmem:[%s358 + $0x1] sm:$0xff]
  %v456 = vld [vmem:[%s358 + $0x9] sm:$0x3f]
  %v457 = vld [vmem:[%s358 + $0x2] sm:$0xff]
  %v458 = vld [vmem:[%s358 + $0xa] sm:$0x3f]
  %s459 = scalar_lea.vmem %s0, 96
  %v460 = vld [vmem:[%s459] sm:$0xff]
  %v461 = vld [vmem:[%s459 + $0x8] sm:$0x3f]
  %v462 = vld [vmem:[%s459 + $0x1] sm:$0xff]
  %v463 = vld [vmem:[%s459 + $0x9] sm:$0x3f]
  %v464 = vld [vmem:[%s459 + $0x2] sm:$0xff]
  %v465 = vld [vmem:[%s459 + $0xa] sm:$0x3f]
  %468 = vrot.lane.b32.xlu0 %v449, 4
  %v469 = vpop.permute.xlu0 %468
  %470 = vrot.lane.b32.xlu0 %v450, 4
  %v471 = vpop.permute.xlu0 %470
  %476 = vrot.lane.b32.xlu0 %v451, 8
  %v477 = vpop.permute.xlu0 %476
  %478 = vrot.lane.b32.xlu0 %v452, 8
  %v479 = vpop.permute.xlu0 %478
  %484 = vrot.lane.b32.xlu0 %v453, 12
  %v485 = vpop.permute.xlu0 %484
  %486 = vrot.lane.b32.xlu0 %v454, 12
  %v487 = vpop.permute.xlu0 %486
  %492 = vrot.lane.b32.xlu0 %v455, 16
  %v493 = vpop.permute.xlu0 %492
  %494 = vrot.lane.b32.xlu0 %v456, 16
  %v495 = vpop.permute.xlu0 %494
  %500 = vrot.lane.b32.xlu0 %v457, 20
  %v501 = vpop.permute.xlu0 %500
  %502 = vrot.lane.b32.xlu0 %v458, 20
  %v503 = vpop.permute.xlu0 %502
  %508 = vrot.lane.b32.xlu0 %v460, 24
  %v509 = vpop.permute.xlu0 %508
  %510 = vrot.lane.b32.xlu0 %v461, 24
  %v511 = vpop.permute.xlu0 %510
  %516 = vrot.lane.b32.xlu0 %v462, 28
  %v517 = vpop.permute.xlu0 %516
  %518 = vrot.lane.b32.xlu0 %v463, 28
  %v519 = vpop.permute.xlu0 %518
  %524 = vrot.lane.b32.xlu0 %v464, 32
  %v525 = vpop.permute.xlu0 %524
  %526 = vrot.lane.b32.xlu0 %v465, 32
  %v527 = vpop.permute.xlu0 %526
  %v530 = vsel %vm116, %v447, %v469
  %v531 = vsel %vm116, %v448, %v471
  %v532 = vsel %vm119, %v530, %v477
  %v533 = vsel %vm119, %v531, %v479
  %v534 = vsel %vm122, %v532, %v485
  %v535 = vsel %vm122, %v533, %v487
  %v536 = vsel %vm125, %v534, %v493
  %v537 = vsel %vm125, %v535, %v495
  %v538 = vsel %vm128, %v536, %v501
  %v539 = vsel %vm128, %v537, %v503
  %v540 = vsel %vm131, %v538, %v509
  %v541 = vsel %vm131, %v539, %v511
  %v542 = vsel %vm134, %v540, %v517
  %v543 = vsel %vm134, %v541, %v519
  %v544 = vsel %vm137, %v542, %v525
  %v545 = vsel %vm137, %v543, %v527
  %546 = vst.msk [vmem:[#allocation2 + $0x38] sm:$0xff] %vm140, %v544
  %547 = vst.msk [vmem:[#allocation2 + $0x40] sm:$0x3f] %vm142, %v545
  %v548 = vld [vmem:[%s358] sm:$0xff]
  %v549 = vld [vmem:[%s358 + $0x8] sm:$0x3f]
  %v550 = vld [vmem:[%s358 + $0x1] sm:$0xff]
  %v551 = vld [vmem:[%s358 + $0x9] sm:$0x3f]
  %v552 = vld [vmem:[%s358 + $0x2] sm:$0xff]
  %v553 = vld [vmem:[%s358 + $0xa] sm:$0x3f]
  %v554 = vld [vmem:[%s459] sm:$0xff]
  %v555 = vld [vmem:[%s459 + $0x8] sm:$0x3f]
  %v556 = vld [vmem:[%s459 + $0x1] sm:$0xff]
  %v557 = vld [vmem:[%s459 + $0x9] sm:$0x3f]
  %v558 = vld [vmem:[%s459 + $0x2] sm:$0xff]
  %v559 = vld [vmem:[%s459 + $0xa] sm:$0x3f]
  %s560 = scalar_lea.vmem %s0, 112
  %v561 = vld [vmem:[%s560] sm:$0xff]
  %v562 = vld [vmem:[%s560 + $0x8] sm:$0x3f]
  %v563 = vld [vmem:[%s560 + $0x1] sm:$0xff]
  %v564 = vld [vmem:[%s560 + $0x9] sm:$0x3f]
  %v565 = vld [vmem:[%s560 + $0x2] sm:$0xff]
  %v566 = vld [vmem:[%s560 + $0xa] sm:$0x3f]
  %569 = vrot.lane.b32.xlu0 %v550, 4
  %v570 = vpop.permute.xlu0 %569
  %571 = vrot.lane.b32.xlu0 %v551, 4
  %v572 = vpop.permute.xlu0 %571
  %577 = vrot.lane.b32.xlu0 %v552, 8
  %v578 = vpop.permute.xlu0 %577
  %579 = vrot.lane.b32.xlu0 %v553, 8
  %v580 = vpop.permute.xlu0 %579
  %585 = vrot.lane.b32.xlu0 %v554, 12
  %v586 = vpop.permute.xlu0 %585
  %587 = vrot.lane.b32.xlu0 %v555, 12
  %v588 = vpop.permute.xlu0 %587
  %593 = vrot.lane.b32.xlu0 %v556, 16
  %v594 = vpop.permute.xlu0 %593
  %595 = vrot.lane.b32.xlu0 %v557, 16
  %v596 = vpop.permute.xlu0 %595
  %601 = vrot.lane.b32.xlu0 %v558, 20
  %v602 = vpop.permute.xlu0 %601
  %603 = vrot.lane.b32.xlu0 %v559, 20
  %v604 = vpop.permute.xlu0 %603
  %609 = vrot.lane.b32.xlu0 %v561, 24
  %v610 = vpop.permute.xlu0 %609
  %611 = vrot.lane.b32.xlu0 %v562, 24
  %v612 = vpop.permute.xlu0 %611
  %617 = vrot.lane.b32.xlu0 %v563, 28
  %v618 = vpop.permute.xlu0 %617
  %619 = vrot.lane.b32.xlu0 %v564, 28
  %v620 = vpop.permute.xlu0 %619
  %625 = vrot.lane.b32.xlu0 %v565, 32
  %v626 = vpop.permute.xlu0 %625
  %627 = vrot.lane.b32.xlu0 %v566, 32
  %v628 = vpop.permute.xlu0 %627
  %v631 = vsel %vm116, %v548, %v570
  %v632 = vsel %vm116, %v549, %v572
  %v633 = vsel %vm119, %v631, %v578
  %v634 = vsel %vm119, %v632, %v580
  %v635 = vsel %vm122, %v633, %v586
  %v636 = vsel %vm122, %v634, %v588
  %v637 = vsel %vm125, %v635, %v594
  %v638 = vsel %vm125, %v636, %v596
  %v639 = vsel %vm128, %v637, %v602
  %v640 = vsel %vm128, %v638, %v604
  %v641 = vsel %vm131, %v639, %v610
  %v642 = vsel %vm131, %v640, %v612
  %v643 = vsel %vm134, %v641, %v618
  %v644 = vsel %vm134, %v642, %v620
  %v645 = vsel %vm137, %v643, %v626
  %v646 = vsel %vm137, %v644, %v628
  %647 = vst.msk [vmem:[#allocation2 + $0x46] sm:$0xff] %vm140, %v645
  %648 = vst.msk [vmem:[#allocation2 + $0x4e] sm:$0x3f] %vm142, %v646
  %v649 = vld [vmem:[%s459] sm:$0xff]
  %v650 = vld [vmem:[%s459 + $0x8] sm:$0x3f]
  %v651 = vld [vmem:[%s459 + $0x1] sm:$0xff]
  %v652 = vld [vmem:[%s459 + $0x9] sm:$0x3f]
  %v653 = vld [vmem:[%s459 + $0x2] sm:$0xff]
  %v654 = vld [vmem:[%s459 + $0xa] sm:$0x3f]
  %v655 = vld [vmem:[%s560] sm:$0xff]
  %v656 = vld [vmem:[%s560 + $0x8] sm:$0x3f]
  %v657 = vld [vmem:[%s560 + $0x1] sm:$0xff]
  %v658 = vld [vmem:[%s560 + $0x9] sm:$0x3f]
  %v659 = vld [vmem:[%s560 + $0x2] sm:$0xff]
  %v660 = vld [vmem:[%s560 + $0xa] sm:$0x3f]
  %s661 = scalar_lea.vmem %s0, 128
  %v662 = vld [vmem:[%s661] sm:$0xff]
  %v663 = vld [vmem:[%s661 + $0x8] sm:$0x3f]
  %v664 = vld [vmem:[%s661 + $0x1] sm:$0xff]
  %v665 = vld [vmem:[%s661 + $0x9] sm:$0x3f]
  %v666 = vld [vmem:[%s661 + $0x2] sm:$0xff]
  %v667 = vld [vmem:[%s661 + $0xa] sm:$0x3f]
  %670 = vrot.lane.b32.xlu0 %v651, 4
  %v671 = vpop.permute.xlu0 %670
  %672 = vrot.lane.b32.xlu0 %v652, 4
  %v673 = vpop.permute.xlu0 %672
  %678 = vrot.lane.b32.xlu0 %v653, 8
  %v679 = vpop.permute.xlu0 %678
  %680 = vrot.lane.b32.xlu0 %v654, 8
  %v681 = vpop.permute.xlu0 %680
  %686 = vrot.lane.b32.xlu0 %v655, 12
  %v687 = vpop.permute.xlu0 %686
  %688 = vrot.lane.b32.xlu0 %v656, 12
  %v689 = vpop.permute.xlu0 %688
  %694 = vrot.lane.b32.xlu0 %v657, 16
  %v695 = vpop.permute.xlu0 %694
  %696 = vrot.lane.b32.xlu0 %v658, 16
  %v697 = vpop.permute.xlu0 %696
  %702 = vrot.lane.b32.xlu0 %v659, 20
  %v703 = vpop.permute.xlu0 %702
  %704 = vrot.lane.b32.xlu0 %v660, 20
  %v705 = vpop.permute.xlu0 %704
  %710 = vrot.lane.b32.xlu0 %v662, 24
  %v711 = vpop.permute.xlu0 %710
  %712 = vrot.lane.b32.xlu0 %v663, 24
  %v713 = vpop.permute.xlu0 %712
  %718 = vrot.lane.b32.xlu0 %v664, 28
  %v719 = vpop.permute.xlu0 %718
  %720 = vrot.lane.b32.xlu0 %v665, 28
  %v721 = vpop.permute.xlu0 %720
  %726 = vrot.lane.b32.xlu0 %v666, 32
  %v727 = vpop.permute.xlu0 %726
  %728 = vrot.lane.b32.xlu0 %v667, 32
  %v729 = vpop.permute.xlu0 %728
  %v732 = vsel %vm116, %v649, %v671
  %v733 = vsel %vm116, %v650, %v673
  %v734 = vsel %vm119, %v732, %v679
  %v735 = vsel %vm119, %v733, %v681
  %v736 = vsel %vm122, %v734, %v687
  %v737 = vsel %vm122, %v735, %v689
  %v738 = vsel %vm125, %v736, %v695
  %v739 = vsel %vm125, %v737, %v697
  %v740 = vsel %vm128, %v738, %v703
  %v741 = vsel %vm128, %v739, %v705
  %v742 = vsel %vm131, %v740, %v711
  %v743 = vsel %vm131, %v741, %v713
  %v744 = vsel %vm134, %v742, %v719
  %v745 = vsel %vm134, %v743, %v721
  %v746 = vsel %vm137, %v744, %v727
  %v747 = vsel %vm137, %v745, %v729
  %748 = vst.msk [vmem:[#allocation2 + $0x54] sm:$0xff] %vm140, %v746
  %749 = vst.msk [vmem:[#allocation2 + $0x5c] sm:$0x3f] %vm142, %v747
  %v750 = vld [vmem:[%s560] sm:$0xff]
  %v751 = vld [vmem:[%s560 + $0x8] sm:$0x3f]
  %v752 = vld [vmem:[%s560 + $0x1] sm:$0xff]
  %v753 = vld [vmem:[%s560 + $0x9] sm:$0x3f]
  %v754 = vld [vmem:[%s560 + $0x2] sm:$0xff]
  %v755 = vld [vmem:[%s560 + $0xa] sm:$0x3f]
  %v756 = vld [vmem:[%s661] sm:$0xff]
  %v757 = vld [vmem:[%s661 + $0x8] sm:$0x3f]
  %v758 = vld [vmem:[%s661 + $0x1] sm:$0xff]
  %v759 = vld [vmem:[%s661 + $0x9] sm:$0x3f]
  %v760 = vld [vmem:[%s661 + $0x2] sm:$0xff]
  %v761 = vld [vmem:[%s661 + $0xa] sm:$0x3f]
  %s762 = scalar_lea.vmem %s0, 144
  %v763 = vld [vmem:[%s762] sm:$0xff]
  %v764 = vld [vmem:[%s762 + $0x8] sm:$0x3f]
  %v765 = vld [vmem:[%s762 + $0x1] sm:$0xff]
  %v766 = vld [vmem:[%s762 + $0x9] sm:$0x3f]
  %v767 = vld [vmem:[%s762 + $0x2] sm:$0xff]
  %v768 = vld [vmem:[%s762 + $0xa] sm:$0x3f]
  %771 = vrot.lane.b32.xlu0 %v752, 4
  %v772 = vpop.permute.xlu0 %771
  %773 = vrot.lane.b32.xlu0 %v753, 4
  %v774 = vpop.permute.xlu0 %773
  %779 = vrot.lane.b32.xlu0 %v754, 8
  %v780 = vpop.permute.xlu0 %779
  %781 = vrot.lane.b32.xlu0 %v755, 8
  %v782 = vpop.permute.xlu0 %781
  %787 = vrot.lane.b32.xlu0 %v756, 12
  %v788 = vpop.permute.xlu0 %787
  %789 = vrot.lane.b32.xlu0 %v757, 12
  %v790 = vpop.permute.xlu0 %789
  %795 = vrot.lane.b32.xlu0 %v758, 16
  %v796 = vpop.permute.xlu0 %795
  %797 = vrot.lane.b32.xlu0 %v759, 16
  %v798 = vpop.permute.xlu0 %797
  %803 = vrot.lane.b32.xlu0 %v760, 20
  %v804 = vpop.permute.xlu0 %803
  %805 = vrot.lane.b32.xlu0 %v761, 20
  %v806 = vpop.permute.xlu0 %805
  %811 = vrot.lane.b32.xlu0 %v763, 24
  %v812 = vpop.permute.xlu0 %811
  %813 = vrot.lane.b32.xlu0 %v764, 24
  %v814 = vpop.permute.xlu0 %813
  %819 = vrot.lane.b32.xlu0 %v765, 28
  %v820 = vpop.permute.xlu0 %819
  %821 = vrot.lane.b32.xlu0 %v766, 28
  %v822 = vpop.permute.xlu0 %821
  %827 = vrot.lane.b32.xlu0 %v767, 32
  %v828 = vpop.permute.xlu0 %827
  %829 = vrot.lane.b32.xlu0 %v768, 32
  %v830 = vpop.permute.xlu0 %829
  %v833 = vsel %vm116, %v750, %v772
  %v834 = vsel %vm116, %v751, %v774
  %v835 = vsel %vm119, %v833, %v780
  %v836 = vsel %vm119, %v834, %v782
  %v837 = vsel %vm122, %v835, %v788
  %v838 = vsel %vm122, %v836, %v790
  %v839 = vsel %vm125, %v837, %v796
  %v840 = vsel %vm125, %v838, %v798
  %v841 = vsel %vm128, %v839, %v804
  %v842 = vsel %vm128, %v840, %v806
  %v843 = vsel %vm131, %v841, %v812
  %v844 = vsel %vm131, %v842, %v814
  %v845 = vsel %vm134, %v843, %v820
  %v846 = vsel %vm134, %v844, %v822
  %v847 = vsel %vm137, %v845, %v828
  %v848 = vsel %vm137, %v846, %v830
  %849 = vst.msk [vmem:[#allocation2 + $0x62] sm:$0xff] %vm140, %v847
  %850 = vst.msk [vmem:[#allocation2 + $0x6a] sm:$0x3f] %vm142, %v848
  %v851 = vld [vmem:[%s661] sm:$0xff]
  %v852 = vld [vmem:[%s661 + $0x8] sm:$0x3f]
  %v853 = vld [vmem:[%s661 + $0x1] sm:$0xff]
  %v854 = vld [vmem:[%s661 + $0x9] sm:$0x3f]
  %v855 = vld [vmem:[%s661 + $0x2] sm:$0xff]
  %v856 = vld [vmem:[%s661 + $0xa] sm:$0x3f]
  %v857 = vld [vmem:[%s762] sm:$0xff]
  %v858 = vld [vmem:[%s762 + $0x8] sm:$0x3f]
  %v859 = vld [vmem:[%s762 + $0x1] sm:$0xff]
  %v860 = vld [vmem:[%s762 + $0x9] sm:$0x3f]
  %v861 = vld [vmem:[%s762 + $0x2] sm:$0xff]
  %v862 = vld [vmem:[%s762 + $0xa] sm:$0x3f]
  %s863 = scalar_lea.vmem %s0, 160
  %v864 = vld [vmem:[%s863] sm:$0xff]
  %v865 = vld [vmem:[%s863 + $0x8] sm:$0x3f]
  %v866 = vld [vmem:[%s863 + $0x1] sm:$0xff]
  %v867 = vld [vmem:[%s863 + $0x9] sm:$0x3f]
  %v868 = vld [vmem:[%s863 + $0x2] sm:$0xff]
  %v869 = vld [vmem:[%s863 + $0xa] sm:$0x3f]
  %872 = vrot.lane.b32.xlu0 %v853, 4
  %v873 = vpop.permute.xlu0 %872
  %874 = vrot.lane.b32.xlu0 %v854, 4
  %v875 = vpop.permute.xlu0 %874
  %880 = vrot.lane.b32.xlu0 %v855, 8
  %v881 = vpop.permute.xlu0 %880
  %882 = vrot.lane.b32.xlu0 %v856, 8
  %v883 = vpop.permute.xlu0 %882
  %888 = vrot.lane.b32.xlu0 %v857, 12
  %v889 = vpop.permute.xlu0 %888
  %890 = vrot.lane.b32.xlu0 %v858, 12
  %v891 = vpop.permute.xlu0 %890
  %896 = vrot.lane.b32.xlu0 %v859, 16
  %v897 = vpop.permute.xlu0 %896
  %898 = vrot.lane.b32.xlu0 %v860, 16
  %v899 = vpop.permute.xlu0 %898
  %904 = vrot.lane.b32.xlu0 %v861, 20
  %v905 = vpop.permute.xlu0 %904
  %906 = vrot.lane.b32.xlu0 %v862, 20
  %v907 = vpop.permute.xlu0 %906
  %912 = vrot.lane.b32.xlu0 %v864, 24
  %v913 = vpop.permute.xlu0 %912
  %914 = vrot.lane.b32.xlu0 %v865, 24
  %v915 = vpop.permute.xlu0 %914
  %920 = vrot.lane.b32.xlu0 %v866, 28
  %v921 = vpop.permute.xlu0 %920
  %922 = vrot.lane.b32.xlu0 %v867, 28
  %v923 = vpop.permute.xlu0 %922
  %928 = vrot.lane.b32.xlu0 %v868, 32
  %v929 = vpop.permute.xlu0 %928
  %930 = vrot.lane.b32.xlu0 %v869, 32
  %v931 = vpop.permute.xlu0 %930
  %v934 = vsel %vm116, %v851, %v873
  %v935 = vsel %vm116, %v852, %v875
  %v936 = vsel %vm119, %v934, %v881
  %v937 = vsel %vm119, %v935, %v883
  %v938 = vsel %vm122, %v936, %v889
  %v939 = vsel %vm122, %v937, %v891
  %v940 = vsel %vm125, %v938, %v897
  %v941 = vsel %vm125, %v939, %v899
  %v942 = vsel %vm128, %v940, %v905
  %v943 = vsel %vm128, %v941, %v907
  %v944 = vsel %vm131, %v942, %v913
  %v945 = vsel %vm131, %v943, %v915
  %v946 = vsel %vm134, %v944, %v921
  %v947 = vsel %vm134, %v945, %v923
  %v948 = vsel %vm137, %v946, %v929
  %v949 = vsel %vm137, %v947, %v931
  %950 = vst.msk [vmem:[#allocation2 + $0x70] sm:$0xff] %vm140, %v948
  %951 = vst.msk [vmem:[#allocation2 + $0x78] sm:$0x3f] %vm142, %v949
  %v952 = vld [vmem:[%s762] sm:$0xff]
  %v953 = vld [vmem:[%s762 + $0x8] sm:$0x3f]
  %v954 = vld [vmem:[%s762 + $0x1] sm:$0xff]
  %v955 = vld [vmem:[%s762 + $0x9] sm:$0x3f]
  %v956 = vld [vmem:[%s762 + $0x2] sm:$0xff]
  %v957 = vld [vmem:[%s762 + $0xa] sm:$0x3f]
  %v958 = vld [vmem:[%s863] sm:$0xff]
  %v959 = vld [vmem:[%s863 + $0x8] sm:$0x3f]
  %v960 = vld [vmem:[%s863 + $0x1] sm:$0xff]
  %v961 = vld [vmem:[%s863 + $0x9] sm:$0x3f]
  %v962 = vld [vmem:[%s863 + $0x2] sm:$0xff]
  %v963 = vld [vmem:[%s863 + $0xa] sm:$0x3f]
  %s964 = scalar_lea.vmem %s0, 176
  %v965 = vld [vmem:[%s964] sm:$0xff]
  %v966 = vld [vmem:[%s964 + $0x8] sm:$0x3f]
  %v967 = vld [vmem:[%s964 + $0x1] sm:$0xff]
  %v968 = vld [vmem:[%s964 + $0x9] sm:$0x3f]
  %v969 = vld [vmem:[%s964 + $0x2] sm:$0xff]
  %v970 = vld [vmem:[%s964 + $0xa] sm:$0x3f]
  %973 = vrot.lane.b32.xlu0 %v954, 4
  %v974 = vpop.permute.xlu0 %973
  %975 = vrot.lane.b32.xlu0 %v955, 4
  %v976 = vpop.permute.xlu0 %975
  %981 = vrot.lane.b32.xlu0 %v956, 8
  %v982 = vpop.permute.xlu0 %981
  %983 = vrot.lane.b32.xlu0 %v957, 8
  %v984 = vpop.permute.xlu0 %983
  %989 = vrot.lane.b32.xlu0 %v958, 12
  %v990 = vpop.permute.xlu0 %989
  %991 = vrot.lane.b32.xlu0 %v959, 12
  %v992 = vpop.permute.xlu0 %991
  %997 = vrot.lane.b32.xlu0 %v960, 16
  %v998 = vpop.permute.xlu0 %997
  %999 = vrot.lane.b32.xlu0 %v961, 16
  %v1000 = vpop.permute.xlu0 %999
  %1005 = vrot.lane.b32.xlu0 %v962, 20
  %v1006 = vpop.permute.xlu0 %1005
  %1007 = vrot.lane.b32.xlu0 %v963, 20
  %v1008 = vpop.permute.xlu0 %1007
  %1013 = vrot.lane.b32.xlu0 %v965, 24
  %v1014 = vpop.permute.xlu0 %1013
  %1015 = vrot.lane.b32.xlu0 %v966, 24
  %v1016 = vpop.permute.xlu0 %1015
  %1021 = vrot.lane.b32.xlu0 %v967, 28
  %v1022 = vpop.permute.xlu0 %1021
  %1023 = vrot.lane.b32.xlu0 %v968, 28
  %v1024 = vpop.permute.xlu0 %1023
  %1029 = vrot.lane.b32.xlu0 %v969, 32
  %v1030 = vpop.permute.xlu0 %1029
  %1031 = vrot.lane.b32.xlu0 %v970, 32
  %v1032 = vpop.permute.xlu0 %1031
  %v1035 = vsel %vm116, %v952, %v974
  %v1036 = vsel %vm116, %v953, %v976
  %v1037 = vsel %vm119, %v1035, %v982
  %v1038 = vsel %vm119, %v1036, %v984
  %v1039 = vsel %vm122, %v1037, %v990
  %v1040 = vsel %vm122, %v1038, %v992
  %v1041 = vsel %vm125, %v1039, %v998
  %v1042 = vsel %vm125, %v1040, %v1000
  %v1043 = vsel %vm128, %v1041, %v1006
  %v1044 = vsel %vm128, %v1042, %v1008
  %v1045 = vsel %vm131, %v1043, %v1014
  %v1046 = vsel %vm131, %v1044, %v1016
  %v1047 = vsel %vm134, %v1045, %v1022
  %v1048 = vsel %vm134, %v1046, %v1024
  %v1049 = vsel %vm137, %v1047, %v1030
  %v1050 = vsel %vm137, %v1048, %v1032
  %1051 = vst.msk [vmem:[#allocation2 + $0x7e] sm:$0xff] %vm140, %v1049
  %1052 = vst.msk [vmem:[#allocation2 + $0x86] sm:$0x3f] %vm142, %v1050
  %v1053 = vld [vmem:[%s863] sm:$0xff]
  %v1054 = vld [vmem:[%s863 + $0x8] sm:$0x3f]
  %v1055 = vld [vmem:[%s863 + $0x1] sm:$0xff]
  %v1056 = vld [vmem:[%s863 + $0x9] sm:$0x3f]
  %v1057 = vld [vmem:[%s863 + $0x2] sm:$0xff]
  %v1058 = vld [vmem:[%s863 + $0xa] sm:$0x3f]
  %v1059 = vld [vmem:[%s964] sm:$0xff]
  %v1060 = vld [vmem:[%s964 + $0x8] sm:$0x3f]
  %v1061 = vld [vmem:[%s964 + $0x1] sm:$0xff]
  %v1062 = vld [vmem:[%s964 + $0x9] sm:$0x3f]
  %v1063 = vld [vmem:[%s964 + $0x2] sm:$0xff]
  %v1064 = vld [vmem:[%s964 + $0xa] sm:$0x3f]
  %s1065 = scalar_lea.vmem %s0, 192
  %v1066 = vld [vmem:[%s1065] sm:$0xff]
  %v1067 = vld [vmem:[%s1065 + $0x8] sm:$0x3f]
  %v1068 = vld [vmem:[%s1065 + $0x1] sm:$0xff]
  %v1069 = vld [vmem:[%s1065 + $0x9] sm:$0x3f]
  %v1070 = vld [vmem:[%s1065 + $0x2] sm:$0xff]
  %v1071 = vld [vmem:[%s1065 + $0xa] sm:$0x3f]
  %1074 = vrot.lane.b32.xlu0 %v1055, 4
  %v1075 = vpop.permute.xlu0 %1074
  %1076 = vrot.lane.b32.xlu0 %v1056, 4
  %v1077 = vpop.permute.xlu0 %1076
  %1082 = vrot.lane.b32.xlu0 %v1057, 8
  %v1083 = vpop.permute.xlu0 %1082
  %1084 = vrot.lane.b32.xlu0 %v1058, 8
  %v1085 = vpop.permute.xlu0 %1084
  %1090 = vrot.lane.b32.xlu0 %v1059, 12
  %v1091 = vpop.permute.xlu0 %1090
  %1092 = vrot.lane.b32.xlu0 %v1060, 12
  %v1093 = vpop.permute.xlu0 %1092
  %1098 = vrot.lane.b32.xlu0 %v1061, 16
  %v1099 = vpop.permute.xlu0 %1098
  %1100 = vrot.lane.b32.xlu0 %v1062, 16
  %v1101 = vpop.permute.xlu0 %1100
  %1106 = vrot.lane.b32.xlu0 %v1063, 20
  %v1107 = vpop.permute.xlu0 %1106
  %1108 = vrot.lane.b32.xlu0 %v1064, 20
  %v1109 = vpop.permute.xlu0 %1108
  %1114 = vrot.lane.b32.xlu0 %v1066, 24
  %v1115 = vpop.permute.xlu0 %1114
  %1116 = vrot.lane.b32.xlu0 %v1067, 24
  %v1117 = vpop.permute.xlu0 %1116
  %1122 = vrot.lane.b32.xlu0 %v1068, 28
  %v1123 = vpop.permute.xlu0 %1122
  %1124 = vrot.lane.b32.xlu0 %v1069, 28
  %v1125 = vpop.permute.xlu0 %1124
  %1130 = vrot.lane.b32.xlu0 %v1070, 32
  %v1131 = vpop.permute.xlu0 %1130
  %1132 = vrot.lane.b32.xlu0 %v1071, 32
  %v1133 = vpop.permute.xlu0 %1132
  %v1136 = vsel %vm116, %v1053, %v1075
  %v1137 = vsel %vm116, %v1054, %v1077
  %v1138 = vsel %vm119, %v1136, %v1083
  %v1139 = vsel %vm119, %v1137, %v1085
  %v1140 = vsel %vm122, %v1138, %v1091
  %v1141 = vsel %vm122, %v1139, %v1093
  %v1142 = vsel %vm125, %v1140, %v1099
  %v1143 = vsel %vm125, %v1141, %v1101
  %v1144 = vsel %vm128, %v1142, %v1107
  %v1145 = vsel %vm128, %v1143, %v1109
  %v1146 = vsel %vm131, %v1144, %v1115
  %v1147 = vsel %vm131, %v1145, %v1117
  %v1148 = vsel %vm134, %v1146, %v1123
  %v1149 = vsel %vm134, %v1147, %v1125
  %v1150 = vsel %vm137, %v1148, %v1131
  %v1151 = vsel %vm137, %v1149, %v1133
  %1152 = vst.msk [vmem:[#allocation2 + $0x8c] sm:$0xff] %vm140, %v1150
  %1153 = vst.msk [vmem:[#allocation2 + $0x94] sm:$0x3f] %vm142, %v1151
  %v1154 = vld [vmem:[%s964] sm:$0xff]
  %v1155 = vld [vmem:[%s964 + $0x8] sm:$0x3f]
  %v1156 = vld [vmem:[%s964 + $0x1] sm:$0xff]
  %v1157 = vld [vmem:[%s964 + $0x9] sm:$0x3f]
  %v1158 = vld [vmem:[%s964 + $0x2] sm:$0xff]
  %v1159 = vld [vmem:[%s964 + $0xa] sm:$0x3f]
  %v1160 = vld [vmem:[%s1065] sm:$0xff]
  %v1161 = vld [vmem:[%s1065 + $0x8] sm:$0x3f]
  %v1162 = vld [vmem:[%s1065 + $0x1] sm:$0xff]
  %v1163 = vld [vmem:[%s1065 + $0x9] sm:$0x3f]
  %v1164 = vld [vmem:[%s1065 + $0x2] sm:$0xff]
  %v1165 = vld [vmem:[%s1065 + $0xa] sm:$0x3f]
  %s1166 = scalar_lea.vmem %s0, 208
  %v1167 = vld [vmem:[%s1166] sm:$0xff]
  %v1168 = vld [vmem:[%s1166 + $0x8] sm:$0x3f]
  %v1169 = vld [vmem:[%s1166 + $0x1] sm:$0xff]
  %v1170 = vld [vmem:[%s1166 + $0x9] sm:$0x3f]
  %v1171 = vld [vmem:[%s1166 + $0x2] sm:$0xff]
  %v1172 = vld [vmem:[%s1166 + $0xa] sm:$0x3f]
  %1175 = vrot.lane.b32.xlu0 %v1156, 4
  %v1176 = vpop.permute.xlu0 %1175
  %1177 = vrot.lane.b32.xlu0 %v1157, 4
  %v1178 = vpop.permute.xlu0 %1177
  %1183 = vrot.lane.b32.xlu0 %v1158, 8
  %v1184 = vpop.permute.xlu0 %1183
  %1185 = vrot.lane.b32.xlu0 %v1159, 8
  %v1186 = vpop.permute.xlu0 %1185
  %1191 = vrot.lane.b32.xlu0 %v1160, 12
  %v1192 = vpop.permute.xlu0 %1191
  %1193 = vrot.lane.b32.xlu0 %v1161, 12
  %v1194 = vpop.permute.xlu0 %1193
  %1199 = vrot.lane.b32.xlu0 %v1162, 16
  %v1200 = vpop.permute.xlu0 %1199
  %1201 = vrot.lane.b32.xlu0 %v1163, 16
  %v1202 = vpop.permute.xlu0 %1201
  %1207 = vrot.lane.b32.xlu0 %v1164, 20
  %v1208 = vpop.permute.xlu0 %1207
  %1209 = vrot.lane.b32.xlu0 %v1165, 20
  %v1210 = vpop.permute.xlu0 %1209
  %1215 = vrot.lane.b32.xlu0 %v1167, 24
  %v1216 = vpop.permute.xlu0 %1215
  %1217 = vrot.lane.b32.xlu0 %v1168, 24
  %v1218 = vpop.permute.xlu0 %1217
  %1223 = vrot.lane.b32.xlu0 %v1169, 28
  %v1224 = vpop.permute.xlu0 %1223
  %1225 = vrot.lane.b32.xlu0 %v1170, 28
  %v1226 = vpop.permute.xlu0 %1225
  %1231 = vrot.lane.b32.xlu0 %v1171, 32
  %v1232 = vpop.permute.xlu0 %1231
  %1233 = vrot.lane.b32.xlu0 %v1172, 32
  %v1234 = vpop.permute.xlu0 %1233
  %v1237 = vsel %vm116, %v1154, %v1176
  %v1238 = vsel %vm116, %v1155, %v1178
  %v1239 = vsel %vm119, %v1237, %v1184
  %v1240 = vsel %vm119, %v1238, %v1186
  %v1241 = vsel %vm122, %v1239, %v1192
  %v1242 = vsel %vm122, %v1240, %v1194
  %v1243 = vsel %vm125, %v1241, %v1200
  %v1244 = vsel %vm125, %v1242, %v1202
  %v1245 = vsel %vm128, %v1243, %v1208
  %v1246 = vsel %vm128, %v1244, %v1210
  %v1247 = vsel %vm131, %v1245, %v1216
  %v1248 = vsel %vm131, %v1246, %v1218
  %v1249 = vsel %vm134, %v1247, %v1224
  %v1250 = vsel %vm134, %v1248, %v1226
  %v1251 = vsel %vm137, %v1249, %v1232
  %v1252 = vsel %vm137, %v1250, %v1234
  %1253 = vst.msk [vmem:[#allocation2 + $0x9a] sm:$0xff] %vm140, %v1251
  %1254 = vst.msk [vmem:[#allocation2 + $0xa2] sm:$0x3f] %vm142, %v1252
  %v1255 = vld [vmem:[%s1065] sm:$0xff]
  %v1256 = vld [vmem:[%s1065 + $0x8] sm:$0x3f]
  %v1257 = vld [vmem:[%s1065 + $0x1] sm:$0xff]
  %v1258 = vld [vmem:[%s1065 + $0x9] sm:$0x3f]
  %v1259 = vld [vmem:[%s1065 + $0x2] sm:$0xff]
  %v1260 = vld [vmem:[%s1065 + $0xa] sm:$0x3f]
  %v1261 = vld [vmem:[%s1166] sm:$0xff]
  %v1262 = vld [vmem:[%s1166 + $0x8] sm:$0x3f]
  %v1263 = vld [vmem:[%s1166 + $0x1] sm:$0xff]
  %v1264 = vld [vmem:[%s1166 + $0x9] sm:$0x3f]
  %v1265 = vld [vmem:[%s1166 + $0x2] sm:$0xff]
  %v1266 = vld [vmem:[%s1166 + $0xa] sm:$0x3f]
  %s1267 = scalar_lea.vmem %s0, 224
  %v1268 = vld [vmem:[%s1267] sm:$0xff]
  %v1269 = vld [vmem:[%s1267 + $0x8] sm:$0x3f]
  %v1270 = vld [vmem:[%s1267 + $0x1] sm:$0xff]
  %v1271 = vld [vmem:[%s1267 + $0x9] sm:$0x3f]
  %v1272 = vld [vmem:[%s1267 + $0x2] sm:$0xff]
  %v1273 = vld [vmem:[%s1267 + $0xa] sm:$0x3f]
  %1276 = vrot.lane.b32.xlu0 %v1257, 4
  %v1277 = vpop.permute.xlu0 %1276
  %1278 = vrot.lane.b32.xlu0 %v1258, 4
  %v1279 = vpop.permute.xlu0 %1278
  %1284 = vrot.lane.b32.xlu0 %v1259, 8
  %v1285 = vpop.permute.xlu0 %1284
  %1286 = vrot.lane.b32.xlu0 %v1260, 8
  %v1287 = vpop.permute.xlu0 %1286
  %1292 = vrot.lane.b32.xlu0 %v1261, 12
  %v1293 = vpop.permute.xlu0 %1292
  %1294 = vrot.lane.b32.xlu0 %v1262, 12
  %v1295 = vpop.permute.xlu0 %1294
  %1300 = vrot.lane.b32.xlu0 %v1263, 16
  %v1301 = vpop.permute.xlu0 %1300
  %1302 = vrot.lane.b32.xlu0 %v1264, 16
  %v1303 = vpop.permute.xlu0 %1302
  %1308 = vrot.lane.b32.xlu0 %v1265, 20
  %v1309 = vpop.permute.xlu0 %1308
  %1310 = vrot.lane.b32.xlu0 %v1266, 20
  %v1311 = vpop.permute.xlu0 %1310
  %1316 = vrot.lane.b32.xlu0 %v1268, 24
  %v1317 = vpop.permute.xlu0 %1316
  %1318 = vrot.lane.b32.xlu0 %v1269, 24
  %v1319 = vpop.permute.xlu0 %1318
  %1324 = vrot.lane.b32.xlu0 %v1270, 28
  %v1325 = vpop.permute.xlu0 %1324
  %1326 = vrot.lane.b32.xlu0 %v1271, 28
  %v1327 = vpop.permute.xlu0 %1326
  %1332 = vrot.lane.b32.xlu0 %v1272, 32
  %v1333 = vpop.permute.xlu0 %1332
  %1334 = vrot.lane.b32.xlu0 %v1273, 32
  %v1335 = vpop.permute.xlu0 %1334
  %v1338 = vsel %vm116, %v1255, %v1277
  %v1339 = vsel %vm116, %v1256, %v1279
  %v1340 = vsel %vm119, %v1338, %v1285
  %v1341 = vsel %vm119, %v1339, %v1287
  %v1342 = vsel %vm122, %v1340, %v1293
  %v1343 = vsel %vm122, %v1341, %v1295
  %v1344 = vsel %vm125, %v1342, %v1301
  %v1345 = vsel %vm125, %v1343, %v1303
  %v1346 = vsel %vm128, %v1344, %v1309
  %v1347 = vsel %vm128, %v1345, %v1311
  %v1348 = vsel %vm131, %v1346, %v1317
  %v1349 = vsel %vm131, %v1347, %v1319
  %v1350 = vsel %vm134, %v1348, %v1325
  %v1351 = vsel %vm134, %v1349, %v1327
  %v1352 = vsel %vm137, %v1350, %v1333
  %v1353 = vsel %vm137, %v1351, %v1335
  %1354 = vst.msk [vmem:[#allocation2 + $0xa8] sm:$0xff] %vm140, %v1352
  %1355 = vst.msk [vmem:[#allocation2 + $0xb0] sm:$0x3f] %vm142, %v1353
  %v1356 = vld [vmem:[%s1166] sm:$0xff]
  %v1357 = vld [vmem:[%s1166 + $0x8] sm:$0x3f]
  %v1358 = vld [vmem:[%s1166 + $0x1] sm:$0xff]
  %v1359 = vld [vmem:[%s1166 + $0x9] sm:$0x3f]
  %v1360 = vld [vmem:[%s1166 + $0x2] sm:$0xff]
  %v1361 = vld [vmem:[%s1166 + $0xa] sm:$0x3f]
  %v1362 = vld [vmem:[%s1267] sm:$0xff]
  %v1363 = vld [vmem:[%s1267 + $0x8] sm:$0x3f]
  %v1364 = vld [vmem:[%s1267 + $0x1] sm:$0xff]
  %v1365 = vld [vmem:[%s1267 + $0x9] sm:$0x3f]
  %v1366 = vld [vmem:[%s1267 + $0x2] sm:$0xff]
  %v1367 = vld [vmem:[%s1267 + $0xa] sm:$0x3f]
  %s1368 = scalar_lea.vmem %s0, 240
  %v1369 = vld [vmem:[%s1368] sm:$0xff]
  %v1370 = vld [vmem:[%s1368 + $0x8] sm:$0x3f]
  %v1371 = vld [vmem:[%s1368 + $0x1] sm:$0xff]
  %v1372 = vld [vmem:[%s1368 + $0x9] sm:$0x3f]
  %v1373 = vld [vmem:[%s1368 + $0x2] sm:$0xff]
  %v1374 = vld [vmem:[%s1368 + $0xa] sm:$0x3f]
  %1377 = vrot.lane.b32.xlu0 %v1358, 4
  %v1378 = vpop.permute.xlu0 %1377
  %1379 = vrot.lane.b32.xlu0 %v1359, 4
  %v1380 = vpop.permute.xlu0 %1379
  %1385 = vrot.lane.b32.xlu0 %v1360, 8
  %v1386 = vpop.permute.xlu0 %1385
  %1387 = vrot.lane.b32.xlu0 %v1361, 8
  %v1388 = vpop.permute.xlu0 %1387
  %1393 = vrot.lane.b32.xlu0 %v1362, 12
  %v1394 = vpop.permute.xlu0 %1393
  %1395 = vrot.lane.b32.xlu0 %v1363, 12
  %v1396 = vpop.permute.xlu0 %1395
  %1401 = vrot.lane.b32.xlu0 %v1364, 16
  %v1402 = vpop.permute.xlu0 %1401
  %1403 = vrot.lane.b32.xlu0 %v1365, 16
  %v1404 = vpop.permute.xlu0 %1403
  %1409 = vrot.lane.b32.xlu0 %v1366, 20
  %v1410 = vpop.permute.xlu0 %1409
  %1411 = vrot.lane.b32.xlu0 %v1367, 20
  %v1412 = vpop.permute.xlu0 %1411
  %1417 = vrot.lane.b32.xlu0 %v1369, 24
  %v1418 = vpop.permute.xlu0 %1417
  %1419 = vrot.lane.b32.xlu0 %v1370, 24
  %v1420 = vpop.permute.xlu0 %1419
  %1425 = vrot.lane.b32.xlu0 %v1371, 28
  %v1426 = vpop.permute.xlu0 %1425
  %1427 = vrot.lane.b32.xlu0 %v1372, 28
  %v1428 = vpop.permute.xlu0 %1427
  %1433 = vrot.lane.b32.xlu0 %v1373, 32
  %v1434 = vpop.permute.xlu0 %1433
  %1435 = vrot.lane.b32.xlu0 %v1374, 32
  %v1436 = vpop.permute.xlu0 %1435
  %v1439 = vsel %vm116, %v1356, %v1378
  %v1440 = vsel %vm116, %v1357, %v1380
  %v1441 = vsel %vm119, %v1439, %v1386
  %v1442 = vsel %vm119, %v1440, %v1388
  %v1443 = vsel %vm122, %v1441, %v1394
  %v1444 = vsel %vm122, %v1442, %v1396
  %v1445 = vsel %vm125, %v1443, %v1402
  %v1446 = vsel %vm125, %v1444, %v1404
  %v1447 = vsel %vm128, %v1445, %v1410
  %v1448 = vsel %vm128, %v1446, %v1412
  %v1449 = vsel %vm131, %v1447, %v1418
  %v1450 = vsel %vm131, %v1448, %v1420
  %v1451 = vsel %vm134, %v1449, %v1426
  %v1452 = vsel %vm134, %v1450, %v1428
  %v1453 = vsel %vm137, %v1451, %v1434
  %v1454 = vsel %vm137, %v1452, %v1436
  %1455 = vst.msk [vmem:[#allocation2 + $0xb6] sm:$0xff] %vm140, %v1453
  %1456 = vst.msk [vmem:[#allocation2 + $0xbe] sm:$0x3f] %vm142, %v1454
  %s1457 = scalar_lea.vmem %s0, 256
  %v1458 = vld [vmem:[%s1457] sm:$0xff]
  %v1459 = vld [vmem:[%s1457 + $0x8] sm:$0x3f]
  %v1460 = vld [vmem:[%s1457 + $0x1] sm:$0xff]
  %v1461 = vld [vmem:[%s1457 + $0x9] sm:$0x3f]
  %v1462 = vld [vmem:[%s1457 + $0x2] sm:$0xff]
  %v1463 = vld [vmem:[%s1457 + $0xa] sm:$0x3f]
  %s1464 = scalar_lea.vmem %s0, 272
  %v1465 = vld [vmem:[%s1464] sm:$0xff]
  %v1466 = vld [vmem:[%s1464 + $0x8] sm:$0x3f]
  %v1467 = vld [vmem:[%s1464 + $0x1] sm:$0xff]
  %v1468 = vld [vmem:[%s1464 + $0x9] sm:$0x3f]
  %v1469 = vld [vmem:[%s1464 + $0x2] sm:$0xff]
  %v1470 = vld [vmem:[%s1464 + $0xa] sm:$0x3f]
  %s1471 = scalar_lea.vmem %s0, 288
  %v1472 = vld [vmem:[%s1471] sm:$0xff]
  %v1473 = vld [vmem:[%s1471 + $0x8] sm:$0x3f]
  %v1474 = vld [vmem:[%s1471 + $0x1] sm:$0xff]
  %v1475 = vld [vmem:[%s1471 + $0x9] sm:$0x3f]
  %v1476 = vld [vmem:[%s1471 + $0x2] sm:$0xff]
  %v1477 = vld [vmem:[%s1471 + $0xa] sm:$0x3f]
  %1480 = vrot.lane.b32.xlu0 %v1460, 4
  %v1481 = vpop.permute.xlu0 %1480
  %1482 = vrot.lane.b32.xlu0 %v1461, 4
  %v1483 = vpop.permute.xlu0 %1482
  %1488 = vrot.lane.b32.xlu0 %v1462, 8
  %v1489 = vpop.permute.xlu0 %1488
  %1490 = vrot.lane.b32.xlu0 %v1463, 8
  %v1491 = vpop.permute.xlu0 %1490
  %1496 = vrot.lane.b32.xlu0 %v1465, 12
  %v1497 = vpop.permute.xlu0 %1496
  %1498 = vrot.lane.b32.xlu0 %v1466, 12
  %v1499 = vpop.permute.xlu0 %1498
  %1504 = vrot.lane.b32.xlu0 %v1467, 16
  %v1505 = vpop.permute.xlu0 %1504
  %1506 = vrot.lane.b32.xlu0 %v1468, 16
  %v1507 = vpop.permute.xlu0 %1506
  %1512 = vrot.lane.b32.xlu0 %v1469, 20
  %v1513 = vpop.permute.xlu0 %1512
  %1514 = vrot.lane.b32.xlu0 %v1470, 20
  %v1515 = vpop.permute.xlu0 %1514
  %1520 = vrot.lane.b32.xlu0 %v1472, 24
  %v1521 = vpop.permute.xlu0 %1520
  %1522 = vrot.lane.b32.xlu0 %v1473, 24
  %v1523 = vpop.permute.xlu0 %1522
  %1528 = vrot.lane.b32.xlu0 %v1474, 28
  %v1529 = vpop.permute.xlu0 %1528
  %1530 = vrot.lane.b32.xlu0 %v1475, 28
  %v1531 = vpop.permute.xlu0 %1530
  %1536 = vrot.lane.b32.xlu0 %v1476, 32
  %v1537 = vpop.permute.xlu0 %1536
  %1538 = vrot.lane.b32.xlu0 %v1477, 32
  %v1539 = vpop.permute.xlu0 %1538
  %v1542 = vsel %vm116, %v1458, %v1481
  %v1543 = vsel %vm116, %v1459, %v1483
  %v1544 = vsel %vm119, %v1542, %v1489
  %v1545 = vsel %vm119, %v1543, %v1491
  %v1546 = vsel %vm122, %v1544, %v1497
  %v1547 = vsel %vm122, %v1545, %v1499
  %v1548 = vsel %vm125, %v1546, %v1505
  %v1549 = vsel %vm125, %v1547, %v1507
  %v1550 = vsel %vm128, %v1548, %v1513
  %v1551 = vsel %vm128, %v1549, %v1515
  %v1552 = vsel %vm131, %v1550, %v1521
  %v1553 = vsel %vm131, %v1551, %v1523
  %v1554 = vsel %vm134, %v1552, %v1529
  %v1555 = vsel %vm134, %v1553, %v1531
  %v1556 = vsel %vm137, %v1554, %v1537
  %v1557 = vsel %vm137, %v1555, %v1539
  %1558 = vst.msk [vmem:[#allocation2 + $0xc4] sm:$0xff] %vm140, %v1556
  %1559 = vst.msk [vmem:[#allocation2 + $0xcc] sm:$0x3f] %vm142, %v1557
  %v1560 = vld [vmem:[%s1464] sm:$0xff]
  %v1561 = vld [vmem:[%s1464 + $0x8] sm:$0x3f]
  %v1562 = vld [vmem:[%s1464 + $0x1] sm:$0xff]
  %v1563 = vld [vmem:[%s1464 + $0x9] sm:$0x3f]
  %v1564 = vld [vmem:[%s1464 + $0x2] sm:$0xff]
  %v1565 = vld [vmem:[%s1464 + $0xa] sm:$0x3f]
  %v1566 = vld [vmem:[%s1471] sm:$0xff]
  %v1567 = vld [vmem:[%s1471 + $0x8] sm:$0x3f]
  %v1568 = vld [vmem:[%s1471 + $0x1] sm:$0xff]
  %v1569 = vld [vmem:[%s1471 + $0x9] sm:$0x3f]
  %v1570 = vld [vmem:[%s1471 + $0x2] sm:$0xff]
  %v1571 = vld [vmem:[%s1471 + $0xa] sm:$0x3f]
  %s1572 = scalar_lea.vmem %s0, 304
  %v1573 = vld [vmem:[%s1572] sm:$0xff]
  %v1574 = vld [vmem:[%s1572 + $0x8] sm:$0x3f]
  %v1575 = vld [vmem:[%s1572 + $0x1] sm:$0xff]
  %v1576 = vld [vmem:[%s1572 + $0x9] sm:$0x3f]
  %v1577 = vld [vmem:[%s1572 + $0x2] sm:$0xff]
  %v1578 = vld [vmem:[%s1572 + $0xa] sm:$0x3f]
  %1581 = vrot.lane.b32.xlu0 %v1562, 4
  %v1582 = vpop.permute.xlu0 %1581
  %1583 = vrot.lane.b32.xlu0 %v1563, 4
  %v1584 = vpop.permute.xlu0 %1583
  %1589 = vrot.lane.b32.xlu0 %v1564, 8
  %v1590 = vpop.permute.xlu0 %1589
  %1591 = vrot.lane.b32.xlu0 %v1565, 8
  %v1592 = vpop.permute.xlu0 %1591
  %1597 = vrot.lane.b32.xlu0 %v1566, 12
  %v1598 = vpop.permute.xlu0 %1597
  %1599 = vrot.lane.b32.xlu0 %v1567, 12
  %v1600 = vpop.permute.xlu0 %1599
  %1605 = vrot.lane.b32.xlu0 %v1568, 16
  %v1606 = vpop.permute.xlu0 %1605
  %1607 = vrot.lane.b32.xlu0 %v1569, 16
  %v1608 = vpop.permute.xlu0 %1607
  %1613 = vrot.lane.b32.xlu0 %v1570, 20
  %v1614 = vpop.permute.xlu0 %1613
  %1615 = vrot.lane.b32.xlu0 %v1571, 20
  %v1616 = vpop.permute.xlu0 %1615
  %1621 = vrot.lane.b32.xlu0 %v1573, 24
  %v1622 = vpop.permute.xlu0 %1621
  %1623 = vrot.lane.b32.xlu0 %v1574, 24
  %v1624 = vpop.permute.xlu0 %1623
  %1629 = vrot.lane.b32.xlu0 %v1575, 28
  %v1630 = vpop.permute.xlu0 %1629
  %1631 = vrot.lane.b32.xlu0 %v1576, 28
  %v1632 = vpop.permute.xlu0 %1631
  %1637 = vrot.lane.b32.xlu0 %v1577, 32
  %v1638 = vpop.permute.xlu0 %1637
  %1639 = vrot.lane.b32.xlu0 %v1578, 32
  %v1640 = vpop.permute.xlu0 %1639
  %v1643 = vsel %vm116, %v1560, %v1582
  %v1644 = vsel %vm116, %v1561, %v1584
  %v1645 = vsel %vm119, %v1643, %v1590
  %v1646 = vsel %vm119, %v1644, %v1592
  %v1647 = vsel %vm122, %v1645, %v1598
  %v1648 = vsel %vm122, %v1646, %v1600
  %v1649 = vsel %vm125, %v1647, %v1606
  %v1650 = vsel %vm125, %v1648, %v1608
  %v1651 = vsel %vm128, %v1649, %v1614
  %v1652 = vsel %vm128, %v1650, %v1616
  %v1653 = vsel %vm131, %v1651, %v1622
  %v1654 = vsel %vm131, %v1652, %v1624
  %v1655 = vsel %vm134, %v1653, %v1630
  %v1656 = vsel %vm134, %v1654, %v1632
  %v1657 = vsel %vm137, %v1655, %v1638
  %v1658 = vsel %vm137, %v1656, %v1640
  %1659 = vst.msk [vmem:[#allocation2 + $0xd2] sm:$0xff] %vm140, %v1657
  %1660 = vst.msk [vmem:[#allocation2 + $0xda] sm:$0x3f] %vm142, %v1658
  %v1661 = vld [vmem:[%s1471] sm:$0xff]
  %v1662 = vld [vmem:[%s1471 + $0x8] sm:$0x3f]
  %v1663 = vld [vmem:[%s1471 + $0x1] sm:$0xff]
  %v1664 = vld [vmem:[%s1471 + $0x9] sm:$0x3f]
  %v1665 = vld [vmem:[%s1471 + $0x2] sm:$0xff]
  %v1666 = vld [vmem:[%s1471 + $0xa] sm:$0x3f]
  %v1667 = vld [vmem:[%s1572] sm:$0xff]
  %v1668 = vld [vmem:[%s1572 + $0x8] sm:$0x3f]
  %v1669 = vld [vmem:[%s1572 + $0x1] sm:$0xff]
  %v1670 = vld [vmem:[%s1572 + $0x9] sm:$0x3f]
  %v1671 = vld [vmem:[%s1572 + $0x2] sm:$0xff]
  %v1672 = vld [vmem:[%s1572 + $0xa] sm:$0x3f]
  %s1673 = scalar_lea.vmem %s0, 320
  %v1674 = vld [vmem:[%s1673] sm:$0xff]
  %v1675 = vld [vmem:[%s1673 + $0x8] sm:$0x3f]
  %v1676 = vld [vmem:[%s1673 + $0x1] sm:$0xff]
  %v1677 = vld [vmem:[%s1673 + $0x9] sm:$0x3f]
  %v1678 = vld [vmem:[%s1673 + $0x2] sm:$0xff]
  %v1679 = vld [vmem:[%s1673 + $0xa] sm:$0x3f]
  %1682 = vrot.lane.b32.xlu0 %v1663, 4
  %v1683 = vpop.permute.xlu0 %1682
  %1684 = vrot.lane.b32.xlu0 %v1664, 4
  %v1685 = vpop.permute.xlu0 %1684
  %1690 = vrot.lane.b32.xlu0 %v1665, 8
  %v1691 = vpop.permute.xlu0 %1690
  %1692 = vrot.lane.b32.xlu0 %v1666, 8
  %v1693 = vpop.permute.xlu0 %1692
  %1698 = vrot.lane.b32.xlu0 %v1667, 12
  %v1699 = vpop.permute.xlu0 %1698
  %1700 = vrot.lane.b32.xlu0 %v1668, 12
  %v1701 = vpop.permute.xlu0 %1700
  %1706 = vrot.lane.b32.xlu0 %v1669, 16
  %v1707 = vpop.permute.xlu0 %1706
  %1708 = vrot.lane.b32.xlu0 %v1670, 16
  %v1709 = vpop.permute.xlu0 %1708
  %1714 = vrot.lane.b32.xlu0 %v1671, 20
  %v1715 = vpop.permute.xlu0 %1714
  %1716 = vrot.lane.b32.xlu0 %v1672, 20
  %v1717 = vpop.permute.xlu0 %1716
  %1722 = vrot.lane.b32.xlu0 %v1674, 24
  %v1723 = vpop.permute.xlu0 %1722
  %1724 = vrot.lane.b32.xlu0 %v1675, 24
  %v1725 = vpop.permute.xlu0 %1724
  %1730 = vrot.lane.b32.xlu0 %v1676, 28
  %v1731 = vpop.permute.xlu0 %1730
  %1732 = vrot.lane.b32.xlu0 %v1677, 28
  %v1733 = vpop.permute.xlu0 %1732
  %1738 = vrot.lane.b32.xlu0 %v1678, 32
  %v1739 = vpop.permute.xlu0 %1738
  %1740 = vrot.lane.b32.xlu0 %v1679, 32
  %v1741 = vpop.permute.xlu0 %1740
  %v1744 = vsel %vm116, %v1661, %v1683
  %v1745 = vsel %vm116, %v1662, %v1685
  %v1746 = vsel %vm119, %v1744, %v1691
  %v1747 = vsel %vm119, %v1745, %v1693
  %v1748 = vsel %vm122, %v1746, %v1699
  %v1749 = vsel %vm122, %v1747, %v1701
  %v1750 = vsel %vm125, %v1748, %v1707
  %v1751 = vsel %vm125, %v1749, %v1709
  %v1752 = vsel %vm128, %v1750, %v1715
  %v1753 = vsel %vm128, %v1751, %v1717
  %v1754 = vsel %vm131, %v1752, %v1723
  %v1755 = vsel %vm131, %v1753, %v1725
  %v1756 = vsel %vm134, %v1754, %v1731
  %v1757 = vsel %vm134, %v1755, %v1733
  %v1758 = vsel %vm137, %v1756, %v1739
  %v1759 = vsel %vm137, %v1757, %v1741
  %1760 = vst.msk [vmem:[#allocation2 + $0xe0] sm:$0xff] %vm140, %v1758
  %1761 = vst.msk [vmem:[#allocation2 + $0xe8] sm:$0x3f] %vm142, %v1759
  %v1762 = vld [vmem:[%s1572] sm:$0xff]
  %v1763 = vld [vmem:[%s1572 + $0x8] sm:$0x3f]
  %v1764 = vld [vmem:[%s1572 + $0x1] sm:$0xff]
  %v1765 = vld [vmem:[%s1572 + $0x9] sm:$0x3f]
  %v1766 = vld [vmem:[%s1572 + $0x2] sm:$0xff]
  %v1767 = vld [vmem:[%s1572 + $0xa] sm:$0x3f]
  %v1768 = vld [vmem:[%s1673] sm:$0xff]
  %v1769 = vld [vmem:[%s1673 + $0x8] sm:$0x3f]
  %v1770 = vld [vmem:[%s1673 + $0x1] sm:$0xff]
  %v1771 = vld [vmem:[%s1673 + $0x9] sm:$0x3f]
  %v1772 = vld [vmem:[%s1673 + $0x2] sm:$0xff]
  %v1773 = vld [vmem:[%s1673 + $0xa] sm:$0x3f]
  %s1774 = scalar_lea.vmem %s0, 336
  %v1775 = vld [vmem:[%s1774] sm:$0xff]
  %v1776 = vld [vmem:[%s1774 + $0x8] sm:$0x3f]
  %v1777 = vld [vmem:[%s1774 + $0x1] sm:$0xff]
  %v1778 = vld [vmem:[%s1774 + $0x9] sm:$0x3f]
  %v1779 = vld [vmem:[%s1774 + $0x2] sm:$0xff]
  %v1780 = vld [vmem:[%s1774 + $0xa] sm:$0x3f]
  %1783 = vrot.lane.b32.xlu0 %v1764, 4
  %v1784 = vpop.permute.xlu0 %1783
  %1785 = vrot.lane.b32.xlu0 %v1765, 4
  %v1786 = vpop.permute.xlu0 %1785
  %1791 = vrot.lane.b32.xlu0 %v1766, 8
  %v1792 = vpop.permute.xlu0 %1791
  %1793 = vrot.lane.b32.xlu0 %v1767, 8
  %v1794 = vpop.permute.xlu0 %1793
  %1799 = vrot.lane.b32.xlu0 %v1768, 12
  %v1800 = vpop.permute.xlu0 %1799
  %1801 = vrot.lane.b32.xlu0 %v1769, 12
  %v1802 = vpop.permute.xlu0 %1801
  %1807 = vrot.lane.b32.xlu0 %v1770, 16
  %v1808 = vpop.permute.xlu0 %1807
  %1809 = vrot.lane.b32.xlu0 %v1771, 16
  %v1810 = vpop.permute.xlu0 %1809
  %1815 = vrot.lane.b32.xlu0 %v1772, 20
  %v1816 = vpop.permute.xlu0 %1815
  %1817 = vrot.lane.b32.xlu0 %v1773, 20
  %v1818 = vpop.permute.xlu0 %1817
  %1823 = vrot.lane.b32.xlu0 %v1775, 24
  %v1824 = vpop.permute.xlu0 %1823
  %1825 = vrot.lane.b32.xlu0 %v1776, 24
  %v1826 = vpop.permute.xlu0 %1825
  %1831 = vrot.lane.b32.xlu0 %v1777, 28
  %v1832 = vpop.permute.xlu0 %1831
  %1833 = vrot.lane.b32.xlu0 %v1778, 28
  %v1834 = vpop.permute.xlu0 %1833
  %1839 = vrot.lane.b32.xlu0 %v1779, 32
  %v1840 = vpop.permute.xlu0 %1839
  %1841 = vrot.lane.b32.xlu0 %v1780, 32
  %v1842 = vpop.permute.xlu0 %1841
  %v1845 = vsel %vm116, %v1762, %v1784
  %v1846 = vsel %vm116, %v1763, %v1786
  %v1847 = vsel %vm119, %v1845, %v1792
  %v1848 = vsel %vm119, %v1846, %v1794
  %v1849 = vsel %vm122, %v1847, %v1800
  %v1850 = vsel %vm122, %v1848, %v1802
  %v1851 = vsel %vm125, %v1849, %v1808
  %v1852 = vsel %vm125, %v1850, %v1810
  %v1853 = vsel %vm128, %v1851, %v1816
  %v1854 = vsel %vm128, %v1852, %v1818
  %v1855 = vsel %vm131, %v1853, %v1824
  %v1856 = vsel %vm131, %v1854, %v1826
  %v1857 = vsel %vm134, %v1855, %v1832
  %v1858 = vsel %vm134, %v1856, %v1834
  %v1859 = vsel %vm137, %v1857, %v1840
  %v1860 = vsel %vm137, %v1858, %v1842
  %1861 = vst.msk [vmem:[#allocation2 + $0xee] sm:$0xff] %vm140, %v1859
  %1862 = vst.msk [vmem:[#allocation2 + $0xf6] sm:$0x3f] %vm142, %v1860
  %v1863 = vld [vmem:[%s1673] sm:$0xff]
  %v1864 = vld [vmem:[%s1673 + $0x8] sm:$0x3f]
  %v1865 = vld [vmem:[%s1673 + $0x1] sm:$0xff]
  %v1866 = vld [vmem:[%s1673 + $0x9] sm:$0x3f]
  %v1867 = vld [vmem:[%s1673 + $0x2] sm:$0xff]
  %v1868 = vld [vmem:[%s1673 + $0xa] sm:$0x3f]
  %v1869 = vld [vmem:[%s1774] sm:$0xff]
  %v1870 = vld [vmem:[%s1774 + $0x8] sm:$0x3f]
  %v1871 = vld [vmem:[%s1774 + $0x1] sm:$0xff]
  %v1872 = vld [vmem:[%s1774 + $0x9] sm:$0x3f]
  %v1873 = vld [vmem:[%s1774 + $0x2] sm:$0xff]
  %v1874 = vld [vmem:[%s1774 + $0xa] sm:$0x3f]
  %s1875 = scalar_lea.vmem %s0, 352
  %v1876 = vld [vmem:[%s1875] sm:$0xff]
  %v1877 = vld [vmem:[%s1875 + $0x8] sm:$0x3f]
  %v1878 = vld [vmem:[%s1875 + $0x1] sm:$0xff]
  %v1879 = vld [vmem:[%s1875 + $0x9] sm:$0x3f]
  %v1880 = vld [vmem:[%s1875 + $0x2] sm:$0xff]
  %v1881 = vld [vmem:[%s1875 + $0xa] sm:$0x3f]
  %1884 = vrot.lane.b32.xlu0 %v1865, 4
  %v1885 = vpop.permute.xlu0 %1884
  %1886 = vrot.lane.b32.xlu0 %v1866, 4
  %v1887 = vpop.permute.xlu0 %1886
  %1892 = vrot.lane.b32.xlu0 %v1867, 8
  %v1893 = vpop.permute.xlu0 %1892
  %1894 = vrot.lane.b32.xlu0 %v1868, 8
  %v1895 = vpop.permute.xlu0 %1894
  %1900 = vrot.lane.b32.xlu0 %v1869, 12
  %v1901 = vpop.permute.xlu0 %1900
  %1902 = vrot.lane.b32.xlu0 %v1870, 12
  %v1903 = vpop.permute.xlu0 %1902
  %1908 = vrot.lane.b32.xlu0 %v1871, 16
  %v1909 = vpop.permute.xlu0 %1908
  %1910 = vrot.lane.b32.xlu0 %v1872, 16
  %v1911 = vpop.permute.xlu0 %1910
  %1916 = vrot.lane.b32.xlu0 %v1873, 20
  %v1917 = vpop.permute.xlu0 %1916
  %1918 = vrot.lane.b32.xlu0 %v1874, 20
  %v1919 = vpop.permute.xlu0 %1918
  %1924 = vrot.lane.b32.xlu0 %v1876, 24
  %v1925 = vpop.permute.xlu0 %1924
  %1926 = vrot.lane.b32.xlu0 %v1877, 24
  %v1927 = vpop.permute.xlu0 %1926
  %1932 = vrot.lane.b32.xlu0 %v1878, 28
  %v1933 = vpop.permute.xlu0 %1932
  %1934 = vrot.lane.b32.xlu0 %v1879, 28
  %v1935 = vpop.permute.xlu0 %1934
  %1940 = vrot.lane.b32.xlu0 %v1880, 32
  %v1941 = vpop.permute.xlu0 %1940
  %1942 = vrot.lane.b32.xlu0 %v1881, 32
  %v1943 = vpop.permute.xlu0 %1942
  %v1946 = vsel %vm116, %v1863, %v1885
  %v1947 = vsel %vm116, %v1864, %v1887
  %v1948 = vsel %vm119, %v1946, %v1893
  %v1949 = vsel %vm119, %v1947, %v1895
  %v1950 = vsel %vm122, %v1948, %v1901
  %v1951 = vsel %vm122, %v1949, %v1903
  %v1952 = vsel %vm125, %v1950, %v1909
  %v1953 = vsel %vm125, %v1951, %v1911
  %v1954 = vsel %vm128, %v1952, %v1917
  %v1955 = vsel %vm128, %v1953, %v1919
  %v1956 = vsel %vm131, %v1954, %v1925
  %v1957 = vsel %vm131, %v1955, %v1927
  %v1958 = vsel %vm134, %v1956, %v1933
  %v1959 = vsel %vm134, %v1957, %v1935
  %v1960 = vsel %vm137, %v1958, %v1941
  %v1961 = vsel %vm137, %v1959, %v1943
  %1962 = vst.msk [vmem:[#allocation2 + $0xfc] sm:$0xff] %vm140, %v1960
  %1963 = vst.msk [vmem:[#allocation2 + $0x104] sm:$0x3f] %vm142, %v1961
  %v1964 = vld [vmem:[%s1774] sm:$0xff]
  %v1965 = vld [vmem:[%s1774 + $0x8] sm:$0x3f]
  %v1966 = vld [vmem:[%s1774 + $0x1] sm:$0xff]
  %v1967 = vld [vmem:[%s1774 + $0x9] sm:$0x3f]
  %v1968 = vld [vmem:[%s1774 + $0x2] sm:$0xff]
  %v1969 = vld [vmem:[%s1774 + $0xa] sm:$0x3f]
  %v1970 = vld [vmem:[%s1875] sm:$0xff]
  %v1971 = vld [vmem:[%s1875 + $0x8] sm:$0x3f]
  %v1972 = vld [vmem:[%s1875 + $0x1] sm:$0xff]
  %v1973 = vld [vmem:[%s1875 + $0x9] sm:$0x3f]
  %v1974 = vld [vmem:[%s1875 + $0x2] sm:$0xff]
  %v1975 = vld [vmem:[%s1875 + $0xa] sm:$0x3f]
  %s1976 = scalar_lea.vmem %s0, 368
  %v1977 = vld [vmem:[%s1976] sm:$0xff]
  %v1978 = vld [vmem:[%s1976 + $0x8] sm:$0x3f]
  %v1979 = vld [vmem:[%s1976 + $0x1] sm:$0xff]
  %v1980 = vld [vmem:[%s1976 + $0x9] sm:$0x3f]
  %v1981 = vld [vmem:[%s1976 + $0x2] sm:$0xff]
  %v1982 = vld [vmem:[%s1976 + $0xa] sm:$0x3f]
  %1985 = vrot.lane.b32.xlu0 %v1966, 4
  %v1986 = vpop.permute.xlu0 %1985
  %1987 = vrot.lane.b32.xlu0 %v1967, 4
  %v1988 = vpop.permute.xlu0 %1987
  %1993 = vrot.lane.b32.xlu0 %v1968, 8
  %v1994 = vpop.permute.xlu0 %1993
  %1995 = vrot.lane.b32.xlu0 %v1969, 8
  %v1996 = vpop.permute.xlu0 %1995
  %2001 = vrot.lane.b32.xlu0 %v1970, 12
  %v2002 = vpop.permute.xlu0 %2001
  %2003 = vrot.lane.b32.xlu0 %v1971, 12
  %v2004 = vpop.permute.xlu0 %2003
  %2009 = vrot.lane.b32.xlu0 %v1972, 16
  %v2010 = vpop.permute.xlu0 %2009
  %2011 = vrot.lane.b32.xlu0 %v1973, 16
  %v2012 = vpop.permute.xlu0 %2011
  %2017 = vrot.lane.b32.xlu0 %v1974, 20
  %v2018 = vpop.permute.xlu0 %2017
  %2019 = vrot.lane.b32.xlu0 %v1975, 20
  %v2020 = vpop.permute.xlu0 %2019
  %2025 = vrot.lane.b32.xlu0 %v1977, 24
  %v2026 = vpop.permute.xlu0 %2025
  %2027 = vrot.lane.b32.xlu0 %v1978, 24
  %v2028 = vpop.permute.xlu0 %2027
  %2033 = vrot.lane.b32.xlu0 %v1979, 28
  %v2034 = vpop.permute.xlu0 %2033
  %2035 = vrot.lane.b32.xlu0 %v1980, 28
  %v2036 = vpop.permute.xlu0 %2035
  %2041 = vrot.lane.b32.xlu0 %v1981, 32
  %v2042 = vpop.permute.xlu0 %2041
  %2043 = vrot.lane.b32.xlu0 %v1982, 32
  %v2044 = vpop.permute.xlu0 %2043
  %v2047 = vsel %vm116, %v1964, %v1986
  %v2048 = vsel %vm116, %v1965, %v1988
  %v2049 = vsel %vm119, %v2047, %v1994
  %v2050 = vsel %vm119, %v2048, %v1996
  %v2051 = vsel %vm122, %v2049, %v2002
  %v2052 = vsel %vm122, %v2050, %v2004
  %v2053 = vsel %vm125, %v2051, %v2010
  %v2054 = vsel %vm125, %v2052, %v2012
  %v2055 = vsel %vm128, %v2053, %v2018
  %v2056 = vsel %vm128, %v2054, %v2020
  %v2057 = vsel %vm131, %v2055, %v2026
  %v2058 = vsel %vm131, %v2056, %v2028
  %v2059 = vsel %vm134, %v2057, %v2034
  %v2060 = vsel %vm134, %v2058, %v2036
  %v2061 = vsel %vm137, %v2059, %v2042
  %v2062 = vsel %vm137, %v2060, %v2044
  %2063 = vst.msk [vmem:[#allocation2 + $0x10a] sm:$0xff] %vm140, %v2061
  %2064 = vst.msk [vmem:[#allocation2 + $0x112] sm:$0x3f] %vm142, %v2062
  %v2065 = vld [vmem:[%s1875] sm:$0xff]
  %v2066 = vld [vmem:[%s1875 + $0x8] sm:$0x3f]
  %v2067 = vld [vmem:[%s1875 + $0x1] sm:$0xff]
  %v2068 = vld [vmem:[%s1875 + $0x9] sm:$0x3f]
  %v2069 = vld [vmem:[%s1875 + $0x2] sm:$0xff]
  %v2070 = vld [vmem:[%s1875 + $0xa] sm:$0x3f]
  %v2071 = vld [vmem:[%s1976] sm:$0xff]
  %v2072 = vld [vmem:[%s1976 + $0x8] sm:$0x3f]
  %v2073 = vld [vmem:[%s1976 + $0x1] sm:$0xff]
  %v2074 = vld [vmem:[%s1976 + $0x9] sm:$0x3f]
  %v2075 = vld [vmem:[%s1976 + $0x2] sm:$0xff]
  %v2076 = vld [vmem:[%s1976 + $0xa] sm:$0x3f]
  %s2077 = scalar_lea.vmem %s0, 384
  %v2078 = vld [vmem:[%s2077] sm:$0xff]
  %v2079 = vld [vmem:[%s2077 + $0x8] sm:$0x3f]
  %v2080 = vld [vmem:[%s2077 + $0x1] sm:$0xff]
  %v2081 = vld [vmem:[%s2077 + $0x9] sm:$0x3f]
  %v2082 = vld [vmem:[%s2077 + $0x2] sm:$0xff]
  %v2083 = vld [vmem:[%s2077 + $0xa] sm:$0x3f]
  %2086 = vrot.lane.b32.xlu0 %v2067, 4
  %v2087 = vpop.permute.xlu0 %2086
  %2088 = vrot.lane.b32.xlu0 %v2068, 4
  %v2089 = vpop.permute.xlu0 %2088
  %2094 = vrot.lane.b32.xlu0 %v2069, 8
  %v2095 = vpop.permute.xlu0 %2094
  %2096 = vrot.lane.b32.xlu0 %v2070, 8
  %v2097 = vpop.permute.xlu0 %2096
  %2102 = vrot.lane.b32.xlu0 %v2071, 12
  %v2103 = vpop.permute.xlu0 %2102
  %2104 = vrot.lane.b32.xlu0 %v2072, 12
  %v2105 = vpop.permute.xlu0 %2104
  %2110 = vrot.lane.b32.xlu0 %v2073, 16
  %v2111 = vpop.permute.xlu0 %2110
  %2112 = vrot.lane.b32.xlu0 %v2074, 16
  %v2113 = vpop.permute.xlu0 %2112
  %2118 = vrot.lane.b32.xlu0 %v2075, 20
  %v2119 = vpop.permute.xlu0 %2118
  %2120 = vrot.lane.b32.xlu0 %v2076, 20
  %v2121 = vpop.permute.xlu0 %2120
  %2126 = vrot.lane.b32.xlu0 %v2078, 24
  %v2127 = vpop.permute.xlu0 %2126
  %2128 = vrot.lane.b32.xlu0 %v2079, 24
  %v2129 = vpop.permute.xlu0 %2128
  %2134 = vrot.lane.b32.xlu0 %v2080, 28
  %v2135 = vpop.permute.xlu0 %2134
  %2136 = vrot.lane.b32.xlu0 %v2081, 28
  %v2137 = vpop.permute.xlu0 %2136
  %2142 = vrot.lane.b32.xlu0 %v2082, 32
  %v2143 = vpop.permute.xlu0 %2142
  %2144 = vrot.lane.b32.xlu0 %v2083, 32
  %v2145 = vpop.permute.xlu0 %2144
  %v2148 = vsel %vm116, %v2065, %v2087
  %v2149 = vsel %vm116, %v2066, %v2089
  %v2150 = vsel %vm119, %v2148, %v2095
  %v2151 = vsel %vm119, %v2149, %v2097
  %v2152 = vsel %vm122, %v2150, %v2103
  %v2153 = vsel %vm122, %v2151, %v2105
  %v2154 = vsel %vm125, %v2152, %v2111
  %v2155 = vsel %vm125, %v2153, %v2113
  %v2156 = vsel %vm128, %v2154, %v2119
  %v2157 = vsel %vm128, %v2155, %v2121
  %v2158 = vsel %vm131, %v2156, %v2127
  %v2159 = vsel %vm131, %v2157, %v2129
  %v2160 = vsel %vm134, %v2158, %v2135
  %v2161 = vsel %vm134, %v2159, %v2137
  %v2162 = vsel %vm137, %v2160, %v2143
  %v2163 = vsel %vm137, %v2161, %v2145
  %2164 = vst.msk [vmem:[#allocation2 + $0x118] sm:$0xff] %vm140, %v2162
  %2165 = vst.msk [vmem:[#allocation2 + $0x120] sm:$0x3f] %vm142, %v2163
  %v2166 = vld [vmem:[%s1976] sm:$0xff]
  %v2167 = vld [vmem:[%s1976 + $0x8] sm:$0x3f]
  %v2168 = vld [vmem:[%s1976 + $0x1] sm:$0xff]
  %v2169 = vld [vmem:[%s1976 + $0x9] sm:$0x3f]
  %v2170 = vld [vmem:[%s1976 + $0x2] sm:$0xff]
  %v2171 = vld [vmem:[%s1976 + $0xa] sm:$0x3f]
  %v2172 = vld [vmem:[%s2077] sm:$0xff]
  %v2173 = vld [vmem:[%s2077 + $0x8] sm:$0x3f]
  %v2174 = vld [vmem:[%s2077 + $0x1] sm:$0xff]
  %v2175 = vld [vmem:[%s2077 + $0x9] sm:$0x3f]
  %v2176 = vld [vmem:[%s2077 + $0x2] sm:$0xff]
  %v2177 = vld [vmem:[%s2077 + $0xa] sm:$0x3f]
  %s2178 = scalar_lea.vmem %s0, 400
  %v2179 = vld [vmem:[%s2178] sm:$0xff]
  %v2180 = vld [vmem:[%s2178 + $0x8] sm:$0x3f]
  %v2181 = vld [vmem:[%s2178 + $0x1] sm:$0xff]
  %v2182 = vld [vmem:[%s2178 + $0x9] sm:$0x3f]
  %v2183 = vld [vmem:[%s2178 + $0x2] sm:$0xff]
  %v2184 = vld [vmem:[%s2178 + $0xa] sm:$0x3f]
  %2187 = vrot.lane.b32.xlu0 %v2168, 4
  %v2188 = vpop.permute.xlu0 %2187
  %2189 = vrot.lane.b32.xlu0 %v2169, 4
  %v2190 = vpop.permute.xlu0 %2189
  %2195 = vrot.lane.b32.xlu0 %v2170, 8
  %v2196 = vpop.permute.xlu0 %2195
  %2197 = vrot.lane.b32.xlu0 %v2171, 8
  %v2198 = vpop.permute.xlu0 %2197
  %2203 = vrot.lane.b32.xlu0 %v2172, 12
  %v2204 = vpop.permute.xlu0 %2203
  %2205 = vrot.lane.b32.xlu0 %v2173, 12
  %v2206 = vpop.permute.xlu0 %2205
  %2211 = vrot.lane.b32.xlu0 %v2174, 16
  %v2212 = vpop.permute.xlu0 %2211
  %2213 = vrot.lane.b32.xlu0 %v2175, 16
  %v2214 = vpop.permute.xlu0 %2213
  %2219 = vrot.lane.b32.xlu0 %v2176, 20
  %v2220 = vpop.permute.xlu0 %2219
  %2221 = vrot.lane.b32.xlu0 %v2177, 20
  %v2222 = vpop.permute.xlu0 %2221
  %2227 = vrot.lane.b32.xlu0 %v2179, 24
  %v2228 = vpop.permute.xlu0 %2227
  %2229 = vrot.lane.b32.xlu0 %v2180, 24
  %v2230 = vpop.permute.xlu0 %2229
  %2235 = vrot.lane.b32.xlu0 %v2181, 28
  %v2236 = vpop.permute.xlu0 %2235
  %2237 = vrot.lane.b32.xlu0 %v2182, 28
  %v2238 = vpop.permute.xlu0 %2237
  %2243 = vrot.lane.b32.xlu0 %v2183, 32
  %v2244 = vpop.permute.xlu0 %2243
  %2245 = vrot.lane.b32.xlu0 %v2184, 32
  %v2246 = vpop.permute.xlu0 %2245
  %v2249 = vsel %vm116, %v2166, %v2188
  %v2250 = vsel %vm116, %v2167, %v2190
  %v2251 = vsel %vm119, %v2249, %v2196
  %v2252 = vsel %vm119, %v2250, %v2198
  %v2253 = vsel %vm122, %v2251, %v2204
  %v2254 = vsel %vm122, %v2252, %v2206
  %v2255 = vsel %vm125, %v2253, %v2212
  %v2256 = vsel %vm125, %v2254, %v2214
  %v2257 = vsel %vm128, %v2255, %v2220
  %v2258 = vsel %vm128, %v2256, %v2222
  %v2259 = vsel %vm131, %v2257, %v2228
  %v2260 = vsel %vm131, %v2258, %v2230
  %v2261 = vsel %vm134, %v2259, %v2236
  %v2262 = vsel %vm134, %v2260, %v2238
  %v2263 = vsel %vm137, %v2261, %v2244
  %v2264 = vsel %vm137, %v2262, %v2246
  %2265 = vst.msk [vmem:[#allocation2 + $0x126] sm:$0xff] %vm140, %v2263
  %2266 = vst.msk [vmem:[#allocation2 + $0x12e] sm:$0x3f] %vm142, %v2264
  %v2267 = vld [vmem:[%s2077] sm:$0xff]
  %v2268 = vld [vmem:[%s2077 + $0x8] sm:$0x3f]
  %v2269 = vld [vmem:[%s2077 + $0x1] sm:$0xff]
  %v2270 = vld [vmem:[%s2077 + $0x9] sm:$0x3f]
  %v2271 = vld [vmem:[%s2077 + $0x2] sm:$0xff]
  %v2272 = vld [vmem:[%s2077 + $0xa] sm:$0x3f]
  %v2273 = vld [vmem:[%s2178] sm:$0xff]
  %v2274 = vld [vmem:[%s2178 + $0x8] sm:$0x3f]
  %v2275 = vld [vmem:[%s2178 + $0x1] sm:$0xff]
  %v2276 = vld [vmem:[%s2178 + $0x9] sm:$0x3f]
  %v2277 = vld [vmem:[%s2178 + $0x2] sm:$0xff]
  %v2278 = vld [vmem:[%s2178 + $0xa] sm:$0x3f]
  %s2279 = scalar_lea.vmem %s0, 416
  %v2280 = vld [vmem:[%s2279] sm:$0xff]
  %v2281 = vld [vmem:[%s2279 + $0x8] sm:$0x3f]
  %v2282 = vld [vmem:[%s2279 + $0x1] sm:$0xff]
  %v2283 = vld [vmem:[%s2279 + $0x9] sm:$0x3f]
  %v2284 = vld [vmem:[%s2279 + $0x2] sm:$0xff]
  %v2285 = vld [vmem:[%s2279 + $0xa] sm:$0x3f]
  %2288 = vrot.lane.b32.xlu0 %v2269, 4
  %v2289 = vpop.permute.xlu0 %2288
  %2290 = vrot.lane.b32.xlu0 %v2270, 4
  %v2291 = vpop.permute.xlu0 %2290
  %2296 = vrot.lane.b32.xlu0 %v2271, 8
  %v2297 = vpop.permute.xlu0 %2296
  %2298 = vrot.lane.b32.xlu0 %v2272, 8
  %v2299 = vpop.permute.xlu0 %2298
  %2304 = vrot.lane.b32.xlu0 %v2273, 12
  %v2305 = vpop.permute.xlu0 %2304
  %2306 = vrot.lane.b32.xlu0 %v2274, 12
  %v2307 = vpop.permute.xlu0 %2306
  %2312 = vrot.lane.b32.xlu0 %v2275, 16
  %v2313 = vpop.permute.xlu0 %2312
  %2314 = vrot.lane.b32.xlu0 %v2276, 16
  %v2315 = vpop.permute.xlu0 %2314
  %2320 = vrot.lane.b32.xlu0 %v2277, 20
  %v2321 = vpop.permute.xlu0 %2320
  %2322 = vrot.lane.b32.xlu0 %v2278, 20
  %v2323 = vpop.permute.xlu0 %2322
  %2328 = vrot.lane.b32.xlu0 %v2280, 24
  %v2329 = vpop.permute.xlu0 %2328
  %2330 = vrot.lane.b32.xlu0 %v2281, 24
  %v2331 = vpop.permute.xlu0 %2330
  %2336 = vrot.lane.b32.xlu0 %v2282, 28
  %v2337 = vpop.permute.xlu0 %2336
  %2338 = vrot.lane.b32.xlu0 %v2283, 28
  %v2339 = vpop.permute.xlu0 %2338
  %2344 = vrot.lane.b32.xlu0 %v2284, 32
  %v2345 = vpop.permute.xlu0 %2344
  %2346 = vrot.lane.b32.xlu0 %v2285, 32
  %v2347 = vpop.permute.xlu0 %2346
  %v2350 = vsel %vm116, %v2267, %v2289
  %v2351 = vsel %vm116, %v2268, %v2291
  %v2352 = vsel %vm119, %v2350, %v2297
  %v2353 = vsel %vm119, %v2351, %v2299
  %v2354 = vsel %vm122, %v2352, %v2305
  %v2355 = vsel %vm122, %v2353, %v2307
  %v2356 = vsel %vm125, %v2354, %v2313
  %v2357 = vsel %vm125, %v2355, %v2315
  %v2358 = vsel %vm128, %v2356, %v2321
  %v2359 = vsel %vm128, %v2357, %v2323
  %v2360 = vsel %vm131, %v2358, %v2329
  %v2361 = vsel %vm131, %v2359, %v2331
  %v2362 = vsel %vm134, %v2360, %v2337
  %v2363 = vsel %vm134, %v2361, %v2339
  %v2364 = vsel %vm137, %v2362, %v2345
  %v2365 = vsel %vm137, %v2363, %v2347
  %2366 = vst.msk [vmem:[#allocation2 + $0x134] sm:$0xff] %vm140, %v2364
  %2367 = vst.msk [vmem:[#allocation2 + $0x13c] sm:$0x3f] %vm142, %v2365
  %v2368 = vld [vmem:[%s2178] sm:$0xff]
  %v2369 = vld [vmem:[%s2178 + $0x8] sm:$0x3f]
  %v2370 = vld [vmem:[%s2178 + $0x1] sm:$0xff]
  %v2371 = vld [vmem:[%s2178 + $0x9] sm:$0x3f]
  %v2372 = vld [vmem:[%s2178 + $0x2] sm:$0xff]
  %v2373 = vld [vmem:[%s2178 + $0xa] sm:$0x3f]
  %v2374 = vld [vmem:[%s2279] sm:$0xff]
  %v2375 = vld [vmem:[%s2279 + $0x8] sm:$0x3f]
  %v2376 = vld [vmem:[%s2279 + $0x1] sm:$0xff]
  %v2377 = vld [vmem:[%s2279 + $0x9] sm:$0x3f]
  %v2378 = vld [vmem:[%s2279 + $0x2] sm:$0xff]
  %v2379 = vld [vmem:[%s2279 + $0xa] sm:$0x3f]
  %s2380 = scalar_lea.vmem %s0, 432
  %v2381 = vld [vmem:[%s2380] sm:$0xff]
  %v2382 = vld [vmem:[%s2380 + $0x8] sm:$0x3f]
  %v2383 = vld [vmem:[%s2380 + $0x1] sm:$0xff]
  %v2384 = vld [vmem:[%s2380 + $0x9] sm:$0x3f]
  %v2385 = vld [vmem:[%s2380 + $0x2] sm:$0xff]
  %v2386 = vld [vmem:[%s2380 + $0xa] sm:$0x3f]
  %2389 = vrot.lane.b32.xlu0 %v2370, 4
  %v2390 = vpop.permute.xlu0 %2389
  %2391 = vrot.lane.b32.xlu0 %v2371, 4
  %v2392 = vpop.permute.xlu0 %2391
  %2397 = vrot.lane.b32.xlu0 %v2372, 8
  %v2398 = vpop.permute.xlu0 %2397
  %2399 = vrot.lane.b32.xlu0 %v2373, 8
  %v2400 = vpop.permute.xlu0 %2399
  %2405 = vrot.lane.b32.xlu0 %v2374, 12
  %v2406 = vpop.permute.xlu0 %2405
  %2407 = vrot.lane.b32.xlu0 %v2375, 12
  %v2408 = vpop.permute.xlu0 %2407
  %2413 = vrot.lane.b32.xlu0 %v2376, 16
  %v2414 = vpop.permute.xlu0 %2413
  %2415 = vrot.lane.b32.xlu0 %v2377, 16
  %v2416 = vpop.permute.xlu0 %2415
  %2421 = vrot.lane.b32.xlu0 %v2378, 20
  %v2422 = vpop.permute.xlu0 %2421
  %2423 = vrot.lane.b32.xlu0 %v2379, 20
  %v2424 = vpop.permute.xlu0 %2423
  %2429 = vrot.lane.b32.xlu0 %v2381, 24
  %v2430 = vpop.permute.xlu0 %2429
  %2431 = vrot.lane.b32.xlu0 %v2382, 24
  %v2432 = vpop.permute.xlu0 %2431
  %2437 = vrot.lane.b32.xlu0 %v2383, 28
  %v2438 = vpop.permute.xlu0 %2437
  %2439 = vrot.lane.b32.xlu0 %v2384, 28
  %v2440 = vpop.permute.xlu0 %2439
  %2445 = vrot.lane.b32.xlu0 %v2385, 32
  %v2446 = vpop.permute.xlu0 %2445
  %2447 = vrot.lane.b32.xlu0 %v2386, 32
  %v2448 = vpop.permute.xlu0 %2447
  %v2451 = vsel %vm116, %v2368, %v2390
  %v2452 = vsel %vm116, %v2369, %v2392
  %v2453 = vsel %vm119, %v2451, %v2398
  %v2454 = vsel %vm119, %v2452, %v2400
  %v2455 = vsel %vm122, %v2453, %v2406
  %v2456 = vsel %vm122, %v2454, %v2408
  %v2457 = vsel %vm125, %v2455, %v2414
  %v2458 = vsel %vm125, %v2456, %v2416
  %v2459 = vsel %vm128, %v2457, %v2422
  %v2460 = vsel %vm128, %v2458, %v2424
  %v2461 = vsel %vm131, %v2459, %v2430
  %v2462 = vsel %vm131, %v2460, %v2432
  %v2463 = vsel %vm134, %v2461, %v2438
  %v2464 = vsel %vm134, %v2462, %v2440
  %v2465 = vsel %vm137, %v2463, %v2446
  %v2466 = vsel %vm137, %v2464, %v2448
  %2467 = vst.msk [vmem:[#allocation2 + $0x142] sm:$0xff] %vm140, %v2465
  %2468 = vst.msk [vmem:[#allocation2 + $0x14a] sm:$0x3f] %vm142, %v2466
  %v2469 = vld [vmem:[%s2279] sm:$0xff]
  %v2470 = vld [vmem:[%s2279 + $0x8] sm:$0x3f]
  %v2471 = vld [vmem:[%s2279 + $0x1] sm:$0xff]
  %v2472 = vld [vmem:[%s2279 + $0x9] sm:$0x3f]
  %v2473 = vld [vmem:[%s2279 + $0x2] sm:$0xff]
  %v2474 = vld [vmem:[%s2279 + $0xa] sm:$0x3f]
  %v2475 = vld [vmem:[%s2380] sm:$0xff]
  %v2476 = vld [vmem:[%s2380 + $0x8] sm:$0x3f]
  %v2477 = vld [vmem:[%s2380 + $0x1] sm:$0xff]
  %v2478 = vld [vmem:[%s2380 + $0x9] sm:$0x3f]
  %v2479 = vld [vmem:[%s2380 + $0x2] sm:$0xff]
  %v2480 = vld [vmem:[%s2380 + $0xa] sm:$0x3f]
  %s2481 = scalar_lea.vmem %s0, 448
  %v2482 = vld [vmem:[%s2481] sm:$0xff]
  %v2483 = vld [vmem:[%s2481 + $0x8] sm:$0x3f]
  %v2484 = vld [vmem:[%s2481 + $0x1] sm:$0xff]
  %v2485 = vld [vmem:[%s2481 + $0x9] sm:$0x3f]
  %v2486 = vld [vmem:[%s2481 + $0x2] sm:$0xff]
  %v2487 = vld [vmem:[%s2481 + $0xa] sm:$0x3f]
  %2490 = vrot.lane.b32.xlu0 %v2471, 4
  %v2491 = vpop.permute.xlu0 %2490
  %2492 = vrot.lane.b32.xlu0 %v2472, 4
  %v2493 = vpop.permute.xlu0 %2492
  %2498 = vrot.lane.b32.xlu0 %v2473, 8
  %v2499 = vpop.permute.xlu0 %2498
  %2500 = vrot.lane.b32.xlu0 %v2474, 8
  %v2501 = vpop.permute.xlu0 %2500
  %2506 = vrot.lane.b32.xlu0 %v2475, 12
  %v2507 = vpop.permute.xlu0 %2506
  %2508 = vrot.lane.b32.xlu0 %v2476, 12
  %v2509 = vpop.permute.xlu0 %2508
  %2514 = vrot.lane.b32.xlu0 %v2477, 16
  %v2515 = vpop.permute.xlu0 %2514
  %2516 = vrot.lane.b32.xlu0 %v2478, 16
  %v2517 = vpop.permute.xlu0 %2516
  %2522 = vrot.lane.b32.xlu0 %v2479, 20
  %v2523 = vpop.permute.xlu0 %2522
  %2524 = vrot.lane.b32.xlu0 %v2480, 20
  %v2525 = vpop.permute.xlu0 %2524
  %2530 = vrot.lane.b32.xlu0 %v2482, 24
  %v2531 = vpop.permute.xlu0 %2530
  %2532 = vrot.lane.b32.xlu0 %v2483, 24
  %v2533 = vpop.permute.xlu0 %2532
  %2538 = vrot.lane.b32.xlu0 %v2484, 28
  %v2539 = vpop.permute.xlu0 %2538
  %2540 = vrot.lane.b32.xlu0 %v2485, 28
  %v2541 = vpop.permute.xlu0 %2540
  %2546 = vrot.lane.b32.xlu0 %v2486, 32
  %v2547 = vpop.permute.xlu0 %2546
  %2548 = vrot.lane.b32.xlu0 %v2487, 32
  %v2549 = vpop.permute.xlu0 %2548
  %v2552 = vsel %vm116, %v2469, %v2491
  %v2553 = vsel %vm116, %v2470, %v2493
  %v2554 = vsel %vm119, %v2552, %v2499
  %v2555 = vsel %vm119, %v2553, %v2501
  %v2556 = vsel %vm122, %v2554, %v2507
  %v2557 = vsel %vm122, %v2555, %v2509
  %v2558 = vsel %vm125, %v2556, %v2515
  %v2559 = vsel %vm125, %v2557, %v2517
  %v2560 = vsel %vm128, %v2558, %v2523
  %v2561 = vsel %vm128, %v2559, %v2525
  %v2562 = vsel %vm131, %v2560, %v2531
  %v2563 = vsel %vm131, %v2561, %v2533
  %v2564 = vsel %vm134, %v2562, %v2539
  %v2565 = vsel %vm134, %v2563, %v2541
  %v2566 = vsel %vm137, %v2564, %v2547
  %v2567 = vsel %vm137, %v2565, %v2549
  %2568 = vst.msk [vmem:[#allocation2 + $0x150] sm:$0xff] %vm140, %v2566
  %2569 = vst.msk [vmem:[#allocation2 + $0x158] sm:$0x3f] %vm142, %v2567
  %v2570 = vld [vmem:[%s2380] sm:$0xff]
  %v2571 = vld [vmem:[%s2380 + $0x8] sm:$0x3f]
  %v2572 = vld [vmem:[%s2380 + $0x1] sm:$0xff]
  %v2573 = vld [vmem:[%s2380 + $0x9] sm:$0x3f]
  %v2574 = vld [vmem:[%s2380 + $0x2] sm:$0xff]
  %v2575 = vld [vmem:[%s2380 + $0xa] sm:$0x3f]
  %v2576 = vld [vmem:[%s2481] sm:$0xff]
  %v2577 = vld [vmem:[%s2481 + $0x8] sm:$0x3f]
  %v2578 = vld [vmem:[%s2481 + $0x1] sm:$0xff]
  %v2579 = vld [vmem:[%s2481 + $0x9] sm:$0x3f]
  %v2580 = vld [vmem:[%s2481 + $0x2] sm:$0xff]
  %v2581 = vld [vmem:[%s2481 + $0xa] sm:$0x3f]
  %s2582 = scalar_lea.vmem %s0, 464
  %v2583 = vld [vmem:[%s2582] sm:$0xff]
  %v2584 = vld [vmem:[%s2582 + $0x8] sm:$0x3f]
  %v2585 = vld [vmem:[%s2582 + $0x1] sm:$0xff]
  %v2586 = vld [vmem:[%s2582 + $0x9] sm:$0x3f]
  %v2587 = vld [vmem:[%s2582 + $0x2] sm:$0xff]
  %v2588 = vld [vmem:[%s2582 + $0xa] sm:$0x3f]
  %2591 = vrot.lane.b32.xlu0 %v2572, 4
  %v2592 = vpop.permute.xlu0 %2591
  %2593 = vrot.lane.b32.xlu0 %v2573, 4
  %v2594 = vpop.permute.xlu0 %2593
  %2599 = vrot.lane.b32.xlu0 %v2574, 8
  %v2600 = vpop.permute.xlu0 %2599
  %2601 = vrot.lane.b32.xlu0 %v2575, 8
  %v2602 = vpop.permute.xlu0 %2601
  %2607 = vrot.lane.b32.xlu0 %v2576, 12
  %v2608 = vpop.permute.xlu0 %2607
  %2609 = vrot.lane.b32.xlu0 %v2577, 12
  %v2610 = vpop.permute.xlu0 %2609
  %2615 = vrot.lane.b32.xlu0 %v2578, 16
  %v2616 = vpop.permute.xlu0 %2615
  %2617 = vrot.lane.b32.xlu0 %v2579, 16
  %v2618 = vpop.permute.xlu0 %2617
  %2623 = vrot.lane.b32.xlu0 %v2580, 20
  %v2624 = vpop.permute.xlu0 %2623
  %2625 = vrot.lane.b32.xlu0 %v2581, 20
  %v2626 = vpop.permute.xlu0 %2625
  %2631 = vrot.lane.b32.xlu0 %v2583, 24
  %v2632 = vpop.permute.xlu0 %2631
  %2633 = vrot.lane.b32.xlu0 %v2584, 24
  %v2634 = vpop.permute.xlu0 %2633
  %2639 = vrot.lane.b32.xlu0 %v2585, 28
  %v2640 = vpop.permute.xlu0 %2639
  %2641 = vrot.lane.b32.xlu0 %v2586, 28
  %v2642 = vpop.permute.xlu0 %2641
  %2647 = vrot.lane.b32.xlu0 %v2587, 32
  %v2648 = vpop.permute.xlu0 %2647
  %2649 = vrot.lane.b32.xlu0 %v2588, 32
  %v2650 = vpop.permute.xlu0 %2649
  %v2653 = vsel %vm116, %v2570, %v2592
  %v2654 = vsel %vm116, %v2571, %v2594
  %v2655 = vsel %vm119, %v2653, %v2600
  %v2656 = vsel %vm119, %v2654, %v2602
  %v2657 = vsel %vm122, %v2655, %v2608
  %v2658 = vsel %vm122, %v2656, %v2610
  %v2659 = vsel %vm125, %v2657, %v2616
  %v2660 = vsel %vm125, %v2658, %v2618
  %v2661 = vsel %vm128, %v2659, %v2624
  %v2662 = vsel %vm128, %v2660, %v2626
  %v2663 = vsel %vm131, %v2661, %v2632
  %v2664 = vsel %vm131, %v2662, %v2634
  %v2665 = vsel %vm134, %v2663, %v2640
  %v2666 = vsel %vm134, %v2664, %v2642
  %v2667 = vsel %vm137, %v2665, %v2648
  %v2668 = vsel %vm137, %v2666, %v2650
  %2669 = vst.msk [vmem:[#allocation2 + $0x15e] sm:$0xff] %vm140, %v2667
  %2670 = vst.msk [vmem:[#allocation2 + $0x166] sm:$0x3f] %vm142, %v2668
  %v2671 = vld [vmem:[%s2481] sm:$0xff]
  %v2672 = vld [vmem:[%s2481 + $0x8] sm:$0x3f]
  %v2673 = vld [vmem:[%s2481 + $0x1] sm:$0xff]
  %v2674 = vld [vmem:[%s2481 + $0x9] sm:$0x3f]
  %v2675 = vld [vmem:[%s2481 + $0x2] sm:$0xff]
  %v2676 = vld [vmem:[%s2481 + $0xa] sm:$0x3f]
  %v2677 = vld [vmem:[%s2582] sm:$0xff]
  %v2678 = vld [vmem:[%s2582 + $0x8] sm:$0x3f]
  %v2679 = vld [vmem:[%s2582 + $0x1] sm:$0xff]
  %v2680 = vld [vmem:[%s2582 + $0x9] sm:$0x3f]
  %v2681 = vld [vmem:[%s2582 + $0x2] sm:$0xff]
  %v2682 = vld [vmem:[%s2582 + $0xa] sm:$0x3f]
  %s2683 = scalar_lea.vmem %s0, 480
  %v2684 = vld [vmem:[%s2683] sm:$0xff]
  %v2685 = vld [vmem:[%s2683 + $0x8] sm:$0x3f]
  %v2686 = vld [vmem:[%s2683 + $0x1] sm:$0xff]
  %v2687 = vld [vmem:[%s2683 + $0x9] sm:$0x3f]
  %v2688 = vld [vmem:[%s2683 + $0x2] sm:$0xff]
  %v2689 = vld [vmem:[%s2683 + $0xa] sm:$0x3f]
  %2692 = vrot.lane.b32.xlu0 %v2673, 4
  %v2693 = vpop.permute.xlu0 %2692
  %2694 = vrot.lane.b32.xlu0 %v2674, 4
  %v2695 = vpop.permute.xlu0 %2694
  %2700 = vrot.lane.b32.xlu0 %v2675, 8
  %v2701 = vpop.permute.xlu0 %2700
  %2702 = vrot.lane.b32.xlu0 %v2676, 8
  %v2703 = vpop.permute.xlu0 %2702
  %2708 = vrot.lane.b32.xlu0 %v2677, 12
  %v2709 = vpop.permute.xlu0 %2708
  %2710 = vrot.lane.b32.xlu0 %v2678, 12
  %v2711 = vpop.permute.xlu0 %2710
  %2716 = vrot.lane.b32.xlu0 %v2679, 16
  %v2717 = vpop.permute.xlu0 %2716
  %2718 = vrot.lane.b32.xlu0 %v2680, 16
  %v2719 = vpop.permute.xlu0 %2718
  %2724 = vrot.lane.b32.xlu0 %v2681, 20
  %v2725 = vpop.permute.xlu0 %2724
  %2726 = vrot.lane.b32.xlu0 %v2682, 20
  %v2727 = vpop.permute.xlu0 %2726
  %2732 = vrot.lane.b32.xlu0 %v2684, 24
  %v2733 = vpop.permute.xlu0 %2732
  %2734 = vrot.lane.b32.xlu0 %v2685, 24
  %v2735 = vpop.permute.xlu0 %2734
  %2740 = vrot.lane.b32.xlu0 %v2686, 28
  %v2741 = vpop.permute.xlu0 %2740
  %2742 = vrot.lane.b32.xlu0 %v2687, 28
  %v2743 = vpop.permute.xlu0 %2742
  %2748 = vrot.lane.b32.xlu0 %v2688, 32
  %v2749 = vpop.permute.xlu0 %2748
  %2750 = vrot.lane.b32.xlu0 %v2689, 32
  %v2751 = vpop.permute.xlu0 %2750
  %v2754 = vsel %vm116, %v2671, %v2693
  %v2755 = vsel %vm116, %v2672, %v2695
  %v2756 = vsel %vm119, %v2754, %v2701
  %v2757 = vsel %vm119, %v2755, %v2703
  %v2758 = vsel %vm122, %v2756, %v2709
  %v2759 = vsel %vm122, %v2757, %v2711
  %v2760 = vsel %vm125, %v2758, %v2717
  %v2761 = vsel %vm125, %v2759, %v2719
  %v2762 = vsel %vm128, %v2760, %v2725
  %v2763 = vsel %vm128, %v2761, %v2727
  %v2764 = vsel %vm131, %v2762, %v2733
  %v2765 = vsel %vm131, %v2763, %v2735
  %v2766 = vsel %vm134, %v2764, %v2741
  %v2767 = vsel %vm134, %v2765, %v2743
  %v2768 = vsel %vm137, %v2766, %v2749
  %v2769 = vsel %vm137, %v2767, %v2751
  %2770 = vst.msk [vmem:[#allocation2 + $0x16c] sm:$0xff] %vm140, %v2768
  %2771 = vst.msk [vmem:[#allocation2 + $0x174] sm:$0x3f] %vm142, %v2769
  %v2772 = vld [vmem:[%s2582] sm:$0xff]
  %v2773 = vld [vmem:[%s2582 + $0x8] sm:$0x3f]
  %v2774 = vld [vmem:[%s2582 + $0x1] sm:$0xff]
  %v2775 = vld [vmem:[%s2582 + $0x9] sm:$0x3f]
  %v2776 = vld [vmem:[%s2582 + $0x2] sm:$0xff]
  %v2777 = vld [vmem:[%s2582 + $0xa] sm:$0x3f]
  %v2778 = vld [vmem:[%s2683] sm:$0xff]
  %v2779 = vld [vmem:[%s2683 + $0x8] sm:$0x3f]
  %v2780 = vld [vmem:[%s2683 + $0x1] sm:$0xff]
  %v2781 = vld [vmem:[%s2683 + $0x9] sm:$0x3f]
  %v2782 = vld [vmem:[%s2683 + $0x2] sm:$0xff]
  %v2783 = vld [vmem:[%s2683 + $0xa] sm:$0x3f]
  %s2784 = scalar_lea.vmem %s0, 496
  %v2785 = vld [vmem:[%s2784] sm:$0xff]
  %v2786 = vld [vmem:[%s2784 + $0x8] sm:$0x3f]
  %v2787 = vld [vmem:[%s2784 + $0x1] sm:$0xff]
  %v2788 = vld [vmem:[%s2784 + $0x9] sm:$0x3f]
  %v2789 = vld [vmem:[%s2784 + $0x2] sm:$0xff]
  %v2790 = vld [vmem:[%s2784 + $0xa] sm:$0x3f]
  %2793 = vrot.lane.b32.xlu0 %v2774, 4
  %v2794 = vpop.permute.xlu0 %2793
  %2795 = vrot.lane.b32.xlu0 %v2775, 4
  %v2796 = vpop.permute.xlu0 %2795
  %2801 = vrot.lane.b32.xlu0 %v2776, 8
  %v2802 = vpop.permute.xlu0 %2801
  %2803 = vrot.lane.b32.xlu0 %v2777, 8
  %v2804 = vpop.permute.xlu0 %2803
  %2809 = vrot.lane.b32.xlu0 %v2778, 12
  %v2810 = vpop.permute.xlu0 %2809
  %2811 = vrot.lane.b32.xlu0 %v2779, 12
  %v2812 = vpop.permute.xlu0 %2811
  %2817 = vrot.lane.b32.xlu0 %v2780, 16
  %v2818 = vpop.permute.xlu0 %2817
  %2819 = vrot.lane.b32.xlu0 %v2781, 16
  %v2820 = vpop.permute.xlu0 %2819
  %2825 = vrot.lane.b32.xlu0 %v2782, 20
  %v2826 = vpop.permute.xlu0 %2825
  %2827 = vrot.lane.b32.xlu0 %v2783, 20
  %v2828 = vpop.permute.xlu0 %2827
  %2833 = vrot.lane.b32.xlu0 %v2785, 24
  %v2834 = vpop.permute.xlu0 %2833
  %2835 = vrot.lane.b32.xlu0 %v2786, 24
  %v2836 = vpop.permute.xlu0 %2835
  %2841 = vrot.lane.b32.xlu0 %v2787, 28
  %v2842 = vpop.permute.xlu0 %2841
  %2843 = vrot.lane.b32.xlu0 %v2788, 28
  %v2844 = vpop.permute.xlu0 %2843
  %2849 = vrot.lane.b32.xlu0 %v2789, 32
  %v2850 = vpop.permute.xlu0 %2849
  %2851 = vrot.lane.b32.xlu0 %v2790, 32
  %v2852 = vpop.permute.xlu0 %2851
  %v2855 = vsel %vm116, %v2772, %v2794
  %v2856 = vsel %vm116, %v2773, %v2796
  %v2857 = vsel %vm119, %v2855, %v2802
  %v2858 = vsel %vm119, %v2856, %v2804
  %v2859 = vsel %vm122, %v2857, %v2810
  %v2860 = vsel %vm122, %v2858, %v2812
  %v2861 = vsel %vm125, %v2859, %v2818
  %v2862 = vsel %vm125, %v2860, %v2820
  %v2863 = vsel %vm128, %v2861, %v2826
  %v2864 = vsel %vm128, %v2862, %v2828
  %v2865 = vsel %vm131, %v2863, %v2834
  %v2866 = vsel %vm131, %v2864, %v2836
  %v2867 = vsel %vm134, %v2865, %v2842
  %v2868 = vsel %vm134, %v2866, %v2844
  %v2869 = vsel %vm137, %v2867, %v2850
  %v2870 = vsel %vm137, %v2868, %v2852
  %2871 = vst.msk [vmem:[#allocation2 + $0x17a] sm:$0xff] %vm140, %v2869
  %2872 = vst.msk [vmem:[#allocation2 + $0x182] sm:$0x3f] %vm142, %v2870
  %v2873 = vld [vmem:[#allocation2] sm:$0xff]
  %v2874 = vld [vmem:[#allocation2 + $0x8] sm:$0xff]
  %v2875 = vld [vmem:[#allocation2 + $0x10] sm:$0xff]
  %v2876 = vld [vmem:[#allocation2 + $0x18] sm:$0xff]
  %v2877 = vld [vmem:[#allocation2 + $0x20] sm:$0xff]
  %v2878 = vld [vmem:[#allocation2 + $0x28] sm:$0xff]
  %v2879 = vld [vmem:[#allocation2 + $0x30] sm:$0xff]
  %v2880 = vld [vmem:[#allocation2 + $0x38] sm:$0xff]
  %v2881 = vld [vmem:[#allocation2 + $0x40] sm:$0xff]
  %v2882 = vld [vmem:[#allocation2 + $0x48] sm:$0xff]
  %v2883 = vld [vmem:[#allocation2 + $0x50] sm:$0xff]
  %v2884 = vld [vmem:[#allocation2 + $0x58] sm:$0xff]
  %v2885 = vld [vmem:[#allocation2 + $0x60] sm:$0xff]
  %v2886 = vld [vmem:[#allocation2 + $0x68] sm:$0xff]
  %v2887 = vld [vmem:[#allocation2 + $0x70] sm:$0xff]
  %v2888 = vld [vmem:[#allocation2 + $0x78] sm:$0xff]
  %v2889 = vld [vmem:[#allocation2 + $0x80] sm:$0xff]
  %v2890 = vld [vmem:[#allocation2 + $0x88] sm:$0xff]
  %v2891 = vld [vmem:[#allocation2 + $0x90] sm:$0xff]
  %v2892 = vld [vmem:[#allocation2 + $0x98] sm:$0xff]
  %v2893 = vld [vmem:[#allocation2 + $0xa0] sm:$0xff]
  %v2894 = vld [vmem:[#allocation2 + $0xa8] sm:$0xff]
  %v2895 = vld [vmem:[#allocation2 + $0xb0] sm:$0xff]
  %v2896 = vld [vmem:[#allocation2 + $0xb8] sm:$0xff]
  %v2897 = vld [vmem:[#allocation2 + $0xc0] sm:$0xff]
  %v2898 = vld [vmem:[#allocation2 + $0xc8] sm:$0xff]
  %v2899 = vld [vmem:[#allocation2 + $0xd0] sm:$0xff]
  %v2900 = vld [vmem:[#allocation2 + $0xd8] sm:$0xff]
  %v2901 = vld [vmem:[#allocation2 + $0xe0] sm:$0xff]
  %v2902 = vld [vmem:[#allocation2 + $0xe8] sm:$0xff]
  %v2903 = vld [vmem:[#allocation2 + $0xf0] sm:$0xff]
  %v2904 = vld [vmem:[#allocation2 + $0xf8] sm:$0xff]
  %v2905 = vld [vmem:[#allocation2 + $0x100] sm:$0xff]
  %v2906 = vld [vmem:[#allocation2 + $0x108] sm:$0xff]
  %v2907 = vld [vmem:[#allocation2 + $0x110] sm:$0xff]
  %v2908 = vld [vmem:[#allocation2 + $0x118] sm:$0xff]
  %v2909 = vld [vmem:[#allocation2 + $0x120] sm:$0xff]
  %v2910 = vld [vmem:[#allocation2 + $0x128] sm:$0xff]
  %v2911 = vld [vmem:[#allocation2 + $0x130] sm:$0xff]
  %v2912 = vld [vmem:[#allocation2 + $0x138] sm:$0xff]
  %v2913 = vld [vmem:[#allocation2 + $0x140] sm:$0xff]
  %v2914 = vld [vmem:[#allocation2 + $0x148] sm:$0xff]
  %v2915 = vld [vmem:[#allocation2 + $0x150] sm:$0xff]
  %v2916 = vld [vmem:[#allocation2 + $0x158] sm:$0xff]
  %v2917 = vld [vmem:[#allocation2 + $0x160] sm:$0xff]
  %v2918 = vld [vmem:[#allocation2 + $0x168] sm:$0xff]
  %v2919 = vld [vmem:[#allocation2 + $0x170] sm:$0xff]
  %v2920 = vld [vmem:[#allocation2 + $0x178] sm:$0xff]
  %v2921 = vld [vmem:[#allocation2 + $0x180] sm:$0xff]
  %v2922 = vld [vmem:[%s1] sm:$0xff]
  %v2923 = vld [vmem:[%s1 + $0x8] sm:$0xff]
  %v2924 = vld [vmem:[%s1 + $0x10] sm:$0xff]
  %v2925 = vld [vmem:[%s1 + $0x18] sm:$0xff]
  %v2926 = vld [vmem:[%s1 + $0x20] sm:$0xf]
  %v2928 = vsel %vm140, %v2873, 0
  %v2931 = vsel %vm140, %v2874, 0
  %v2934 = vsel %vm140, %v2875, 0
  %v2937 = vsel %vm140, %v2876, 0
  %v2940 = vsel %vm140, %v2877, 0
  %v2943 = vsel %vm140, %v2878, 0
  %v2946 = vsel %vm140, %v2879, 0
  %v2949 = vsel %vm140, %v2880, 0
  %v2952 = vsel %vm140, %v2881, 0
  %v2955 = vsel %vm140, %v2882, 0
  %v2958 = vsel %vm140, %v2883, 0
  %v2961 = vsel %vm140, %v2884, 0
  %v2964 = vsel %vm140, %v2885, 0
  %v2967 = vsel %vm140, %v2886, 0
  %v2970 = vsel %vm140, %v2887, 0
  %v2973 = vsel %vm140, %v2888, 0
  %v2976 = vsel %vm140, %v2889, 0
  %v2979 = vsel %vm140, %v2890, 0
  %v2982 = vsel %vm140, %v2891, 0
  %v2985 = vsel %vm140, %v2892, 0
  %v2988 = vsel %vm140, %v2893, 0
  %v2991 = vsel %vm140, %v2894, 0
  %v2994 = vsel %vm140, %v2895, 0
  %v2997 = vsel %vm140, %v2896, 0
  %v3000 = vsel %vm140, %v2897, 0
  %v3003 = vsel %vm140, %v2898, 0
  %v3006 = vsel %vm140, %v2899, 0
  %v3009 = vsel %vm140, %v2900, 0
  %v3012 = vsel %vm140, %v2901, 0
  %v3015 = vsel %vm140, %v2902, 0
  %v3018 = vsel %vm140, %v2903, 0
  %v3021 = vsel %vm140, %v2904, 0
  %v3024 = vsel %vm140, %v2905, 0
  %v3027 = vsel %vm140, %v2906, 0
  %v3030 = vsel %vm140, %v2907, 0
  %v3033 = vsel %vm140, %v2908, 0
  %v3036 = vsel %vm140, %v2909, 0
  %v3039 = vsel %vm140, %v2910, 0
  %v3042 = vsel %vm140, %v2911, 0
  %v3045 = vsel %vm140, %v2912, 0
  %v3048 = vsel %vm140, %v2913, 0
  %v3051 = vsel %vm140, %v2914, 0
  %v3054 = vsel %vm140, %v2915, 0
  %v3057 = vsel %vm140, %v2916, 0
  %v3060 = vsel %vm140, %v2917, 0
  %v3063 = vsel %vm140, %v2918, 0
  %v3066 = vsel %vm140, %v2919, 0
  %v3069 = vsel %vm140, %v2920, 0
  %v3072 = vsel %vm140, %v2921, 0
  %vm3074 = vcmask 1043456
  %v3076 = vsel %vm3074, %v2926, 0
  %3078 = vmatprep.subr.mxu0 0.0
  %3079 = vmatpush1.msra.mxu0 %v2922
  %3080 = vmatprep.subr.mxu0 0.0
  %3081 = vmatpush1.msra.mxu0 %v2923
  %3082 = vmatprep.subr.mxu0 0.0
  %3083 = vmatpush1.msra.mxu0 %v2924
  %3084 = vmatprep.subr.mxu0 0.0
  %3085 = vmatpush1.msra.mxu0 %v2925
  %3086 = vmatprep.subr.mxu0 0.0
  %3087 = vmatpush1.msra.mxu0 %v3076
  %3088 = vmatprep.subr.mxu0 0.0
  %3089 = vmatpush1.msra.mxu0 0.0
  %3090 = vmatprep.subr.mxu0 0.0
  %3091 = vmatpush1.msra.mxu0 0.0
  %3092 = vmatprep.subr.mxu0 0.0
  %3093 = vmatpush1.msra.mxu0 0.0
  %3094 = vmatprep.subr.mxu0 0.0
  %3095 = vmatpush1.msra.mxu0 0.0
  %3096 = vmatprep.subr.mxu0 0.0
  %3097 = vmatpush1.msra.mxu0 0.0
  %3098 = vmatprep.subr.mxu0 0.0
  %3099 = vmatpush1.msra.mxu0 0.0
  %3100 = vmatprep.subr.mxu0 0.0
  %3101 = vmatpush1.msra.mxu0 0.0
  %3102 = vmatprep.subr.mxu0 0.0
  %3103 = vmatpush1.msra.mxu0 0.0
  %3104 = vmatprep.subr.mxu0 0.0
  %3105 = vmatpush1.msra.mxu0 0.0
  %3106 = vmatprep.subr.mxu0 0.0
  %3107 = vmatpush1.msra.mxu0 0.0
  %3108 = vmatprep.subr.mxu0 0.0
  %3109 = vmatpush1.msra.mxu0 0.0
  %3110 = vmatprep.subr.mxu0 0.0
  %3111 = vmatpush1.msra.mxu0 0.0
  %3112 = vmatprep.subr.mxu0 0.0
  %3113 = vmatpush1.msra.mxu0 0.0
  %3114 = vmatprep.subr.mxu0 0.0
  %3115 = vmatpush1.msra.mxu0 0.0
  %3116 = vmatprep.subr.mxu0 0.0
  %3117 = vmatpush1.msra.mxu0 0.0
  %3118 = vmatprep.subr.mxu0 0.0
  %3119 = vmatpush1.msra.mxu0 0.0
  %3120 = vmatprep.subr.mxu0 0.0
  %3121 = vmatpush1.msra.mxu0 0.0
  %3122 = vmatprep.subr.mxu0 0.0
  %3123 = vmatpush1.msra.mxu0 0.0
  %3124 = vmatprep.subr.mxu0 0.0
  %3125 = vmatpush1.msra.mxu0 0.0
  %3126 = vmatprep.subr.mxu0 0.0
  %3127 = vmatpush1.msra.mxu0 0.0
  %3128 = vmatprep.subr.mxu0 0.0
  %3129 = vmatpush1.msra.mxu0 0.0
  %3130 = vmatprep.subr.mxu0 0.0
  %3131 = vmatpush1.msra.mxu0 0.0
  %3132 = vmatprep.subr.mxu0 0.0
  %3133 = vmatpush1.msra.mxu0 0.0
  %3134 = vmatprep.subr.mxu0 0.0
  %3135 = vmatpush1.msra.mxu0 0.0
  %3136 = vmatprep.subr.mxu0 0.0
  %3137 = vmatpush1.msra.mxu0 0.0
  %3138 = vmatprep.subr.mxu0 0.0
  %3139 = vmatpush1.msra.mxu0 0.0
  %3140 = vmatprep.subr.mxu0 0.0
  %3141 = vmatpush1.msra.mxu0 0.0
  %3142 = vmatprep.mubr.f32.mxu0 0.0
  %3143 = vmatmul.mubr.f32.gmra.mrb[0].mxu0 %v2928
  %v3144 = vpop.f32.mrb[0].mxu0
  %v3145 = vadd.f32 0.0, %v3144
  %v3146 = vpop.f32.mrb[0].mxu0
  %3147 = vmatprep.mubr.f32.mxu0 0.0
  %3148 = vmatmul.mubr.f32.gmra.mrb[0].mxu0 %v2931
  %v3149 = vpop.f32.mrb[0].mxu0
  %v3150 = vadd.f32 0.0, %v3149
  %v3151 = vpop.f32.mrb[0].mxu0
  %3152 = vmatprep.mubr.f32.mxu0 0.0
  %3153 = vmatmul.mubr.f32.gmra.mrb[0].mxu0 %v2934
  %v3154 = vpop.f32.mrb[0].mxu0
  %v3155 = vadd.f32 0.0, %v3154
  %v3156 = vpop.f32.mrb[0].mxu0
  %3157 = vmatprep.mubr.f32.mxu0 0.0
  %3158 = vmatmul.mubr.f32.gmra.mrb[0].mxu0 %v2937
  %v3159 = vpop.f32.mrb[0].mxu0
  %v3160 = vadd.f32 0.0, %v3159
  %v3161 = vpop.f32.mrb[0].mxu0
  %3162 = vmatprep.mubr.f32.mxu0 0.0
  %3163 = vmatmul.mubr.f32.gmra.mrb[0].mxu0 %v2940
  %v3164 = vpop.f32.mrb[0].mxu0
  %v3165 = vadd.f32 0.0, %v3164
  %v3166 = vpop.f32.mrb[0].mxu0
  %3167 = vmatprep.mubr.f32.mxu0 0.0
  %3168 = vmatmul.mubr.f32.gmra.mrb[0].mxu0 %v2943
  %v3169 = vpop.f32.mrb[0].mxu0
  %v3170 = vadd.f32 0.0, %v3169
  %v3171 = vpop.f32.mrb[0].mxu0
  %3172 = vmatprep.mubr.f32.mxu0 0.0
  %3173 = vmatmul.mubr.f32.gmra.mrb[0].mxu0 %v2946
  %v3174 = vpop.f32.mrb[0].mxu0
  %v3175 = vadd.f32 0.0, %v3174
  %v3176 = vpop.f32.mrb[0].mxu0
  %3177 = vmatprep.mubr.f32.mxu0 0.0
  %3178 = vmatmul.mubr.f32.gmra.mrb[0].mxu0 %v2949
  %v3179 = vpop.f32.mrb[0].mxu0
  %v3180 = vadd.f32 0.0, %v3179
  %v3181 = vpop.f32.mrb[0].mxu0
  %3182 = vmatprep.mubr.f32.mxu0 0.0
  %3183 = vmatmul.mubr.f32.gmra.mrb[0].mxu0 %v2952
  %v3184 = vpop.f32.mrb[0].mxu0
  %v3185 = vadd.f32 0.0, %v3184
  %v3186 = vpop.f32.mrb[0].mxu0
  %3187 = vmatprep.mubr.f32.mxu0 0.0
  %3188 = vmatmul.mubr.f32.gmra.mrb[0].mxu0 %v2955
  %v3189 = vpop.f32.mrb[0].mxu0
  %v3190 = vadd.f32 0.0, %v3189
  %v3191 = vpop.f32.mrb[0].mxu0
  %3192 = vmatprep.mubr.f32.mxu0 0.0
  %3193 = vmatmul.mubr.f32.gmra.mrb[0].mxu0 %v2958
  %v3194 = vpop.f32.mrb[0].mxu0
  %v3195 = vadd.f32 0.0, %v3194
  %v3196 = vpop.f32.mrb[0].mxu0
  %3197 = vmatprep.mubr.f32.mxu0 0.0
  %3198 = vmatmul.mubr.f32.gmra.mrb[0].mxu0 %v2961
  %v3199 = vpop.f32.mrb[0].mxu0
  %v3200 = vadd.f32 0.0, %v3199
  %v3201 = vpop.f32.mrb[0].mxu0
  %3202 = vmatprep.mubr.f32.mxu0 0.0
  %3203 = vmatmul.mubr.f32.gmra.mrb[0].mxu0 %v2964
  %v3204 = vpop.f32.mrb[0].mxu0
  %v3205 = vadd.f32 0.0, %v3204
  %v3206 = vpop.f32.mrb[0].mxu0
  %3207 = vmatprep.mubr.f32.mxu0 0.0
  %3208 = vmatmul.mubr.f32.gmra.mrb[0].mxu0 %v2967
  %v3209 = vpop.f32.mrb[0].mxu0
  %v3210 = vadd.f32 0.0, %v3209
  %v3211 = vpop.f32.mrb[0].mxu0
  %3212 = vmatprep.mubr.f32.mxu0 0.0
  %3213 = vmatmul.mubr.f32.gmra.mrb[0].mxu0 %v2970
  %v3214 = vpop.f32.mrb[0].mxu0
  %v3215 = vadd.f32 0.0, %v3214
  %v3216 = vpop.f32.mrb[0].mxu0
  %3217 = vmatprep.mubr.f32.mxu0 0.0
  %3218 = vmatmul.mubr.f32.gmra.mrb[0].mxu0 %v2973
  %v3219 = vpop.f32.mrb[0].mxu0
  %v3220 = vadd.f32 0.0, %v3219
  %v3221 = vpop.f32.mrb[0].mxu0
  %3222 = vmatprep.mubr.f32.mxu0 0.0
  %3223 = vmatmul.mubr.f32.gmra.mrb[0].mxu0 %v2976
  %v3224 = vpop.f32.mrb[0].mxu0
  %v3225 = vadd.f32 0.0, %v3224
  %v3226 = vpop.f32.mrb[0].mxu0
  %3227 = vmatprep.mubr.f32.mxu0 0.0
  %3228 = vmatmul.mubr.f32.gmra.mrb[0].mxu0 %v2979
  %v3229 = vpop.f32.mrb[0].mxu0
  %v3230 = vadd.f32 0.0, %v3229
  %v3231 = vpop.f32.mrb[0].mxu0
  %3232 = vmatprep.mubr.f32.mxu0 0.0
  %3233 = vmatmul.mubr.f32.gmra.mrb[0].mxu0 %v2982
  %v3234 = vpop.f32.mrb[0].mxu0
  %v3235 = vadd.f32 0.0, %v3234
  %v3236 = vpop.f32.mrb[0].mxu0
  %3237 = vmatprep.mubr.f32.mxu0 0.0
  %3238 = vmatmul.mubr.f32.gmra.mrb[0].mxu0 %v2985
  %v3239 = vpop.f32.mrb[0].mxu0
  %v3240 = vadd.f32 0.0, %v3239
  %v3241 = vpop.f32.mrb[0].mxu0
  %3242 = vmatprep.mubr.f32.mxu0 0.0
  %3243 = vmatmul.mubr.f32.gmra.mrb[0].mxu0 %v2988
  %v3244 = vpop.f32.mrb[0].mxu0
  %v3245 = vadd.f32 0.0, %v3244
  %v3246 = vpop.f32.mrb[0].mxu0
  %3247 = vmatprep.mubr.f32.mxu0 0.0
  %3248 = vmatmul.mubr.f32.gmra.mrb[0].mxu0 %v2991
  %v3249 = vpop.f32.mrb[0].mxu0
  %v3250 = vadd.f32 0.0, %v3249
  %v3251 = vpop.f32.mrb[0].mxu0
  %3252 = vmatprep.mubr.f32.mxu0 0.0
  %3253 = vmatmul.mubr.f32.gmra.mrb[0].mxu0 %v2994
  %v3254 = vpop.f32.mrb[0].mxu0
  %v3255 = vadd.f32 0.0, %v3254
  %v3256 = vpop.f32.mrb[0].mxu0
  %3257 = vmatprep.mubr.f32.mxu0 0.0
  %3258 = vmatmul.mubr.f32.gmra.mrb[0].mxu0 %v2997
  %v3259 = vpop.f32.mrb[0].mxu0
  %v3260 = vadd.f32 0.0, %v3259
  %v3261 = vpop.f32.mrb[0].mxu0
  %3262 = vmatprep.mubr.f32.mxu0 0.0
  %3263 = vmatmul.mubr.f32.gmra.mrb[0].mxu0 %v3000
  %v3264 = vpop.f32.mrb[0].mxu0
  %v3265 = vadd.f32 0.0, %v3264
  %v3266 = vpop.f32.mrb[0].mxu0
  %3267 = vmatprep.mubr.f32.mxu0 0.0
  %3268 = vmatmul.mubr.f32.gmra.mrb[0].mxu0 %v3003
  %v3269 = vpop.f32.mrb[0].mxu0
  %v3270 = vadd.f32 0.0, %v3269
  %v3271 = vpop.f32.mrb[0].mxu0
  %3272 = vmatprep.mubr.f32.mxu0 0.0
  %3273 = vmatmul.mubr.f32.gmra.mrb[0].mxu0 %v3006
  %v3274 = vpop.f32.mrb[0].mxu0
  %v3275 = vadd.f32 0.0, %v3274
  %v3276 = vpop.f32.mrb[0].mxu0
  %3277 = vmatprep.mubr.f32.mxu0 0.0
  %3278 = vmatmul.mubr.f32.gmra.mrb[0].mxu0 %v3009
  %v3279 = vpop.f32.mrb[0].mxu0
  %v3280 = vadd.f32 0.0, %v3279
  %v3281 = vpop.f32.mrb[0].mxu0
  %3282 = vmatprep.mubr.f32.mxu0 0.0
  %3283 = vmatmul.mubr.f32.gmra.mrb[0].mxu0 %v3012
  %v3284 = vpop.f32.mrb[0].mxu0
  %v3285 = vadd.f32 0.0, %v3284
  %v3286 = vpop.f32.mrb[0].mxu0
  %3287 = vmatprep.mubr.f32.mxu0 0.0
  %3288 = vmatmul.mubr.f32.gmra.mrb[0].mxu0 %v3015
  %v3289 = vpop.f32.mrb[0].mxu0
  %v3290 = vadd.f32 0.0, %v3289
  %v3291 = vpop.f32.mrb[0].mxu0
  %3292 = vmatprep.mubr.f32.mxu0 0.0
  %3293 = vmatmul.mubr.f32.gmra.mrb[0].mxu0 %v3018
  %v3294 = vpop.f32.mrb[0].mxu0
  %v3295 = vadd.f32 0.0, %v3294
  %v3296 = vpop.f32.mrb[0].mxu0
  %3297 = vmatprep.mubr.f32.mxu0 0.0
  %3298 = vmatmul.mubr.f32.gmra.mrb[0].mxu0 %v3021
  %v3299 = vpop.f32.mrb[0].mxu0
  %v3300 = vadd.f32 0.0, %v3299
  %v3301 = vpop.f32.mrb[0].mxu0
  %3302 = vmatprep.mubr.f32.mxu0 0.0
  %3303 = vmatmul.mubr.f32.gmra.mrb[0].mxu0 %v3024
  %v3304 = vpop.f32.mrb[0].mxu0
  %v3305 = vadd.f32 0.0, %v3304
  %v3306 = vpop.f32.mrb[0].mxu0
  %3307 = vmatprep.mubr.f32.mxu0 0.0
  %3308 = vmatmul.mubr.f32.gmra.mrb[0].mxu0 %v3027
  %v3309 = vpop.f32.mrb[0].mxu0
  %v3310 = vadd.f32 0.0, %v3309
  %v3311 = vpop.f32.mrb[0].mxu0
  %3312 = vmatprep.mubr.f32.mxu0 0.0
  %3313 = vmatmul.mubr.f32.gmra.mrb[0].mxu0 %v3030
  %v3314 = vpop.f32.mrb[0].mxu0
  %v3315 = vadd.f32 0.0, %v3314
  %v3316 = vpop.f32.mrb[0].mxu0
  %3317 = vmatprep.mubr.f32.mxu0 0.0
  %3318 = vmatmul.mubr.f32.gmra.mrb[0].mxu0 %v3033
  %v3319 = vpop.f32.mrb[0].mxu0
  %v3320 = vadd.f32 0.0, %v3319
  %v3321 = vpop.f32.mrb[0].mxu0
  %3322 = vmatprep.mubr.f32.mxu0 0.0
  %3323 = vmatmul.mubr.f32.gmra.mrb[0].mxu0 %v3036
  %v3324 = vpop.f32.mrb[0].mxu0
  %v3325 = vadd.f32 0.0, %v3324
  %v3326 = vpop.f32.mrb[0].mxu0
  %3327 = vmatprep.mubr.f32.mxu0 0.0
  %3328 = vmatmul.mubr.f32.gmra.mrb[0].mxu0 %v3039
  %v3329 = vpop.f32.mrb[0].mxu0
  %v3330 = vadd.f32 0.0, %v3329
  %v3331 = vpop.f32.mrb[0].mxu0
  %3332 = vmatprep.mubr.f32.mxu0 0.0
  %3333 = vmatmul.mubr.f32.gmra.mrb[0].mxu0 %v3042
  %v3334 = vpop.f32.mrb[0].mxu0
  %v3335 = vadd.f32 0.0, %v3334
  %v3336 = vpop.f32.mrb[0].mxu0
  %3337 = vmatprep.mubr.f32.mxu0 0.0
  %3338 = vmatmul.mubr.f32.gmra.mrb[0].mxu0 %v3045
  %v3339 = vpop.f32.mrb[0].mxu0
  %v3340 = vadd.f32 0.0, %v3339
  %v3341 = vpop.f32.mrb[0].mxu0
  %3342 = vmatprep.mubr.f32.mxu0 0.0
  %3343 = vmatmul.mubr.f32.gmra.mrb[0].mxu0 %v3048
  %v3344 = vpop.f32.mrb[0].mxu0
  %v3345 = vadd.f32 0.0, %v3344
  %v3346 = vpop.f32.mrb[0].mxu0
  %3347 = vmatprep.mubr.f32.mxu0 0.0
  %3348 = vmatmul.mubr.f32.gmra.mrb[0].mxu0 %v3051
  %v3349 = vpop.f32.mrb[0].mxu0
  %v3350 = vadd.f32 0.0, %v3349
  %v3351 = vpop.f32.mrb[0].mxu0
  %3352 = vmatprep.mubr.f32.mxu0 0.0
  %3353 = vmatmul.mubr.f32.gmra.mrb[0].mxu0 %v3054
  %v3354 = vpop.f32.mrb[0].mxu0
  %v3355 = vadd.f32 0.0, %v3354
  %v3356 = vpop.f32.mrb[0].mxu0
  %3357 = vmatprep.mubr.f32.mxu0 0.0
  %3358 = vmatmul.mubr.f32.gmra.mrb[0].mxu0 %v3057
  %v3359 = vpop.f32.mrb[0].mxu0
  %v3360 = vadd.f32 0.0, %v3359
  %v3361 = vpop.f32.mrb[0].mxu0
  %3362 = vmatprep.mubr.f32.mxu0 0.0
  %3363 = vmatmul.mubr.f32.gmra.mrb[0].mxu0 %v3060
  %v3364 = vpop.f32.mrb[0].mxu0
  %v3365 = vadd.f32 0.0, %v3364
  %v3366 = vpop.f32.mrb[0].mxu0
  %3367 = vmatprep.mubr.f32.mxu0 0.0
  %3368 = vmatmul.mubr.f32.gmra.mrb[0].mxu0 %v3063
  %v3369 = vpop.f32.mrb[0].mxu0
  %v3370 = vadd.f32 0.0, %v3369
  %v3371 = vpop.f32.mrb[0].mxu0
  %3372 = vmatprep.mubr.f32.mxu0 0.0
  %3373 = vmatmul.mubr.f32.gmra.mrb[0].mxu0 %v3066
  %v3374 = vpop.f32.mrb[0].mxu0
  %v3375 = vadd.f32 0.0, %v3374
  %v3376 = vpop.f32.mrb[0].mxu0
  %3377 = vmatprep.mubr.f32.mxu0 0.0
  %3378 = vmatmul.mubr.f32.gmra.mrb[0].mxu0 %v3069
  %v3379 = vpop.f32.mrb[0].mxu0
  %v3380 = vadd.f32 0.0, %v3379
  %v3381 = vpop.f32.mrb[0].mxu0
  %3382 = vmatprep.mubr.f32.mxu0 0.0
  %3383 = vmatmul.mubr.f32.gmra.mrb[0].mxu0 %v3072
  %v3384 = vpop.f32.mrb[0].mxu0
  %v3385 = vadd.f32 0.0, %v3384
  %v3386 = vpop.f32.mrb[0].mxu0
  %3387 = vdwg.mxu0
  %v3388 = vld [vmem:[%s2] sm:$0x1]
  %v3389 = vld [vmem:[%s3] sm:$0x1]
  %v3390 = vsel %vm119, %v3145, 0.0
  %v3391 = vsel %vm119, %v3150, 0.0
  %v3392 = vadd.f32 %v3390, %v3391
  %v3393 = vsel %vm119, %v3155, 0.0
  %v3394 = vadd.f32 %v3392, %v3393
  %v3395 = vsel %vm119, %v3160, 0.0
  %v3396 = vadd.f32 %v3394, %v3395
  %v3397 = vsel %vm119, %v3165, 0.0
  %v3398 = vadd.f32 %v3396, %v3397
  %v3399 = vsel %vm119, %v3170, 0.0
  %v3400 = vadd.f32 %v3398, %v3399
  %v3401 = vsel %vm119, %v3175, 0.0
  %v3402 = vadd.f32 %v3400, %v3401
  %v3403 = vsel %vm119, %v3180, 0.0
  %v3404 = vadd.f32 %v3402, %v3403
  %v3405 = vsel %vm119, %v3185, 0.0
  %v3406 = vadd.f32 %v3404, %v3405
  %v3407 = vsel %vm119, %v3190, 0.0
  %v3408 = vadd.f32 %v3406, %v3407
  %v3409 = vsel %vm119, %v3195, 0.0
  %v3410 = vadd.f32 %v3408, %v3409
  %v3411 = vsel %vm119, %v3200, 0.0
  %v3412 = vadd.f32 %v3410, %v3411
  %v3413 = vsel %vm119, %v3205, 0.0
  %v3414 = vadd.f32 %v3412, %v3413
  %v3415 = vsel %vm119, %v3210, 0.0
  %v3416 = vadd.f32 %v3414, %v3415
  %v3417 = vsel %vm119, %v3215, 0.0
  %v3418 = vadd.f32 %v3416, %v3417
  %v3419 = vsel %vm119, %v3220, 0.0
  %v3420 = vadd.f32 %v3418, %v3419
  %v3421 = vsel %vm119, %v3225, 0.0
  %v3422 = vadd.f32 %v3420, %v3421
  %v3423 = vsel %vm119, %v3230, 0.0
  %v3424 = vadd.f32 %v3422, %v3423
  %v3425 = vsel %vm119, %v3235, 0.0
  %v3426 = vadd.f32 %v3424, %v3425
  %v3427 = vsel %vm119, %v3240, 0.0
  %v3428 = vadd.f32 %v3426, %v3427
  %v3429 = vsel %vm119, %v3245, 0.0
  %v3430 = vadd.f32 %v3428, %v3429
  %v3431 = vsel %vm119, %v3250, 0.0
  %v3432 = vadd.f32 %v3430, %v3431
  %v3433 = vsel %vm119, %v3255, 0.0
  %v3434 = vadd.f32 %v3432, %v3433
  %v3435 = vsel %vm119, %v3260, 0.0
  %v3436 = vadd.f32 %v3434, %v3435
  %v3437 = vsel %vm119, %v3265, 0.0
  %v3438 = vadd.f32 %v3436, %v3437
  %v3439 = vsel %vm119, %v3270, 0.0
  %v3440 = vadd.f32 %v3438, %v3439
  %v3441 = vsel %vm119, %v3275, 0.0
  %v3442 = vadd.f32 %v3440, %v3441
  %v3443 = vsel %vm119, %v3280, 0.0
  %v3444 = vadd.f32 %v3442, %v3443
  %v3445 = vsel %vm119, %v3285, 0.0
  %v3446 = vadd.f32 %v3444, %v3445
  %v3447 = vsel %vm119, %v3290, 0.0
  %v3448 = vadd.f32 %v3446, %v3447
  %v3449 = vsel %vm119, %v3295, 0.0
  %v3450 = vadd.f32 %v3448, %v3449
  %v3451 = vsel %vm119, %v3300, 0.0
  %v3452 = vadd.f32 %v3450, %v3451
  %v3453 = vsel %vm119, %v3305, 0.0
  %v3454 = vadd.f32 %v3452, %v3453
  %v3455 = vsel %vm119, %v3310, 0.0
  %v3456 = vadd.f32 %v3454, %v3455
  %v3457 = vsel %vm119, %v3315, 0.0
  %v3458 = vadd.f32 %v3456, %v3457
  %v3459 = vsel %vm119, %v3320, 0.0
  %v3460 = vadd.f32 %v3458, %v3459
  %v3461 = vsel %vm119, %v3325, 0.0
  %v3462 = vadd.f32 %v3460, %v3461
  %v3463 = vsel %vm119, %v3330, 0.0
  %v3464 = vadd.f32 %v3462, %v3463
  %v3465 = vsel %vm119, %v3335, 0.0
  %v3466 = vadd.f32 %v3464, %v3465
  %v3467 = vsel %vm119, %v3340, 0.0
  %v3468 = vadd.f32 %v3466, %v3467
  %v3469 = vsel %vm119, %v3345, 0.0
  %v3470 = vadd.f32 %v3468, %v3469
  %v3471 = vsel %vm119, %v3350, 0.0
  %v3472 = vadd.f32 %v3470, %v3471
  %v3473 = vsel %vm119, %v3355, 0.0
  %v3474 = vadd.f32 %v3472, %v3473
  %v3475 = vsel %vm119, %v3360, 0.0
  %v3476 = vadd.f32 %v3474, %v3475
  %v3477 = vsel %vm119, %v3365, 0.0
  %v3478 = vadd.f32 %v3476, %v3477
  %v3479 = vsel %vm119, %v3370, 0.0
  %v3480 = vadd.f32 %v3478, %v3479
  %v3481 = vsel %vm119, %v3375, 0.0
  %v3482 = vadd.f32 %v3480, %v3481
  %v3483 = vsel %vm119, %v3380, 0.0
  %v3484 = vadd.f32 %v3482, %v3483
  %v3485 = vsel %vm119, %v3385, 0.0
  %v3486 = vadd.f32 %v3484, %v3485
  %v3487 = vrot.slane %v3486, 4
  %v3488 = vadd.f32 %v3486, %v3487
  %v3489 = vrot.slane %v3488, 2
  %v3490 = vadd.f32 %v3488, %v3489
  %v3491 = vrot.slane %v3490, 1
  %v3492 = vadd.f32 %v3490, %v3491
  %v3493 = vmul.f32 %v3492, 0.0025510204
  %v3494 = vmul.f32 %v3145, %v3145
  %v3495 = vmul.f32 %v3150, %v3150
  %v3496 = vmul.f32 %v3155, %v3155
  %v3497 = vmul.f32 %v3160, %v3160
  %v3498 = vmul.f32 %v3165, %v3165
  %v3499 = vmul.f32 %v3170, %v3170
  %v3500 = vmul.f32 %v3175, %v3175
  %v3501 = vmul.f32 %v3180, %v3180
  %v3502 = vmul.f32 %v3185, %v3185
  %v3503 = vmul.f32 %v3190, %v3190
  %v3504 = vmul.f32 %v3195, %v3195
  %v3505 = vmul.f32 %v3200, %v3200
  %v3506 = vmul.f32 %v3205, %v3205
  %v3507 = vmul.f32 %v3210, %v3210
  %v3508 = vmul.f32 %v3215, %v3215
  %v3509 = vmul.f32 %v3220, %v3220
  %v3510 = vmul.f32 %v3225, %v3225
  %v3511 = vmul.f32 %v3230, %v3230
  %v3512 = vmul.f32 %v3235, %v3235
  %v3513 = vmul.f32 %v3240, %v3240
  %v3514 = vmul.f32 %v3245, %v3245
  %v3515 = vmul.f32 %v3250, %v3250
  %v3516 = vmul.f32 %v3255, %v3255
  %v3517 = vmul.f32 %v3260, %v3260
  %v3518 = vmul.f32 %v3265, %v3265
  %v3519 = vmul.f32 %v3270, %v3270
  %v3520 = vmul.f32 %v3275, %v3275
  %v3521 = vmul.f32 %v3280, %v3280
  %v3522 = vmul.f32 %v3285, %v3285
  %v3523 = vmul.f32 %v3290, %v3290
  %v3524 = vmul.f32 %v3295, %v3295
  %v3525 = vmul.f32 %v3300, %v3300
  %v3526 = vmul.f32 %v3305, %v3305
  %v3527 = vmul.f32 %v3310, %v3310
  %v3528 = vmul.f32 %v3315, %v3315
  %v3529 = vmul.f32 %v3320, %v3320
  %v3530 = vmul.f32 %v3325, %v3325
  %v3531 = vmul.f32 %v3330, %v3330
  %v3532 = vmul.f32 %v3335, %v3335
  %v3533 = vmul.f32 %v3340, %v3340
  %v3534 = vmul.f32 %v3345, %v3345
  %v3535 = vmul.f32 %v3350, %v3350
  %v3536 = vmul.f32 %v3355, %v3355
  %v3537 = vmul.f32 %v3360, %v3360
  %v3538 = vmul.f32 %v3365, %v3365
  %v3539 = vmul.f32 %v3370, %v3370
  %v3540 = vmul.f32 %v3375, %v3375
  %v3541 = vmul.f32 %v3380, %v3380
  %v3542 = vmul.f32 %v3385, %v3385
  %v3543 = vsel %vm119, %v3494, 0.0
  %v3544 = vsel %vm119, %v3495, 0.0
  %v3545 = vadd.f32 %v3543, %v3544
  %v3546 = vsel %vm119, %v3496, 0.0
  %v3547 = vadd.f32 %v3545, %v3546
  %v3548 = vsel %vm119, %v3497, 0.0
  %v3549 = vadd.f32 %v3547, %v3548
  %v3550 = vsel %vm119, %v3498, 0.0
  %v3551 = vadd.f32 %v3549, %v3550
  %v3552 = vsel %vm119, %v3499, 0.0
  %v3553 = vadd.f32 %v3551, %v3552
  %v3554 = vsel %vm119, %v3500, 0.0
  %v3555 = vadd.f32 %v3553, %v3554
  %v3556 = vsel %vm119, %v3501, 0.0
  %v3557 = vadd.f32 %v3555, %v3556
  %v3558 = vsel %vm119, %v3502, 0.0
  %v3559 = vadd.f32 %v3557, %v3558
  %v3560 = vsel %vm119, %v3503, 0.0
  %v3561 = vadd.f32 %v3559, %v3560
  %v3562 = vsel %vm119, %v3504, 0.0
  %v3563 = vadd.f32 %v3561, %v3562
  %v3564 = vsel %vm119, %v3505, 0.0
  %v3565 = vadd.f32 %v3563, %v3564
  %v3566 = vsel %vm119, %v3506, 0.0
  %v3567 = vadd.f32 %v3565, %v3566
  %v3568 = vsel %vm119, %v3507, 0.0
  %v3569 = vadd.f32 %v3567, %v3568
  %v3570 = vsel %vm119, %v3508, 0.0
  %v3571 = vadd.f32 %v3569, %v3570
  %v3572 = vsel %vm119, %v3509, 0.0
  %v3573 = vadd.f32 %v3571, %v3572
  %v3574 = vsel %vm119, %v3510, 0.0
  %v3575 = vadd.f32 %v3573, %v3574
  %v3576 = vsel %vm119, %v3511, 0.0
  %v3577 = vadd.f32 %v3575, %v3576
  %v3578 = vsel %vm119, %v3512, 0.0
  %v3579 = vadd.f32 %v3577, %v3578
  %v3580 = vsel %vm119, %v3513, 0.0
  %v3581 = vadd.f32 %v3579, %v3580
  %v3582 = vsel %vm119, %v3514, 0.0
  %v3583 = vadd.f32 %v3581, %v3582
  %v3584 = vsel %vm119, %v3515, 0.0
  %v3585 = vadd.f32 %v3583, %v3584
  %v3586 = vsel %vm119, %v3516, 0.0
  %v3587 = vadd.f32 %v3585, %v3586
  %v3588 = vsel %vm119, %v3517, 0.0
  %v3589 = vadd.f32 %v3587, %v3588
  %v3590 = vsel %vm119, %v3518, 0.0
  %v3591 = vadd.f32 %v3589, %v3590
  %v3592 = vsel %vm119, %v3519, 0.0
  %v3593 = vadd.f32 %v3591, %v3592
  %v3594 = vsel %vm119, %v3520, 0.0
  %v3595 = vadd.f32 %v3593, %v3594
  %v3596 = vsel %vm119, %v3521, 0.0
  %v3597 = vadd.f32 %v3595, %v3596
  %v3598 = vsel %vm119, %v3522, 0.0
  %v3599 = vadd.f32 %v3597, %v3598
  %v3600 = vsel %vm119, %v3523, 0.0
  %v3601 = vadd.f32 %v3599, %v3600
  %v3602 = vsel %vm119, %v3524, 0.0
  %v3603 = vadd.f32 %v3601, %v3602
  %v3604 = vsel %vm119, %v3525, 0.0
  %v3605 = vadd.f32 %v3603, %v3604
  %v3606 = vsel %vm119, %v3526, 0.0
  %v3607 = vadd.f32 %v3605, %v3606
  %v3608 = vsel %vm119, %v3527, 0.0
  %v3609 = vadd.f32 %v3607, %v3608
  %v3610 = vsel %vm119, %v3528, 0.0
  %v3611 = vadd.f32 %v3609, %v3610
  %v3612 = vsel %vm119, %v3529, 0.0
  %v3613 = vadd.f32 %v3611, %v3612
  %v3614 = vsel %vm119, %v3530, 0.0
  %v3615 = vadd.f32 %v3613, %v3614
  %v3616 = vsel %vm119, %v3531, 0.0
  %v3617 = vadd.f32 %v3615, %v3616
  %v3618 = vsel %vm119, %v3532, 0.0
  %v3619 = vadd.f32 %v3617, %v3618
  %v3620 = vsel %vm119, %v3533, 0.0
  %v3621 = vadd.f32 %v3619, %v3620
  %v3622 = vsel %vm119, %v3534, 0.0
  %v3623 = vadd.f32 %v3621, %v3622
  %v3624 = vsel %vm119, %v3535, 0.0
  %v3625 = vadd.f32 %v3623, %v3624
  %v3626 = vsel %vm119, %v3536, 0.0
  %v3627 = vadd.f32 %v3625, %v3626
  %v3628 = vsel %vm119, %v3537, 0.0
  %v3629 = vadd.f32 %v3627, %v3628
  %v3630 = vsel %vm119, %v3538, 0.0
  %v3631 = vadd.f32 %v3629, %v3630
  %v3632 = vsel %vm119, %v3539, 0.0
  %v3633 = vadd.f32 %v3631, %v3632
  %v3634 = vsel %vm119, %v3540, 0.0
  %v3635 = vadd.f32 %v3633, %v3634
  %v3636 = vsel %vm119, %v3541, 0.0
  %v3637 = vadd.f32 %v3635, %v3636
  %v3638 = vsel %vm119, %v3542, 0.0
  %v3639 = vadd.f32 %v3637, %v3638
  %v3640 = vrot.slane %v3639, 4
  %v3641 = vadd.f32 %v3639, %v3640
  %v3642 = vrot.slane %v3641, 2
  %v3643 = vadd.f32 %v3641, %v3642
  %v3644 = vrot.slane %v3643, 1
  %v3645 = vadd.f32 %v3643, %v3644
  %v3646 = vmul.f32 %v3645, 0.0025510204
  %v3647 = vmul.f32 %v3493, %v3493
  %v3648 = vsub.f32 %v3646, %v3647
  %v3649 = vsub.f32 %v3145, %v3493
  %v3650 = vsub.f32 %v3150, %v3493
  %v3651 = vsub.f32 %v3155, %v3493
  %v3652 = vsub.f32 %v3160, %v3493
  %v3653 = vsub.f32 %v3165, %v3493
  %v3654 = vsub.f32 %v3170, %v3493
  %v3655 = vsub.f32 %v3175, %v3493
  %v3656 = vsub.f32 %v3180, %v3493
  %v3657 = vsub.f32 %v3185, %v3493
  %v3658 = vsub.f32 %v3190, %v3493
  %v3659 = vsub.f32 %v3195, %v3493
  %v3660 = vsub.f32 %v3200, %v3493
  %v3661 = vsub.f32 %v3205, %v3493
  %v3662 = vsub.f32 %v3210, %v3493
  %v3663 = vsub.f32 %v3215, %v3493
  %v3664 = vsub.f32 %v3220, %v3493
  %v3665 = vsub.f32 %v3225, %v3493
  %v3666 = vsub.f32 %v3230, %v3493
  %v3667 = vsub.f32 %v3235, %v3493
  %v3668 = vsub.f32 %v3240, %v3493
  %v3669 = vsub.f32 %v3245, %v3493
  %v3670 = vsub.f32 %v3250, %v3493
  %v3671 = vsub.f32 %v3255, %v3493
  %v3672 = vsub.f32 %v3260, %v3493
  %v3673 = vsub.f32 %v3265, %v3493
  %v3674 = vsub.f32 %v3270, %v3493
  %v3675 = vsub.f32 %v3275, %v3493
  %v3676 = vsub.f32 %v3280, %v3493
  %v3677 = vsub.f32 %v3285, %v3493
  %v3678 = vsub.f32 %v3290, %v3493
  %v3679 = vsub.f32 %v3295, %v3493
  %v3680 = vsub.f32 %v3300, %v3493
  %v3681 = vsub.f32 %v3305, %v3493
  %v3682 = vsub.f32 %v3310, %v3493
  %v3683 = vsub.f32 %v3315, %v3493
  %v3684 = vsub.f32 %v3320, %v3493
  %v3685 = vsub.f32 %v3325, %v3493
  %v3686 = vsub.f32 %v3330, %v3493
  %v3687 = vsub.f32 %v3335, %v3493
  %v3688 = vsub.f32 %v3340, %v3493
  %v3689 = vsub.f32 %v3345, %v3493
  %v3690 = vsub.f32 %v3350, %v3493
  %v3691 = vsub.f32 %v3355, %v3493
  %v3692 = vsub.f32 %v3360, %v3493
  %v3693 = vsub.f32 %v3365, %v3493
  %v3694 = vsub.f32 %v3370, %v3493
  %v3695 = vsub.f32 %v3375, %v3493
  %v3696 = vsub.f32 %v3380, %v3493
  %v3697 = vsub.f32 %v3385, %v3493
  %v3698 = vadd.f32 %v3648, 1e-05
  %v3699 = vrsqrt.pop %v3698
  %v3700 = vmul.f32 %v3649, %v3699
  %v3701 = vmul.f32 %v3650, %v3699
  %v3702 = vmul.f32 %v3651, %v3699
  %v3703 = vmul.f32 %v3652, %v3699
  %v3704 = vmul.f32 %v3653, %v3699
  %v3705 = vmul.f32 %v3654, %v3699
  %v3706 = vmul.f32 %v3655, %v3699
  %v3707 = vmul.f32 %v3656, %v3699
  %v3708 = vmul.f32 %v3657, %v3699
  %v3709 = vmul.f32 %v3658, %v3699
  %v3710 = vmul.f32 %v3659, %v3699
  %v3711 = vmul.f32 %v3660, %v3699
  %v3712 = vmul.f32 %v3661, %v3699
  %v3713 = vmul.f32 %v3662, %v3699
  %v3714 = vmul.f32 %v3663, %v3699
  %v3715 = vmul.f32 %v3664, %v3699
  %v3716 = vmul.f32 %v3665, %v3699
  %v3717 = vmul.f32 %v3666, %v3699
  %v3718 = vmul.f32 %v3667, %v3699
  %v3719 = vmul.f32 %v3668, %v3699
  %v3720 = vmul.f32 %v3669, %v3699
  %v3721 = vmul.f32 %v3670, %v3699
  %v3722 = vmul.f32 %v3671, %v3699
  %v3723 = vmul.f32 %v3672, %v3699
  %v3724 = vmul.f32 %v3673, %v3699
  %v3725 = vmul.f32 %v3674, %v3699
  %v3726 = vmul.f32 %v3675, %v3699
  %v3727 = vmul.f32 %v3676, %v3699
  %v3728 = vmul.f32 %v3677, %v3699
  %v3729 = vmul.f32 %v3678, %v3699
  %v3730 = vmul.f32 %v3679, %v3699
  %v3731 = vmul.f32 %v3680, %v3699
  %v3732 = vmul.f32 %v3681, %v3699
  %v3733 = vmul.f32 %v3682, %v3699
  %v3734 = vmul.f32 %v3683, %v3699
  %v3735 = vmul.f32 %v3684, %v3699
  %v3736 = vmul.f32 %v3685, %v3699
  %v3737 = vmul.f32 %v3686, %v3699
  %v3738 = vmul.f32 %v3687, %v3699
  %v3739 = vmul.f32 %v3688, %v3699
  %v3740 = vmul.f32 %v3689, %v3699
  %v3741 = vmul.f32 %v3690, %v3699
  %v3742 = vmul.f32 %v3691, %v3699
  %v3743 = vmul.f32 %v3692, %v3699
  %v3744 = vmul.f32 %v3693, %v3699
  %v3745 = vmul.f32 %v3694, %v3699
  %v3746 = vmul.f32 %v3695, %v3699
  %v3747 = vmul.f32 %v3696, %v3699
  %v3748 = vmul.f32 %v3697, %v3699
  %v3750 = vlaneseq
  %v3751 = vshrl.u32 %v3750, 7
  %v3752 = vsub.s32 0, %v3751
  %v3753 = vrot.slane %v3388, %v3752
  %v3755 = vmul.f32 %v3700, %v3753
  %v3756 = vmul.f32 %v3701, %v3753
  %v3757 = vmul.f32 %v3702, %v3753
  %v3758 = vmul.f32 %v3703, %v3753
  %v3759 = vmul.f32 %v3704, %v3753
  %v3760 = vmul.f32 %v3705, %v3753
  %v3761 = vmul.f32 %v3706, %v3753
  %v3762 = vmul.f32 %v3707, %v3753
  %v3763 = vmul.f32 %v3708, %v3753
  %v3764 = vmul.f32 %v3709, %v3753
  %v3765 = vmul.f32 %v3710, %v3753
  %v3766 = vmul.f32 %v3711, %v3753
  %v3767 = vmul.f32 %v3712, %v3753
  %v3768 = vmul.f32 %v3713, %v3753
  %v3769 = vmul.f32 %v3714, %v3753
  %v3770 = vmul.f32 %v3715, %v3753
  %v3771 = vmul.f32 %v3716, %v3753
  %v3772 = vmul.f32 %v3717, %v3753
  %v3773 = vmul.f32 %v3718, %v3753
  %v3774 = vmul.f32 %v3719, %v3753
  %v3775 = vmul.f32 %v3720, %v3753
  %v3776 = vmul.f32 %v3721, %v3753
  %v3777 = vmul.f32 %v3722, %v3753
  %v3778 = vmul.f32 %v3723, %v3753
  %v3779 = vmul.f32 %v3724, %v3753
  %v3780 = vmul.f32 %v3725, %v3753
  %v3781 = vmul.f32 %v3726, %v3753
  %v3782 = vmul.f32 %v3727, %v3753
  %v3783 = vmul.f32 %v3728, %v3753
  %v3784 = vmul.f32 %v3729, %v3753
  %v3785 = vmul.f32 %v3730, %v3753
  %v3786 = vmul.f32 %v3731, %v3753
  %v3787 = vmul.f32 %v3732, %v3753
  %v3788 = vmul.f32 %v3733, %v3753
  %v3789 = vmul.f32 %v3734, %v3753
  %v3790 = vmul.f32 %v3735, %v3753
  %v3791 = vmul.f32 %v3736, %v3753
  %v3792 = vmul.f32 %v3737, %v3753
  %v3793 = vmul.f32 %v3738, %v3753
  %v3794 = vmul.f32 %v3739, %v3753
  %v3795 = vmul.f32 %v3740, %v3753
  %v3796 = vmul.f32 %v3741, %v3753
  %v3797 = vmul.f32 %v3742, %v3753
  %v3798 = vmul.f32 %v3743, %v3753
  %v3799 = vmul.f32 %v3744, %v3753
  %v3800 = vmul.f32 %v3745, %v3753
  %v3801 = vmul.f32 %v3746, %v3753
  %v3802 = vmul.f32 %v3747, %v3753
  %v3803 = vmul.f32 %v3748, %v3753
  %v3805 = vlaneseq
  %v3806 = vshrl.u32 %v3805, 7
  %v3807 = vsub.s32 0, %v3806
  %v3808 = vrot.slane %v3389, %v3807
  %v3810 = vadd.f32 %v3755, %v3808
  %v3811 = vadd.f32 %v3756, %v3808
  %v3812 = vadd.f32 %v3757, %v3808
  %v3813 = vadd.f32 %v3758, %v3808
  %v3814 = vadd.f32 %v3759, %v3808
  %v3815 = vadd.f32 %v3760, %v3808
  %v3816 = vadd.f32 %v3761, %v3808
  %v3817 = vadd.f32 %v3762, %v3808
  %v3818 = vadd.f32 %v3763, %v3808
  %v3819 = vadd.f32 %v3764, %v3808
  %v3820 = vadd.f32 %v3765, %v3808
  %v3821 = vadd.f32 %v3766, %v3808
  %v3822 = vadd.f32 %v3767, %v3808
  %v3823 = vadd.f32 %v3768, %v3808
  %v3824 = vadd.f32 %v3769, %v3808
  %v3825 = vadd.f32 %v3770, %v3808
  %v3826 = vadd.f32 %v3771, %v3808
  %v3827 = vadd.f32 %v3772, %v3808
  %v3828 = vadd.f32 %v3773, %v3808
  %v3829 = vadd.f32 %v3774, %v3808
  %v3830 = vadd.f32 %v3775, %v3808
  %v3831 = vadd.f32 %v3776, %v3808
  %v3832 = vadd.f32 %v3777, %v3808
  %v3833 = vadd.f32 %v3778, %v3808
  %v3834 = vadd.f32 %v3779, %v3808
  %v3835 = vadd.f32 %v3780, %v3808
  %v3836 = vadd.f32 %v3781, %v3808
  %v3837 = vadd.f32 %v3782, %v3808
  %v3838 = vadd.f32 %v3783, %v3808
  %v3839 = vadd.f32 %v3784, %v3808
  %v3840 = vadd.f32 %v3785, %v3808
  %v3841 = vadd.f32 %v3786, %v3808
  %v3842 = vadd.f32 %v3787, %v3808
  %v3843 = vadd.f32 %v3788, %v3808
  %v3844 = vadd.f32 %v3789, %v3808
  %v3845 = vadd.f32 %v3790, %v3808
  %v3846 = vadd.f32 %v3791, %v3808
  %v3847 = vadd.f32 %v3792, %v3808
  %v3848 = vadd.f32 %v3793, %v3808
  %v3849 = vadd.f32 %v3794, %v3808
  %v3850 = vadd.f32 %v3795, %v3808
  %v3851 = vadd.f32 %v3796, %v3808
  %v3852 = vadd.f32 %v3797, %v3808
  %v3853 = vadd.f32 %v3798, %v3808
  %v3854 = vadd.f32 %v3799, %v3808
  %v3855 = vadd.f32 %v3800, %v3808
  %v3856 = vadd.f32 %v3801, %v3808
  %v3857 = vadd.f32 %v3802, %v3808
  %v3858 = vadd.f32 %v3803, %v3808
  %v3859 = vmax.f32 %v3810, 0.0
  %v3860 = vmax.f32 %v3811, 0.0
  %v3861 = vmax.f32 %v3812, 0.0
  %v3862 = vmax.f32 %v3813, 0.0
  %v3863 = vmax.f32 %v3814, 0.0
  %v3864 = vmax.f32 %v3815, 0.0
  %v3865 = vmax.f32 %v3816, 0.0
  %v3866 = vmax.f32 %v3817, 0.0
  %v3867 = vmax.f32 %v3818, 0.0
  %v3868 = vmax.f32 %v3819, 0.0
  %v3869 = vmax.f32 %v3820, 0.0
  %v3870 = vmax.f32 %v3821, 0.0
  %v3871 = vmax.f32 %v3822, 0.0
  %v3872 = vmax.f32 %v3823, 0.0
  %v3873 = vmax.f32 %v3824, 0.0
  %v3874 = vmax.f32 %v3825, 0.0
  %v3875 = vmax.f32 %v3826, 0.0
  %v3876 = vmax.f32 %v3827, 0.0
  %v3877 = vmax.f32 %v3828, 0.0
  %v3878 = vmax.f32 %v3829, 0.0
  %v3879 = vmax.f32 %v3830, 0.0
  %v3880 = vmax.f32 %v3831, 0.0
  %v3881 = vmax.f32 %v3832, 0.0
  %v3882 = vmax.f32 %v3833, 0.0
  %v3883 = vmax.f32 %v3834, 0.0
  %v3884 = vmax.f32 %v3835, 0.0
  %v3885 = vmax.f32 %v3836, 0.0
  %v3886 = vmax.f32 %v3837, 0.0
  %v3887 = vmax.f32 %v3838, 0.0
  %v3888 = vmax.f32 %v3839, 0.0
  %v3889 = vmax.f32 %v3840, 0.0
  %v3890 = vmax.f32 %v3841, 0.0
  %v3891 = vmax.f32 %v3842, 0.0
  %v3892 = vmax.f32 %v3843, 0.0
  %v3893 = vmax.f32 %v3844, 0.0
  %v3894 = vmax.f32 %v3845, 0.0
  %v3895 = vmax.f32 %v3846, 0.0
  %v3896 = vmax.f32 %v3847, 0.0
  %v3897 = vmax.f32 %v3848, 0.0
  %v3898 = vmax.f32 %v3849, 0.0
  %v3899 = vmax.f32 %v3850, 0.0
  %v3900 = vmax.f32 %v3851, 0.0
  %v3901 = vmax.f32 %v3852, 0.0
  %v3902 = vmax.f32 %v3853, 0.0
  %v3903 = vmax.f32 %v3854, 0.0
  %v3904 = vmax.f32 %v3855, 0.0
  %v3905 = vmax.f32 %v3856, 0.0
  %v3906 = vmax.f32 %v3857, 0.0
  %v3907 = vmax.f32 %v3858, 0.0
  %3908 = vst.msk [vmem:[#allocation3] sm:$0xff] %vm119, %v3859
  %3909 = vst.msk [vmem:[#allocation3 + $0x8] sm:$0xff] %vm119, %v3860
  %3910 = vst.msk [vmem:[#allocation3 + $0x10] sm:$0xff] %vm119, %v3861
  %3911 = vst.msk [vmem:[#allocation3 + $0x18] sm:$0xff] %vm119, %v3862
  %3912 = vst.msk [vmem:[#allocation3 + $0x20] sm:$0xff] %vm119, %v3863
  %3913 = vst.msk [vmem:[#allocation3 + $0x28] sm:$0xff] %vm119, %v3864
  %3914 = vst.msk [vmem:[#allocation3 + $0x30] sm:$0xff] %vm119, %v3865
  %3915 = vst.msk [vmem:[#allocation3 + $0x38] sm:$0xff] %vm119, %v3866
  %3916 = vst.msk [vmem:[#allocation3 + $0x40] sm:$0xff] %vm119, %v3867
  %3917 = vst.msk [vmem:[#allocation3 + $0x48] sm:$0xff] %vm119, %v3868
  %3918 = vst.msk [vmem:[#allocation3 + $0x50] sm:$0xff] %vm119, %v3869
  %3919 = vst.msk [vmem:[#allocation3 + $0x58] sm:$0xff] %vm119, %v3870
  %3920 = vst.msk [vmem:[#allocation3 + $0x60] sm:$0xff] %vm119, %v3871
  %3921 = vst.msk [vmem:[#allocation3 + $0x68] sm:$0xff] %vm119, %v3872
  %3922 = vst.msk [vmem:[#allocation3 + $0x70] sm:$0xff] %vm119, %v3873
  %3923 = vst.msk [vmem:[#allocation3 + $0x78] sm:$0xff] %vm119, %v3874
  %3924 = vst.msk [vmem:[#allocation3 + $0x80] sm:$0xff] %vm119, %v3875
  %3925 = vst.msk [vmem:[#allocation3 + $0x88] sm:$0xff] %vm119, %v3876
  %3926 = vst.msk [vmem:[#allocation3 + $0x90] sm:$0xff] %vm119, %v3877
  %3927 = vst.msk [vmem:[#allocation3 + $0x98] sm:$0xff] %vm119, %v3878
  %3928 = vst.msk [vmem:[#allocation3 + $0xa0] sm:$0xff] %vm119, %v3879
  %3929 = vst.msk [vmem:[#allocation3 + $0xa8] sm:$0xff] %vm119, %v3880
  %3930 = vst.msk [vmem:[#allocation3 + $0xb0] sm:$0xff] %vm119, %v3881
  %3931 = vst.msk [vmem:[#allocation3 + $0xb8] sm:$0xff] %vm119, %v3882
  %3932 = vst.msk [vmem:[#allocation3 + $0xc0] sm:$0xff] %vm119, %v3883
  %3933 = vst.msk [vmem:[#allocation3 + $0xc8] sm:$0xff] %vm119, %v3884
  %3934 = vst.msk [vmem:[#allocation3 + $0xd0] sm:$0xff] %vm119, %v3885
  %3935 = vst.msk [vmem:[#allocation3 + $0xd8] sm:$0xff] %vm119, %v3886
  %3936 = vst.msk [vmem:[#allocation3 + $0xe0] sm:$0xff] %vm119, %v3887
  %3937 = vst.msk [vmem:[#allocation3 + $0xe8] sm:$0xff] %vm119, %v3888
  %3938 = vst.msk [vmem:[#allocation3 + $0xf0] sm:$0xff] %vm119, %v3889
  %3939 = vst.msk [vmem:[#allocation3 + $0xf8] sm:$0xff] %vm119, %v3890
  %3940 = vst.msk [vmem:[#allocation3 + $0x100] sm:$0xff] %vm119, %v3891
  %3941 = vst.msk [vmem:[#allocation3 + $0x108] sm:$0xff] %vm119, %v3892
  %3942 = vst.msk [vmem:[#allocation3 + $0x110] sm:$0xff] %vm119, %v3893
  %3943 = vst.msk [vmem:[#allocation3 + $0x118] sm:$0xff] %vm119, %v3894
  %3944 = vst.msk [vmem:[#allocation3 + $0x120] sm:$0xff] %vm119, %v3895
  %3945 = vst.msk [vmem:[#allocation3 + $0x128] sm:$0xff] %vm119, %v3896
  %3946 = vst.msk [vmem:[#allocation3 + $0x130] sm:$0xff] %vm119, %v3897
  %3947 = vst.msk [vmem:[#allocation3 + $0x138] sm:$0xff] %vm119, %v3898
  %3948 = vst.msk [vmem:[#allocation3 + $0x140] sm:$0xff] %vm119, %v3899
  %3949 = vst.msk [vmem:[#allocation3 + $0x148] sm:$0xff] %vm119, %v3900
  %3950 = vst.msk [vmem:[#allocation3 + $0x150] sm:$0xff] %vm119, %v3901
  %3951 = vst.msk [vmem:[#allocation3 + $0x158] sm:$0xff] %vm119, %v3902
  %3952 = vst.msk [vmem:[#allocation3 + $0x160] sm:$0xff] %vm119, %v3903
  %3953 = vst.msk [vmem:[#allocation3 + $0x168] sm:$0xff] %vm119, %v3904
  %3954 = vst.msk [vmem:[#allocation3 + $0x170] sm:$0xff] %vm119, %v3905
  %3955 = vst.msk [vmem:[#allocation3 + $0x178] sm:$0xff] %vm119, %v3906
  %3956 = vst.msk [vmem:[#allocation3 + $0x180] sm:$0xff] %vm119, %v3907
  %v3957 = vld [vmem:[#allocation3] sm:$0xff]
  %v3958 = vld [vmem:[#allocation3 + $0x8] sm:$0xf]
  %v3959 = vld [vmem:[#allocation3 + $0x1] sm:$0xff]
  %v3960 = vld [vmem:[#allocation3 + $0x9] sm:$0xf]
  %v3961 = vld [vmem:[#allocation3 + $0x2] sm:$0xff]
  %v3962 = vld [vmem:[#allocation3 + $0xa] sm:$0xf]
  %v3963 = vld [vmem:[#allocation3 + $0xe] sm:$0xff]
  %v3964 = vld [vmem:[#allocation3 + $0x16] sm:$0xf]
  %v3965 = vld [vmem:[#allocation3 + $0xf] sm:$0xff]
  %v3966 = vld [vmem:[#allocation3 + $0x17] sm:$0xf]
  %v3967 = vld [vmem:[#allocation3 + $0x10] sm:$0xff]
  %v3968 = vld [vmem:[#allocation3 + $0x18] sm:$0xf]
  %v3969 = vld [vmem:[#allocation3 + $0x1c] sm:$0xff]
  %v3970 = vld [vmem:[#allocation3 + $0x24] sm:$0xf]
  %v3971 = vld [vmem:[#allocation3 + $0x1d] sm:$0xff]
  %v3972 = vld [vmem:[#allocation3 + $0x25] sm:$0xf]
  %v3973 = vld [vmem:[#allocation3 + $0x1e] sm:$0xff]
  %v3974 = vld [vmem:[#allocation3 + $0x26] sm:$0xf]
  %3977 = vrot.lane.b32.xlu0 %v3959, 8
  %v3978 = vpop.permute.xlu0 %3977
  %3979 = vrot.lane.b32.xlu0 %v3960, 8
  %v3980 = vpop.permute.xlu0 %3979
  %3985 = vrot.lane.b32.xlu0 %v3961, 16
  %v3986 = vpop.permute.xlu0 %3985
  %3987 = vrot.lane.b32.xlu0 %v3962, 16
  %v3988 = vpop.permute.xlu0 %3987
  %3993 = vrot.lane.b32.xlu0 %v3963, 24
  %v3994 = vpop.permute.xlu0 %3993
  %3995 = vrot.lane.b32.xlu0 %v3964, 24
  %v3996 = vpop.permute.xlu0 %3995
  %4001 = vrot.lane.b32.xlu0 %v3965, 32
  %v4002 = vpop.permute.xlu0 %4001
  %4003 = vrot.lane.b32.xlu0 %v3966, 32
  %v4004 = vpop.permute.xlu0 %4003
  %4009 = vrot.lane.b32.xlu0 %v3967, 40
  %v4010 = vpop.permute.xlu0 %4009
  %4011 = vrot.lane.b32.xlu0 %v3968, 40
  %v4012 = vpop.permute.xlu0 %4011
  %4017 = vrot.lane.b32.xlu0 %v3969, 48
  %v4018 = vpop.permute.xlu0 %4017
  %4019 = vrot.lane.b32.xlu0 %v3970, 48
  %v4020 = vpop.permute.xlu0 %4019
  %4025 = vrot.lane.b32.xlu0 %v3971, 56
  %v4026 = vpop.permute.xlu0 %4025
  %4027 = vrot.lane.b32.xlu0 %v3972, 56
  %v4028 = vpop.permute.xlu0 %4027
  %4033 = vrot.lane.b32.xlu0 %v3973, 64
  %v4034 = vpop.permute.xlu0 %4033
  %4035 = vrot.lane.b32.xlu0 %v3974, 64
  %v4036 = vpop.permute.xlu0 %4035
  %v4039 = vsel %vm119, %v3957, %v3978
  %v4040 = vsel %vm119, %v3958, %v3980
  %v4041 = vsel %vm125, %v4039, %v3986
  %v4042 = vsel %vm125, %v4040, %v3988
  %v4043 = vsel %vm131, %v4041, %v3994
  %v4044 = vsel %vm131, %v4042, %v3996
  %v4045 = vsel %vm137, %v4043, %v4002
  %v4046 = vsel %vm137, %v4044, %v4004
  %vm4047 = vcmask 326656
  %v4048 = vsel %vm4047, %v4045, %v4010
  %v4049 = vsel %vm4047, %v4046, %v4012
  %vm4050 = vcmask 392192
  %v4051 = vsel %vm4050, %v4048, %v4018
  %v4052 = vsel %vm4050, %v4049, %v4020
  %vm4053 = vcmask 457728
  %v4054 = vsel %vm4053, %v4051, %v4026
  %v4055 = vsel %vm4053, %v4052, %v4028
  %vm4056 = vcmask 523264
  %v4057 = vsel %vm4056, %v4054, %v4034
  %v4058 = vsel %vm4056, %v4055, %v4036
  %vm4059 = vcmask 588800
  %4060 = vst.msk [vmem:[#allocation4] sm:$0xff] %vm4059, %v4057
  %vm4061 = vcmask 584704
  %4062 = vst.msk [vmem:[#allocation4 + $0x8] sm:$0xf] %vm4061, %v4058
  %v4063 = vld [vmem:[#allocation3 + $0xe] sm:$0xff]
  %v4064 = vld [vmem:[#allocation3 + $0x16] sm:$0xf]
  %v4065 = vld [vmem:[#allocation3 + $0xf] sm:$0xff]
  %v4066 = vld [vmem:[#allocation3 + $0x17] sm:$0xf]
  %v4067 = vld [vmem:[#allocation3 + $0x10] sm:$0xff]
  %v4068 = vld [vmem:[#allocation3 + $0x18] sm:$0xf]
  %v4069 = vld [vmem:[#allocation3 + $0x1c] sm:$0xff]
  %v4070 = vld [vmem:[#allocation3 + $0x24] sm:$0xf]
  %v4071 = vld [vmem:[#allocation3 + $0x1d] sm:$0xff]
  %v4072 = vld [vmem:[#allocation3 + $0x25] sm:$0xf]
  %v4073 = vld [vmem:[#allocation3 + $0x1e] sm:$0xff]
  %v4074 = vld [vmem:[#allocation3 + $0x26] sm:$0xf]
  %v4075 = vld [vmem:[#allocation3 + $0x2a] sm:$0xff]
  %v4076 = vld [vmem:[#allocation3 + $0x32] sm:$0xf]
  %v4077 = vld [vmem:[#allocation3 + $0x2b] sm:$0xff]
  %v4078 = vld [vmem:[#allocation3 + $0x33] sm:$0xf]
  %v4079 = vld [vmem:[#allocation3 + $0x2c] sm:$0xff]
  %v4080 = vld [vmem:[#allocation3 + $0x34] sm:$0xf]
  %4083 = vrot.lane.b32.xlu0 %v4065, 8
  %v4084 = vpop.permute.xlu0 %4083
  %4085 = vrot.lane.b32.xlu0 %v4066, 8
  %v4086 = vpop.permute.xlu0 %4085
  %4091 = vrot.lane.b32.xlu0 %v4067, 16
  %v4092 = vpop.permute.xlu0 %4091
  %4093 = vrot.lane.b32.xlu0 %v4068, 16
  %v4094 = vpop.permute.xlu0 %4093
  %4099 = vrot.lane.b32.xlu0 %v4069, 24
  %v4100 = vpop.permute.xlu0 %4099
  %4101 = vrot.lane.b32.xlu0 %v4070, 24
  %v4102 = vpop.permute.xlu0 %4101
  %4107 = vrot.lane.b32.xlu0 %v4071, 32
  %v4108 = vpop.permute.xlu0 %4107
  %4109 = vrot.lane.b32.xlu0 %v4072, 32
  %v4110 = vpop.permute.xlu0 %4109
  %4115 = vrot.lane.b32.xlu0 %v4073, 40
  %v4116 = vpop.permute.xlu0 %4115
  %4117 = vrot.lane.b32.xlu0 %v4074, 40
  %v4118 = vpop.permute.xlu0 %4117
  %4123 = vrot.lane.b32.xlu0 %v4075, 48
  %v4124 = vpop.permute.xlu0 %4123
  %4125 = vrot.lane.b32.xlu0 %v4076, 48
  %v4126 = vpop.permute.xlu0 %4125
  %4131 = vrot.lane.b32.xlu0 %v4077, 56
  %v4132 = vpop.permute.xlu0 %4131
  %4133 = vrot.lane.b32.xlu0 %v4078, 56
  %v4134 = vpop.permute.xlu0 %4133
  %4139 = vrot.lane.b32.xlu0 %v4079, 64
  %v4140 = vpop.permute.xlu0 %4139
  %4141 = vrot.lane.b32.xlu0 %v4080, 64
  %v4142 = vpop.permute.xlu0 %4141
  %v4145 = vsel %vm119, %v4063, %v4084
  %v4146 = vsel %vm119, %v4064, %v4086
  %v4147 = vsel %vm125, %v4145, %v4092
  %v4148 = vsel %vm125, %v4146, %v4094
  %v4149 = vsel %vm131, %v4147, %v4100
  %v4150 = vsel %vm131, %v4148, %v4102
  %v4151 = vsel %vm137, %v4149, %v4108
  %v4152 = vsel %vm137, %v4150, %v4110
  %v4153 = vsel %vm4047, %v4151, %v4116
  %v4154 = vsel %vm4047, %v4152, %v4118
  %v4155 = vsel %vm4050, %v4153, %v4124
  %v4156 = vsel %vm4050, %v4154, %v4126
  %v4157 = vsel %vm4053, %v4155, %v4132
  %v4158 = vsel %vm4053, %v4156, %v4134
  %v4159 = vsel %vm4056, %v4157, %v4140
  %v4160 = vsel %vm4056, %v4158, %v4142
  %4161 = vst.msk [vmem:[#allocation4 + $0xc] sm:$0xff] %vm4059, %v4159
  %4162 = vst.msk [vmem:[#allocation4 + $0x14] sm:$0xf] %vm4061, %v4160
  %v4163 = vld [vmem:[#allocation3 + $0x1c] sm:$0xff]
  %v4164 = vld [vmem:[#allocation3 + $0x24] sm:$0xf]
  %v4165 = vld [vmem:[#allocation3 + $0x1d] sm:$0xff]
  %v4166 = vld [vmem:[#allocation3 + $0x25] sm:$0xf]
  %v4167 = vld [vmem:[#allocation3 + $0x1e] sm:$0xff]
  %v4168 = vld [vmem:[#allocation3 + $0x26] sm:$0xf]
  %v4169 = vld [vmem:[#allocation3 + $0x2a] sm:$0xff]
  %v4170 = vld [vmem:[#allocation3 + $0x32] sm:$0xf]
  %v4171 = vld [vmem:[#allocation3 + $0x2b] sm:$0xff]
  %v4172 = vld [vmem:[#allocation3 + $0x33] sm:$0xf]
  %v4173 = vld [vmem:[#allocation3 + $0x2c] sm:$0xff]
  %v4174 = vld [vmem:[#allocation3 + $0x34] sm:$0xf]
  %v4175 = vld [vmem:[#allocation3 + $0x38] sm:$0xff]
  %v4176 = vld [vmem:[#allocation3 + $0x40] sm:$0xf]
  %v4177 = vld [vmem:[#allocation3 + $0x39] sm:$0xff]
  %v4178 = vld [vmem:[#allocation3 + $0x41] sm:$0xf]
  %v4179 = vld [vmem:[#allocation3 + $0x3a] sm:$0xff]
  %v4180 = vld [vmem:[#allocation3 + $0x42] sm:$0xf]
  %4183 = vrot.lane.b32.xlu0 %v4165, 8
  %v4184 = vpop.permute.xlu0 %4183
  %4185 = vrot.lane.b32.xlu0 %v4166, 8
  %v4186 = vpop.permute.xlu0 %4185
  %4191 = vrot.lane.b32.xlu0 %v4167, 16
  %v4192 = vpop.permute.xlu0 %4191
  %4193 = vrot.lane.b32.xlu0 %v4168, 16
  %v4194 = vpop.permute.xlu0 %4193
  %4199 = vrot.lane.b32.xlu0 %v4169, 24
  %v4200 = vpop.permute.xlu0 %4199
  %4201 = vrot.lane.b32.xlu0 %v4170, 24
  %v4202 = vpop.permute.xlu0 %4201
  %4207 = vrot.lane.b32.xlu0 %v4171, 32
  %v4208 = vpop.permute.xlu0 %4207
  %4209 = vrot.lane.b32.xlu0 %v4172, 32
  %v4210 = vpop.permute.xlu0 %4209
  %4215 = vrot.lane.b32.xlu0 %v4173, 40
  %v4216 = vpop.permute.xlu0 %4215
  %4217 = vrot.lane.b32.xlu0 %v4174, 40
  %v4218 = vpop.permute.xlu0 %4217
  %4223 = vrot.lane.b32.xlu0 %v4175, 48
  %v4224 = vpop.permute.xlu0 %4223
  %4225 = vrot.lane.b32.xlu0 %v4176, 48
  %v4226 = vpop.permute.xlu0 %4225
  %4231 = vrot.lane.b32.xlu0 %v4177, 56
  %v4232 = vpop.permute.xlu0 %4231
  %4233 = vrot.lane.b32.xlu0 %v4178, 56
  %v4234 = vpop.permute.xlu0 %4233
  %4239 = vrot.lane.b32.xlu0 %v4179, 64
  %v4240 = vpop.permute.xlu0 %4239
  %4241 = vrot.lane.b32.xlu0 %v4180, 64
  %v4242 = vpop.permute.xlu0 %4241
  %v4245 = vsel %vm119, %v4163, %v4184
  %v4246 = vsel %vm119, %v4164, %v4186
  %v4247 = vsel %vm125, %v4245, %v4192
  %v4248 = vsel %vm125, %v4246, %v4194
  %v4249 = vsel %vm131, %v4247, %v4200
  %v4250 = vsel %vm131, %v4248, %v4202
  %v4251 = vsel %vm137, %v4249, %v4208
  %v4252 = vsel %vm137, %v4250, %v4210
  %v4253 = vsel %vm4047, %v4251, %v4216
  %v4254 = vsel %vm4047, %v4252, %v4218
  %v4255 = vsel %vm4050, %v4253, %v4224
  %v4256 = vsel %vm4050, %v4254, %v4226
  %v4257 = vsel %vm4053, %v4255, %v4232
  %v4258 = vsel %vm4053, %v4256, %v4234
  %v4259 = vsel %vm4056, %v4257, %v4240
  %v4260 = vsel %vm4056, %v4258, %v4242
  %4261 = vst.msk [vmem:[#allocation4 + $0x18] sm:$0xff] %vm4059, %v4259
  %4262 = vst.msk [vmem:[#allocation4 + $0x20] sm:$0xf] %vm4061, %v4260
  %v4263 = vld [vmem:[#allocation3 + $0x2a] sm:$0xff]
  %v4264 = vld [vmem:[#allocation3 + $0x32] sm:$0xf]
  %v4265 = vld [vmem:[#allocation3 + $0x2b] sm:$0xff]
  %v4266 = vld [vmem:[#allocation3 + $0x33] sm:$0xf]
  %v4267 = vld [vmem:[#allocation3 + $0x2c] sm:$0xff]
  %v4268 = vld [vmem:[#allocation3 + $0x34] sm:$0xf]
  %v4269 = vld [vmem:[#allocation3 + $0x38] sm:$0xff]
  %v4270 = vld [vmem:[#allocation3 + $0x40] sm:$0xf]
  %v4271 = vld [vmem:[#allocation3 + $0x39] sm:$0xff]
  %v4272 = vld [vmem:[#allocation3 + $0x41] sm:$0xf]
  %v4273 = vld [vmem:[#allocation3 + $0x3a] sm:$0xff]
  %v4274 = vld [vmem:[#allocation3 + $0x42] sm:$0xf]
  %v4275 = vld [vmem:[#allocation3 + $0x46] sm:$0xff]
  %v4276 = vld [vmem:[#allocation3 + $0x4e] sm:$0xf]
  %v4277 = vld [vmem:[#allocation3 + $0x47] sm:$0xff]
  %v4278 = vld [vmem:[#allocation3 + $0x4f] sm:$0xf]
  %v4279 = vld [vmem:[#allocation3 + $0x48] sm:$0xff]
  %v4280 = vld [vmem:[#allocation3 + $0x50] sm:$0xf]
  %4283 = vrot.lane.b32.xlu0 %v4265, 8
  %v4284 = vpop.permute.xlu0 %4283
  %4285 = vrot.lane.b32.xlu0 %v4266, 8
  %v4286 = vpop.permute.xlu0 %4285
  %4291 = vrot.lane.b32.xlu0 %v4267, 16
  %v4292 = vpop.permute.xlu0 %4291
  %4293 = vrot.lane.b32.xlu0 %v4268, 16
  %v4294 = vpop.permute.xlu0 %4293
  %4299 = vrot.lane.b32.xlu0 %v4269, 24
  %v4300 = vpop.permute.xlu0 %4299
  %4301 = vrot.lane.b32.xlu0 %v4270, 24
  %v4302 = vpop.permute.xlu0 %4301
  %4307 = vrot.lane.b32.xlu0 %v4271, 32
  %v4308 = vpop.permute.xlu0 %4307
  %4309 = vrot.lane.b32.xlu0 %v4272, 32
  %v4310 = vpop.permute.xlu0 %4309
  %4315 = vrot.lane.b32.xlu0 %v4273, 40
  %v4316 = vpop.permute.xlu0 %4315
  %4317 = vrot.lane.b32.xlu0 %v4274, 40
  %v4318 = vpop.permute.xlu0 %4317
  %4323 = vrot.lane.b32.xlu0 %v4275, 48
  %v4324 = vpop.permute.xlu0 %4323
  %4325 = vrot.lane.b32.xlu0 %v4276, 48
  %v4326 = vpop.permute.xlu0 %4325
  %4331 = vrot.lane.b32.xlu0 %v4277, 56
  %v4332 = vpop.permute.xlu0 %4331
  %4333 = vrot.lane.b32.xlu0 %v4278, 56
  %v4334 = vpop.permute.xlu0 %4333
  %4339 = vrot.lane.b32.xlu0 %v4279, 64
  %v4340 = vpop.permute.xlu0 %4339
  %4341 = vrot.lane.b32.xlu0 %v4280, 64
  %v4342 = vpop.permute.xlu0 %4341
  %v4345 = vsel %vm119, %v4263, %v4284
  %v4346 = vsel %vm119, %v4264, %v4286
  %v4347 = vsel %vm125, %v4345, %v4292
  %v4348 = vsel %vm125, %v4346, %v4294
  %v4349 = vsel %vm131, %v4347, %v4300
  %v4350 = vsel %vm131, %v4348, %v4302
  %v4351 = vsel %vm137, %v4349, %v4308
  %v4352 = vsel %vm137, %v4350, %v4310
  %v4353 = vsel %vm4047, %v4351, %v4316
  %v4354 = vsel %vm4047, %v4352, %v4318
  %v4355 = vsel %vm4050, %v4353, %v4324
  %v4356 = vsel %vm4050, %v4354, %v4326
  %v4357 = vsel %vm4053, %v4355, %v4332
  %v4358 = vsel %vm4053, %v4356, %v4334
  %v4359 = vsel %vm4056, %v4357, %v4340
  %v4360 = vsel %vm4056, %v4358, %v4342
  %4361 = vst.msk [vmem:[#allocation4 + $0x24] sm:$0xff] %vm4059, %v4359
  %4362 = vst.msk [vmem:[#allocation4 + $0x2c] sm:$0xf] %vm4061, %v4360
  %v4363 = vld [vmem:[#allocation3 + $0x38] sm:$0xff]
  %v4364 = vld [vmem:[#allocation3 + $0x40] sm:$0xf]
  %v4365 = vld [vmem:[#allocation3 + $0x39] sm:$0xff]
  %v4366 = vld [vmem:[#allocation3 + $0x41] sm:$0xf]
  %v4367 = vld [vmem:[#allocation3 + $0x3a] sm:$0xff]
  %v4368 = vld [vmem:[#allocation3 + $0x42] sm:$0xf]
  %v4369 = vld [vmem:[#allocation3 + $0x46] sm:$0xff]
  %v4370 = vld [vmem:[#allocation3 + $0x4e] sm:$0xf]
  %v4371 = vld [vmem:[#allocation3 + $0x47] sm:$0xff]
  %v4372 = vld [vmem:[#allocation3 + $0x4f] sm:$0xf]
  %v4373 = vld [vmem:[#allocation3 + $0x48] sm:$0xff]
  %v4374 = vld [vmem:[#allocation3 + $0x50] sm:$0xf]
  %v4375 = vld [vmem:[#allocation3 + $0x54] sm:$0xff]
  %v4376 = vld [vmem:[#allocation3 + $0x5c] sm:$0xf]
  %v4377 = vld [vmem:[#allocation3 + $0x55] sm:$0xff]
  %v4378 = vld [vmem:[#allocation3 + $0x5d] sm:$0xf]
  %v4379 = vld [vmem:[#allocation3 + $0x56] sm:$0xff]
  %v4380 = vld [vmem:[#allocation3 + $0x5e] sm:$0xf]
  %4383 = vrot.lane.b32.xlu0 %v4365, 8
  %v4384 = vpop.permute.xlu0 %4383
  %4385 = vrot.lane.b32.xlu0 %v4366, 8
  %v4386 = vpop.permute.xlu0 %4385
  %4391 = vrot.lane.b32.xlu0 %v4367, 16
  %v4392 = vpop.permute.xlu0 %4391
  %4393 = vrot.lane.b32.xlu0 %v4368, 16
  %v4394 = vpop.permute.xlu0 %4393
  %4399 = vrot.lane.b32.xlu0 %v4369, 24
  %v4400 = vpop.permute.xlu0 %4399
  %4401 = vrot.lane.b32.xlu0 %v4370, 24
  %v4402 = vpop.permute.xlu0 %4401
  %4407 = vrot.lane.b32.xlu0 %v4371, 32
  %v4408 = vpop.permute.xlu0 %4407
  %4409 = vrot.lane.b32.xlu0 %v4372, 32
  %v4410 = vpop.permute.xlu0 %4409
  %4415 = vrot.lane.b32.xlu0 %v4373, 40
  %v4416 = vpop.permute.xlu0 %4415
  %4417 = vrot.lane.b32.xlu0 %v4374, 40
  %v4418 = vpop.permute.xlu0 %4417
  %4423 = vrot.lane.b32.xlu0 %v4375, 48
  %v4424 = vpop.permute.xlu0 %4423
  %4425 = vrot.lane.b32.xlu0 %v4376, 48
  %v4426 = vpop.permute.xlu0 %4425
  %4431 = vrot.lane.b32.xlu0 %v4377, 56
  %v4432 = vpop.permute.xlu0 %4431
  %4433 = vrot.lane.b32.xlu0 %v4378, 56
  %v4434 = vpop.permute.xlu0 %4433
  %4439 = vrot.lane.b32.xlu0 %v4379, 64
  %v4440 = vpop.permute.xlu0 %4439
  %4441 = vrot.lane.b32.xlu0 %v4380, 64
  %v4442 = vpop.permute.xlu0 %4441
  %v4445 = vsel %vm119, %v4363, %v4384
  %v4446 = vsel %vm119, %v4364, %v4386
  %v4447 = vsel %vm125, %v4445, %v4392
  %v4448 = vsel %vm125, %v4446, %v4394
  %v4449 = vsel %vm131, %v4447, %v4400
  %v4450 = vsel %vm131, %v4448, %v4402
  %v4451 = vsel %vm137, %v4449, %v4408
  %v4452 = vsel %vm137, %v4450, %v4410
  %v4453 = vsel %vm4047, %v4451, %v4416
  %v4454 = vsel %vm4047, %v4452, %v4418
  %v4455 = vsel %vm4050, %v4453, %v4424
  %v4456 = vsel %vm4050, %v4454, %v4426
  %v4457 = vsel %vm4053, %v4455, %v4432
  %v4458 = vsel %vm4053, %v4456, %v4434
  %v4459 = vsel %vm4056, %v4457, %v4440
  %v4460 = vsel %vm4056, %v4458, %v4442
  %4461 = vst.msk [vmem:[#allocation4 + $0x30] sm:$0xff] %vm4059, %v4459
  %4462 = vst.msk [vmem:[#allocation4 + $0x38] sm:$0xf] %vm4061, %v4460
  %v4463 = vld [vmem:[#allocation3 + $0x46] sm:$0xff]
  %v4464 = vld [vmem:[#allocation3 + $0x4e] sm:$0xf]
  %v4465 = vld [vmem:[#allocation3 + $0x47] sm:$0xff]
  %v4466 = vld [vmem:[#allocation3 + $0x4f] sm:$0xf]
  %v4467 = vld [vmem:[#allocation3 + $0x48] sm:$0xff]
  %v4468 = vld [vmem:[#allocation3 + $0x50] sm:$0xf]
  %v4469 = vld [vmem:[#allocation3 + $0x54] sm:$0xff]
  %v4470 = vld [vmem:[#allocation3 + $0x5c] sm:$0xf]
  %v4471 = vld [vmem:[#allocation3 + $0x55] sm:$0xff]
  %v4472 = vld [vmem:[#allocation3 + $0x5d] sm:$0xf]
  %v4473 = vld [vmem:[#allocation3 + $0x56] sm:$0xff]
  %v4474 = vld [vmem:[#allocation3 + $0x5e] sm:$0xf]
  %v4475 = vld [vmem:[#allocation3 + $0x62] sm:$0xff]
  %v4476 = vld [vmem:[#allocation3 + $0x6a] sm:$0xf]
  %v4477 = vld [vmem:[#allocation3 + $0x63] sm:$0xff]
  %v4478 = vld [vmem:[#allocation3 + $0x6b] sm:$0xf]
  %v4479 = vld [vmem:[#allocation3 + $0x64] sm:$0xff]
  %v4480 = vld [vmem:[#allocation3 + $0x6c] sm:$0xf]
  %4483 = vrot.lane.b32.xlu0 %v4465, 8
  %v4484 = vpop.permute.xlu0 %4483
  %4485 = vrot.lane.b32.xlu0 %v4466, 8
  %v4486 = vpop.permute.xlu0 %4485
  %4491 = vrot.lane.b32.xlu0 %v4467, 16
  %v4492 = vpop.permute.xlu0 %4491
  %4493 = vrot.lane.b32.xlu0 %v4468, 16
  %v4494 = vpop.permute.xlu0 %4493
  %4499 = vrot.lane.b32.xlu0 %v4469, 24
  %v4500 = vpop.permute.xlu0 %4499
  %4501 = vrot.lane.b32.xlu0 %v4470, 24
  %v4502 = vpop.permute.xlu0 %4501
  %4507 = vrot.lane.b32.xlu0 %v4471, 32
  %v4508 = vpop.permute.xlu0 %4507
  %4509 = vrot.lane.b32.xlu0 %v4472, 32
  %v4510 = vpop.permute.xlu0 %4509
  %4515 = vrot.lane.b32.xlu0 %v4473, 40
  %v4516 = vpop.permute.xlu0 %4515
  %4517 = vrot.lane.b32.xlu0 %v4474, 40
  %v4518 = vpop.permute.xlu0 %4517
  %4523 = vrot.lane.b32.xlu0 %v4475, 48
  %v4524 = vpop.permute.xlu0 %4523
  %4525 = vrot.lane.b32.xlu0 %v4476, 48
  %v4526 = vpop.permute.xlu0 %4525
  %4531 = vrot.lane.b32.xlu0 %v4477, 56
  %v4532 = vpop.permute.xlu0 %4531
  %4533 = vrot.lane.b32.xlu0 %v4478, 56
  %v4534 = vpop.permute.xlu0 %4533
  %4539 = vrot.lane.b32.xlu0 %v4479, 64
  %v4540 = vpop.permute.xlu0 %4539
  %4541 = vrot.lane.b32.xlu0 %v4480, 64
  %v4542 = vpop.permute.xlu0 %4541
  %v4545 = vsel %vm119, %v4463, %v4484
  %v4546 = vsel %vm119, %v4464, %v4486
  %v4547 = vsel %vm125, %v4545, %v4492
  %v4548 = vsel %vm125, %v4546, %v4494
  %v4549 = vsel %vm131, %v4547, %v4500
  %v4550 = vsel %vm131, %v4548, %v4502
  %v4551 = vsel %vm137, %v4549, %v4508
  %v4552 = vsel %vm137, %v4550, %v4510
  %v4553 = vsel %vm4047, %v4551, %v4516
  %v4554 = vsel %vm4047, %v4552, %v4518
  %v4555 = vsel %vm4050, %v4553, %v4524
  %v4556 = vsel %vm4050, %v4554, %v4526
  %v4557 = vsel %vm4053, %v4555, %v4532
  %v4558 = vsel %vm4053, %v4556, %v4534
  %v4559 = vsel %vm4056, %v4557, %v4540
  %v4560 = vsel %vm4056, %v4558, %v4542
  %4561 = vst.msk [vmem:[#allocation4 + $0x3c] sm:$0xff] %vm4059, %v4559
  %4562 = vst.msk [vmem:[#allocation4 + $0x44] sm:$0xf] %vm4061, %v4560
  %v4563 = vld [vmem:[#allocation3 + $0x54] sm:$0xff]
  %v4564 = vld [vmem:[#allocation3 + $0x5c] sm:$0xf]
  %v4565 = vld [vmem:[#allocation3 + $0x55] sm:$0xff]
  %v4566 = vld [vmem:[#allocation3 + $0x5d] sm:$0xf]
  %v4567 = vld [vmem:[#allocation3 + $0x56] sm:$0xff]
  %v4568 = vld [vmem:[#allocation3 + $0x5e] sm:$0xf]
  %v4569 = vld [vmem:[#allocation3 + $0x62] sm:$0xff]
  %v4570 = vld [vmem:[#allocation3 + $0x6a] sm:$0xf]
  %v4571 = vld [vmem:[#allocation3 + $0x63] sm:$0xff]
  %v4572 = vld [vmem:[#allocation3 + $0x6b] sm:$0xf]
  %v4573 = vld [vmem:[#allocation3 + $0x64] sm:$0xff]
  %v4574 = vld [vmem:[#allocation3 + $0x6c] sm:$0xf]
  %v4575 = vld [vmem:[#allocation3 + $0x70] sm:$0xff]
  %v4576 = vld [vmem:[#allocation3 + $0x78] sm:$0xf]
  %v4577 = vld [vmem:[#allocation3 + $0x71] sm:$0xff]
  %v4578 = vld [vmem:[#allocation3 + $0x79] sm:$0xf]
  %v4579 = vld [vmem:[#allocation3 + $0x72] sm:$0xff]
  %v4580 = vld [vmem:[#allocation3 + $0x7a] sm:$0xf]
  %4583 = vrot.lane.b32.xlu0 %v4565, 8
  %v4584 = vpop.permute.xlu0 %4583
  %4585 = vrot.lane.b32.xlu0 %v4566, 8
  %v4586 = vpop.permute.xlu0 %4585
  %4591 = vrot.lane.b32.xlu0 %v4567, 16
  %v4592 = vpop.permute.xlu0 %4591
  %4593 = vrot.lane.b32.xlu0 %v4568, 16
  %v4594 = vpop.permute.xlu0 %4593
  %4599 = vrot.lane.b32.xlu0 %v4569, 24
  %v4600 = vpop.permute.xlu0 %4599
  %4601 = vrot.lane.b32.xlu0 %v4570, 24
  %v4602 = vpop.permute.xlu0 %4601
  %4607 = vrot.lane.b32.xlu0 %v4571, 32
  %v4608 = vpop.permute.xlu0 %4607
  %4609 = vrot.lane.b32.xlu0 %v4572, 32
  %v4610 = vpop.permute.xlu0 %4609
  %4615 = vrot.lane.b32.xlu0 %v4573, 40
  %v4616 = vpop.permute.xlu0 %4615
  %4617 = vrot.lane.b32.xlu0 %v4574, 40
  %v4618 = vpop.permute.xlu0 %4617
  %4623 = vrot.lane.b32.xlu0 %v4575, 48
  %v4624 = vpop.permute.xlu0 %4623
  %4625 = vrot.lane.b32.xlu0 %v4576, 48
  %v4626 = vpop.permute.xlu0 %4625
  %4631 = vrot.lane.b32.xlu0 %v4577, 56
  %v4632 = vpop.permute.xlu0 %4631
  %4633 = vrot.lane.b32.xlu0 %v4578, 56
  %v4634 = vpop.permute.xlu0 %4633
  %4639 = vrot.lane.b32.xlu0 %v4579, 64
  %v4640 = vpop.permute.xlu0 %4639
  %4641 = vrot.lane.b32.xlu0 %v4580, 64
  %v4642 = vpop.permute.xlu0 %4641
  %v4645 = vsel %vm119, %v4563, %v4584
  %v4646 = vsel %vm119, %v4564, %v4586
  %v4647 = vsel %vm125, %v4645, %v4592
  %v4648 = vsel %vm125, %v4646, %v4594
  %v4649 = vsel %vm131, %v4647, %v4600
  %v4650 = vsel %vm131, %v4648, %v4602
  %v4651 = vsel %vm137, %v4649, %v4608
  %v4652 = vsel %vm137, %v4650, %v4610
  %v4653 = vsel %vm4047, %v4651, %v4616
  %v4654 = vsel %vm4047, %v4652, %v4618
  %v4655 = vsel %vm4050, %v4653, %v4624
  %v4656 = vsel %vm4050, %v4654, %v4626
  %v4657 = vsel %vm4053, %v4655, %v4632
  %v4658 = vsel %vm4053, %v4656, %v4634
  %v4659 = vsel %vm4056, %v4657, %v4640
  %v4660 = vsel %vm4056, %v4658, %v4642
  %4661 = vst.msk [vmem:[#allocation4 + $0x48] sm:$0xff] %vm4059, %v4659
  %4662 = vst.msk [vmem:[#allocation4 + $0x50] sm:$0xf] %vm4061, %v4660
  %v4663 = vld [vmem:[#allocation3 + $0x62] sm:$0xff]
  %v4664 = vld [vmem:[#allocation3 + $0x6a] sm:$0xf]
  %v4665 = vld [vmem:[#allocation3 + $0x63] sm:$0xff]
  %v4666 = vld [vmem:[#allocation3 + $0x6b] sm:$0xf]
  %v4667 = vld [vmem:[#allocation3 + $0x64] sm:$0xff]
  %v4668 = vld [vmem:[#allocation3 + $0x6c] sm:$0xf]
  %v4669 = vld [vmem:[#allocation3 + $0x70] sm:$0xff]
  %v4670 = vld [vmem:[#allocation3 + $0x78] sm:$0xf]
  %v4671 = vld [vmem:[#allocation3 + $0x71] sm:$0xff]
  %v4672 = vld [vmem:[#allocation3 + $0x79] sm:$0xf]
  %v4673 = vld [vmem:[#allocation3 + $0x72] sm:$0xff]
  %v4674 = vld [vmem:[#allocation3 + $0x7a] sm:$0xf]
  %v4675 = vld [vmem:[#allocation3 + $0x7e] sm:$0xff]
  %v4676 = vld [vmem:[#allocation3 + $0x86] sm:$0xf]
  %v4677 = vld [vmem:[#allocation3 + $0x7f] sm:$0xff]
  %v4678 = vld [vmem:[#allocation3 + $0x87] sm:$0xf]
  %v4679 = vld [vmem:[#allocation3 + $0x80] sm:$0xff]
  %v4680 = vld [vmem:[#allocation3 + $0x88] sm:$0xf]
  %4683 = vrot.lane.b32.xlu0 %v4665, 8
  %v4684 = vpop.permute.xlu0 %4683
  %4685 = vrot.lane.b32.xlu0 %v4666, 8
  %v4686 = vpop.permute.xlu0 %4685
  %4691 = vrot.lane.b32.xlu0 %v4667, 16
  %v4692 = vpop.permute.xlu0 %4691
  %4693 = vrot.lane.b32.xlu0 %v4668, 16
  %v4694 = vpop.permute.xlu0 %4693
  %4699 = vrot.lane.b32.xlu0 %v4669, 24
  %v4700 = vpop.permute.xlu0 %4699
  %4701 = vrot.lane.b32.xlu0 %v4670, 24
  %v4702 = vpop.permute.xlu0 %4701
  %4707 = vrot.lane.b32.xlu0 %v4671, 32
  %v4708 = vpop.permute.xlu0 %4707
  %4709 = vrot.lane.b32.xlu0 %v4672, 32
  %v4710 = vpop.permute.xlu0 %4709
  %4715 = vrot.lane.b32.xlu0 %v4673, 40
  %v4716 = vpop.permute.xlu0 %4715
  %4717 = vrot.lane.b32.xlu0 %v4674, 40
  %v4718 = vpop.permute.xlu0 %4717
  %4723 = vrot.lane.b32.xlu0 %v4675, 48
  %v4724 = vpop.permute.xlu0 %4723
  %4725 = vrot.lane.b32.xlu0 %v4676, 48
  %v4726 = vpop.permute.xlu0 %4725
  %4731 = vrot.lane.b32.xlu0 %v4677, 56
  %v4732 = vpop.permute.xlu0 %4731
  %4733 = vrot.lane.b32.xlu0 %v4678, 56
  %v4734 = vpop.permute.xlu0 %4733
  %4739 = vrot.lane.b32.xlu0 %v4679, 64
  %v4740 = vpop.permute.xlu0 %4739
  %4741 = vrot.lane.b32.xlu0 %v4680, 64
  %v4742 = vpop.permute.xlu0 %4741
  %v4745 = vsel %vm119, %v4663, %v4684
  %v4746 = vsel %vm119, %v4664, %v4686
  %v4747 = vsel %vm125, %v4745, %v4692
  %v4748 = vsel %vm125, %v4746, %v4694
  %v4749 = vsel %vm131, %v4747, %v4700
  %v4750 = vsel %vm131, %v4748, %v4702
  %v4751 = vsel %vm137, %v4749, %v4708
  %v4752 = vsel %vm137, %v4750, %v4710
  %v4753 = vsel %vm4047, %v4751, %v4716
  %v4754 = vsel %vm4047, %v4752, %v4718
  %v4755 = vsel %vm4050, %v4753, %v4724
  %v4756 = vsel %vm4050, %v4754, %v4726
  %v4757 = vsel %vm4053, %v4755, %v4732
  %v4758 = vsel %vm4053, %v4756, %v4734
  %v4759 = vsel %vm4056, %v4757, %v4740
  %v4760 = vsel %vm4056, %v4758, %v4742
  %4761 = vst.msk [vmem:[#allocation4 + $0x54] sm:$0xff] %vm4059, %v4759
  %4762 = vst.msk [vmem:[#allocation4 + $0x5c] sm:$0xf] %vm4061, %v4760
  %v4763 = vld [vmem:[#allocation3 + $0x70] sm:$0xff]
  %v4764 = vld [vmem:[#allocation3 + $0x78] sm:$0xf]
  %v4765 = vld [vmem:[#allocation3 + $0x71] sm:$0xff]
  %v4766 = vld [vmem:[#allocation3 + $0x79] sm:$0xf]
  %v4767 = vld [vmem:[#allocation3 + $0x72] sm:$0xff]
  %v4768 = vld [vmem:[#allocation3 + $0x7a] sm:$0xf]
  %v4769 = vld [vmem:[#allocation3 + $0x7e] sm:$0xff]
  %v4770 = vld [vmem:[#allocation3 + $0x86] sm:$0xf]
  %v4771 = vld [vmem:[#allocation3 + $0x7f] sm:$0xff]
  %v4772 = vld [vmem:[#allocation3 + $0x87] sm:$0xf]
  %v4773 = vld [vmem:[#allocation3 + $0x80] sm:$0xff]
  %v4774 = vld [vmem:[#allocation3 + $0x88] sm:$0xf]
  %v4775 = vld [vmem:[#allocation3 + $0x8c] sm:$0xff]
  %v4776 = vld [vmem:[#allocation3 + $0x94] sm:$0xf]
  %v4777 = vld [vmem:[#allocation3 + $0x8d] sm:$0xff]
  %v4778 = vld [vmem:[#allocation3 + $0x95] sm:$0xf]
  %v4779 = vld [vmem:[#allocation3 + $0x8e] sm:$0xff]
  %v4780 = vld [vmem:[#allocation3 + $0x96] sm:$0xf]
  %4783 = vrot.lane.b32.xlu0 %v4765, 8
  %v4784 = vpop.permute.xlu0 %4783
  %4785 = vrot.lane.b32.xlu0 %v4766, 8
  %v4786 = vpop.permute.xlu0 %4785
  %4791 = vrot.lane.b32.xlu0 %v4767, 16
  %v4792 = vpop.permute.xlu0 %4791
  %4793 = vrot.lane.b32.xlu0 %v4768, 16
  %v4794 = vpop.permute.xlu0 %4793
  %4799 = vrot.lane.b32.xlu0 %v4769, 24
  %v4800 = vpop.permute.xlu0 %4799
  %4801 = vrot.lane.b32.xlu0 %v4770, 24
  %v4802 = vpop.permute.xlu0 %4801
  %4807 = vrot.lane.b32.xlu0 %v4771, 32
  %v4808 = vpop.permute.xlu0 %4807
  %4809 = vrot.lane.b32.xlu0 %v4772, 32
  %v4810 = vpop.permute.xlu0 %4809
  %4815 = vrot.lane.b32.xlu0 %v4773, 40
  %v4816 = vpop.permute.xlu0 %4815
  %4817 = vrot.lane.b32.xlu0 %v4774, 40
  %v4818 = vpop.permute.xlu0 %4817
  %4823 = vrot.lane.b32.xlu0 %v4775, 48
  %v4824 = vpop.permute.xlu0 %4823
  %4825 = vrot.lane.b32.xlu0 %v4776, 48
  %v4826 = vpop.permute.xlu0 %4825
  %4831 = vrot.lane.b32.xlu0 %v4777, 56
  %v4832 = vpop.permute.xlu0 %4831
  %4833 = vrot.lane.b32.xlu0 %v4778, 56
  %v4834 = vpop.permute.xlu0 %4833
  %4839 = vrot.lane.b32.xlu0 %v4779, 64
  %v4840 = vpop.permute.xlu0 %4839
  %4841 = vrot.lane.b32.xlu0 %v4780, 64
  %v4842 = vpop.permute.xlu0 %4841
  %v4845 = vsel %vm119, %v4763, %v4784
  %v4846 = vsel %vm119, %v4764, %v4786
  %v4847 = vsel %vm125, %v4845, %v4792
  %v4848 = vsel %vm125, %v4846, %v4794
  %v4849 = vsel %vm131, %v4847, %v4800
  %v4850 = vsel %vm131, %v4848, %v4802
  %v4851 = vsel %vm137, %v4849, %v4808
  %v4852 = vsel %vm137, %v4850, %v4810
  %v4853 = vsel %vm4047, %v4851, %v4816
  %v4854 = vsel %vm4047, %v4852, %v4818
  %v4855 = vsel %vm4050, %v4853, %v4824
  %v4856 = vsel %vm4050, %v4854, %v4826
  %v4857 = vsel %vm4053, %v4855, %v4832
  %v4858 = vsel %vm4053, %v4856, %v4834
  %v4859 = vsel %vm4056, %v4857, %v4840
  %v4860 = vsel %vm4056, %v4858, %v4842
  %4861 = vst.msk [vmem:[#allocation4 + $0x60] sm:$0xff] %vm4059, %v4859
  %4862 = vst.msk [vmem:[#allocation4 + $0x68] sm:$0xf] %vm4061, %v4860
  %v4863 = vld [vmem:[#allocation3 + $0x7e] sm:$0xff]
  %v4864 = vld [vmem:[#allocation3 + $0x86] sm:$0xf]
  %v4865 = vld [vmem:[#allocation3 + $0x7f] sm:$0xff]
  %v4866 = vld [vmem:[#allocation3 + $0x87] sm:$0xf]
  %v4867 = vld [vmem:[#allocation3 + $0x80] sm:$0xff]
  %v4868 = vld [vmem:[#allocation3 + $0x88] sm:$0xf]
  %v4869 = vld [vmem:[#allocation3 + $0x8c] sm:$0xff]
  %v4870 = vld [vmem:[#allocation3 + $0x94] sm:$0xf]
  %v4871 = vld [vmem:[#allocation3 + $0x8d] sm:$0xff]
  %v4872 = vld [vmem:[#allocation3 + $0x95] sm:$0xf]
  %v4873 = vld [vmem:[#allocation3 + $0x8e] sm:$0xff]
  %v4874 = vld [vmem:[#allocation3 + $0x96] sm:$0xf]
  %v4875 = vld [vmem:[#allocation3 + $0x9a] sm:$0xff]
  %v4876 = vld [vmem:[#allocation3 + $0xa2] sm:$0xf]
  %v4877 = vld [vmem:[#allocation3 + $0x9b] sm:$0xff]
  %v4878 = vld [vmem:[#allocation3 + $0xa3] sm:$0xf]
  %v4879 = vld [vmem:[#allocation3 + $0x9c] sm:$0xff]
  %v4880 = vld [vmem:[#allocation3 + $0xa4] sm:$0xf]
  %4883 = vrot.lane.b32.xlu0 %v4865, 8
  %v4884 = vpop.permute.xlu0 %4883
  %4885 = vrot.lane.b32.xlu0 %v4866, 8
  %v4886 = vpop.permute.xlu0 %4885
  %4891 = vrot.lane.b32.xlu0 %v4867, 16
  %v4892 = vpop.permute.xlu0 %4891
  %4893 = vrot.lane.b32.xlu0 %v4868, 16
  %v4894 = vpop.permute.xlu0 %4893
  %4899 = vrot.lane.b32.xlu0 %v4869, 24
  %v4900 = vpop.permute.xlu0 %4899
  %4901 = vrot.lane.b32.xlu0 %v4870, 24
  %v4902 = vpop.permute.xlu0 %4901
  %4907 = vrot.lane.b32.xlu0 %v4871, 32
  %v4908 = vpop.permute.xlu0 %4907
  %4909 = vrot.lane.b32.xlu0 %v4872, 32
  %v4910 = vpop.permute.xlu0 %4909
  %4915 = vrot.lane.b32.xlu0 %v4873, 40
  %v4916 = vpop.permute.xlu0 %4915
  %4917 = vrot.lane.b32.xlu0 %v4874, 40
  %v4918 = vpop.permute.xlu0 %4917
  %4923 = vrot.lane.b32.xlu0 %v4875, 48
  %v4924 = vpop.permute.xlu0 %4923
  %4925 = vrot.lane.b32.xlu0 %v4876, 48
  %v4926 = vpop.permute.xlu0 %4925
  %4931 = vrot.lane.b32.xlu0 %v4877, 56
  %v4932 = vpop.permute.xlu0 %4931
  %4933 = vrot.lane.b32.xlu0 %v4878, 56
  %v4934 = vpop.permute.xlu0 %4933
  %4939 = vrot.lane.b32.xlu0 %v4879, 64
  %v4940 = vpop.permute.xlu0 %4939
  %4941 = vrot.lane.b32.xlu0 %v4880, 64
  %v4942 = vpop.permute.xlu0 %4941
  %v4945 = vsel %vm119, %v4863, %v4884
  %v4946 = vsel %vm119, %v4864, %v4886
  %v4947 = vsel %vm125, %v4945, %v4892
  %v4948 = vsel %vm125, %v4946, %v4894
  %v4949 = vsel %vm131, %v4947, %v4900
  %v4950 = vsel %vm131, %v4948, %v4902
  %v4951 = vsel %vm137, %v4949, %v4908
  %v4952 = vsel %vm137, %v4950, %v4910
  %v4953 = vsel %vm4047, %v4951, %v4916
  %v4954 = vsel %vm4047, %v4952, %v4918
  %v4955 = vsel %vm4050, %v4953, %v4924
  %v4956 = vsel %vm4050, %v4954, %v4926
  %v4957 = vsel %vm4053, %v4955, %v4932
  %v4958 = vsel %vm4053, %v4956, %v4934
  %v4959 = vsel %vm4056, %v4957, %v4940
  %v4960 = vsel %vm4056, %v4958, %v4942
  %4961 = vst.msk [vmem:[#allocation4 + $0x6c] sm:$0xff] %vm4059, %v4959
  %4962 = vst.msk [vmem:[#allocation4 + $0x74] sm:$0xf] %vm4061, %v4960
  %v4963 = vld [vmem:[#allocation3 + $0x8c] sm:$0xff]
  %v4964 = vld [vmem:[#allocation3 + $0x94] sm:$0xf]
  %v4965 = vld [vmem:[#allocation3 + $0x8d] sm:$0xff]
  %v4966 = vld [vmem:[#allocation3 + $0x95] sm:$0xf]
  %v4967 = vld [vmem:[#allocation3 + $0x8e] sm:$0xff]
  %v4968 = vld [vmem:[#allocation3 + $0x96] sm:$0xf]
  %v4969 = vld [vmem:[#allocation3 + $0x9a] sm:$0xff]
  %v4970 = vld [vmem:[#allocation3 + $0xa2] sm:$0xf]
  %v4971 = vld [vmem:[#allocation3 + $0x9b] sm:$0xff]
  %v4972 = vld [vmem:[#allocation3 + $0xa3] sm:$0xf]
  %v4973 = vld [vmem:[#allocation3 + $0x9c] sm:$0xff]
  %v4974 = vld [vmem:[#allocation3 + $0xa4] sm:$0xf]
  %v4975 = vld [vmem:[#allocation3 + $0xa8] sm:$0xff]
  %v4976 = vld [vmem:[#allocation3 + $0xb0] sm:$0xf]
  %v4977 = vld [vmem:[#allocation3 + $0xa9] sm:$0xff]
  %v4978 = vld [vmem:[#allocation3 + $0xb1] sm:$0xf]
  %v4979 = vld [vmem:[#allocation3 + $0xaa] sm:$0xff]
  %v4980 = vld [vmem:[#allocation3 + $0xb2] sm:$0xf]
  %4983 = vrot.lane.b32.xlu0 %v4965, 8
  %v4984 = vpop.permute.xlu0 %4983
  %4985 = vrot.lane.b32.xlu0 %v4966, 8
  %v4986 = vpop.permute.xlu0 %4985
  %4991 = vrot.lane.b32.xlu0 %v4967, 16
  %v4992 = vpop.permute.xlu0 %4991
  %4993 = vrot.lane.b32.xlu0 %v4968, 16
  %v4994 = vpop.permute.xlu0 %4993
  %4999 = vrot.lane.b32.xlu0 %v4969, 24
  %v5000 = vpop.permute.xlu0 %4999
  %5001 = vrot.lane.b32.xlu0 %v4970, 24
  %v5002 = vpop.permute.xlu0 %5001
  %5007 = vrot.lane.b32.xlu0 %v4971, 32
  %v5008 = vpop.permute.xlu0 %5007
  %5009 = vrot.lane.b32.xlu0 %v4972, 32
  %v5010 = vpop.permute.xlu0 %5009
  %5015 = vrot.lane.b32.xlu0 %v4973, 40
  %v5016 = vpop.permute.xlu0 %5015
  %5017 = vrot.lane.b32.xlu0 %v4974, 40
  %v5018 = vpop.permute.xlu0 %5017
  %5023 = vrot.lane.b32.xlu0 %v4975, 48
  %v5024 = vpop.permute.xlu0 %5023
  %5025 = vrot.lane.b32.xlu0 %v4976, 48
  %v5026 = vpop.permute.xlu0 %5025
  %5031 = vrot.lane.b32.xlu0 %v4977, 56
  %v5032 = vpop.permute.xlu0 %5031
  %5033 = vrot.lane.b32.xlu0 %v4978, 56
  %v5034 = vpop.permute.xlu0 %5033
  %5039 = vrot.lane.b32.xlu0 %v4979, 64
  %v5040 = vpop.permute.xlu0 %5039
  %5041 = vrot.lane.b32.xlu0 %v4980, 64
  %v5042 = vpop.permute.xlu0 %5041
  %v5045 = vsel %vm119, %v4963, %v4984
  %v5046 = vsel %vm119, %v4964, %v4986
  %v5047 = vsel %vm125, %v5045, %v4992
  %v5048 = vsel %vm125, %v5046, %v4994
  %v5049 = vsel %vm131, %v5047, %v5000
  %v5050 = vsel %vm131, %v5048, %v5002
  %v5051 = vsel %vm137, %v5049, %v5008
  %v5052 = vsel %vm137, %v5050, %v5010
  %v5053 = vsel %vm4047, %v5051, %v5016
  %v5054 = vsel %vm4047, %v5052, %v5018
  %v5055 = vsel %vm4050, %v5053, %v5024
  %v5056 = vsel %vm4050, %v5054, %v5026
  %v5057 = vsel %vm4053, %v5055, %v5032
  %v5058 = vsel %vm4053, %v5056, %v5034
  %v5059 = vsel %vm4056, %v5057, %v5040
  %v5060 = vsel %vm4056, %v5058, %v5042
  %5061 = vst.msk [vmem:[#allocation4 + $0x78] sm:$0xff] %vm4059, %v5059
  %5062 = vst.msk [vmem:[#allocation4 + $0x80] sm:$0xf] %vm4061, %v5060
  %v5063 = vld [vmem:[#allocation3 + $0x9a] sm:$0xff]
  %v5064 = vld [vmem:[#allocation3 + $0xa2] sm:$0xf]
  %v5065 = vld [vmem:[#allocation3 + $0x9b] sm:$0xff]
  %v5066 = vld [vmem:[#allocation3 + $0xa3] sm:$0xf]
  %v5067 = vld [vmem:[#allocation3 + $0x9c] sm:$0xff]
  %v5068 = vld [vmem:[#allocation3 + $0xa4] sm:$0xf]
  %v5069 = vld [vmem:[#allocation3 + $0xa8] sm:$0xff]
  %v5070 = vld [vmem:[#allocation3 + $0xb0] sm:$0xf]
  %v5071 = vld [vmem:[#allocation3 + $0xa9] sm:$0xff]
  %v5072 = vld [vmem:[#allocation3 + $0xb1] sm:$0xf]
  %v5073 = vld [vmem:[#allocation3 + $0xaa] sm:$0xff]
  %v5074 = vld [vmem:[#allocation3 + $0xb2] sm:$0xf]
  %v5075 = vld [vmem:[#allocation3 + $0xb6] sm:$0xff]
  %v5076 = vld [vmem:[#allocation3 + $0xbe] sm:$0xf]
  %v5077 = vld [vmem:[#allocation3 + $0xb7] sm:$0xff]
  %v5078 = vld [vmem:[#allocation3 + $0xbf] sm:$0xf]
  %v5079 = vld [vmem:[#allocation3 + $0xb8] sm:$0xff]
  %v5080 = vld [vmem:[#allocation3 + $0xc0] sm:$0xf]
  %5083 = vrot.lane.b32.xlu0 %v5065, 8
  %v5084 = vpop.permute.xlu0 %5083
  %5085 = vrot.lane.b32.xlu0 %v5066, 8
  %v5086 = vpop.permute.xlu0 %5085
  %5091 = vrot.lane.b32.xlu0 %v5067, 16
  %v5092 = vpop.permute.xlu0 %5091
  %5093 = vrot.lane.b32.xlu0 %v5068, 16
  %v5094 = vpop.permute.xlu0 %5093
  %5099 = vrot.lane.b32.xlu0 %v5069, 24
  %v5100 = vpop.permute.xlu0 %5099
  %5101 = vrot.lane.b32.xlu0 %v5070, 24
  %v5102 = vpop.permute.xlu0 %5101
  %5107 = vrot.lane.b32.xlu0 %v5071, 32
  %v5108 = vpop.permute.xlu0 %5107
  %5109 = vrot.lane.b32.xlu0 %v5072, 32
  %v5110 = vpop.permute.xlu0 %5109
  %5115 = vrot.lane.b32.xlu0 %v5073, 40
  %v5116 = vpop.permute.xlu0 %5115
  %5117 = vrot.lane.b32.xlu0 %v5074, 40
  %v5118 = vpop.permute.xlu0 %5117
  %5123 = vrot.lane.b32.xlu0 %v5075, 48
  %v5124 = vpop.permute.xlu0 %5123
  %5125 = vrot.lane.b32.xlu0 %v5076, 48
  %v5126 = vpop.permute.xlu0 %5125
  %5131 = vrot.lane.b32.xlu0 %v5077, 56
  %v5132 = vpop.permute.xlu0 %5131
  %5133 = vrot.lane.b32.xlu0 %v5078, 56
  %v5134 = vpop.permute.xlu0 %5133
  %5139 = vrot.lane.b32.xlu0 %v5079, 64
  %v5140 = vpop.permute.xlu0 %5139
  %5141 = vrot.lane.b32.xlu0 %v5080, 64
  %v5142 = vpop.permute.xlu0 %5141
  %v5145 = vsel %vm119, %v5063, %v5084
  %v5146 = vsel %vm119, %v5064, %v5086
  %v5147 = vsel %vm125, %v5145, %v5092
  %v5148 = vsel %vm125, %v5146, %v5094
  %v5149 = vsel %vm131, %v5147, %v5100
  %v5150 = vsel %vm131, %v5148, %v5102
  %v5151 = vsel %vm137, %v5149, %v5108
  %v5152 = vsel %vm137, %v5150, %v5110
  %v5153 = vsel %vm4047, %v5151, %v5116
  %v5154 = vsel %vm4047, %v5152, %v5118
  %v5155 = vsel %vm4050, %v5153, %v5124
  %v5156 = vsel %vm4050, %v5154, %v5126
  %v5157 = vsel %vm4053, %v5155, %v5132
  %v5158 = vsel %vm4053, %v5156, %v5134
  %v5159 = vsel %vm4056, %v5157, %v5140
  %v5160 = vsel %vm4056, %v5158, %v5142
  %5161 = vst.msk [vmem:[#allocation4 + $0x84] sm:$0xff] %vm4059, %v5159
  %5162 = vst.msk [vmem:[#allocation4 + $0x8c] sm:$0xf] %vm4061, %v5160
  %v5163 = vld [vmem:[#allocation3 + $0xc4] sm:$0xff]
  %v5164 = vld [vmem:[#allocation3 + $0xcc] sm:$0xf]
  %v5165 = vld [vmem:[#allocation3 + $0xc5] sm:$0xff]
  %v5166 = vld [vmem:[#allocation3 + $0xcd] sm:$0xf]
  %v5167 = vld [vmem:[#allocation3 + $0xc6] sm:$0xff]
  %v5168 = vld [vmem:[#allocation3 + $0xce] sm:$0xf]
  %v5169 = vld [vmem:[#allocation3 + $0xd2] sm:$0xff]
  %v5170 = vld [vmem:[#allocation3 + $0xda] sm:$0xf]
  %v5171 = vld [vmem:[#allocation3 + $0xd3] sm:$0xff]
  %v5172 = vld [vmem:[#allocation3 + $0xdb] sm:$0xf]
  %v5173 = vld [vmem:[#allocation3 + $0xd4] sm:$0xff]
  %v5174 = vld [vmem:[#allocation3 + $0xdc] sm:$0xf]
  %v5175 = vld [vmem:[#allocation3 + $0xe0] sm:$0xff]
  %v5176 = vld [vmem:[#allocation3 + $0xe8] sm:$0xf]
  %v5177 = vld [vmem:[#allocation3 + $0xe1] sm:$0xff]
  %v5178 = vld [vmem:[#allocation3 + $0xe9] sm:$0xf]
  %v5179 = vld [vmem:[#allocation3 + $0xe2] sm:$0xff]
  %v5180 = vld [vmem:[#allocation3 + $0xea] sm:$0xf]
  %5183 = vrot.lane.b32.xlu0 %v5165, 8
  %v5184 = vpop.permute.xlu0 %5183
  %5185 = vrot.lane.b32.xlu0 %v5166, 8
  %v5186 = vpop.permute.xlu0 %5185
  %5191 = vrot.lane.b32.xlu0 %v5167, 16
  %v5192 = vpop.permute.xlu0 %5191
  %5193 = vrot.lane.b32.xlu0 %v5168, 16
  %v5194 = vpop.permute.xlu0 %5193
  %5199 = vrot.lane.b32.xlu0 %v5169, 24
  %v5200 = vpop.permute.xlu0 %5199
  %5201 = vrot.lane.b32.xlu0 %v5170, 24
  %v5202 = vpop.permute.xlu0 %5201
  %5207 = vrot.lane.b32.xlu0 %v5171, 32
  %v5208 = vpop.permute.xlu0 %5207
  %5209 = vrot.lane.b32.xlu0 %v5172, 32
  %v5210 = vpop.permute.xlu0 %5209
  %5215 = vrot.lane.b32.xlu0 %v5173, 40
  %v5216 = vpop.permute.xlu0 %5215
  %5217 = vrot.lane.b32.xlu0 %v5174, 40
  %v5218 = vpop.permute.xlu0 %5217
  %5223 = vrot.lane.b32.xlu0 %v5175, 48
  %v5224 = vpop.permute.xlu0 %5223
  %5225 = vrot.lane.b32.xlu0 %v5176, 48
  %v5226 = vpop.permute.xlu0 %5225
  %5231 = vrot.lane.b32.xlu0 %v5177, 56
  %v5232 = vpop.permute.xlu0 %5231
  %5233 = vrot.lane.b32.xlu0 %v5178, 56
  %v5234 = vpop.permute.xlu0 %5233
  %5239 = vrot.lane.b32.xlu0 %v5179, 64
  %v5240 = vpop.permute.xlu0 %5239
  %5241 = vrot.lane.b32.xlu0 %v5180, 64
  %v5242 = vpop.permute.xlu0 %5241
  %v5245 = vsel %vm119, %v5163, %v5184
  %v5246 = vsel %vm119, %v5164, %v5186
  %v5247 = vsel %vm125, %v5245, %v5192
  %v5248 = vsel %vm125, %v5246, %v5194
  %v5249 = vsel %vm131, %v5247, %v5200
  %v5250 = vsel %vm131, %v5248, %v5202
  %v5251 = vsel %vm137, %v5249, %v5208
  %v5252 = vsel %vm137, %v5250, %v5210
  %v5253 = vsel %vm4047, %v5251, %v5216
  %v5254 = vsel %vm4047, %v5252, %v5218
  %v5255 = vsel %vm4050, %v5253, %v5224
  %v5256 = vsel %vm4050, %v5254, %v5226
  %v5257 = vsel %vm4053, %v5255, %v5232
  %v5258 = vsel %vm4053, %v5256, %v5234
  %v5259 = vsel %vm4056, %v5257, %v5240
  %v5260 = vsel %vm4056, %v5258, %v5242
  %5261 = vst.msk [vmem:[#allocation4 + $0x90] sm:$0xff] %vm4059, %v5259
  %5262 = vst.msk [vmem:[#allocation4 + $0x98] sm:$0xf] %vm4061, %v5260
  %v5263 = vld [vmem:[#allocation3 + $0xd2] sm:$0xff]
  %v5264 = vld [vmem:[#allocation3 + $0xda] sm:$0xf]
  %v5265 = vld [vmem:[#allocation3 + $0xd3] sm:$0xff]
  %v5266 = vld [vmem:[#allocation3 + $0xdb] sm:$0xf]
  %v5267 = vld [vmem:[#allocation3 + $0xd4] sm:$0xff]
  %v5268 = vld [vmem:[#allocation3 + $0xdc] sm:$0xf]
  %v5269 = vld [vmem:[#allocation3 + $0xe0] sm:$0xff]
  %v5270 = vld [vmem:[#allocation3 + $0xe8] sm:$0xf]
  %v5271 = vld [vmem:[#allocation3 + $0xe1] sm:$0xff]
  %v5272 = vld [vmem:[#allocation3 + $0xe9] sm:$0xf]
  %v5273 = vld [vmem:[#allocation3 + $0xe2] sm:$0xff]
  %v5274 = vld [vmem:[#allocation3 + $0xea] sm:$0xf]
  %v5275 = vld [vmem:[#allocation3 + $0xee] sm:$0xff]
  %v5276 = vld [vmem:[#allocation3 + $0xf6] sm:$0xf]
  %v5277 = vld [vmem:[#allocation3 + $0xef] sm:$0xff]
  %v5278 = vld [vmem:[#allocation3 + $0xf7] sm:$0xf]
  %v5279 = vld [vmem:[#allocation3 + $0xf0] sm:$0xff]
  %v5280 = vld [vmem:[#allocation3 + $0xf8] sm:$0xf]
  %5283 = vrot.lane.b32.xlu0 %v5265, 8
  %v5284 = vpop.permute.xlu0 %5283
  %5285 = vrot.lane.b32.xlu0 %v5266, 8
  %v5286 = vpop.permute.xlu0 %5285
  %5291 = vrot.lane.b32.xlu0 %v5267, 16
  %v5292 = vpop.permute.xlu0 %5291
  %5293 = vrot.lane.b32.xlu0 %v5268, 16
  %v5294 = vpop.permute.xlu0 %5293
  %5299 = vrot.lane.b32.xlu0 %v5269, 24
  %v5300 = vpop.permute.xlu0 %5299
  %5301 = vrot.lane.b32.xlu0 %v5270, 24
  %v5302 = vpop.permute.xlu0 %5301
  %5307 = vrot.lane.b32.xlu0 %v5271, 32
  %v5308 = vpop.permute.xlu0 %5307
  %5309 = vrot.lane.b32.xlu0 %v5272, 32
  %v5310 = vpop.permute.xlu0 %5309
  %5315 = vrot.lane.b32.xlu0 %v5273, 40
  %v5316 = vpop.permute.xlu0 %5315
  %5317 = vrot.lane.b32.xlu0 %v5274, 40
  %v5318 = vpop.permute.xlu0 %5317
  %5323 = vrot.lane.b32.xlu0 %v5275, 48
  %v5324 = vpop.permute.xlu0 %5323
  %5325 = vrot.lane.b32.xlu0 %v5276, 48
  %v5326 = vpop.permute.xlu0 %5325
  %5331 = vrot.lane.b32.xlu0 %v5277, 56
  %v5332 = vpop.permute.xlu0 %5331
  %5333 = vrot.lane.b32.xlu0 %v5278, 56
  %v5334 = vpop.permute.xlu0 %5333
  %5339 = vrot.lane.b32.xlu0 %v5279, 64
  %v5340 = vpop.permute.xlu0 %5339
  %5341 = vrot.lane.b32.xlu0 %v5280, 64
  %v5342 = vpop.permute.xlu0 %5341
  %v5345 = vsel %vm119, %v5263, %v5284
  %v5346 = vsel %vm119, %v5264, %v5286
  %v5347 = vsel %vm125, %v5345, %v5292
  %v5348 = vsel %vm125, %v5346, %v5294
  %v5349 = vsel %vm131, %v5347, %v5300
  %v5350 = vsel %vm131, %v5348, %v5302
  %v5351 = vsel %vm137, %v5349, %v5308
  %v5352 = vsel %vm137, %v5350, %v5310
  %v5353 = vsel %vm4047, %v5351, %v5316
  %v5354 = vsel %vm4047, %v5352, %v5318
  %v5355 = vsel %vm4050, %v5353, %v5324
  %v5356 = vsel %vm4050, %v5354, %v5326
  %v5357 = vsel %vm4053, %v5355, %v5332
  %v5358 = vsel %vm4053, %v5356, %v5334
  %v5359 = vsel %vm4056, %v5357, %v5340
  %v5360 = vsel %vm4056, %v5358, %v5342
  %5361 = vst.msk [vmem:[#allocation4 + $0x9c] sm:$0xff] %vm4059, %v5359
  %5362 = vst.msk [vmem:[#allocation4 + $0xa4] sm:$0xf] %vm4061, %v5360
  %v5363 = vld [vmem:[#allocation3 + $0xe0] sm:$0xff]
  %v5364 = vld [vmem:[#allocation3 + $0xe8] sm:$0xf]
  %v5365 = vld [vmem:[#allocation3 + $0xe1] sm:$0xff]
  %v5366 = vld [vmem:[#allocation3 + $0xe9] sm:$0xf]
  %v5367 = vld [vmem:[#allocation3 + $0xe2] sm:$0xff]
  %v5368 = vld [vmem:[#allocation3 + $0xea] sm:$0xf]
  %v5369 = vld [vmem:[#allocation3 + $0xee] sm:$0xff]
  %v5370 = vld [vmem:[#allocation3 + $0xf6] sm:$0xf]
  %v5371 = vld [vmem:[#allocation3 + $0xef] sm:$0xff]
  %v5372 = vld [vmem:[#allocation3 + $0xf7] sm:$0xf]
  %v5373 = vld [vmem:[#allocation3 + $0xf0] sm:$0xff]
  %v5374 = vld [vmem:[#allocation3 + $0xf8] sm:$0xf]
  %v5375 = vld [vmem:[#allocation3 + $0xfc] sm:$0xff]
  %v5376 = vld [vmem:[#allocation3 + $0x104] sm:$0xf]
  %v5377 = vld [vmem:[#allocation3 + $0xfd] sm:$0xff]
  %v5378 = vld [vmem:[#allocation3 + $0x105] sm:$0xf]
  %v5379 = vld [vmem:[#allocation3 + $0xfe] sm:$0xff]
  %v5380 = vld [vmem:[#allocation3 + $0x106] sm:$0xf]
  %5383 = vrot.lane.b32.xlu0 %v5365, 8
  %v5384 = vpop.permute.xlu0 %5383
  %5385 = vrot.lane.b32.xlu0 %v5366, 8
  %v5386 = vpop.permute.xlu0 %5385
  %5391 = vrot.lane.b32.xlu0 %v5367, 16
  %v5392 = vpop.permute.xlu0 %5391
  %5393 = vrot.lane.b32.xlu0 %v5368, 16
  %v5394 = vpop.permute.xlu0 %5393
  %5399 = vrot.lane.b32.xlu0 %v5369, 24
  %v5400 = vpop.permute.xlu0 %5399
  %5401 = vrot.lane.b32.xlu0 %v5370, 24
  %v5402 = vpop.permute.xlu0 %5401
  %5407 = vrot.lane.b32.xlu0 %v5371, 32
  %v5408 = vpop.permute.xlu0 %5407
  %5409 = vrot.lane.b32.xlu0 %v5372, 32
  %v5410 = vpop.permute.xlu0 %5409
  %5415 = vrot.lane.b32.xlu0 %v5373, 40
  %v5416 = vpop.permute.xlu0 %5415
  %5417 = vrot.lane.b32.xlu0 %v5374, 40
  %v5418 = vpop.permute.xlu0 %5417
  %5423 = vrot.lane.b32.xlu0 %v5375, 48
  %v5424 = vpop.permute.xlu0 %5423
  %5425 = vrot.lane.b32.xlu0 %v5376, 48
  %v5426 = vpop.permute.xlu0 %5425
  %5431 = vrot.lane.b32.xlu0 %v5377, 56
  %v5432 = vpop.permute.xlu0 %5431
  %5433 = vrot.lane.b32.xlu0 %v5378, 56
  %v5434 = vpop.permute.xlu0 %5433
  %5439 = vrot.lane.b32.xlu0 %v5379, 64
  %v5440 = vpop.permute.xlu0 %5439
  %5441 = vrot.lane.b32.xlu0 %v5380, 64
  %v5442 = vpop.permute.xlu0 %5441
  %v5445 = vsel %vm119, %v5363, %v5384
  %v5446 = vsel %vm119, %v5364, %v5386
  %v5447 = vsel %vm125, %v5445, %v5392
  %v5448 = vsel %vm125, %v5446, %v5394
  %v5449 = vsel %vm131, %v5447, %v5400
  %v5450 = vsel %vm131, %v5448, %v5402
  %v5451 = vsel %vm137, %v5449, %v5408
  %v5452 = vsel %vm137, %v5450, %v5410
  %v5453 = vsel %vm4047, %v5451, %v5416
  %v5454 = vsel %vm4047, %v5452, %v5418
  %v5455 = vsel %vm4050, %v5453, %v5424
  %v5456 = vsel %vm4050, %v5454, %v5426
  %v5457 = vsel %vm4053, %v5455, %v5432
  %v5458 = vsel %vm4053, %v5456, %v5434
  %v5459 = vsel %vm4056, %v5457, %v5440
  %v5460 = vsel %vm4056, %v5458, %v5442
  %5461 = vst.msk [vmem:[#allocation4 + $0xa8] sm:$0xff] %vm4059, %v5459
  %5462 = vst.msk [vmem:[#allocation4 + $0xb0] sm:$0xf] %vm4061, %v5460
  %v5463 = vld [vmem:[#allocation3 + $0xee] sm:$0xff]
  %v5464 = vld [vmem:[#allocation3 + $0xf6] sm:$0xf]
  %v5465 = vld [vmem:[#allocation3 + $0xef] sm:$0xff]
  %v5466 = vld [vmem:[#allocation3 + $0xf7] sm:$0xf]
  %v5467 = vld [vmem:[#allocation3 + $0xf0] sm:$0xff]
  %v5468 = vld [vmem:[#allocation3 + $0xf8] sm:$0xf]
  %v5469 = vld [vmem:[#allocation3 + $0xfc] sm:$0xff]
  %v5470 = vld [vmem:[#allocation3 + $0x104] sm:$0xf]
  %v5471 = vld [vmem:[#allocation3 + $0xfd] sm:$0xff]
  %v5472 = vld [vmem:[#allocation3 + $0x105] sm:$0xf]
  %v5473 = vld [vmem:[#allocation3 + $0xfe] sm:$0xff]
  %v5474 = vld [vmem:[#allocation3 + $0x106] sm:$0xf]
  %v5475 = vld [vmem:[#allocation3 + $0x10a] sm:$0xff]
  %v5476 = vld [vmem:[#allocation3 + $0x112] sm:$0xf]
  %v5477 = vld [vmem:[#allocation3 + $0x10b] sm:$0xff]
  %v5478 = vld [vmem:[#allocation3 + $0x113] sm:$0xf]
  %v5479 = vld [vmem:[#allocation3 + $0x10c] sm:$0xff]
  %v5480 = vld [vmem:[#allocation3 + $0x114] sm:$0xf]
  %5483 = vrot.lane.b32.xlu0 %v5465, 8
  %v5484 = vpop.permute.xlu0 %5483
  %5485 = vrot.lane.b32.xlu0 %v5466, 8
  %v5486 = vpop.permute.xlu0 %5485
  %5491 = vrot.lane.b32.xlu0 %v5467, 16
  %v5492 = vpop.permute.xlu0 %5491
  %5493 = vrot.lane.b32.xlu0 %v5468, 16
  %v5494 = vpop.permute.xlu0 %5493
  %5499 = vrot.lane.b32.xlu0 %v5469, 24
  %v5500 = vpop.permute.xlu0 %5499
  %5501 = vrot.lane.b32.xlu0 %v5470, 24
  %v5502 = vpop.permute.xlu0 %5501
  %5507 = vrot.lane.b32.xlu0 %v5471, 32
  %v5508 = vpop.permute.xlu0 %5507
  %5509 = vrot.lane.b32.xlu0 %v5472, 32
  %v5510 = vpop.permute.xlu0 %5509
  %5515 = vrot.lane.b32.xlu0 %v5473, 40
  %v5516 = vpop.permute.xlu0 %5515
  %5517 = vrot.lane.b32.xlu0 %v5474, 40
  %v5518 = vpop.permute.xlu0 %5517
  %5523 = vrot.lane.b32.xlu0 %v5475, 48
  %v5524 = vpop.permute.xlu0 %5523
  %5525 = vrot.lane.b32.xlu0 %v5476, 48
  %v5526 = vpop.permute.xlu0 %5525
  %5531 = vrot.lane.b32.xlu0 %v5477, 56
  %v5532 = vpop.permute.xlu0 %5531
  %5533 = vrot.lane.b32.xlu0 %v5478, 56
  %v5534 = vpop.permute.xlu0 %5533
  %5539 = vrot.lane.b32.xlu0 %v5479, 64
  %v5540 = vpop.permute.xlu0 %5539
  %5541 = vrot.lane.b32.xlu0 %v5480, 64
  %v5542 = vpop.permute.xlu0 %5541
  %v5545 = vsel %vm119, %v5463, %v5484
  %v5546 = vsel %vm119, %v5464, %v5486
  %v5547 = vsel %vm125, %v5545, %v5492
  %v5548 = vsel %vm125, %v5546, %v5494
  %v5549 = vsel %vm131, %v5547, %v5500
  %v5550 = vsel %vm131, %v5548, %v5502
  %v5551 = vsel %vm137, %v5549, %v5508
  %v5552 = vsel %vm137, %v5550, %v5510
  %v5553 = vsel %vm4047, %v5551, %v5516
  %v5554 = vsel %vm4047, %v5552, %v5518
  %v5555 = vsel %vm4050, %v5553, %v5524
  %v5556 = vsel %vm4050, %v5554, %v5526
  %v5557 = vsel %vm4053, %v5555, %v5532
  %v5558 = vsel %vm4053, %v5556, %v5534
  %v5559 = vsel %vm4056, %v5557, %v5540
  %v5560 = vsel %vm4056, %v5558, %v5542
  %5561 = vst.msk [vmem:[#allocation4 + $0xb4] sm:$0xff] %vm4059, %v5559
  %5562 = vst.msk [vmem:[#allocation4 + $0xbc] sm:$0xf] %vm4061, %v5560
  %v5563 = vld [vmem:[#allocation3 + $0xfc] sm:$0xff]
  %v5564 = vld [vmem:[#allocation3 + $0x104] sm:$0xf]
  %v5565 = vld [vmem:[#allocation3 + $0xfd] sm:$0xff]
  %v5566 = vld [vmem:[#allocation3 + $0x105] sm:$0xf]
  %v5567 = vld [vmem:[#allocation3 + $0xfe] sm:$0xff]
  %v5568 = vld [vmem:[#allocation3 + $0x106] sm:$0xf]
  %v5569 = vld [vmem:[#allocation3 + $0x10a] sm:$0xff]
  %v5570 = vld [vmem:[#allocation3 + $0x112] sm:$0xf]
  %v5571 = vld [vmem:[#allocation3 + $0x10b] sm:$0xff]
  %v5572 = vld [vmem:[#allocation3 + $0x113] sm:$0xf]
  %v5573 = vld [vmem:[#allocation3 + $0x10c] sm:$0xff]
  %v5574 = vld [vmem:[#allocation3 + $0x114] sm:$0xf]
  %v5575 = vld [vmem:[#allocation3 + $0x118] sm:$0xff]
  %v5576 = vld [vmem:[#allocation3 + $0x120] sm:$0xf]
  %v5577 = vld [vmem:[#allocation3 + $0x119] sm:$0xff]
  %v5578 = vld [vmem:[#allocation3 + $0x121] sm:$0xf]
  %v5579 = vld [vmem:[#allocation3 + $0x11a] sm:$0xff]
  %v5580 = vld [vmem:[#allocation3 + $0x122] sm:$0xf]
  %5583 = vrot.lane.b32.xlu0 %v5565, 8
  %v5584 = vpop.permute.xlu0 %5583
  %5585 = vrot.lane.b32.xlu0 %v5566, 8
  %v5586 = vpop.permute.xlu0 %5585
  %5591 = vrot.lane.b32.xlu0 %v5567, 16
  %v5592 = vpop.permute.xlu0 %5591
  %5593 = vrot.lane.b32.xlu0 %v5568, 16
  %v5594 = vpop.permute.xlu0 %5593
  %5599 = vrot.lane.b32.xlu0 %v5569, 24
  %v5600 = vpop.permute.xlu0 %5599
  %5601 = vrot.lane.b32.xlu0 %v5570, 24
  %v5602 = vpop.permute.xlu0 %5601
  %5607 = vrot.lane.b32.xlu0 %v5571, 32
  %v5608 = vpop.permute.xlu0 %5607
  %5609 = vrot.lane.b32.xlu0 %v5572, 32
  %v5610 = vpop.permute.xlu0 %5609
  %5615 = vrot.lane.b32.xlu0 %v5573, 40
  %v5616 = vpop.permute.xlu0 %5615
  %5617 = vrot.lane.b32.xlu0 %v5574, 40
  %v5618 = vpop.permute.xlu0 %5617
  %5623 = vrot.lane.b32.xlu0 %v5575, 48
  %v5624 = vpop.permute.xlu0 %5623
  %5625 = vrot.lane.b32.xlu0 %v5576, 48
  %v5626 = vpop.permute.xlu0 %5625
  %5631 = vrot.lane.b32.xlu0 %v5577, 56
  %v5632 = vpop.permute.xlu0 %5631
  %5633 = vrot.lane.b32.xlu0 %v5578, 56
  %v5634 = vpop.permute.xlu0 %5633
  %5639 = vrot.lane.b32.xlu0 %v5579, 64
  %v5640 = vpop.permute.xlu0 %5639
  %5641 = vrot.lane.b32.xlu0 %v5580, 64
  %v5642 = vpop.permute.xlu0 %5641
  %v5645 = vsel %vm119, %v5563, %v5584
  %v5646 = vsel %vm119, %v5564, %v5586
  %v5647 = vsel %vm125, %v5645, %v5592
  %v5648 = vsel %vm125, %v5646, %v5594
  %v5649 = vsel %vm131, %v5647, %v5600
  %v5650 = vsel %vm131, %v5648, %v5602
  %v5651 = vsel %vm137, %v5649, %v5608
  %v5652 = vsel %vm137, %v5650, %v5610
  %v5653 = vsel %vm4047, %v5651, %v5616
  %v5654 = vsel %vm4047, %v5652, %v5618
  %v5655 = vsel %vm4050, %v5653, %v5624
  %v5656 = vsel %vm4050, %v5654, %v5626
  %v5657 = vsel %vm4053, %v5655, %v5632
  %v5658 = vsel %vm4053, %v5656, %v5634
  %v5659 = vsel %vm4056, %v5657, %v5640
  %v5660 = vsel %vm4056, %v5658, %v5642
  %5661 = vst.msk [vmem:[#allocation4 + $0xc0] sm:$0xff] %vm4059, %v5659
  %5662 = vst.msk [vmem:[#allocation4 + $0xc8] sm:$0xf] %vm4061, %v5660
  %v5663 = vld [vmem:[#allocation3 + $0x10a] sm:$0xff]
  %v5664 = vld [vmem:[#allocation3 + $0x112] sm:$0xf]
  %v5665 = vld [vmem:[#allocation3 + $0x10b] sm:$0xff]
  %v5666 = vld [vmem:[#allocation3 + $0x113] sm:$0xf]
  %v5667 = vld [vmem:[#allocation3 + $0x10c] sm:$0xff]
  %v5668 = vld [vmem:[#allocation3 + $0x114] sm:$0xf]
  %v5669 = vld [vmem:[#allocation3 + $0x118] sm:$0xff]
  %v5670 = vld [vmem:[#allocation3 + $0x120] sm:$0xf]
  %v5671 = vld [vmem:[#allocation3 + $0x119] sm:$0xff]
  %v5672 = vld [vmem:[#allocation3 + $0x121] sm:$0xf]
  %v5673 = vld [vmem:[#allocation3 + $0x11a] sm:$0xff]
  %v5674 = vld [vmem:[#allocation3 + $0x122] sm:$0xf]
  %v5675 = vld [vmem:[#allocation3 + $0x126] sm:$0xff]
  %v5676 = vld [vmem:[#allocation3 + $0x12e] sm:$0xf]
  %v5677 = vld [vmem:[#allocation3 + $0x127] sm:$0xff]
  %v5678 = vld [vmem:[#allocation3 + $0x12f] sm:$0xf]
  %v5679 = vld [vmem:[#allocation3 + $0x128] sm:$0xff]
  %v5680 = vld [vmem:[#allocation3 + $0x130] sm:$0xf]
  %5683 = vrot.lane.b32.xlu0 %v5665, 8
  %v5684 = vpop.permute.xlu0 %5683
  %5685 = vrot.lane.b32.xlu0 %v5666, 8
  %v5686 = vpop.permute.xlu0 %5685
  %5691 = vrot.lane.b32.xlu0 %v5667, 16
  %v5692 = vpop.permute.xlu0 %5691
  %5693 = vrot.lane.b32.xlu0 %v5668, 16
  %v5694 = vpop.permute.xlu0 %5693
  %5699 = vrot.lane.b32.xlu0 %v5669, 24
  %v5700 = vpop.permute.xlu0 %5699
  %5701 = vrot.lane.b32.xlu0 %v5670, 24
  %v5702 = vpop.permute.xlu0 %5701
  %5707 = vrot.lane.b32.xlu0 %v5671, 32
  %v5708 = vpop.permute.xlu0 %5707
  %5709 = vrot.lane.b32.xlu0 %v5672, 32
  %v5710 = vpop.permute.xlu0 %5709
  %5715 = vrot.lane.b32.xlu0 %v5673, 40
  %v5716 = vpop.permute.xlu0 %5715
  %5717 = vrot.lane.b32.xlu0 %v5674, 40
  %v5718 = vpop.permute.xlu0 %5717
  %5723 = vrot.lane.b32.xlu0 %v5675, 48
  %v5724 = vpop.permute.xlu0 %5723
  %5725 = vrot.lane.b32.xlu0 %v5676, 48
  %v5726 = vpop.permute.xlu0 %5725
  %5731 = vrot.lane.b32.xlu0 %v5677, 56
  %v5732 = vpop.permute.xlu0 %5731
  %5733 = vrot.lane.b32.xlu0 %v5678, 56
  %v5734 = vpop.permute.xlu0 %5733
  %5739 = vrot.lane.b32.xlu0 %v5679, 64
  %v5740 = vpop.permute.xlu0 %5739
  %5741 = vrot.lane.b32.xlu0 %v5680, 64
  %v5742 = vpop.permute.xlu0 %5741
  %v5745 = vsel %vm119, %v5663, %v5684
  %v5746 = vsel %vm119, %v5664, %v5686
  %v5747 = vsel %vm125, %v5745, %v5692
  %v5748 = vsel %vm125, %v5746, %v5694
  %v5749 = vsel %vm131, %v5747, %v5700
  %v5750 = vsel %vm131, %v5748, %v5702
  %v5751 = vsel %vm137, %v5749, %v5708
  %v5752 = vsel %vm137, %v5750, %v5710
  %v5753 = vsel %vm4047, %v5751, %v5716
  %v5754 = vsel %vm4047, %v5752, %v5718
  %v5755 = vsel %vm4050, %v5753, %v5724
  %v5756 = vsel %vm4050, %v5754, %v5726
  %v5757 = vsel %vm4053, %v5755, %v5732
  %v5758 = vsel %vm4053, %v5756, %v5734
  %v5759 = vsel %vm4056, %v5757, %v5740
  %v5760 = vsel %vm4056, %v5758, %v5742
  %5761 = vst.msk [vmem:[#allocation4 + $0xcc] sm:$0xff] %vm4059, %v5759
  %5762 = vst.msk [vmem:[#allocation4 + $0xd4] sm:$0xf] %vm4061, %v5760
  %v5763 = vld [vmem:[#allocation3 + $0x118] sm:$0xff]
  %v5764 = vld [vmem:[#allocation3 + $0x120] sm:$0xf]
  %v5765 = vld [vmem:[#allocation3 + $0x119] sm:$0xff]
  %v5766 = vld [vmem:[#allocation3 + $0x121] sm:$0xf]
  %v5767 = vld [vmem:[#allocation3 + $0x11a] sm:$0xff]
  %v5768 = vld [vmem:[#allocation3 + $0x122] sm:$0xf]
  %v5769 = vld [vmem:[#allocation3 + $0x126] sm:$0xff]
  %v5770 = vld [vmem:[#allocation3 + $0x12e] sm:$0xf]
  %v5771 = vld [vmem:[#allocation3 + $0x127] sm:$0xff]
  %v5772 = vld [vmem:[#allocation3 + $0x12f] sm:$0xf]
  %v5773 = vld [vmem:[#allocation3 + $0x128] sm:$0xff]
  %v5774 = vld [vmem:[#allocation3 + $0x130] sm:$0xf]
  %v5775 = vld [vmem:[#allocation3 + $0x134] sm:$0xff]
  %v5776 = vld [vmem:[#allocation3 + $0x13c] sm:$0xf]
  %v5777 = vld [vmem:[#allocation3 + $0x135] sm:$0xff]
  %v5778 = vld [vmem:[#allocation3 + $0x13d] sm:$0xf]
  %v5779 = vld [vmem:[#allocation3 + $0x136] sm:$0xff]
  %v5780 = vld [vmem:[#allocation3 + $0x13e] sm:$0xf]
  %5783 = vrot.lane.b32.xlu0 %v5765, 8
  %v5784 = vpop.permute.xlu0 %5783
  %5785 = vrot.lane.b32.xlu0 %v5766, 8
  %v5786 = vpop.permute.xlu0 %5785
  %5791 = vrot.lane.b32.xlu0 %v5767, 16
  %v5792 = vpop.permute.xlu0 %5791
  %5793 = vrot.lane.b32.xlu0 %v5768, 16
  %v5794 = vpop.permute.xlu0 %5793
  %5799 = vrot.lane.b32.xlu0 %v5769, 24
  %v5800 = vpop.permute.xlu0 %5799
  %5801 = vrot.lane.b32.xlu0 %v5770, 24
  %v5802 = vpop.permute.xlu0 %5801
  %5807 = vrot.lane.b32.xlu0 %v5771, 32
  %v5808 = vpop.permute.xlu0 %5807
  %5809 = vrot.lane.b32.xlu0 %v5772, 32
  %v5810 = vpop.permute.xlu0 %5809
  %5815 = vrot.lane.b32.xlu0 %v5773, 40
  %v5816 = vpop.permute.xlu0 %5815
  %5817 = vrot.lane.b32.xlu0 %v5774, 40
  %v5818 = vpop.permute.xlu0 %5817
  %5823 = vrot.lane.b32.xlu0 %v5775, 48
  %v5824 = vpop.permute.xlu0 %5823
  %5825 = vrot.lane.b32.xlu0 %v5776, 48
  %v5826 = vpop.permute.xlu0 %5825
  %5831 = vrot.lane.b32.xlu0 %v5777, 56
  %v5832 = vpop.permute.xlu0 %5831
  %5833 = vrot.lane.b32.xlu0 %v5778, 56
  %v5834 = vpop.permute.xlu0 %5833
  %5839 = vrot.lane.b32.xlu0 %v5779, 64
  %v5840 = vpop.permute.xlu0 %5839
  %5841 = vrot.lane.b32.xlu0 %v5780, 64
  %v5842 = vpop.permute.xlu0 %5841
  %v5845 = vsel %vm119, %v5763, %v5784
  %v5846 = vsel %vm119, %v5764, %v5786
  %v5847 = vsel %vm125, %v5845, %v5792
  %v5848 = vsel %vm125, %v5846, %v5794
  %v5849 = vsel %vm131, %v5847, %v5800
  %v5850 = vsel %vm131, %v5848, %v5802
  %v5851 = vsel %vm137, %v5849, %v5808
  %v5852 = vsel %vm137, %v5850, %v5810
  %v5853 = vsel %vm4047, %v5851, %v5816
  %v5854 = vsel %vm4047, %v5852, %v5818
  %v5855 = vsel %vm4050, %v5853, %v5824
  %v5856 = vsel %vm4050, %v5854, %v5826
  %v5857 = vsel %vm4053, %v5855, %v5832
  %v5858 = vsel %vm4053, %v5856, %v5834
  %v5859 = vsel %vm4056, %v5857, %v5840
  %v5860 = vsel %vm4056, %v5858, %v5842
  %5861 = vst.msk [vmem:[#allocation4 + $0xd8] sm:$0xff] %vm4059, %v5859
  %5862 = vst.msk [vmem:[#allocation4 + $0xe0] sm:$0xf] %vm4061, %v5860
  %v5863 = vld [vmem:[#allocation3 + $0x126] sm:$0xff]
  %v5864 = vld [vmem:[#allocation3 + $0x12e] sm:$0xf]
  %v5865 = vld [vmem:[#allocation3 + $0x127] sm:$0xff]
  %v5866 = vld [vmem:[#allocation3 + $0x12f] sm:$0xf]
  %v5867 = vld [vmem:[#allocation3 + $0x128] sm:$0xff]
  %v5868 = vld [vmem:[#allocation3 + $0x130] sm:$0xf]
  %v5869 = vld [vmem:[#allocation3 + $0x134] sm:$0xff]
  %v5870 = vld [vmem:[#allocation3 + $0x13c] sm:$0xf]
  %v5871 = vld [vmem:[#allocation3 + $0x135] sm:$0xff]
  %v5872 = vld [vmem:[#allocation3 + $0x13d] sm:$0xf]
  %v5873 = vld [vmem:[#allocation3 + $0x136] sm:$0xff]
  %v5874 = vld [vmem:[#allocation3 + $0x13e] sm:$0xf]
  %v5875 = vld [vmem:[#allocation3 + $0x142] sm:$0xff]
  %v5876 = vld [vmem:[#allocation3 + $0x14a] sm:$0xf]
  %v5877 = vld [vmem:[#allocation3 + $0x143] sm:$0xff]
  %v5878 = vld [vmem:[#allocation3 + $0x14b] sm:$0xf]
  %v5879 = vld [vmem:[#allocation3 + $0x144] sm:$0xff]
  %v5880 = vld [vmem:[#allocation3 + $0x14c] sm:$0xf]
  %5883 = vrot.lane.b32.xlu0 %v5865, 8
  %v5884 = vpop.permute.xlu0 %5883
  %5885 = vrot.lane.b32.xlu0 %v5866, 8
  %v5886 = vpop.permute.xlu0 %5885
  %5891 = vrot.lane.b32.xlu0 %v5867, 16
  %v5892 = vpop.permute.xlu0 %5891
  %5893 = vrot.lane.b32.xlu0 %v5868, 16
  %v5894 = vpop.permute.xlu0 %5893
  %5899 = vrot.lane.b32.xlu0 %v5869, 24
  %v5900 = vpop.permute.xlu0 %5899
  %5901 = vrot.lane.b32.xlu0 %v5870, 24
  %v5902 = vpop.permute.xlu0 %5901
  %5907 = vrot.lane.b32.xlu0 %v5871, 32
  %v5908 = vpop.permute.xlu0 %5907
  %5909 = vrot.lane.b32.xlu0 %v5872, 32
  %v5910 = vpop.permute.xlu0 %5909
  %5915 = vrot.lane.b32.xlu0 %v5873, 40
  %v5916 = vpop.permute.xlu0 %5915
  %5917 = vrot.lane.b32.xlu0 %v5874, 40
  %v5918 = vpop.permute.xlu0 %5917
  %5923 = vrot.lane.b32.xlu0 %v5875, 48
  %v5924 = vpop.permute.xlu0 %5923
  %5925 = vrot.lane.b32.xlu0 %v5876, 48
  %v5926 = vpop.permute.xlu0 %5925
  %5931 = vrot.lane.b32.xlu0 %v5877, 56
  %v5932 = vpop.permute.xlu0 %5931
  %5933 = vrot.lane.b32.xlu0 %v5878, 56
  %v5934 = vpop.permute.xlu0 %5933
  %5939 = vrot.lane.b32.xlu0 %v5879, 64
  %v5940 = vpop.permute.xlu0 %5939
  %5941 = vrot.lane.b32.xlu0 %v5880, 64
  %v5942 = vpop.permute.xlu0 %5941
  %v5945 = vsel %vm119, %v5863, %v5884
  %v5946 = vsel %vm119, %v5864, %v5886
  %v5947 = vsel %vm125, %v5945, %v5892
  %v5948 = vsel %vm125, %v5946, %v5894
  %v5949 = vsel %vm131, %v5947, %v5900
  %v5950 = vsel %vm131, %v5948, %v5902
  %v5951 = vsel %vm137, %v5949, %v5908
  %v5952 = vsel %vm137, %v5950, %v5910
  %v5953 = vsel %vm4047, %v5951, %v5916
  %v5954 = vsel %vm4047, %v5952, %v5918
  %v5955 = vsel %vm4050, %v5953, %v5924
  %v5956 = vsel %vm4050, %v5954, %v5926
  %v5957 = vsel %vm4053, %v5955, %v5932
  %v5958 = vsel %vm4053, %v5956, %v5934
  %v5959 = vsel %vm4056, %v5957, %v5940
  %v5960 = vsel %vm4056, %v5958, %v5942
  %5961 = vst.msk [vmem:[#allocation4 + $0xe4] sm:$0xff] %vm4059, %v5959
  %5962 = vst.msk [vmem:[#allocation4 + $0xec] sm:$0xf] %vm4061, %v5960
  %v5963 = vld [vmem:[#allocation3 + $0x134] sm:$0xff]
  %v5964 = vld [vmem:[#allocation3 + $0x13c] sm:$0xf]
  %v5965 = vld [vmem:[#allocation3 + $0x135] sm:$0xff]
  %v5966 = vld [vmem:[#allocation3 + $0x13d] sm:$0xf]
  %v5967 = vld [vmem:[#allocation3 + $0x136] sm:$0xff]
  %v5968 = vld [vmem:[#allocation3 + $0x13e] sm:$0xf]
  %v5969 = vld [vmem:[#allocation3 + $0x142] sm:$0xff]
  %v5970 = vld [vmem:[#allocation3 + $0x14a] sm:$0xf]
  %v5971 = vld [vmem:[#allocation3 + $0x143] sm:$0xff]
  %v5972 = vld [vmem:[#allocation3 + $0x14b] sm:$0xf]
  %v5973 = vld [vmem:[#allocation3 + $0x144] sm:$0xff]
  %v5974 = vld [vmem:[#allocation3 + $0x14c] sm:$0xf]
  %v5975 = vld [vmem:[#allocation3 + $0x150] sm:$0xff]
  %v5976 = vld [vmem:[#allocation3 + $0x158] sm:$0xf]
  %v5977 = vld [vmem:[#allocation3 + $0x151] sm:$0xff]
  %v5978 = vld [vmem:[#allocation3 + $0x159] sm:$0xf]
  %v5979 = vld [vmem:[#allocation3 + $0x152] sm:$0xff]
  %v5980 = vld [vmem:[#allocation3 + $0x15a] sm:$0xf]
  %5983 = vrot.lane.b32.xlu0 %v5965, 8
  %v5984 = vpop.permute.xlu0 %5983
  %5985 = vrot.lane.b32.xlu0 %v5966, 8
  %v5986 = vpop.permute.xlu0 %5985
  %5991 = vrot.lane.b32.xlu0 %v5967, 16
  %v5992 = vpop.permute.xlu0 %5991
  %5993 = vrot.lane.b32.xlu0 %v5968, 16
  %v5994 = vpop.permute.xlu0 %5993
  %5999 = vrot.lane.b32.xlu0 %v5969, 24
  %v6000 = vpop.permute.xlu0 %5999
  %6001 = vrot.lane.b32.xlu0 %v5970, 24
  %v6002 = vpop.permute.xlu0 %6001
  %6007 = vrot.lane.b32.xlu0 %v5971, 32
  %v6008 = vpop.permute.xlu0 %6007
  %6009 = vrot.lane.b32.xlu0 %v5972, 32
  %v6010 = vpop.permute.xlu0 %6009
  %6015 = vrot.lane.b32.xlu0 %v5973, 40
  %v6016 = vpop.permute.xlu0 %6015
  %6017 = vrot.lane.b32.xlu0 %v5974, 40
  %v6018 = vpop.permute.xlu0 %6017
  %6023 = vrot.lane.b32.xlu0 %v5975, 48
  %v6024 = vpop.permute.xlu0 %6023
  %6025 = vrot.lane.b32.xlu0 %v5976, 48
  %v6026 = vpop.permute.xlu0 %6025
  %6031 = vrot.lane.b32.xlu0 %v5977, 56
  %v6032 = vpop.permute.xlu0 %6031
  %6033 = vrot.lane.b32.xlu0 %v5978, 56
  %v6034 = vpop.permute.xlu0 %6033
  %6039 = vrot.lane.b32.xlu0 %v5979, 64
  %v6040 = vpop.permute.xlu0 %6039
  %6041 = vrot.lane.b32.xlu0 %v5980, 64
  %v6042 = vpop.permute.xlu0 %6041
  %v6045 = vsel %vm119, %v5963, %v5984
  %v6046 = vsel %vm119, %v5964, %v5986
  %v6047 = vsel %vm125, %v6045, %v5992
  %v6048 = vsel %vm125, %v6046, %v5994
  %v6049 = vsel %vm131, %v6047, %v6000
  %v6050 = vsel %vm131, %v6048, %v6002
  %v6051 = vsel %vm137, %v6049, %v6008
  %v6052 = vsel %vm137, %v6050, %v6010
  %v6053 = vsel %vm4047, %v6051, %v6016
  %v6054 = vsel %vm4047, %v6052, %v6018
  %v6055 = vsel %vm4050, %v6053, %v6024
  %v6056 = vsel %vm4050, %v6054, %v6026
  %v6057 = vsel %vm4053, %v6055, %v6032
  %v6058 = vsel %vm4053, %v6056, %v6034
  %v6059 = vsel %vm4056, %v6057, %v6040
  %v6060 = vsel %vm4056, %v6058, %v6042
  %6061 = vst.msk [vmem:[#allocation4 + $0xf0] sm:$0xff] %vm4059, %v6059
  %6062 = vst.msk [vmem:[#allocation4 + $0xf8] sm:$0xf] %vm4061, %v6060
  %v6063 = vld [vmem:[#allocation3 + $0x142] sm:$0xff]
  %v6064 = vld [vmem:[#allocation3 + $0x14a] sm:$0xf]
  %v6065 = vld [vmem:[#allocation3 + $0x143] sm:$0xff]
  %v6066 = vld [vmem:[#allocation3 + $0x14b] sm:$0xf]
  %v6067 = vld [vmem:[#allocation3 + $0x144] sm:$0xff]
  %v6068 = vld [vmem:[#allocation3 + $0x14c] sm:$0xf]
  %v6069 = vld [vmem:[#allocation3 + $0x150] sm:$0xff]
  %v6070 = vld [vmem:[#allocation3 + $0x158] sm:$0xf]
  %v6071 = vld [vmem:[#allocation3 + $0x151] sm:$0xff]
  %v6072 = vld [vmem:[#allocation3 + $0x159] sm:$0xf]
  %v6073 = vld [vmem:[#allocation3 + $0x152] sm:$0xff]
  %v6074 = vld [vmem:[#allocation3 + $0x15a] sm:$0xf]
  %v6075 = vld [vmem:[#allocation3 + $0x15e] sm:$0xff]
  %v6076 = vld [vmem:[#allocation3 + $0x166] sm:$0xf]
  %v6077 = vld [vmem:[#allocation3 + $0x15f] sm:$0xff]
  %v6078 = vld [vmem:[#allocation3 + $0x167] sm:$0xf]
  %v6079 = vld [vmem:[#allocation3 + $0x160] sm:$0xff]
  %v6080 = vld [vmem:[#allocation3 + $0x168] sm:$0xf]
  %6083 = vrot.lane.b32.xlu0 %v6065, 8
  %v6084 = vpop.permute.xlu0 %6083
  %6085 = vrot.lane.b32.xlu0 %v6066, 8
  %v6086 = vpop.permute.xlu0 %6085
  %6091 = vrot.lane.b32.xlu0 %v6067, 16
  %v6092 = vpop.permute.xlu0 %6091
  %6093 = vrot.lane.b32.xlu0 %v6068, 16
  %v6094 = vpop.permute.xlu0 %6093
  %6099 = vrot.lane.b32.xlu0 %v6069, 24
  %v6100 = vpop.permute.xlu0 %6099
  %6101 = vrot.lane.b32.xlu0 %v6070, 24
  %v6102 = vpop.permute.xlu0 %6101
  %6107 = vrot.lane.b32.xlu0 %v6071, 32
  %v6108 = vpop.permute.xlu0 %6107
  %6109 = vrot.lane.b32.xlu0 %v6072, 32
  %v6110 = vpop.permute.xlu0 %6109
  %6115 = vrot.lane.b32.xlu0 %v6073, 40
  %v6116 = vpop.permute.xlu0 %6115
  %6117 = vrot.lane.b32.xlu0 %v6074, 40
  %v6118 = vpop.permute.xlu0 %6117
  %6123 = vrot.lane.b32.xlu0 %v6075, 48
  %v6124 = vpop.permute.xlu0 %6123
  %6125 = vrot.lane.b32.xlu0 %v6076, 48
  %v6126 = vpop.permute.xlu0 %6125
  %6131 = vrot.lane.b32.xlu0 %v6077, 56
  %v6132 = vpop.permute.xlu0 %6131
  %6133 = vrot.lane.b32.xlu0 %v6078, 56
  %v6134 = vpop.permute.xlu0 %6133
  %6139 = vrot.lane.b32.xlu0 %v6079, 64
  %v6140 = vpop.permute.xlu0 %6139
  %6141 = vrot.lane.b32.xlu0 %v6080, 64
  %v6142 = vpop.permute.xlu0 %6141
  %v6145 = vsel %vm119, %v6063, %v6084
  %v6146 = vsel %vm119, %v6064, %v6086
  %v6147 = vsel %vm125, %v6145, %v6092
  %v6148 = vsel %vm125, %v6146, %v6094
  %v6149 = vsel %vm131, %v6147, %v6100
  %v6150 = vsel %vm131, %v6148, %v6102
  %v6151 = vsel %vm137, %v6149, %v6108
  %v6152 = vsel %vm137, %v6150, %v6110
  %v6153 = vsel %vm4047, %v6151, %v6116
  %v6154 = vsel %vm4047, %v6152, %v6118
  %v6155 = vsel %vm4050, %v6153, %v6124
  %v6156 = vsel %vm4050, %v6154, %v6126
  %v6157 = vsel %vm4053, %v6155, %v6132
  %v6158 = vsel %vm4053, %v6156, %v6134
  %v6159 = vsel %vm4056, %v6157, %v6140
  %v6160 = vsel %vm4056, %v6158, %v6142
  %6161 = vst.msk [vmem:[#allocation4 + $0xfc] sm:$0xff] %vm4059, %v6159
  %6162 = vst.msk [vmem:[#allocation4 + $0x104] sm:$0xf] %vm4061, %v6160
  %v6163 = vld [vmem:[#allocation3 + $0x150] sm:$0xff]
  %v6164 = vld [vmem:[#allocation3 + $0x158] sm:$0xf]
  %v6165 = vld [vmem:[#allocation3 + $0x151] sm:$0xff]
  %v6166 = vld [vmem:[#allocation3 + $0x159] sm:$0xf]
  %v6167 = vld [vmem:[#allocation3 + $0x152] sm:$0xff]
  %v6168 = vld [vmem:[#allocation3 + $0x15a] sm:$0xf]
  %v6169 = vld [vmem:[#allocation3 + $0x15e] sm:$0xff]
  %v6170 = vld [vmem:[#allocation3 + $0x166] sm:$0xf]
  %v6171 = vld [vmem:[#allocation3 + $0x15f] sm:$0xff]
  %v6172 = vld [vmem:[#allocation3 + $0x167] sm:$0xf]
  %v6173 = vld [vmem:[#allocation3 + $0x160] sm:$0xff]
  %v6174 = vld [vmem:[#allocation3 + $0x168] sm:$0xf]
  %v6175 = vld [vmem:[#allocation3 + $0x16c] sm:$0xff]
  %v6176 = vld [vmem:[#allocation3 + $0x174] sm:$0xf]
  %v6177 = vld [vmem:[#allocation3 + $0x16d] sm:$0xff]
  %v6178 = vld [vmem:[#allocation3 + $0x175] sm:$0xf]
  %v6179 = vld [vmem:[#allocation3 + $0x16e] sm:$0xff]
  %v6180 = vld [vmem:[#allocation3 + $0x176] sm:$0xf]
  %6183 = vrot.lane.b32.xlu0 %v6165, 8
  %v6184 = vpop.permute.xlu0 %6183
  %6185 = vrot.lane.b32.xlu0 %v6166, 8
  %v6186 = vpop.permute.xlu0 %6185
  %6191 = vrot.lane.b32.xlu0 %v6167, 16
  %v6192 = vpop.permute.xlu0 %6191
  %6193 = vrot.lane.b32.xlu0 %v6168, 16
  %v6194 = vpop.permute.xlu0 %6193
  %6199 = vrot.lane.b32.xlu0 %v6169, 24
  %v6200 = vpop.permute.xlu0 %6199
  %6201 = vrot.lane.b32.xlu0 %v6170, 24
  %v6202 = vpop.permute.xlu0 %6201
  %6207 = vrot.lane.b32.xlu0 %v6171, 32
  %v6208 = vpop.permute.xlu0 %6207
  %6209 = vrot.lane.b32.xlu0 %v6172, 32
  %v6210 = vpop.permute.xlu0 %6209
  %6215 = vrot.lane.b32.xlu0 %v6173, 40
  %v6216 = vpop.permute.xlu0 %6215
  %6217 = vrot.lane.b32.xlu0 %v6174, 40
  %v6218 = vpop.permute.xlu0 %6217
  %6223 = vrot.lane.b32.xlu0 %v6175, 48
  %v6224 = vpop.permute.xlu0 %6223
  %6225 = vrot.lane.b32.xlu0 %v6176, 48
  %v6226 = vpop.permute.xlu0 %6225
  %6231 = vrot.lane.b32.xlu0 %v6177, 56
  %v6232 = vpop.permute.xlu0 %6231
  %6233 = vrot.lane.b32.xlu0 %v6178, 56
  %v6234 = vpop.permute.xlu0 %6233
  %6239 = vrot.lane.b32.xlu0 %v6179, 64
  %v6240 = vpop.permute.xlu0 %6239
  %6241 = vrot.lane.b32.xlu0 %v6180, 64
  %v6242 = vpop.permute.xlu0 %6241
  %v6245 = vsel %vm119, %v6163, %v6184
  %v6246 = vsel %vm119, %v6164, %v6186
  %v6247 = vsel %vm125, %v6245, %v6192
  %v6248 = vsel %vm125, %v6246, %v6194
  %v6249 = vsel %vm131, %v6247, %v6200
  %v6250 = vsel %vm131, %v6248, %v6202
  %v6251 = vsel %vm137, %v6249, %v6208
  %v6252 = vsel %vm137, %v6250, %v6210
  %v6253 = vsel %vm4047, %v6251, %v6216
  %v6254 = vsel %vm4047, %v6252, %v6218
  %v6255 = vsel %vm4050, %v6253, %v6224
  %v6256 = vsel %vm4050, %v6254, %v6226
  %v6257 = vsel %vm4053, %v6255, %v6232
  %v6258 = vsel %vm4053, %v6256, %v6234
  %v6259 = vsel %vm4056, %v6257, %v6240
  %v6260 = vsel %vm4056, %v6258, %v6242
  %6261 = vst.msk [vmem:[#allocation4 + $0x108] sm:$0xff] %vm4059, %v6259
  %6262 = vst.msk [vmem:[#allocation4 + $0x110] sm:$0xf] %vm4061, %v6260
  %v6263 = vld [vmem:[#allocation3 + $0x15e] sm:$0xff]
  %v6264 = vld [vmem:[#allocation3 + $0x166] sm:$0xf]
  %v6265 = vld [vmem:[#allocation3 + $0x15f] sm:$0xff]
  %v6266 = vld [vmem:[#allocation3 + $0x167] sm:$0xf]
  %v6267 = vld [vmem:[#allocation3 + $0x160] sm:$0xff]
  %v6268 = vld [vmem:[#allocation3 + $0x168] sm:$0xf]
  %v6269 = vld [vmem:[#allocation3 + $0x16c] sm:$0xff]
  %v6270 = vld [vmem:[#allocation3 + $0x174] sm:$0xf]
  %v6271 = vld [vmem:[#allocation3 + $0x16d] sm:$0xff]
  %v6272 = vld [vmem:[#allocation3 + $0x175] sm:$0xf]
  %v6273 = vld [vmem:[#allocation3 + $0x16e] sm:$0xff]
  %v6274 = vld [vmem:[#allocation3 + $0x176] sm:$0xf]
  %v6275 = vld [vmem:[#allocation3 + $0x17a] sm:$0xff]
  %v6276 = vld [vmem:[#allocation3 + $0x182] sm:$0xf]
  %v6277 = vld [vmem:[#allocation3 + $0x17b] sm:$0xff]
  %v6278 = vld [vmem:[#allocation3 + $0x183] sm:$0xf]
  %v6279 = vld [vmem:[#allocation3 + $0x17c] sm:$0xff]
  %v6280 = vld [vmem:[#allocation3 + $0x184] sm:$0xf]
  %6283 = vrot.lane.b32.xlu0 %v6265, 8
  %v6284 = vpop.permute.xlu0 %6283
  %6285 = vrot.lane.b32.xlu0 %v6266, 8
  %v6286 = vpop.permute.xlu0 %6285
  %6291 = vrot.lane.b32.xlu0 %v6267, 16
  %v6292 = vpop.permute.xlu0 %6291
  %6293 = vrot.lane.b32.xlu0 %v6268, 16
  %v6294 = vpop.permute.xlu0 %6293
  %6299 = vrot.lane.b32.xlu0 %v6269, 24
  %v6300 = vpop.permute.xlu0 %6299
  %6301 = vrot.lane.b32.xlu0 %v6270, 24
  %v6302 = vpop.permute.xlu0 %6301
  %6307 = vrot.lane.b32.xlu0 %v6271, 32
  %v6308 = vpop.permute.xlu0 %6307
  %6309 = vrot.lane.b32.xlu0 %v6272, 32
  %v6310 = vpop.permute.xlu0 %6309
  %6315 = vrot.lane.b32.xlu0 %v6273, 40
  %v6316 = vpop.permute.xlu0 %6315
  %6317 = vrot.lane.b32.xlu0 %v6274, 40
  %v6318 = vpop.permute.xlu0 %6317
  %6323 = vrot.lane.b32.xlu0 %v6275, 48
  %v6324 = vpop.permute.xlu0 %6323
  %6325 = vrot.lane.b32.xlu0 %v6276, 48
  %v6326 = vpop.permute.xlu0 %6325
  %6331 = vrot.lane.b32.xlu0 %v6277, 56
  %v6332 = vpop.permute.xlu0 %6331
  %6333 = vrot.lane.b32.xlu0 %v6278, 56
  %v6334 = vpop.permute.xlu0 %6333
  %6339 = vrot.lane.b32.xlu0 %v6279, 64
  %v6340 = vpop.permute.xlu0 %6339
  %6341 = vrot.lane.b32.xlu0 %v6280, 64
  %v6342 = vpop.permute.xlu0 %6341
  %v6345 = vsel %vm119, %v6263, %v6284
  %v6346 = vsel %vm119, %v6264, %v6286
  %v6347 = vsel %vm125, %v6345, %v6292
  %v6348 = vsel %vm125, %v6346, %v6294
  %v6349 = vsel %vm131, %v6347, %v6300
  %v6350 = vsel %vm131, %v6348, %v6302
  %v6351 = vsel %vm137, %v6349, %v6308
  %v6352 = vsel %vm137, %v6350, %v6310
  %v6353 = vsel %vm4047, %v6351, %v6316
  %v6354 = vsel %vm4047, %v6352, %v6318
  %v6355 = vsel %vm4050, %v6353, %v6324
  %v6356 = vsel %vm4050, %v6354, %v6326
  %v6357 = vsel %vm4053, %v6355, %v6332
  %v6358 = vsel %vm4053, %v6356, %v6334
  %v6359 = vsel %vm4056, %v6357, %v6340
  %v6360 = vsel %vm4056, %v6358, %v6342
  %6361 = vst.msk [vmem:[#allocation4 + $0x114] sm:$0xff] %vm4059, %v6359
  %6362 = vst.msk [vmem:[#allocation4 + $0x11c] sm:$0xf] %vm4061, %v6360
  %v6363 = vld [vmem:[#allocation4] sm:$0xff]
  %v6364 = vld [vmem:[#allocation4 + $0x8] sm:$0xff]
  %v6365 = vld [vmem:[#allocation4 + $0x10] sm:$0xff]
  %v6366 = vld [vmem:[#allocation4 + $0x18] sm:$0xff]
  %v6367 = vld [vmem:[#allocation4 + $0x20] sm:$0xff]
  %v6368 = vld [vmem:[#allocation4 + $0x28] sm:$0xff]
  %v6369 = vld [vmem:[#allocation4 + $0x30] sm:$0xff]
  %v6370 = vld [vmem:[#allocation4 + $0x38] sm:$0xff]
  %v6371 = vld [vmem:[#allocation4 + $0x40] sm:$0xff]
  %v6372 = vld [vmem:[#allocation4 + $0x48] sm:$0xff]
  %v6373 = vld [vmem:[#allocation4 + $0x50] sm:$0xff]
  %v6374 = vld [vmem:[#allocation4 + $0x58] sm:$0xff]
  %v6375 = vld [vmem:[#allocation4 + $0x60] sm:$0xff]
  %v6376 = vld [vmem:[#allocation4 + $0x68] sm:$0xff]
  %v6377 = vld [vmem:[#allocation4 + $0x70] sm:$0xff]
  %v6378 = vld [vmem:[#allocation4 + $0x78] sm:$0xff]
  %v6379 = vld [vmem:[#allocation4 + $0x80] sm:$0xff]
  %v6380 = vld [vmem:[#allocation4 + $0x88] sm:$0xff]
  %v6381 = vld [vmem:[#allocation4 + $0x90] sm:$0xff]
  %v6382 = vld [vmem:[#allocation4 + $0x98] sm:$0xff]
  %v6383 = vld [vmem:[#allocation4 + $0xa0] sm:$0xff]
  %v6384 = vld [vmem:[#allocation4 + $0xa8] sm:$0xff]
  %v6385 = vld [vmem:[#allocation4 + $0xb0] sm:$0xff]
  %v6386 = vld [vmem:[#allocation4 + $0xb8] sm:$0xff]
  %v6387 = vld [vmem:[#allocation4 + $0xc0] sm:$0xff]
  %v6388 = vld [vmem:[#allocation4 + $0xc8] sm:$0xff]
  %v6389 = vld [vmem:[#allocation4 + $0xd0] sm:$0xff]
  %v6390 = vld [vmem:[#allocation4 + $0xd8] sm:$0xff]
  %v6391 = vld [vmem:[#allocation4 + $0xe0] sm:$0xff]
  %v6392 = vld [vmem:[#allocation4 + $0xe8] sm:$0xff]
  %v6393 = vld [vmem:[#allocation4 + $0xf0] sm:$0xff]
  %v6394 = vld [vmem:[#allocation4 + $0xf8] sm:$0xff]
  %v6395 = vld [vmem:[#allocation4 + $0x100] sm:$0xff]
  %v6396 = vld [vmem:[#allocation4 + $0x108] sm:$0xff]
  %v6397 = vld [vmem:[#allocation4 + $0x110] sm:$0xff]
  %v6398 = vld [vmem:[#allocation4 + $0x118] sm:$0xff]
  %v6399 = vld [vmem:[%s4] sm:$0xff]
  %v6400 = vld [vmem:[%s4 + $0x8] sm:$0xff]
  %v6401 = vld [vmem:[%s4 + $0x10] sm:$0xff]
  %v6402 = vld [vmem:[%s4 + $0x18] sm:$0xff]
  %v6403 = vld [vmem:[%s4 + $0x20] sm:$0xff]
  %v6404 = vld [vmem:[%s4 + $0x28] sm:$0xff]
  %v6405 = vld [vmem:[%s4 + $0x30] sm:$0xff]
  %v6406 = vld [vmem:[%s4 + $0x38] sm:$0xff]
  %v6407 = vld [vmem:[%s4 + $0x40] sm:$0xff]
  %v6409 = vsel %vm4059, %v6363, 0
  %v6412 = vsel %vm4059, %v6364, 0
  %v6415 = vsel %vm4059, %v6365, 0
  %v6418 = vsel %vm4059, %v6366, 0
  %v6421 = vsel %vm4059, %v6367, 0
  %v6424 = vsel %vm4059, %v6368, 0
  %v6427 = vsel %vm4059, %v6369, 0
  %v6430 = vsel %vm4059, %v6370, 0
  %v6433 = vsel %vm4059, %v6371, 0
  %v6436 = vsel %vm4059, %v6372, 0
  %v6439 = vsel %vm4059, %v6373, 0
  %v6442 = vsel %vm4059, %v6374, 0
  %v6445 = vsel %vm4059, %v6375, 0
  %v6448 = vsel %vm4059, %v6376, 0
  %v6451 = vsel %vm4059, %v6377, 0
  %v6454 = vsel %vm4059, %v6378, 0
  %v6457 = vsel %vm4059, %v6379, 0
  %v6460 = vsel %vm4059, %v6380, 0
  %v6463 = vsel %vm4059, %v6381, 0
  %v6466 = vsel %vm4059, %v6382, 0
  %v6469 = vsel %vm4059, %v6383, 0
  %v6472 = vsel %vm4059, %v6384, 0
  %v6475 = vsel %vm4059, %v6385, 0
  %v6478 = vsel %vm4059, %v6386, 0
  %v6481 = vsel %vm4059, %v6387, 0
  %v6484 = vsel %vm4059, %v6388, 0
  %v6487 = vsel %vm4059, %v6389, 0
  %v6490 = vsel %vm4059, %v6390, 0
  %v6493 = vsel %vm4059, %v6391, 0
  %v6496 = vsel %vm4059, %v6392, 0
  %v6499 = vsel %vm4059, %v6393, 0
  %v6502 = vsel %vm4059, %v6394, 0
  %v6505 = vsel %vm4059, %v6395, 0
  %v6508 = vsel %vm4059, %v6396, 0
  %v6511 = vsel %vm4059, %v6397, 0
  %v6514 = vsel %vm4059, %v6398, 0
  %6516 = vmatprep.subr.mxu0 0.0
  %6517 = vmatpush1.msra.mxu0 %v6399
  %6518 = vmatprep.subr.mxu0 0.0
  %6519 = vmatpush1.msra.mxu0 %v6400
  %6520 = vmatprep.subr.mxu0 0.0
  %6521 = vmatpush1.msra.mxu0 %v6401
  %6522 = vmatprep.subr.mxu0 0.0
  %6523 = vmatpush1.msra.mxu0 %v6402
  %6524 = vmatprep.subr.mxu0 0.0
  %6525 = vmatpush1.msra.mxu0 %v6403
  %6526 = vmatprep.subr.mxu0 0.0
  %6527 = vmatpush1.msra.mxu0 %v6404
  %6528 = vmatprep.subr.mxu0 0.0
  %6529 = vmatpush1.msra.mxu0 %v6405
  %6530 = vmatprep.subr.mxu0 0.0
  %6531 = vmatpush1.msra.mxu0 %v6406
  %6532 = vmatprep.subr.mxu0 0.0
  %6533 = vmatpush1.msra.mxu0 %v6407
  %6534 = vmatprep.subr.mxu0 0.0
  %6535 = vmatpush1.msra.mxu0 0.0
  %6536 = vmatprep.subr.mxu0 0.0
  %6537 = vmatpush1.msra.mxu0 0.0
  %6538 = vmatprep.subr.mxu0 0.0
  %6539 = vmatpush1.msra.mxu0 0.0
  %6540 = vmatprep.subr.mxu0 0.0
  %6541 = vmatpush1.msra.mxu0 0.0
  %6542 = vmatprep.subr.mxu0 0.0
  %6543 = vmatpush1.msra.mxu0 0.0
  %6544 = vmatprep.subr.mxu0 0.0
  %6545 = vmatpush1.msra.mxu0 0.0
  %6546 = vmatprep.subr.mxu0 0.0
  %6547 = vmatpush1.msra.mxu0 0.0
  %6548 = vmatprep.subr.mxu0 0.0
  %6549 = vmatpush1.msra.mxu0 0.0
  %6550 = vmatprep.subr.mxu0 0.0
  %6551 = vmatpush1.msra.mxu0 0.0
  %6552 = vmatprep.subr.mxu0 0.0
  %6553 = vmatpush1.msra.mxu0 0.0
  %6554 = vmatprep.subr.mxu0 0.0
  %6555 = vmatpush1.msra.mxu0 0.0
  %6556 = vmatprep.subr.mxu0 0.0
  %6557 = vmatpush1.msra.mxu0 0.0
  %6558 = vmatprep.subr.mxu0 0.0
  %6559 = vmatpush1.msra.mxu0 0.0
  %6560 = vmatprep.subr.mxu0 0.0
  %6561 = vmatpush1.msra.mxu0 0.0
  %6562 = vmatprep.subr.mxu0 0.0
  %6563 = vmatpush1.msra.mxu0 0.0
  %6564 = vmatprep.subr.mxu0 0.0
  %6565 = vmatpush1.msra.mxu0 0.0
  %6566 = vmatprep.subr.mxu0 0.0
  %6567 = vmatpush1.msra.mxu0 0.0
  %6568 = vmatprep.subr.mxu0 0.0
  %6569 = vmatpush1.msra.mxu0 0.0
  %6570 = vmatprep.subr.mxu0 0.0
  %6571 = vmatpush1.msra.mxu0 0.0
  %6572 = vmatprep.subr.mxu0 0.0
  %6573 = vmatpush1.msra.mxu0 0.0
  %6574 = vmatprep.subr.mxu0 0.0
  %6575 = vmatpush1.msra.mxu0 0.0
  %6576 = vmatprep.subr.mxu0 0.0
  %6577 = vmatpush1.msra.mxu0 0.0
  %6578 = vmatprep.subr.mxu0 0.0
  %6579 = vmatpush1.msra.mxu0 0.0
  %6580 = vmatprep.mubr.f32.mxu0 0.0
  %6581 = vmatmul.mubr.f32.gmra.mrb[0].mxu0 %v6409
  %v6582 = vpop.f32.mrb[0].mxu0
  %v6583 = vadd.f32 0.0, %v6582
  %v6584 = vpop.f32.mrb[0].mxu0
  %6585 = vmatprep.mubr.f32.mxu0 0.0
  %6586 = vmatmul.mubr.f32.gmra.mrb[0].mxu0 %v6412
  %v6587 = vpop.f32.mrb[0].mxu0
  %v6588 = vadd.f32 0.0, %v6587
  %v6589 = vpop.f32.mrb[0].mxu0
  %6590 = vmatprep.mubr.f32.mxu0 0.0
  %6591 = vmatmul.mubr.f32.gmra.mrb[0].mxu0 %v6415
  %v6592 = vpop.f32.mrb[0].mxu0
  %v6593 = vadd.f32 0.0, %v6592
  %v6594 = vpop.f32.mrb[0].mxu0
  %6595 = vmatprep.mubr.f32.mxu0 0.0
  %6596 = vmatmul.mubr.f32.gmra.mrb[0].mxu0 %v6418
  %v6597 = vpop.f32.mrb[0].mxu0
  %v6598 = vadd.f32 0.0, %v6597
  %v6599 = vpop.f32.mrb[0].mxu0
  %6600 = vmatprep.mubr.f32.mxu0 0.0
  %6601 = vmatmul.mubr.f32.gmra.mrb[0].mxu0 %v6421
  %v6602 = vpop.f32.mrb[0].mxu0
  %v6603 = vadd.f32 0.0, %v6602
  %v6604 = vpop.f32.mrb[0].mxu0
  %6605 = vmatprep.mubr.f32.mxu0 0.0
  %6606 = vmatmul.mubr.f32.gmra.mrb[0].mxu0 %v6424
  %v6607 = vpop.f32.mrb[0].mxu0
  %v6608 = vadd.f32 0.0, %v6607
  %v6609 = vpop.f32.mrb[0].mxu0
  %6610 = vmatprep.mubr.f32.mxu0 0.0
  %6611 = vmatmul.mubr.f32.gmra.mrb[0].mxu0 %v6427
  %v6612 = vpop.f32.mrb[0].mxu0
  %v6613 = vadd.f32 0.0, %v6612
  %v6614 = vpop.f32.mrb[0].mxu0
  %6615 = vmatprep.mubr.f32.mxu0 0.0
  %6616 = vmatmul.mubr.f32.gmra.mrb[0].mxu0 %v6430
  %v6617 = vpop.f32.mrb[0].mxu0
  %v6618 = vadd.f32 0.0, %v6617
  %v6619 = vpop.f32.mrb[0].mxu0
  %6620 = vmatprep.mubr.f32.mxu0 0.0
  %6621 = vmatmul.mubr.f32.gmra.mrb[0].mxu0 %v6433
  %v6622 = vpop.f32.mrb[0].mxu0
  %v6623 = vadd.f32 0.0, %v6622
  %v6624 = vpop.f32.mrb[0].mxu0
  %6625 = vmatprep.mubr.f32.mxu0 0.0
  %6626 = vmatmul.mubr.f32.gmra.mrb[0].mxu0 %v6436
  %v6627 = vpop.f32.mrb[0].mxu0
  %v6628 = vadd.f32 0.0, %v6627
  %v6629 = vpop.f32.mrb[0].mxu0
  %6630 = vmatprep.mubr.f32.mxu0 0.0
  %6631 = vmatmul.mubr.f32.gmra.mrb[0].mxu0 %v6439
  %v6632 = vpop.f32.mrb[0].mxu0
  %v6633 = vadd.f32 0.0, %v6632
  %v6634 = vpop.f32.mrb[0].mxu0
  %6635 = vmatprep.mubr.f32.mxu0 0.0
  %6636 = vmatmul.mubr.f32.gmra.mrb[0].mxu0 %v6442
  %v6637 = vpop.f32.mrb[0].mxu0
  %v6638 = vadd.f32 0.0, %v6637
  %v6639 = vpop.f32.mrb[0].mxu0
  %6640 = vmatprep.mubr.f32.mxu0 0.0
  %6641 = vmatmul.mubr.f32.gmra.mrb[0].mxu0 %v6445
  %v6642 = vpop.f32.mrb[0].mxu0
  %v6643 = vadd.f32 0.0, %v6642
  %v6644 = vpop.f32.mrb[0].mxu0
  %6645 = vmatprep.mubr.f32.mxu0 0.0
  %6646 = vmatmul.mubr.f32.gmra.mrb[0].mxu0 %v6448
  %v6647 = vpop.f32.mrb[0].mxu0
  %v6648 = vadd.f32 0.0, %v6647
  %v6649 = vpop.f32.mrb[0].mxu0
  %6650 = vmatprep.mubr.f32.mxu0 0.0
  %6651 = vmatmul.mubr.f32.gmra.mrb[0].mxu0 %v6451
  %v6652 = vpop.f32.mrb[0].mxu0
  %v6653 = vadd.f32 0.0, %v6652
  %v6654 = vpop.f32.mrb[0].mxu0
  %6655 = vmatprep.mubr.f32.mxu0 0.0
  %6656 = vmatmul.mubr.f32.gmra.mrb[0].mxu0 %v6454
  %v6657 = vpop.f32.mrb[0].mxu0
  %v6658 = vadd.f32 0.0, %v6657
  %v6659 = vpop.f32.mrb[0].mxu0
  %6660 = vmatprep.mubr.f32.mxu0 0.0
  %6661 = vmatmul.mubr.f32.gmra.mrb[0].mxu0 %v6457
  %v6662 = vpop.f32.mrb[0].mxu0
  %v6663 = vadd.f32 0.0, %v6662
  %v6664 = vpop.f32.mrb[0].mxu0
  %6665 = vmatprep.mubr.f32.mxu0 0.0
  %6666 = vmatmul.mubr.f32.gmra.mrb[0].mxu0 %v6460
  %v6667 = vpop.f32.mrb[0].mxu0
  %v6668 = vadd.f32 0.0, %v6667
  %v6669 = vpop.f32.mrb[0].mxu0
  %6670 = vmatprep.mubr.f32.mxu0 0.0
  %6671 = vmatmul.mubr.f32.gmra.mrb[0].mxu0 %v6463
  %v6672 = vpop.f32.mrb[0].mxu0
  %v6673 = vadd.f32 0.0, %v6672
  %v6674 = vpop.f32.mrb[0].mxu0
  %6675 = vmatprep.mubr.f32.mxu0 0.0
  %6676 = vmatmul.mubr.f32.gmra.mrb[0].mxu0 %v6466
  %v6677 = vpop.f32.mrb[0].mxu0
  %v6678 = vadd.f32 0.0, %v6677
  %v6679 = vpop.f32.mrb[0].mxu0
  %6680 = vmatprep.mubr.f32.mxu0 0.0
  %6681 = vmatmul.mubr.f32.gmra.mrb[0].mxu0 %v6469
  %v6682 = vpop.f32.mrb[0].mxu0
  %v6683 = vadd.f32 0.0, %v6682
  %v6684 = vpop.f32.mrb[0].mxu0
  %6685 = vmatprep.mubr.f32.mxu0 0.0
  %6686 = vmatmul.mubr.f32.gmra.mrb[0].mxu0 %v6472
  %v6687 = vpop.f32.mrb[0].mxu0
  %v6688 = vadd.f32 0.0, %v6687
  %v6689 = vpop.f32.mrb[0].mxu0
  %6690 = vmatprep.mubr.f32.mxu0 0.0
  %6691 = vmatmul.mubr.f32.gmra.mrb[0].mxu0 %v6475
  %v6692 = vpop.f32.mrb[0].mxu0
  %v6693 = vadd.f32 0.0, %v6692
  %v6694 = vpop.f32.mrb[0].mxu0
  %6695 = vmatprep.mubr.f32.mxu0 0.0
  %6696 = vmatmul.mubr.f32.gmra.mrb[0].mxu0 %v6478
  %v6697 = vpop.f32.mrb[0].mxu0
  %v6698 = vadd.f32 0.0, %v6697
  %v6699 = vpop.f32.mrb[0].mxu0
  %6700 = vmatprep.mubr.f32.mxu0 0.0
  %6701 = vmatmul.mubr.f32.gmra.mrb[0].mxu0 %v6481
  %v6702 = vpop.f32.mrb[0].mxu0
  %v6703 = vadd.f32 0.0, %v6702
  %v6704 = vpop.f32.mrb[0].mxu0
  %6705 = vmatprep.mubr.f32.mxu0 0.0
  %6706 = vmatmul.mubr.f32.gmra.mrb[0].mxu0 %v6484
  %v6707 = vpop.f32.mrb[0].mxu0
  %v6708 = vadd.f32 0.0, %v6707
  %v6709 = vpop.f32.mrb[0].mxu0
  %6710 = vmatprep.mubr.f32.mxu0 0.0
  %6711 = vmatmul.mubr.f32.gmra.mrb[0].mxu0 %v6487
  %v6712 = vpop.f32.mrb[0].mxu0
  %v6713 = vadd.f32 0.0, %v6712
  %v6714 = vpop.f32.mrb[0].mxu0
  %6715 = vmatprep.mubr.f32.mxu0 0.0
  %6716 = vmatmul.mubr.f32.gmra.mrb[0].mxu0 %v6490
  %v6717 = vpop.f32.mrb[0].mxu0
  %v6718 = vadd.f32 0.0, %v6717
  %v6719 = vpop.f32.mrb[0].mxu0
  %6720 = vmatprep.mubr.f32.mxu0 0.0
  %6721 = vmatmul.mubr.f32.gmra.mrb[0].mxu0 %v6493
  %v6722 = vpop.f32.mrb[0].mxu0
  %v6723 = vadd.f32 0.0, %v6722
  %v6724 = vpop.f32.mrb[0].mxu0
  %6725 = vmatprep.mubr.f32.mxu0 0.0
  %6726 = vmatmul.mubr.f32.gmra.mrb[0].mxu0 %v6496
  %v6727 = vpop.f32.mrb[0].mxu0
  %v6728 = vadd.f32 0.0, %v6727
  %v6729 = vpop.f32.mrb[0].mxu0
  %6730 = vmatprep.mubr.f32.mxu0 0.0
  %6731 = vmatmul.mubr.f32.gmra.mrb[0].mxu0 %v6499
  %v6732 = vpop.f32.mrb[0].mxu0
  %v6733 = vadd.f32 0.0, %v6732
  %v6734 = vpop.f32.mrb[0].mxu0
  %6735 = vmatprep.mubr.f32.mxu0 0.0
  %6736 = vmatmul.mubr.f32.gmra.mrb[0].mxu0 %v6502
  %v6737 = vpop.f32.mrb[0].mxu0
  %v6738 = vadd.f32 0.0, %v6737
  %v6739 = vpop.f32.mrb[0].mxu0
  %6740 = vmatprep.mubr.f32.mxu0 0.0
  %6741 = vmatmul.mubr.f32.gmra.mrb[0].mxu0 %v6505
  %v6742 = vpop.f32.mrb[0].mxu0
  %v6743 = vadd.f32 0.0, %v6742
  %v6744 = vpop.f32.mrb[0].mxu0
  %6745 = vmatprep.mubr.f32.mxu0 0.0
  %6746 = vmatmul.mubr.f32.gmra.mrb[0].mxu0 %v6508
  %v6747 = vpop.f32.mrb[0].mxu0
  %v6748 = vadd.f32 0.0, %v6747
  %v6749 = vpop.f32.mrb[0].mxu0
  %6750 = vmatprep.mubr.f32.mxu0 0.0
  %6751 = vmatmul.mubr.f32.gmra.mrb[0].mxu0 %v6511
  %v6752 = vpop.f32.mrb[0].mxu0
  %v6753 = vadd.f32 0.0, %v6752
  %v6754 = vpop.f32.mrb[0].mxu0
  %6755 = vmatprep.mubr.f32.mxu0 0.0
  %6756 = vmatmul.mubr.f32.gmra.mrb[0].mxu0 %v6514
  %v6757 = vpop.f32.mrb[0].mxu0
  %v6758 = vadd.f32 0.0, %v6757
  %v6759 = vpop.f32.mrb[0].mxu0
  %6760 = vdwg.mxu0
  %v6761 = vld [vmem:[%s5] sm:$0x1]
  %v6762 = vld [vmem:[%s6] sm:$0x1]
  %v6763 = vsel %vm119, %v6583, 0.0
  %v6764 = vsel %vm119, %v6588, 0.0
  %v6765 = vadd.f32 %v6763, %v6764
  %v6766 = vsel %vm119, %v6593, 0.0
  %v6767 = vadd.f32 %v6765, %v6766
  %v6768 = vsel %vm119, %v6598, 0.0
  %v6769 = vadd.f32 %v6767, %v6768
  %v6770 = vsel %vm119, %v6603, 0.0
  %v6771 = vadd.f32 %v6769, %v6770
  %v6772 = vsel %vm119, %v6608, 0.0
  %v6773 = vadd.f32 %v6771, %v6772
  %v6774 = vsel %vm119, %v6613, 0.0
  %v6775 = vadd.f32 %v6773, %v6774
  %v6776 = vsel %vm119, %v6618, 0.0
  %v6777 = vadd.f32 %v6775, %v6776
  %v6778 = vsel %vm119, %v6623, 0.0
  %v6779 = vadd.f32 %v6777, %v6778
  %v6780 = vsel %vm119, %v6628, 0.0
  %v6781 = vadd.f32 %v6779, %v6780
  %v6782 = vsel %vm119, %v6633, 0.0
  %v6783 = vadd.f32 %v6781, %v6782
  %v6784 = vsel %vm119, %v6638, 0.0
  %v6785 = vadd.f32 %v6783, %v6784
  %v6786 = vsel %vm119, %v6643, 0.0
  %v6787 = vadd.f32 %v6785, %v6786
  %v6788 = vsel %vm119, %v6648, 0.0
  %v6789 = vadd.f32 %v6787, %v6788
  %v6790 = vsel %vm119, %v6653, 0.0
  %v6791 = vadd.f32 %v6789, %v6790
  %v6792 = vsel %vm119, %v6658, 0.0
  %v6793 = vadd.f32 %v6791, %v6792
  %v6794 = vsel %vm119, %v6663, 0.0
  %v6795 = vadd.f32 %v6793, %v6794
  %v6796 = vsel %vm119, %v6668, 0.0
  %v6797 = vadd.f32 %v6795, %v6796
  %v6798 = vsel %vm119, %v6673, 0.0
  %v6799 = vadd.f32 %v6797, %v6798
  %v6800 = vsel %vm119, %v6678, 0.0
  %v6801 = vadd.f32 %v6799, %v6800
  %v6802 = vsel %vm119, %v6683, 0.0
  %v6803 = vadd.f32 %v6801, %v6802
  %v6804 = vsel %vm119, %v6688, 0.0
  %v6805 = vadd.f32 %v6803, %v6804
  %v6806 = vsel %vm119, %v6693, 0.0
  %v6807 = vadd.f32 %v6805, %v6806
  %v6808 = vsel %vm119, %v6698, 0.0
  %v6809 = vadd.f32 %v6807, %v6808
  %v6810 = vsel %vm119, %v6703, 0.0
  %v6811 = vadd.f32 %v6809, %v6810
  %v6812 = vsel %vm119, %v6708, 0.0
  %v6813 = vadd.f32 %v6811, %v6812
  %v6814 = vsel %vm119, %v6713, 0.0
  %v6815 = vadd.f32 %v6813, %v6814
  %v6816 = vsel %vm119, %v6718, 0.0
  %v6817 = vadd.f32 %v6815, %v6816
  %v6818 = vsel %vm119, %v6723, 0.0
  %v6819 = vadd.f32 %v6817, %v6818
  %v6820 = vsel %vm119, %v6728, 0.0
  %v6821 = vadd.f32 %v6819, %v6820
  %v6822 = vsel %vm119, %v6733, 0.0
  %v6823 = vadd.f32 %v6821, %v6822
  %v6824 = vsel %vm119, %v6738, 0.0
  %v6825 = vadd.f32 %v6823, %v6824
  %v6826 = vsel %vm119, %v6743, 0.0
  %v6827 = vadd.f32 %v6825, %v6826
  %v6828 = vsel %vm119, %v6748, 0.0
  %v6829 = vadd.f32 %v6827, %v6828
  %v6830 = vsel %vm119, %v6753, 0.0
  %v6831 = vadd.f32 %v6829, %v6830
  %v6832 = vsel %vm119, %v6758, 0.0
  %v6833 = vadd.f32 %v6831, %v6832
  %v6834 = vrot.slane %v6833, 4
  %v6835 = vadd.f32 %v6833, %v6834
  %v6836 = vrot.slane %v6835, 2
  %v6837 = vadd.f32 %v6835, %v6836
  %v6838 = vrot.slane %v6837, 1
  %v6839 = vadd.f32 %v6837, %v6838
  %v6840 = vmul.f32 %v6839, 0.0034722222
  %v6841 = vmul.f32 %v6583, %v6583
  %v6842 = vmul.f32 %v6588, %v6588
  %v6843 = vmul.f32 %v6593, %v6593
  %v6844 = vmul.f32 %v6598, %v6598
  %v6845 = vmul.f32 %v6603, %v6603
  %v6846 = vmul.f32 %v6608, %v6608
  %v6847 = vmul.f32 %v6613, %v6613
  %v6848 = vmul.f32 %v6618, %v6618
  %v6849 = vmul.f32 %v6623, %v6623
  %v6850 = vmul.f32 %v6628, %v6628
  %v6851 = vmul.f32 %v6633, %v6633
  %v6852 = vmul.f32 %v6638, %v6638
  %v6853 = vmul.f32 %v6643, %v6643
  %v6854 = vmul.f32 %v6648, %v6648
  %v6855 = vmul.f32 %v6653, %v6653
  %v6856 = vmul.f32 %v6658, %v6658
  %v6857 = vmul.f32 %v6663, %v6663
  %v6858 = vmul.f32 %v6668, %v6668
  %v6859 = vmul.f32 %v6673, %v6673
  %v6860 = vmul.f32 %v6678, %v6678
  %v6861 = vmul.f32 %v6683, %v6683
  %v6862 = vmul.f32 %v6688, %v6688
  %v6863 = vmul.f32 %v6693, %v6693
  %v6864 = vmul.f32 %v6698, %v6698
  %v6865 = vmul.f32 %v6703, %v6703
  %v6866 = vmul.f32 %v6708, %v6708
  %v6867 = vmul.f32 %v6713, %v6713
  %v6868 = vmul.f32 %v6718, %v6718
  %v6869 = vmul.f32 %v6723, %v6723
  %v6870 = vmul.f32 %v6728, %v6728
  %v6871 = vmul.f32 %v6733, %v6733
  %v6872 = vmul.f32 %v6738, %v6738
  %v6873 = vmul.f32 %v6743, %v6743
  %v6874 = vmul.f32 %v6748, %v6748
  %v6875 = vmul.f32 %v6753, %v6753
  %v6876 = vmul.f32 %v6758, %v6758
  %v6877 = vsel %vm119, %v6841, 0.0
  %v6878 = vsel %vm119, %v6842, 0.0
  %v6879 = vadd.f32 %v6877, %v6878
  %v6880 = vsel %vm119, %v6843, 0.0
  %v6881 = vadd.f32 %v6879, %v6880
  %v6882 = vsel %vm119, %v6844, 0.0
  %v6883 = vadd.f32 %v6881, %v6882
  %v6884 = vsel %vm119, %v6845, 0.0
  %v6885 = vadd.f32 %v6883, %v6884
  %v6886 = vsel %vm119, %v6846, 0.0
  %v6887 = vadd.f32 %v6885, %v6886
  %v6888 = vsel %vm119, %v6847, 0.0
  %v6889 = vadd.f32 %v6887, %v6888
  %v6890 = vsel %vm119, %v6848, 0.0
  %v6891 = vadd.f32 %v6889, %v6890
  %v6892 = vsel %vm119, %v6849, 0.0
  %v6893 = vadd.f32 %v6891, %v6892
  %v6894 = vsel %vm119, %v6850, 0.0
  %v6895 = vadd.f32 %v6893, %v6894
  %v6896 = vsel %vm119, %v6851, 0.0
  %v6897 = vadd.f32 %v6895, %v6896
  %v6898 = vsel %vm119, %v6852, 0.0
  %v6899 = vadd.f32 %v6897, %v6898
  %v6900 = vsel %vm119, %v6853, 0.0
  %v6901 = vadd.f32 %v6899, %v6900
  %v6902 = vsel %vm119, %v6854, 0.0
  %v6903 = vadd.f32 %v6901, %v6902
  %v6904 = vsel %vm119, %v6855, 0.0
  %v6905 = vadd.f32 %v6903, %v6904
  %v6906 = vsel %vm119, %v6856, 0.0
  %v6907 = vadd.f32 %v6905, %v6906
  %v6908 = vsel %vm119, %v6857, 0.0
  %v6909 = vadd.f32 %v6907, %v6908
  %v6910 = vsel %vm119, %v6858, 0.0
  %v6911 = vadd.f32 %v6909, %v6910
  %v6912 = vsel %vm119, %v6859, 0.0
  %v6913 = vadd.f32 %v6911, %v6912
  %v6914 = vsel %vm119, %v6860, 0.0
  %v6915 = vadd.f32 %v6913, %v6914
  %v6916 = vsel %vm119, %v6861, 0.0
  %v6917 = vadd.f32 %v6915, %v6916
  %v6918 = vsel %vm119, %v6862, 0.0
  %v6919 = vadd.f32 %v6917, %v6918
  %v6920 = vsel %vm119, %v6863, 0.0
  %v6921 = vadd.f32 %v6919, %v6920
  %v6922 = vsel %vm119, %v6864, 0.0
  %v6923 = vadd.f32 %v6921, %v6922
  %v6924 = vsel %vm119, %v6865, 0.0
  %v6925 = vadd.f32 %v6923, %v6924
  %v6926 = vsel %vm119, %v6866, 0.0
  %v6927 = vadd.f32 %v6925, %v6926
  %v6928 = vsel %vm119, %v6867, 0.0
  %v6929 = vadd.f32 %v6927, %v6928
  %v6930 = vsel %vm119, %v6868, 0.0
  %v6931 = vadd.f32 %v6929, %v6930
  %v6932 = vsel %vm119, %v6869, 0.0
  %v6933 = vadd.f32 %v6931, %v6932
  %v6934 = vsel %vm119, %v6870, 0.0
  %v6935 = vadd.f32 %v6933, %v6934
  %v6936 = vsel %vm119, %v6871, 0.0
  %v6937 = vadd.f32 %v6935, %v6936
  %v6938 = vsel %vm119, %v6872, 0.0
  %v6939 = vadd.f32 %v6937, %v6938
  %v6940 = vsel %vm119, %v6873, 0.0
  %v6941 = vadd.f32 %v6939, %v6940
  %v6942 = vsel %vm119, %v6874, 0.0
  %v6943 = vadd.f32 %v6941, %v6942
  %v6944 = vsel %vm119, %v6875, 0.0
  %v6945 = vadd.f32 %v6943, %v6944
  %v6946 = vsel %vm119, %v6876, 0.0
  %v6947 = vadd.f32 %v6945, %v6946
  %v6948 = vrot.slane %v6947, 4
  %v6949 = vadd.f32 %v6947, %v6948
  %v6950 = vrot.slane %v6949, 2
  %v6951 = vadd.f32 %v6949, %v6950
  %v6952 = vrot.slane %v6951, 1
  %v6953 = vadd.f32 %v6951, %v6952
  %v6954 = vmul.f32 %v6953, 0.0034722222
  %v6955 = vmul.f32 %v6840, %v6840
  %v6956 = vsub.f32 %v6954, %v6955
  %v6957 = vsub.f32 %v6583, %v6840
  %v6958 = vsub.f32 %v6588, %v6840
  %v6959 = vsub.f32 %v6593, %v6840
  %v6960 = vsub.f32 %v6598, %v6840
  %v6961 = vsub.f32 %v6603, %v6840
  %v6962 = vsub.f32 %v6608, %v6840
  %v6963 = vsub.f32 %v6613, %v6840
  %v6964 = vsub.f32 %v6618, %v6840
  %v6965 = vsub.f32 %v6623, %v6840
  %v6966 = vsub.f32 %v6628, %v6840
  %v6967 = vsub.f32 %v6633, %v6840
  %v6968 = vsub.f32 %v6638, %v6840
  %v6969 = vsub.f32 %v6643, %v6840
  %v6970 = vsub.f32 %v6648, %v6840
  %v6971 = vsub.f32 %v6653, %v6840
  %v6972 = vsub.f32 %v6658, %v6840
  %v6973 = vsub.f32 %v6663, %v6840
  %v6974 = vsub.f32 %v6668, %v6840
  %v6975 = vsub.f32 %v6673, %v6840
  %v6976 = vsub.f32 %v6678, %v6840
  %v6977 = vsub.f32 %v6683, %v6840
  %v6978 = vsub.f32 %v6688, %v6840
  %v6979 = vsub.f32 %v6693, %v6840
  %v6980 = vsub.f32 %v6698, %v6840
  %v6981 = vsub.f32 %v6703, %v6840
  %v6982 = vsub.f32 %v6708, %v6840
  %v6983 = vsub.f32 %v6713, %v6840
  %v6984 = vsub.f32 %v6718, %v6840
  %v6985 = vsub.f32 %v6723, %v6840
  %v6986 = vsub.f32 %v6728, %v6840
  %v6987 = vsub.f32 %v6733, %v6840
  %v6988 = vsub.f32 %v6738, %v6840
  %v6989 = vsub.f32 %v6743, %v6840
  %v6990 = vsub.f32 %v6748, %v6840
  %v6991 = vsub.f32 %v6753, %v6840
  %v6992 = vsub.f32 %v6758, %v6840
  %v6993 = vadd.f32 %v6956, 1e-05
  %v6994 = vrsqrt.pop %v6993
  %v6995 = vmul.f32 %v6957, %v6994
  %v6996 = vmul.f32 %v6958, %v6994
  %v6997 = vmul.f32 %v6959, %v6994
  %v6998 = vmul.f32 %v6960, %v6994
  %v6999 = vmul.f32 %v6961, %v6994
  %v7000 = vmul.f32 %v6962, %v6994
  %v7001 = vmul.f32 %v6963, %v6994
  %v7002 = vmul.f32 %v6964, %v6994
  %v7003 = vmul.f32 %v6965, %v6994
  %v7004 = vmul.f32 %v6966, %v6994
  %v7005 = vmul.f32 %v6967, %v6994
  %v7006 = vmul.f32 %v6968, %v6994
  %v7007 = vmul.f32 %v6969, %v6994
  %v7008 = vmul.f32 %v6970, %v6994
  %v7009 = vmul.f32 %v6971, %v6994
  %v7010 = vmul.f32 %v6972, %v6994
  %v7011 = vmul.f32 %v6973, %v6994
  %v7012 = vmul.f32 %v6974, %v6994
  %v7013 = vmul.f32 %v6975, %v6994
  %v7014 = vmul.f32 %v6976, %v6994
  %v7015 = vmul.f32 %v6977, %v6994
  %v7016 = vmul.f32 %v6978, %v6994
  %v7017 = vmul.f32 %v6979, %v6994
  %v7018 = vmul.f32 %v6980, %v6994
  %v7019 = vmul.f32 %v6981, %v6994
  %v7020 = vmul.f32 %v6982, %v6994
  %v7021 = vmul.f32 %v6983, %v6994
  %v7022 = vmul.f32 %v6984, %v6994
  %v7023 = vmul.f32 %v6985, %v6994
  %v7024 = vmul.f32 %v6986, %v6994
  %v7025 = vmul.f32 %v6987, %v6994
  %v7026 = vmul.f32 %v6988, %v6994
  %v7027 = vmul.f32 %v6989, %v6994
  %v7028 = vmul.f32 %v6990, %v6994
  %v7029 = vmul.f32 %v6991, %v6994
  %v7030 = vmul.f32 %v6992, %v6994
  %v7032 = vlaneseq
  %v7033 = vshrl.u32 %v7032, 7
  %v7034 = vsub.s32 0, %v7033
  %v7035 = vrot.slane %v6761, %v7034
  %v7037 = vmul.f32 %v6995, %v7035
  %v7038 = vmul.f32 %v6996, %v7035
  %v7039 = vmul.f32 %v6997, %v7035
  %v7040 = vmul.f32 %v6998, %v7035
  %v7041 = vmul.f32 %v6999, %v7035
  %v7042 = vmul.f32 %v7000, %v7035
  %v7043 = vmul.f32 %v7001, %v7035
  %v7044 = vmul.f32 %v7002, %v7035
  %v7045 = vmul.f32 %v7003, %v7035
  %v7046 = vmul.f32 %v7004, %v7035
  %v7047 = vmul.f32 %v7005, %v7035
  %v7048 = vmul.f32 %v7006, %v7035
  %v7049 = vmul.f32 %v7007, %v7035
  %v7050 = vmul.f32 %v7008, %v7035
  %v7051 = vmul.f32 %v7009, %v7035
  %v7052 = vmul.f32 %v7010, %v7035
  %v7053 = vmul.f32 %v7011, %v7035
  %v7054 = vmul.f32 %v7012, %v7035
  %v7055 = vmul.f32 %v7013, %v7035
  %v7056 = vmul.f32 %v7014, %v7035
  %v7057 = vmul.f32 %v7015, %v7035
  %v7058 = vmul.f32 %v7016, %v7035
  %v7059 = vmul.f32 %v7017, %v7035
  %v7060 = vmul.f32 %v7018, %v7035
  %v7061 = vmul.f32 %v7019, %v7035
  %v7062 = vmul.f32 %v7020, %v7035
  %v7063 = vmul.f32 %v7021, %v7035
  %v7064 = vmul.f32 %v7022, %v7035
  %v7065 = vmul.f32 %v7023, %v7035
  %v7066 = vmul.f32 %v7024, %v7035
  %v7067 = vmul.f32 %v7025, %v7035
  %v7068 = vmul.f32 %v7026, %v7035
  %v7069 = vmul.f32 %v7027, %v7035
  %v7070 = vmul.f32 %v7028, %v7035
  %v7071 = vmul.f32 %v7029, %v7035
  %v7072 = vmul.f32 %v7030, %v7035
  %v7074 = vlaneseq
  %v7075 = vshrl.u32 %v7074, 7
  %v7076 = vsub.s32 0, %v7075
  %v7077 = vrot.slane %v6762, %v7076
  %v7079 = vadd.f32 %v7037, %v7077
  %v7080 = vadd.f32 %v7038, %v7077
  %v7081 = vadd.f32 %v7039, %v7077
  %v7082 = vadd.f32 %v7040, %v7077
  %v7083 = vadd.f32 %v7041, %v7077
  %v7084 = vadd.f32 %v7042, %v7077
  %v7085 = vadd.f32 %v7043, %v7077
  %v7086 = vadd.f32 %v7044, %v7077
  %v7087 = vadd.f32 %v7045, %v7077
  %v7088 = vadd.f32 %v7046, %v7077
  %v7089 = vadd.f32 %v7047, %v7077
  %v7090 = vadd.f32 %v7048, %v7077
  %v7091 = vadd.f32 %v7049, %v7077
  %v7092 = vadd.f32 %v7050, %v7077
  %v7093 = vadd.f32 %v7051, %v7077
  %v7094 = vadd.f32 %v7052, %v7077
  %v7095 = vadd.f32 %v7053, %v7077
  %v7096 = vadd.f32 %v7054, %v7077
  %v7097 = vadd.f32 %v7055, %v7077
  %v7098 = vadd.f32 %v7056, %v7077
  %v7099 = vadd.f32 %v7057, %v7077
  %v7100 = vadd.f32 %v7058, %v7077
  %v7101 = vadd.f32 %v7059, %v7077
  %v7102 = vadd.f32 %v7060, %v7077
  %v7103 = vadd.f32 %v7061, %v7077
  %v7104 = vadd.f32 %v7062, %v7077
  %v7105 = vadd.f32 %v7063, %v7077
  %v7106 = vadd.f32 %v7064, %v7077
  %v7107 = vadd.f32 %v7065, %v7077
  %v7108 = vadd.f32 %v7066, %v7077
  %v7109 = vadd.f32 %v7067, %v7077
  %v7110 = vadd.f32 %v7068, %v7077
  %v7111 = vadd.f32 %v7069, %v7077
  %v7112 = vadd.f32 %v7070, %v7077
  %v7113 = vadd.f32 %v7071, %v7077
  %v7114 = vadd.f32 %v7072, %v7077
  %v7115 = vmax.f32 %v7079, 0.0
  %v7116 = vmax.f32 %v7080, 0.0
  %v7117 = vmax.f32 %v7081, 0.0
  %v7118 = vmax.f32 %v7082, 0.0
  %v7119 = vmax.f32 %v7083, 0.0
  %v7120 = vmax.f32 %v7084, 0.0
  %v7121 = vmax.f32 %v7085, 0.0
  %v7122 = vmax.f32 %v7086, 0.0
  %v7123 = vmax.f32 %v7087, 0.0
  %v7124 = vmax.f32 %v7088, 0.0
  %v7125 = vmax.f32 %v7089, 0.0
  %v7126 = vmax.f32 %v7090, 0.0
  %v7127 = vmax.f32 %v7091, 0.0
  %v7128 = vmax.f32 %v7092, 0.0
  %v7129 = vmax.f32 %v7093, 0.0
  %v7130 = vmax.f32 %v7094, 0.0
  %v7131 = vmax.f32 %v7095, 0.0
  %v7132 = vmax.f32 %v7096, 0.0
  %v7133 = vmax.f32 %v7097, 0.0
  %v7134 = vmax.f32 %v7098, 0.0
  %v7135 = vmax.f32 %v7099, 0.0
  %v7136 = vmax.f32 %v7100, 0.0
  %v7137 = vmax.f32 %v7101, 0.0
  %v7138 = vmax.f32 %v7102, 0.0
  %v7139 = vmax.f32 %v7103, 0.0
  %v7140 = vmax.f32 %v7104, 0.0
  %v7141 = vmax.f32 %v7105, 0.0
  %v7142 = vmax.f32 %v7106, 0.0
  %v7143 = vmax.f32 %v7107, 0.0
  %v7144 = vmax.f32 %v7108, 0.0
  %v7145 = vmax.f32 %v7109, 0.0
  %v7146 = vmax.f32 %v7110, 0.0
  %v7147 = vmax.f32 %v7111, 0.0
  %v7148 = vmax.f32 %v7112, 0.0
  %v7149 = vmax.f32 %v7113, 0.0
  %v7150 = vmax.f32 %v7114, 0.0
  %v7151 = vld [vmem:[%s7] sm:$0xff]
  %v7152 = vld [vmem:[%s8] sm:$0x1]
  %v7154 = vlaneseq
  %v7155 = vshrl.u32 %v7154, 7
  %v7156 = vsub.s32 0, %v7155
  %v7157 = vrot.slane %v7152, %v7156
  %v7160 = vsel %vm119, %v7115, 0
  %v7163 = vsel %vm119, %v7116, 0
  %v7166 = vsel %vm119, %v7117, 0
  %v7169 = vsel %vm119, %v7118, 0
  %v7172 = vsel %vm119, %v7119, 0
  %v7175 = vsel %vm119, %v7120, 0
  %v7178 = vsel %vm119, %v7121, 0
  %v7181 = vsel %vm119, %v7122, 0
  %v7184 = vsel %vm119, %v7123, 0
  %v7187 = vsel %vm119, %v7124, 0
  %v7190 = vsel %vm119, %v7125, 0
  %v7193 = vsel %vm119, %v7126, 0
  %v7196 = vsel %vm119, %v7127, 0
  %v7199 = vsel %vm119, %v7128, 0
  %v7202 = vsel %vm119, %v7129, 0
  %v7205 = vsel %vm119, %v7130, 0
  %v7208 = vsel %vm119, %v7131, 0
  %v7211 = vsel %vm119, %v7132, 0
  %v7214 = vsel %vm119, %v7133, 0
  %v7217 = vsel %vm119, %v7134, 0
  %v7220 = vsel %vm119, %v7135, 0
  %v7223 = vsel %vm119, %v7136, 0
  %v7226 = vsel %vm119, %v7137, 0
  %v7229 = vsel %vm119, %v7138, 0
  %v7232 = vsel %vm119, %v7139, 0
  %v7235 = vsel %vm119, %v7140, 0
  %v7238 = vsel %vm119, %v7141, 0
  %v7241 = vsel %vm119, %v7142, 0
  %v7244 = vsel %vm119, %v7143, 0
  %v7247 = vsel %vm119, %v7144, 0
  %v7250 = vsel %vm119, %v7145, 0
  %v7253 = vsel %vm119, %v7146, 0
  %v7256 = vsel %vm119, %v7147, 0
  %v7259 = vsel %vm119, %v7148, 0
  %v7262 = vsel %vm119, %v7149, 0
  %v7265 = vsel %vm119, %v7150, 0
  %7267 = vmatprep.subr.mxu0 0.0
  %7268 = vmatpush1.msra.mxu0 %v7151
  %7269 = vmatprep.subr.mxu0 0.0
  %7270 = vmatpush1.msra.mxu0 0.0
  %7271 = vmatprep.subr.mxu0 0.0
  %7272 = vmatpush1.msra.mxu0 0.0
  %7273 = vmatprep.subr.mxu0 0.0
  %7274 = vmatpush1.msra.mxu0 0.0
  %7275 = vmatprep.subr.mxu0 0.0
  %7276 = vmatpush1.msra.mxu0 0.0
  %7277 = vmatprep.subr.mxu0 0.0
  %7278 = vmatpush1.msra.mxu0 0.0
  %7279 = vmatprep.subr.mxu0 0.0
  %7280 = vmatpush1.msra.mxu0 0.0
  %7281 = vmatprep.subr.mxu0 0.0
  %7282 = vmatpush1.msra.mxu0 0.0
  %7283 = vmatprep.subr.mxu0 0.0
  %7284 = vmatpush1.msra.mxu0 0.0
  %7285 = vmatprep.subr.mxu0 0.0
  %7286 = vmatpush1.msra.mxu0 0.0
  %7287 = vmatprep.subr.mxu0 0.0
  %7288 = vmatpush1.msra.mxu0 0.0
  %7289 = vmatprep.subr.mxu0 0.0
  %7290 = vmatpush1.msra.mxu0 0.0
  %7291 = vmatprep.subr.mxu0 0.0
  %7292 = vmatpush1.msra.mxu0 0.0
  %7293 = vmatprep.subr.mxu0 0.0
  %7294 = vmatpush1.msra.mxu0 0.0
  %7295 = vmatprep.subr.mxu0 0.0
  %7296 = vmatpush1.msra.mxu0 0.0
  %7297 = vmatprep.subr.mxu0 0.0
  %7298 = vmatpush1.msra.mxu0 0.0
  %7299 = vmatprep.subr.mxu0 0.0
  %7300 = vmatpush1.msra.mxu0 0.0
  %7301 = vmatprep.subr.mxu0 0.0
  %7302 = vmatpush1.msra.mxu0 0.0
  %7303 = vmatprep.subr.mxu0 0.0
  %7304 = vmatpush1.msra.mxu0 0.0
  %7305 = vmatprep.subr.mxu0 0.0
  %7306 = vmatpush1.msra.mxu0 0.0
  %7307 = vmatprep.subr.mxu0 0.0
  %7308 = vmatpush1.msra.mxu0 0.0
  %7309 = vmatprep.subr.mxu0 0.0
  %7310 = vmatpush1.msra.mxu0 0.0
  %7311 = vmatprep.subr.mxu0 0.0
  %7312 = vmatpush1.msra.mxu0 0.0
  %7313 = vmatprep.subr.mxu0 0.0
  %7314 = vmatpush1.msra.mxu0 0.0
  %7315 = vmatprep.subr.mxu0 0.0
  %7316 = vmatpush1.msra.mxu0 0.0
  %7317 = vmatprep.subr.mxu0 0.0
  %7318 = vmatpush1.msra.mxu0 0.0
  %7319 = vmatprep.subr.mxu0 0.0
  %7320 = vmatpush1.msra.mxu0 0.0
  %7321 = vmatprep.subr.mxu0 0.0
  %7322 = vmatpush1.msra.mxu0 0.0
  %7323 = vmatprep.subr.mxu0 0.0
  %7324 = vmatpush1.msra.mxu0 0.0
  %7325 = vmatprep.subr.mxu0 0.0
  %7326 = vmatpush1.msra.mxu0 0.0
  %7327 = vmatprep.subr.mxu0 0.0
  %7328 = vmatpush1.msra.mxu0 0.0
  %7329 = vmatprep.subr.mxu0 0.0
  %7330 = vmatpush1.msra.mxu0 0.0
  %7331 = vmatprep.mubr.f32.mxu0 0.0
  %7332 = vmatmul.mubr.f32.gmra.mrb[0].mxu0 %v7160
  %v7333 = vpop.f32.mrb[0].mxu0
  %v7334 = vadd.f32 %v7157, %v7333
  %v7335 = vpop.f32.mrb[0].mxu0
  %7336 = vmatprep.mubr.f32.mxu0 0.0
  %7337 = vmatmul.mubr.f32.gmra.mrb[0].mxu0 %v7163
  %v7338 = vpop.f32.mrb[0].mxu0
  %v7339 = vadd.f32 %v7157, %v7338
  %v7340 = vpop.f32.mrb[0].mxu0
  %7341 = vmatprep.mubr.f32.mxu0 0.0
  %7342 = vmatmul.mubr.f32.gmra.mrb[0].mxu0 %v7166
  %v7343 = vpop.f32.mrb[0].mxu0
  %v7344 = vadd.f32 %v7157, %v7343
  %v7345 = vpop.f32.mrb[0].mxu0
  %7346 = vmatprep.mubr.f32.mxu0 0.0
  %7347 = vmatmul.mubr.f32.gmra.mrb[0].mxu0 %v7169
  %v7348 = vpop.f32.mrb[0].mxu0
  %v7349 = vadd.f32 %v7157, %v7348
  %v7350 = vpop.f32.mrb[0].mxu0
  %7351 = vmatprep.mubr.f32.mxu0 0.0
  %7352 = vmatmul.mubr.f32.gmra.mrb[0].mxu0 %v7172
  %v7353 = vpop.f32.mrb[0].mxu0
  %v7354 = vadd.f32 %v7157, %v7353
  %v7355 = vpop.f32.mrb[0].mxu0
  %7356 = vmatprep.mubr.f32.mxu0 0.0
  %7357 = vmatmul.mubr.f32.gmra.mrb[0].mxu0 %v7175
  %v7358 = vpop.f32.mrb[0].mxu0
  %v7359 = vadd.f32 %v7157, %v7358
  %v7360 = vpop.f32.mrb[0].mxu0
  %7361 = vmatprep.mubr.f32.mxu0 0.0
  %7362 = vmatmul.mubr.f32.gmra.mrb[0].mxu0 %v7178
  %v7363 = vpop.f32.mrb[0].mxu0
  %v7364 = vadd.f32 %v7157, %v7363
  %v7365 = vpop.f32.mrb[0].mxu0
  %7366 = vmatprep.mubr.f32.mxu0 0.0
  %7367 = vmatmul.mubr.f32.gmra.mrb[0].mxu0 %v7181
  %v7368 = vpop.f32.mrb[0].mxu0
  %v7369 = vadd.f32 %v7157, %v7368
  %v7370 = vpop.f32.mrb[0].mxu0
  %7371 = vmatprep.mubr.f32.mxu0 0.0
  %7372 = vmatmul.mubr.f32.gmra.mrb[0].mxu0 %v7184
  %v7373 = vpop.f32.mrb[0].mxu0
  %v7374 = vadd.f32 %v7157, %v7373
  %v7375 = vpop.f32.mrb[0].mxu0
  %7376 = vmatprep.mubr.f32.mxu0 0.0
  %7377 = vmatmul.mubr.f32.gmra.mrb[0].mxu0 %v7187
  %v7378 = vpop.f32.mrb[0].mxu0
  %v7379 = vadd.f32 %v7157, %v7378
  %v7380 = vpop.f32.mrb[0].mxu0
  %7381 = vmatprep.mubr.f32.mxu0 0.0
  %7382 = vmatmul.mubr.f32.gmra.mrb[0].mxu0 %v7190
  %v7383 = vpop.f32.mrb[0].mxu0
  %v7384 = vadd.f32 %v7157, %v7383
  %v7385 = vpop.f32.mrb[0].mxu0
  %7386 = vmatprep.mubr.f32.mxu0 0.0
  %7387 = vmatmul.mubr.f32.gmra.mrb[0].mxu0 %v7193
  %v7388 = vpop.f32.mrb[0].mxu0
  %v7389 = vadd.f32 %v7157, %v7388
  %v7390 = vpop.f32.mrb[0].mxu0
  %7391 = vmatprep.mubr.f32.mxu0 0.0
  %7392 = vmatmul.mubr.f32.gmra.mrb[0].mxu0 %v7196
  %v7393 = vpop.f32.mrb[0].mxu0
  %v7394 = vadd.f32 %v7157, %v7393
  %v7395 = vpop.f32.mrb[0].mxu0
  %7396 = vmatprep.mubr.f32.mxu0 0.0
  %7397 = vmatmul.mubr.f32.gmra.mrb[0].mxu0 %v7199
  %v7398 = vpop.f32.mrb[0].mxu0
  %v7399 = vadd.f32 %v7157, %v7398
  %v7400 = vpop.f32.mrb[0].mxu0
  %7401 = vmatprep.mubr.f32.mxu0 0.0
  %7402 = vmatmul.mubr.f32.gmra.mrb[0].mxu0 %v7202
  %v7403 = vpop.f32.mrb[0].mxu0
  %v7404 = vadd.f32 %v7157, %v7403
  %v7405 = vpop.f32.mrb[0].mxu0
  %7406 = vmatprep.mubr.f32.mxu0 0.0
  %7407 = vmatmul.mubr.f32.gmra.mrb[0].mxu0 %v7205
  %v7408 = vpop.f32.mrb[0].mxu0
  %v7409 = vadd.f32 %v7157, %v7408
  %v7410 = vpop.f32.mrb[0].mxu0
  %7411 = vmatprep.mubr.f32.mxu0 0.0
  %7412 = vmatmul.mubr.f32.gmra.mrb[0].mxu0 %v7208
  %v7413 = vpop.f32.mrb[0].mxu0
  %v7414 = vadd.f32 %v7157, %v7413
  %v7415 = vpop.f32.mrb[0].mxu0
  %7416 = vmatprep.mubr.f32.mxu0 0.0
  %7417 = vmatmul.mubr.f32.gmra.mrb[0].mxu0 %v7211
  %v7418 = vpop.f32.mrb[0].mxu0
  %v7419 = vadd.f32 %v7157, %v7418
  %v7420 = vpop.f32.mrb[0].mxu0
  %7421 = vmatprep.mubr.f32.mxu0 0.0
  %7422 = vmatmul.mubr.f32.gmra.mrb[0].mxu0 %v7214
  %v7423 = vpop.f32.mrb[0].mxu0
  %v7424 = vadd.f32 %v7157, %v7423
  %v7425 = vpop.f32.mrb[0].mxu0
  %7426 = vmatprep.mubr.f32.mxu0 0.0
  %7427 = vmatmul.mubr.f32.gmra.mrb[0].mxu0 %v7217
  %v7428 = vpop.f32.mrb[0].mxu0
  %v7429 = vadd.f32 %v7157, %v7428
  %v7430 = vpop.f32.mrb[0].mxu0
  %7431 = vmatprep.mubr.f32.mxu0 0.0
  %7432 = vmatmul.mubr.f32.gmra.mrb[0].mxu0 %v7220
  %v7433 = vpop.f32.mrb[0].mxu0
  %v7434 = vadd.f32 %v7157, %v7433
  %v7435 = vpop.f32.mrb[0].mxu0
  %7436 = vmatprep.mubr.f32.mxu0 0.0
  %7437 = vmatmul.mubr.f32.gmra.mrb[0].mxu0 %v7223
  %v7438 = vpop.f32.mrb[0].mxu0
  %v7439 = vadd.f32 %v7157, %v7438
  %v7440 = vpop.f32.mrb[0].mxu0
  %7441 = vmatprep.mubr.f32.mxu0 0.0
  %7442 = vmatmul.mubr.f32.gmra.mrb[0].mxu0 %v7226
  %v7443 = vpop.f32.mrb[0].mxu0
  %v7444 = vadd.f32 %v7157, %v7443
  %v7445 = vpop.f32.mrb[0].mxu0
  %7446 = vmatprep.mubr.f32.mxu0 0.0
  %7447 = vmatmul.mubr.f32.gmra.mrb[0].mxu0 %v7229
  %v7448 = vpop.f32.mrb[0].mxu0
  %v7449 = vadd.f32 %v7157, %v7448
  %v7450 = vpop.f32.mrb[0].mxu0
  %7451 = vmatprep.mubr.f32.mxu0 0.0
  %7452 = vmatmul.mubr.f32.gmra.mrb[0].mxu0 %v7232
  %v7453 = vpop.f32.mrb[0].mxu0
  %v7454 = vadd.f32 %v7157, %v7453
  %v7455 = vpop.f32.mrb[0].mxu0
  %7456 = vmatprep.mubr.f32.mxu0 0.0
  %7457 = vmatmul.mubr.f32.gmra.mrb[0].mxu0 %v7235
  %v7458 = vpop.f32.mrb[0].mxu0
  %v7459 = vadd.f32 %v7157, %v7458
  %v7460 = vpop.f32.mrb[0].mxu0
  %7461 = vmatprep.mubr.f32.mxu0 0.0
  %7462 = vmatmul.mubr.f32.gmra.mrb[0].mxu0 %v7238
  %v7463 = vpop.f32.mrb[0].mxu0
  %v7464 = vadd.f32 %v7157, %v7463
  %v7465 = vpop.f32.mrb[0].mxu0
  %7466 = vmatprep.mubr.f32.mxu0 0.0
  %7467 = vmatmul.mubr.f32.gmra.mrb[0].mxu0 %v7241
  %v7468 = vpop.f32.mrb[0].mxu0
  %v7469 = vadd.f32 %v7157, %v7468
  %v7470 = vpop.f32.mrb[0].mxu0
  %7471 = vmatprep.mubr.f32.mxu0 0.0
  %7472 = vmatmul.mubr.f32.gmra.mrb[0].mxu0 %v7244
  %v7473 = vpop.f32.mrb[0].mxu0
  %v7474 = vadd.f32 %v7157, %v7473
  %v7475 = vpop.f32.mrb[0].mxu0
  %7476 = vmatprep.mubr.f32.mxu0 0.0
  %7477 = vmatmul.mubr.f32.gmra.mrb[0].mxu0 %v7247
  %v7478 = vpop.f32.mrb[0].mxu0
  %v7479 = vadd.f32 %v7157, %v7478
  %v7480 = vpop.f32.mrb[0].mxu0
  %7481 = vmatprep.mubr.f32.mxu0 0.0
  %7482 = vmatmul.mubr.f32.gmra.mrb[0].mxu0 %v7250
  %v7483 = vpop.f32.mrb[0].mxu0
  %v7484 = vadd.f32 %v7157, %v7483
  %v7485 = vpop.f32.mrb[0].mxu0
  %7486 = vmatprep.mubr.f32.mxu0 0.0
  %7487 = vmatmul.mubr.f32.gmra.mrb[0].mxu0 %v7253
  %v7488 = vpop.f32.mrb[0].mxu0
  %v7489 = vadd.f32 %v7157, %v7488
  %v7490 = vpop.f32.mrb[0].mxu0
  %7491 = vmatprep.mubr.f32.mxu0 0.0
  %7492 = vmatmul.mubr.f32.gmra.mrb[0].mxu0 %v7256
  %v7493 = vpop.f32.mrb[0].mxu0
  %v7494 = vadd.f32 %v7157, %v7493
  %v7495 = vpop.f32.mrb[0].mxu0
  %7496 = vmatprep.mubr.f32.mxu0 0.0
  %7497 = vmatmul.mubr.f32.gmra.mrb[0].mxu0 %v7259
  %v7498 = vpop.f32.mrb[0].mxu0
  %v7499 = vadd.f32 %v7157, %v7498
  %v7500 = vpop.f32.mrb[0].mxu0
  %7501 = vmatprep.mubr.f32.mxu0 0.0
  %7502 = vmatmul.mubr.f32.gmra.mrb[0].mxu0 %v7262
  %v7503 = vpop.f32.mrb[0].mxu0
  %v7504 = vadd.f32 %v7157, %v7503
  %v7505 = vpop.f32.mrb[0].mxu0
  %7506 = vmatprep.mubr.f32.mxu0 0.0
  %7507 = vmatmul.mubr.f32.gmra.mrb[0].mxu0 %v7265
  %v7508 = vpop.f32.mrb[0].mxu0
  %v7509 = vadd.f32 %v7157, %v7508
  %v7510 = vpop.f32.mrb[0].mxu0
  %7511 = vdwg.mxu0
  %7512 = vst.msk [vmem:[%s9] sm:$0xff] %vm125, %v7334
  %7513 = vst.msk [vmem:[%s9 + $0x8] sm:$0xff] %vm125, %v7339
  %7514 = vst.msk [vmem:[%s9 + $0x10] sm:$0xff] %vm125, %v7344
  %7515 = vst.msk [vmem:[%s9 + $0x18] sm:$0xff] %vm125, %v7349
  %7516 = vst.msk [vmem:[%s9 + $0x20] sm:$0xff] %vm125, %v7354
  %7517 = vst.msk [vmem:[%s9 + $0x28] sm:$0xff] %vm125, %v7359
  %7518 = vst.msk [vmem:[%s9 + $0x30] sm:$0xff] %vm125, %v7364
  %7519 = vst.msk [vmem:[%s9 + $0x38] sm:$0xff] %vm125, %v7369
  %7520 = vst.msk [vmem:[%s9 + $0x40] sm:$0xff] %vm125, %v7374
  %7521 = vst.msk [vmem:[%s9 + $0x48] sm:$0xff] %vm125, %v7379
  %7522 = vst.msk [vmem:[%s9 + $0x50] sm:$0xff] %vm125, %v7384
  %7523 = vst.msk [vmem:[%s9 + $0x58] sm:$0xff] %vm125, %v7389
  %7524 = vst.msk [vmem:[%s9 + $0x60] sm:$0xff] %vm125, %v7394
  %7525 = vst.msk [vmem:[%s9 + $0x68] sm:$0xff] %vm125, %v7399
  %7526 = vst.msk [vmem:[%s9 + $0x70] sm:$0xff] %vm125, %v7404
  %7527 = vst.msk [vmem:[%s9 + $0x78] sm:$0xff] %vm125, %v7409
  %7528 = vst.msk [vmem:[%s9 + $0x80] sm:$0xff] %vm125, %v7414
  %7529 = vst.msk [vmem:[%s9 + $0x88] sm:$0xff] %vm125, %v7419
  %7530 = vst.msk [vmem:[%s9 + $0x90] sm:$0xff] %vm125, %v7424
  %7531 = vst.msk [vmem:[%s9 + $0x98] sm:$0xff] %vm125, %v7429
  %7532 = vst.msk [vmem:[%s9 + $0xa0] sm:$0xff] %vm125, %v7434
  %7533 = vst.msk [vmem:[%s9 + $0xa8] sm:$0xff] %vm125, %v7439
  %7534 = vst.msk [vmem:[%s9 + $0xb0] sm:$0xff] %vm125, %v7444
  %7535 = vst.msk [vmem:[%s9 + $0xb8] sm:$0xff] %vm125, %v7449
  %7536 = vst.msk [vmem:[%s9 + $0xc0] sm:$0xff] %vm125, %v7454
  %7537 = vst.msk [vmem:[%s9 + $0xc8] sm:$0xff] %vm125, %v7459
  %7538 = vst.msk [vmem:[%s9 + $0xd0] sm:$0xff] %vm125, %v7464
  %7539 = vst.msk [vmem:[%s9 + $0xd8] sm:$0xff] %vm125, %v7469
  %7540 = vst.msk [vmem:[%s9 + $0xe0] sm:$0xff] %vm125, %v7474
  %7541 = vst.msk [vmem:[%s9 + $0xe8] sm:$0xff] %vm125, %v7479
  %7542 = vst.msk [vmem:[%s9 + $0xf0] sm:$0xff] %vm125, %v7484
  %7543 = vst.msk [vmem:[%s9 + $0xf8] sm:$0xff] %vm125, %v7489
  %7544 = vst.msk [vmem:[%s9 + $0x100] sm:$0xff] %vm125, %v7494
  %7545 = vst.msk [vmem:[%s9 + $0x108] sm:$0xff] %vm125, %v7499
  %7546 = vst.msk [vmem:[%s9 + $0x110] sm:$0xff] %vm125, %v7504
  %7547 = vst.msk [vmem:[%s9 + $0x118] sm:$0xff] %vm125, %v7509
  // Predicated region
  $region38: #{decoder_block_forward.1} parent=0 // pred_check
    _
  $region39: #{decoder_block_forward.1} parent=0 // pred_check_branch
    %7549 = sbr.rel (0) target = $region41
  $region40: #{decoder_block_forward.1} parent=0 // pred_region
    _
  $region41: #{decoder_block_forward.1} parent=0 // pred_fallthru
    _
  // Predicated region
  $region42: #{decoder_block_forward.1} parent=0 // pred_check
    _
  $region43: #{decoder_block_forward.1} parent=0 // pred_check_branch
    %7551 = sbr.rel (0) target = $region45
  $region44: #{decoder_block_forward.1} parent=0 // pred_region
    _
  $region45: #{decoder_block_forward.1} parent=0 // pred_fallthru
    _

</llo_original>
